<compile_context>
chip_gen: v7x
topology: tpu7x:2x2x1
jax: 0.10.0
libtpu: 0.0.40
codegen_flags: <defaults>
</compile_context>

<pallas_src>
import functools

import jax
import jax.numpy as jnp
from jax.experimental import pallas as pl
from jax.experimental.pallas import tpu as pltpu


def _full_spec(shape):
    nd = len(shape)
    return pl.BlockSpec(shape, lambda i, _nd=nd: (0,) * _nd)


# --------------- fused conv-as-matmul + BatchNorm + activation (encoder) ---------------
def _conv_bn_act_kernel(a_ref, w_ref, g_ref, b_ref, o_ref, *, act, bn):
    # a: (M, K) bf16 im2col patches, w: (K, N) bf16 weights -> f32 MXU accumulation.
    y = jnp.dot(a_ref[...], w_ref[...], preferred_element_type=jnp.float32)
    if bn:
        # training-mode BatchNorm2d: per-channel biased batch stats, eps=1e-5
        mean = jnp.mean(y, axis=0, keepdims=True)
        var = jnp.mean(jnp.square(y - mean), axis=0, keepdims=True)
        y = (y - mean) * (g_ref[...] * jax.lax.rsqrt(var + 1e-5)) + b_ref[...]
    if act == "leaky_relu":
        y = jnp.where(y >= 0.0, y, 0.2 * y)
    elif act == "relu":
        y = jnp.maximum(y, 0.0)
    elif act == "sigmoid":
        y = 1.0 / (1.0 + jnp.exp(-y))
    o_ref[...] = y


def conv_bn_act(patches, wmat, gamma, beta, *, act="none", bn=False):
    M, K = patches.shape
    K2, N = wmat.shape
    assert K == K2
    return pl.pallas_call(
        functools.partial(_conv_bn_act_kernel, act=act, bn=bn),
        out_shape=jax.ShapeDtypeStruct((M, N), jnp.float32),
        grid_spec=pltpu.PrefetchScalarGridSpec(
            num_scalar_prefetch=0,
            grid=(1,),
            in_specs=[_full_spec((M, K)), _full_spec((K, N)),
                      _full_spec((1, N)), _full_spec((1, N))],
            out_specs=_full_spec((M, N))),
    )(patches.astype(jnp.bfloat16), wmat,
      gamma.reshape(1, N).astype(jnp.float32),
      beta.reshape(1, N).astype(jnp.float32))


# ---------- fused 4-phase transposed-conv + BatchNorm + activation (decoder) ----------
def _deconv_bn_act_kernel(a_ref, w_ref, g_ref, b_ref, o_ref, *, act, bn):
    # a: (4, M, K) per-output-parity 2x2 patches, w: (4, K, N) per-parity sub-kernels.
    y = jnp.einsum("pmk,pkn->pmn", a_ref[...], w_ref[...],
                   preferred_element_type=jnp.float32)
    if bn:
        # stats over all phases x positions == full (B, 2H, 2W) output, per channel
        mean = jnp.mean(jnp.mean(y, axis=1, keepdims=True), axis=0, keepdims=True)
        d = y - mean
        var = jnp.mean(jnp.mean(jnp.square(d), axis=1, keepdims=True),
                       axis=0, keepdims=True)
        y = d * (g_ref[...] * jax.lax.rsqrt(var + 1e-5)) + b_ref[...]
    if act == "relu":
        y = jnp.maximum(y, 0.0)
    elif act == "sigmoid":
        y = 1.0 / (1.0 + jnp.exp(-y))
    o_ref[...] = y


def deconv_bn_act(x_nhwc, wphase, gamma, beta, *, act="none", bn=False):
    # ConvTranspose2d(k=4, s=2, p=1, bias=False) via output-parity decomposition:
    # out[2m+py, 2n+px] is a 2x2 conv over padded input rows/cols starting at (m+py, n+px)
    # with sub-kernel taps ky=(3-py)-2*di, kx=(3-px)-2*dj.
    B, H, W, Cin = x_nhwc.shape
    Cout = wphase.shape[-1]
    M = B * H * W
    xp = jnp.pad(x_nhwc, ((0, 0), (1, 1), (1, 1), (0, 0)))
    phase_patches = []
    for py in (0, 1):
        for px in (0, 1):
            cols = [xp[:, py + di:py + di + H, px + dj:px + dj + W, :]
                    for di in (0, 1) for dj in (0, 1)]
            phase_patches.append(jnp.stack(cols, axis=-1).reshape(M, Cin * 4))
    a = jnp.stack(phase_patches, axis=0).astype(jnp.bfloat16)          # (4, M, Cin*4)

    out = pl.pallas_call(
        functools.partial(_deconv_bn_act_kernel, act=act, bn=bn),
        out_shape=jax.ShapeDtypeStruct((4, M, Cout), jnp.float32),
        grid_spec=pltpu.PrefetchScalarGridSpec(
            num_scalar_prefetch=0,
            grid=(1,),
            in_specs=[_full_spec((4, M, Cin * 4)),
                      _full_spec((4, Cin * 4, Cout)),
                      _full_spec((1, 1, Cout)),
                      _full_spec((1, 1, Cout))],
            out_specs=_full_spec((4, M, Cout))),
    )(a, wphase,
      gamma.reshape(1, 1, Cout).astype(jnp.float32),
      beta.reshape(1, 1, Cout).astype(jnp.float32))

    # interleave phases: y = 2h+py, x = 2w+px
    out = out.reshape(2, 2, B, H, W, Cout).transpose(2, 3, 0, 4, 1, 5)
    return out.reshape(B, 2 * H, 2 * W, Cout)


# ----------------------- fused small FC (matmul + bias + activation) -----------------------
def _fc_kernel(x_ref, w_ref, b_ref, o_ref, *, act):
    y = jnp.dot(x_ref[...], w_ref[...], preferred_element_type=jnp.float32) + b_ref[...]
    if act == "relu":
        y = jnp.maximum(y, 0.0)
    o_ref[...] = y


def fc(x, w, b, *, act="none"):
    M, K = x.shape
    K2, N = w.shape
    assert K == K2
    return pl.pallas_call(
        functools.partial(_fc_kernel, act=act),
        out_shape=jax.ShapeDtypeStruct((M, N), jnp.float32),
        grid_spec=pltpu.PrefetchScalarGridSpec(
            num_scalar_prefetch=0,
            grid=(1,),
            in_specs=[_full_spec((M, K)), _full_spec((K, N)), _full_spec((1, N))],
            out_specs=_full_spec((M, N))),
    )(x.astype(jnp.bfloat16), w, b.reshape(1, N).astype(jnp.float32))


# ----------------------------- im2col for Conv2d(k=4, s=2, p=1) -----------------------------
def im2col_stride2_k4(x_nhwc):
    B, H, W, C = x_nhwc.shape
    OH, OW = H // 2, W // 2
    xp = jnp.pad(x_nhwc, ((0, 0), (1, 1), (1, 1), (0, 0)))
    cols = [xp[:, kh:kh + 2 * OH:2, kw:kw + 2 * OW:2, :]
            for kh in range(4) for kw in range(4)]
    patches = jnp.stack(cols, axis=-1).reshape(B * OH * OW, C * 16)   # cols: (c, kh, kw)
    return patches, OH, OW


# ---------------------------------------- parameters ----------------------------------------
def init_params(key):
    ks = jax.random.split(key, 14)

    def rn(k, shape, s=0.05):
        return jax.random.normal(k, shape, jnp.float32) * s

    p = {}
    p["enc_w1"] = rn(ks[0], (32, 3, 4, 4))
    p["enc_g1"] = jnp.ones((32,), jnp.float32);  p["enc_b1"] = jnp.zeros((32,), jnp.float32)
    p["enc_w2"] = rn(ks[1], (64, 32, 4, 4))
    p["enc_g2"] = jnp.ones((64,), jnp.float32);  p["enc_b2"] = jnp.zeros((64,), jnp.float32)
    p["enc_w3"] = rn(ks[2], (128, 64, 4, 4))
    p["fc21_w"] = rn(ks[3], (10, 2048));  p["fc21_b"] = rn(ks[4], (10,))
    p["fc22_w"] = rn(ks[5], (10, 2048));  p["fc22_b"] = rn(ks[6], (10,))
    p["fc23_w"] = rn(ks[7], (10, 2048));  p["fc23_b"] = rn(ks[8], (10,))
    p["fc3_w"]  = rn(ks[9], (2048, 20));  p["fc3_b"]  = rn(ks[10], (2048,))
    p["dec_w1"] = rn(ks[11], (128, 64, 4, 4))   # ConvTranspose2d weight: (Cin, Cout, K, K)
    p["dec_g1"] = jnp.ones((64,), jnp.float32);  p["dec_b1"] = jnp.zeros((64,), jnp.float32)
    p["dec_w2"] = rn(ks[12], (64, 32, 4, 4))
    p["dec_g2"] = jnp.ones((32,), jnp.float32);  p["dec_b2"] = jnp.zeros((32,), jnp.float32)
    p["dec_w3"] = rn(ks[13], (32, 3, 4, 4))
    return p


def prepare_params(p):
    """One-time weight packing (reshape/transpose/concat/permute/bf16-cast), outside jit."""
    q = {}

    def conv_mat(w):                               # (Cout, Cin, 4, 4) -> (Cin*16, Cout)
        return w.reshape(w.shape[0], -1).T.astype(jnp.bfloat16)

    def deconv_phase_mats(w_t):                    # (Cin, Cout, 4, 4) -> (4, Cin*4, Cout)
        cin, cout = w_t.shape[0], w_t.shape[1]
        mats = []
        for py in (0, 1):
            for px in (0, 1):
                sub = w_t[:, :, 3 - py::-2, 3 - px::-2]        # taps ky=(3-py)-2di, kx=(3-px)-2dj
                mats.append(sub.transpose(0, 2, 3, 1).reshape(cin * 4, cout))
        return jnp.stack(mats, axis=0).astype(jnp.bfloat16)

    q["enc_w1"] = conv_mat(p["enc_w1"])
    q["enc_w2"] = conv_mat(p["enc_w2"])
    q["enc_w3"] = conv_mat(p["enc_w3"])
    for k in ("enc_g1", "enc_b1", "enc_g2", "enc_b2",
              "dec_g1", "dec_b1", "dec_g2", "dec_b2"):
        q[k] = p[k]

    # fc21/fc22/fc23 fused into one matmul; 2048-dim permuted (c,h,w)->(h,w,c) to match NHWC h1.
    w_enc = jnp.concatenate([p["fc21_w"], p["fc22_w"], p["fc23_w"]], axis=0)      # (30, 2048)
    w_enc = w_enc.reshape(30, 128, 4, 4).transpose(0, 2, 3, 1).reshape(30, 2048)
    q["fc_enc_w"] = w_enc.T.astype(jnp.bfloat16)                                  # (2048, 30)
    q["fc_enc_b"] = jnp.concatenate([p["fc21_b"], p["fc22_b"], p["fc23_b"]])

    # fc3: output dim (2048) permuted (c,h,w)->(h,w,c) so h3 reshapes directly to NHWC (B,4,4,128).
    w3 = p["fc3_w"].reshape(128, 4, 4, 20).transpose(1, 2, 0, 3).reshape(2048, 20)
    q["fc3_w"] = w3.T.astype(jnp.bfloat16)                                        # (20, 2048)
    q["fc3_b"] = p["fc3_b"].reshape(128, 4, 4).transpose(1, 2, 0).reshape(2048)

    q["dec_w1"] = deconv_phase_mats(p["dec_w1"])   # (4, 512, 64)
    q["dec_w2"] = deconv_phase_mats(p["dec_w2"])   # (4, 256, 32)
    q["dec_w3"] = deconv_phase_mats(p["dec_w3"])   # (4, 128, 3)
    return q


# ------------------------------------------ forward ------------------------------------------
def vae_forward(params, x, key, temperature=1.0):
    # TODO(synk): args.temperature is undefined in the source script; fixed to 1.0 here.
    B = x.shape[0]
    xh = jnp.transpose(x, (0, 2, 3, 1))                          # NCHW -> NHWC, once

    # ---- encode: [conv+BN+LeakyReLU(0.2)] x2 -> conv, each one fused Pallas kernel ----
    pm, OH, OW = im2col_stride2_k4(xh)
    h = conv_bn_act(pm, params["enc_w1"], params["enc_g1"], params["enc_b1"],
                    act="leaky_relu", bn=True)                   # (B*16*16, 32)
    pm, OH, OW = im2col_stride2_k4(h.reshape(B, OH, OW, 32))
    h = conv_bn_act(pm, params["enc_w2"], params["enc_g2"], params["enc_b2"],
                    act="leaky_relu", bn=True)                   # (B*8*8, 64)
    pm, OH, OW = im2col_stride2_k4(h.reshape(B, OH, OW, 64))
    h = conv_bn_act(pm, params["enc_w3"],
                    jnp.ones((128,), jnp.float32), jnp.zeros((128,), jnp.float32),
                    act="none", bn=False)                        # (B*4*4, 128)
    h1 = h.reshape(B, 2048)                # NHWC flatten; FC weights were permuted to match

    enc = fc(h1, params["fc_enc_w"], params["fc_enc_b"], act="none")   # (B, 30)
    mu, logvar, categorical = enc[:, :10], enc[:, 10:20], enc[:, 20:30]

    # ---- reparametrize_normal (reproduces original: z = eps*std*std + mu) ----
    k1, k2 = jax.random.split(key)
    std = jnp.exp(0.5 * logvar)
    eps = jax.random.normal(k1, std.shape, jnp.float32)
    z = (eps * std) * std + mu

    # ---- reparametrize_gumbel (hard=False path) ----
    u = jax.random.uniform(k2, categorical.shape, jnp.float32, 0.0, 1.0)
    noise = -jnp.log(-jnp.log(u + 1e-9) + 1e-9)
    c = jax.nn.softmax((categorical + noise) / temperature, axis=1)

    # ---- decode ----
    zc = jnp.concatenate([z, c], axis=1)                         # (B, 20)
    h3 = fc(zc, params["fc3_w"], params["fc3_b"], act="relu")    # (B, 2048), NHWC order
    h3 = h3.reshape(B, 4, 4, 128)

    d = deconv_bn_act(h3, params["dec_w1"], params["dec_g1"], params["dec_b1"],
                      act="relu", bn=True)                       # (B, 8, 8, 64)
    d = deconv_bn_act(d, params["dec_w2"], params["dec_g2"], params["dec_b2"],
                      act="relu", bn=True)                       # (B, 16, 16, 32)
    d = deconv_bn_act(d, params["dec_w3"],
                      jnp.ones((3,), jnp.float32), jnp.zeros((3,), jnp.float32),
                      act="sigmoid", bn=False)                   # (B, 32, 32, 3)
    recon = jnp.transpose(d, (0, 3, 1, 2))                       # NHWC -> NCHW output
    return recon, mu, logvar, categorical


if __name__ == "__main__":
    key = jax.random.PRNGKey(0)
    kp, kx, kn = jax.random.split(key, 3)
    raw_params = init_params(kp)
    params = prepare_params(raw_params)      # hoisted weight packing, outside the jitted forward
    # Architecture fixes spatial size: encoder flatten is 2048 = 128*4*4 -> input must be 3x32x32.
    x = jax.random.normal(kx, (2, 3, 32, 32), jnp.float32)

    fwd = jax.jit(vae_forward)
    recon, mu, logvar, categorical = fwd(params, x, kn)
    jax.block_until_ready((recon, mu, logvar, categorical))

    assert recon.shape == (2, 3, 32, 32)
    assert mu.shape == (2, 10) and logvar.shape == (2, 10) and categorical.shape == (2, 10)
    assert bool(jnp.all(jnp.isfinite(recon)))
    print("KERNEL_OK")
</pallas_src>

<mosaic_0001>
module attributes {stable_mosaic.version = 11 : i64} {
  func.func @_conv_bn_act_kernel(%arg0: i32, %arg1: memref<512x48xbf16, #tpu.memory_space<vmem>>, %arg2: memref<48x32xbf16, #tpu.memory_space<vmem>>, %arg3: memref<1x32xf32, #tpu.memory_space<vmem>>, %arg4: memref<1x32xf32, #tpu.memory_space<vmem>>, %arg5: memref<512x32xf32, #tpu.memory_space<vmem>>) attributes {dimension_semantics = [#tpu.dimension_semantics<arbitrary>], iteration_bounds = array<i64: 1>, scalar_prefetch = 0 : i64, scratch_operands = 0 : i64, tpu.core_type = #tpu.core_type<tc>, window_params = [{pipeline_mode = #tpu.pipeline_mode<synchronous>, transform_indices = @transform_0, window_bounds = array<i64: 512, 48>}, {pipeline_mode = #tpu.pipeline_mode<synchronous>, transform_indices = @transform_1, window_bounds = array<i64: 48, 32>}, {pipeline_mode = #tpu.pipeline_mode<synchronous>, transform_indices = @transform_2, window_bounds = array<i64: 1, 32>}, {pipeline_mode = #tpu.pipeline_mode<synchronous>, transform_indices = @transform_3, window_bounds = array<i64: 1, 32>}, {pipeline_mode = #tpu.pipeline_mode<synchronous>, transform_indices = @transform_4, window_bounds = array<i64: 512, 32>}]} {
    %c0 = arith.constant 0 : index
    %c0_0 = arith.constant 0 : index
    %0 = vector.load %arg1[%c0, %c0_0] : memref<512x48xbf16, #tpu.memory_space<vmem>>, vector<512x48xbf16>
    %c0_1 = arith.constant 0 : index
    %c0_2 = arith.constant 0 : index
    %1 = vector.load %arg2[%c0_1, %c0_2] : memref<48x32xbf16, #tpu.memory_space<vmem>>, vector<48x32xbf16>
    %cst = arith.constant dense<0.000000e+00> : vector<512x32xf32>
    %2 = tpu.matmul %0, %1, %cst {dimension_numbers = #tpu.dot_dimension_numbers<[1], [0], [0], [1], [0, 0, 1, 1], [], []>} : vector<512x48xbf16>, vector<48x32xbf16>, vector<512x32xf32> -> vector<512x32xf32>
    %cst_3 = arith.constant dense<0.000000e+00> : vector<32xf32>
    %3 = vector.multi_reduction <add>, %2, %cst_3 [0] : vector<512x32xf32> to vector<32xf32>
    %4 = vector.shape_cast %3 : vector<32xf32> to vector<1x32xf32>
    %cst_4 = arith.constant 5.120000e+02 : f32
    %5 = vector.broadcast %cst_4 : f32 to vector<1x32xf32>
    %6 = arith.divf %4, %5 : vector<1x32xf32>
    %7 = vector.broadcast %6 : vector<1x32xf32> to vector<512x32xf32>
    %8 = arith.subf %2, %7 : vector<512x32xf32>
    %9 = arith.mulf %8, %8 : vector<512x32xf32>
    %cst_5 = arith.constant dense<0.000000e+00> : vector<32xf32>
    %10 = vector.multi_reduction <add>, %9, %cst_5 [0] : vector<512x32xf32> to vector<32xf32>
    %11 = vector.shape_cast %10 : vector<32xf32> to vector<1x32xf32>
    %cst_6 = arith.constant 5.120000e+02 : f32
    %12 = vector.broadcast %cst_6 : f32 to vector<1x32xf32>
    %13 = arith.divf %11, %12 : vector<1x32xf32>
    %14 = vector.broadcast %6 : vector<1x32xf32> to vector<512x32xf32>
    %15 = arith.subf %2, %14 : vector<512x32xf32>
    %c0_7 = arith.constant 0 : index
    %c0_8 = arith.constant 0 : index
    %16 = vector.load %arg3[%c0_7, %c0_8] : memref<1x32xf32, #tpu.memory_space<vmem>>, vector<1x32xf32>
    %cst_9 = arith.constant 9.99999974E-6 : f32
    %17 = vector.broadcast %cst_9 : f32 to vector<1x32xf32>
    %18 = arith.addf %13, %17 : vector<1x32xf32>
    %19 = math.rsqrt %18 : vector<1x32xf32>
    %20 = arith.mulf %16, %19 : vector<1x32xf32>
    %21 = vector.broadcast %20 : vector<1x32xf32> to vector<512x32xf32>
    %22 = arith.mulf %15, %21 : vector<512x32xf32>
    %c0_10 = arith.constant 0 : index
    %c0_11 = arith.constant 0 : index
    %23 = vector.load %arg4[%c0_10, %c0_11] : memref<1x32xf32, #tpu.memory_space<vmem>>, vector<1x32xf32>
    %24 = vector.broadcast %23 : vector<1x32xf32> to vector<512x32xf32>
    %25 = arith.addf %22, %24 : vector<512x32xf32>
    %cst_12 = arith.constant 0.000000e+00 : f32
    %26 = vector.broadcast %cst_12 : f32 to vector<512x32xf32>
    %27 = arith.cmpf oge, %25, %26 : vector<512x32xf32>
    %cst_13 = arith.constant 2.000000e-01 : f32
    %28 = vector.broadcast %cst_13 : f32 to vector<512x32xf32>
    %29 = arith.mulf %28, %25 : vector<512x32xf32>
    %30 = arith.select %27, %25, %29 : vector<512x32xi1>, vector<512x32xf32>
    %c0_14 = arith.constant 0 : index
    %c0_15 = arith.constant 0 : index
    %31 = vector.load %arg5[%c0_14, %c0_15] : memref<512x32xf32, #tpu.memory_space<vmem>>, vector<512x32xf32>
    tpu.vector_store %arg5[%c0_14, %c0_15], %30 {strides = array<i32>} : memref<512x32xf32, #tpu.memory_space<vmem>>, vector<512x32xf32>,
    return
  }
  func.func @transform_0(%arg0: i32) -> (i32, i32) {
    %c0_i32 = arith.constant 0 : i32
    %c0_i32_0 = arith.constant 0 : i32
    %c0_i32_1 = arith.constant 0 : i32
    return %c0_i32, %c0_i32_0 : i32, i32
  }
  func.func @transform_1(%arg0: i32) -> (i32, i32) {
    %c0_i32 = arith.constant 0 : i32
    %c0_i32_0 = arith.constant 0 : i32
    %c0_i32_1 = arith.constant 0 : i32
    return %c0_i32, %c0_i32_0 : i32, i32
  }
  func.func @transform_2(%arg0: i32) -> (i32, i32) {
    %c0_i32 = arith.constant 0 : i32
    %c0_i32_0 = arith.constant 0 : i32
    %c0_i32_1 = arith.constant 0 : i32
    return %c0_i32, %c0_i32_0 : i32, i32
  }
  func.func @transform_3(%arg0: i32) -> (i32, i32) {
    %c0_i32 = arith.constant 0 : i32
    %c0_i32_0 = arith.constant 0 : i32
    %c0_i32_1 = arith.constant 0 : i32
    return %c0_i32, %c0_i32_0 : i32, i32
  }
  func.func @transform_4(%arg0: i32) -> (i32, i32) {
    %c0_i32 = arith.constant 0 : i32
    %c0_i32_0 = arith.constant 0 : i32
    %c0_i32_1 = arith.constant 0 : i32
    return %c0_i32, %c0_i32_0 : i32, i32
  }
}

module attributes {stable_mosaic.version = 11 : i64} {
  func.func @_conv_bn_act_kernel(%arg0: i32, %arg1: memref<128x512xbf16, #tpu.memory_space<vmem>>, %arg2: memref<512x64xbf16, #tpu.memory_space<vmem>>, %arg3: memref<1x64xf32, #tpu.memory_space<vmem>>, %arg4: memref<1x64xf32, #tpu.memory_space<vmem>>, %arg5: memref<128x64xf32, #tpu.memory_space<vmem>>) attributes {dimension_semantics = [#tpu.dimension_semantics<arbitrary>], iteration_bounds = array<i64: 1>, scalar_prefetch = 0 : i64, scratch_operands = 0 : i64, tpu.core_type = #tpu.core_type<tc>, window_params = [{pipeline_mode = #tpu.pipeline_mode<synchronous>, transform_indices = @transform_0, window_bounds = array<i64: 128, 512>}, {pipeline_mode = #tpu.pipeline_mode<synchronous>, transform_indices = @transform_1, window_bounds = array<i64: 512, 64>}, {pipeline_mode = #tpu.pipeline_mode<synchronous>, transform_indices = @transform_2, window_bounds = array<i64: 1, 64>}, {pipeline_mode = #tpu.pipeline_mode<synchronous>, transform_indices = @transform_3, window_bounds = array<i64: 1, 64>}, {pipeline_mode = #tpu.pipeline_mode<synchronous>, transform_indices = @transform_4, window_bounds = array<i64: 128, 64>}]} {
    %c0 = arith.constant 0 : index
    %c0_0 = arith.constant 0 : index
    %0 = vector.load %arg1[%c0, %c0_0] : memref<128x512xbf16, #tpu.memory_space<vmem>>, vector<128x512xbf16>
    %c0_1 = arith.constant 0 : index
    %c0_2 = arith.constant 0 : index
    %1 = vector.load %arg2[%c0_1, %c0_2] : memref<512x64xbf16, #tpu.memory_space<vmem>>, vector<512x64xbf16>
    %cst = arith.constant dense<0.000000e+00> : vector<128x64xf32>
    %2 = tpu.matmul %0, %1, %cst {dimension_numbers = #tpu.dot_dimension_numbers<[1], [0], [0], [1], [0, 0, 1, 1], [], []>} : vector<128x512xbf16>, vector<512x64xbf16>, vector<128x64xf32> -> vector<128x64xf32>
    %cst_3 = arith.constant dense<0.000000e+00> : vector<64xf32>
    %3 = vector.multi_reduction <add>, %2, %cst_3 [0] : vector<128x64xf32> to vector<64xf32>
    %4 = vector.shape_cast %3 : vector<64xf32> to vector<1x64xf32>
    %cst_4 = arith.constant 1.280000e+02 : f32
    %5 = vector.broadcast %cst_4 : f32 to vector<1x64xf32>
    %6 = arith.divf %4, %5 : vector<1x64xf32>
    %7 = vector.broadcast %6 : vector<1x64xf32> to vector<128x64xf32>
    %8 = arith.subf %2, %7 : vector<128x64xf32>
    %9 = arith.mulf %8, %8 : vector<128x64xf32>
    %cst_5 = arith.constant dense<0.000000e+00> : vector<64xf32>
    %10 = vector.multi_reduction <add>, %9, %cst_5 [0] : vector<128x64xf32> to vector<64xf32>
    %11 = vector.shape_cast %10 : vector<64xf32> to vector<1x64xf32>
    %cst_6 = arith.constant 1.280000e+02 : f32
    %12 = vector.broadcast %cst_6 : f32 to vector<1x64xf32>
    %13 = arith.divf %11, %12 : vector<1x64xf32>
    %14 = vector.broadcast %6 : vector<1x64xf32> to vector<128x64xf32>
    %15 = arith.subf %2, %14 : vector<128x64xf32>
    %c0_7 = arith.constant 0 : index
    %c0_8 = arith.constant 0 : index
    %16 = vector.load %arg3[%c0_7, %c0_8] : memref<1x64xf32, #tpu.memory_space<vmem>>, vector<1x64xf32>
    %cst_9 = arith.constant 9.99999974E-6 : f32
    %17 = vector.broadcast %cst_9 : f32 to vector<1x64xf32>
    %18 = arith.addf %13, %17 : vector<1x64xf32>
    %19 = math.rsqrt %18 : vector<1x64xf32>
    %20 = arith.mulf %16, %19 : vector<1x64xf32>
    %21 = vector.broadcast %20 : vector<1x64xf32> to vector<128x64xf32>
    %22 = arith.mulf %15, %21 : vector<128x64xf32>
    %c0_10 = arith.constant 0 : index
    %c0_11 = arith.constant 0 : index
    %23 = vector.load %arg4[%c0_10, %c0_11] : memref<1x64xf32, #tpu.memory_space<vmem>>, vector<1x64xf32>
    %24 = vector.broadcast %23 : vector<1x64xf32> to vector<128x64xf32>
    %25 = arith.addf %22, %24 : vector<128x64xf32>
    %cst_12 = arith.constant 0.000000e+00 : f32
    %26 = vector.broadcast %cst_12 : f32 to vector<128x64xf32>
    %27 = arith.cmpf oge, %25, %26 : vector<128x64xf32>
    %cst_13 = arith.constant 2.000000e-01 : f32
    %28 = vector.broadcast %cst_13 : f32 to vector<128x64xf32>
    %29 = arith.mulf %28, %25 : vector<128x64xf32>
    %30 = arith.select %27, %25, %29 : vector<128x64xi1>, vector<128x64xf32>
    %c0_14 = arith.constant 0 : index
    %c0_15 = arith.constant 0 : index
    %31 = vector.load %arg5[%c0_14, %c0_15] : memref<128x64xf32, #tpu.memory_space<vmem>>, vector<128x64xf32>
    tpu.vector_store %arg5[%c0_14, %c0_15], %30 {strides = array<i32>} : memref<128x64xf32, #tpu.memory_space<vmem>>, vector<128x64xf32>,
    return
  }
  func.func @transform_0(%arg0: i32) -> (i32, i32) {
    %c0_i32 = arith.constant 0 : i32
    %c0_i32_0 = arith.constant 0 : i32
    %c0_i32_1 = arith.constant 0 : i32
    return %c0_i32, %c0_i32_0 : i32, i32
  }
  func.func @transform_1(%arg0: i32) -> (i32, i32) {
    %c0_i32 = arith.constant 0 : i32
    %c0_i32_0 = arith.constant 0 : i32
    %c0_i32_1 = arith.constant 0 : i32
    return %c0_i32, %c0_i32_0 : i32, i32
  }
  func.func @transform_2(%arg0: i32) -> (i32, i32) {
    %c0_i32 = arith.constant 0 : i32
    %c0_i32_0 = arith.constant 0 : i32
    %c0_i32_1 = arith.constant 0 : i32
    return %c0_i32, %c0_i32_0 : i32, i32
  }
  func.func @transform_3(%arg0: i32) -> (i32, i32) {
    %c0_i32 = arith.constant 0 : i32
    %c0_i32_0 = arith.constant 0 : i32
    %c0_i32_1 = arith.constant 0 : i32
    return %c0_i32, %c0_i32_0 : i32, i32
  }
  func.func @transform_4(%arg0: i32) -> (i32, i32) {
    %c0_i32 = arith.constant 0 : i32
    %c0_i32_0 = arith.constant 0 : i32
    %c0_i32_1 = arith.constant 0 : i32
    return %c0_i32, %c0_i32_0 : i32, i32
  }
}

module attributes {stable_mosaic.version = 11 : i64} {
  func.func @_conv_bn_act_kernel(%arg0: i32, %arg1: memref<32x1024xbf16, #tpu.memory_space<vmem>>, %arg2: memref<1024x128xbf16, #tpu.memory_space<vmem>>, %arg3: memref<1x128xf32, #tpu.memory_space<vmem>>, %arg4: memref<1x128xf32, #tpu.memory_space<vmem>>, %arg5: memref<32x128xf32, #tpu.memory_space<vmem>>) attributes {dimension_semantics = [#tpu.dimension_semantics<arbitrary>], iteration_bounds = array<i64: 1>, scalar_prefetch = 0 : i64, scratch_operands = 0 : i64, tpu.core_type = #tpu.core_type<tc>, window_params = [{pipeline_mode = #tpu.pipeline_mode<synchronous>, transform_indices = @transform_0, window_bounds = array<i64: 32, 1024>}, {pipeline_mode = #tpu.pipeline_mode<synchronous>, transform_indices = @transform_1, window_bounds = array<i64: 1024, 128>}, {pipeline_mode = #tpu.pipeline_mode<synchronous>, transform_indices = @transform_2, window_bounds = array<i64: 1, 128>}, {pipeline_mode = #tpu.pipeline_mode<synchronous>, transform_indices = @transform_3, window_bounds = array<i64: 1, 128>}, {pipeline_mode = #tpu.pipeline_mode<synchronous>, transform_indices = @transform_4, window_bounds = array<i64: 32, 128>}]} {
    %c0 = arith.constant 0 : index
    %c0_0 = arith.constant 0 : index
    %0 = vector.load %arg1[%c0, %c0_0] : memref<32x1024xbf16, #tpu.memory_space<vmem>>, vector<32x1024xbf16>
    %c0_1 = arith.constant 0 : index
    %c0_2 = arith.constant 0 : index
    %1 = vector.load %arg2[%c0_1, %c0_2] : memref<1024x128xbf16, #tpu.memory_space<vmem>>, vector<1024x128xbf16>
    %cst = arith.constant dense<0.000000e+00> : vector<32x128xf32>
    %2 = tpu.matmul %0, %1, %cst {dimension_numbers = #tpu.dot_dimension_numbers<[1], [0], [0], [1], [0, 0, 1, 1], [], []>} : vector<32x1024xbf16>, vector<1024x128xbf16>, vector<32x128xf32> -> vector<32x128xf32>
    %c0_3 = arith.constant 0 : index
    %c0_4 = arith.constant 0 : index
    %3 = vector.load %arg5[%c0_3, %c0_4] : memref<32x128xf32, #tpu.memory_space<vmem>>, vector<32x128xf32>
    tpu.vector_store %arg5[%c0_3, %c0_4], %2 {strides = array<i32>} : memref<32x128xf32, #tpu.memory_space<vmem>>, vector<32x128xf32>,
    return
  }
  func.func @transform_0(%arg0: i32) -> (i32, i32) {
    %c0_i32 = arith.constant 0 : i32
    %c0_i32_0 = arith.constant 0 : i32
    %c0_i32_1 = arith.constant 0 : i32
    return %c0_i32, %c0_i32_0 : i32, i32
  }
  func.func @transform_1(%arg0: i32) -> (i32, i32) {
    %c0_i32 = arith.constant 0 : i32
    %c0_i32_0 = arith.constant 0 : i32
    %c0_i32_1 = arith.constant 0 : i32
    return %c0_i32, %c0_i32_0 : i32, i32
  }
  func.func @transform_2(%arg0: i32) -> (i32, i32) {
    %c0_i32 = arith.constant 0 : i32
    %c0_i32_0 = arith.constant 0 : i32
    %c0_i32_1 = arith.constant 0 : i32
    return %c0_i32, %c0_i32_0 : i32, i32
  }
  func.func @transform_3(%arg0: i32) -> (i32, i32) {
    %c0_i32 = arith.constant 0 : i32
    %c0_i32_0 = arith.constant 0 : i32
    %c0_i32_1 = arith.constant 0 : i32
    return %c0_i32, %c0_i32_0 : i32, i32
  }
  func.func @transform_4(%arg0: i32) -> (i32, i32) {
    %c0_i32 = arith.constant 0 : i32
    %c0_i32_0 = arith.constant 0 : i32
    %c0_i32_1 = arith.constant 0 : i32
    return %c0_i32, %c0_i32_0 : i32, i32
  }
}

module attributes {stable_mosaic.version = 11 : i64} {
  func.func @_fc_kernel(%arg0: i32, %arg1: memref<2x2048xbf16, #tpu.memory_space<vmem>>, %arg2: memref<2048x30xbf16, #tpu.memory_space<vmem>>, %arg3: memref<1x30xf32, #tpu.memory_space<vmem>>, %arg4: memref<2x30xf32, #tpu.memory_space<vmem>>) attributes {dimension_semantics = [#tpu.dimension_semantics<arbitrary>], iteration_bounds = array<i64: 1>, scalar_prefetch = 0 : i64, scratch_operands = 0 : i64, tpu.core_type = #tpu.core_type<tc>, window_params = [{pipeline_mode = #tpu.pipeline_mode<synchronous>, transform_indices = @transform_0, window_bounds = array<i64: 2, 2048>}, {pipeline_mode = #tpu.pipeline_mode<synchronous>, transform_indices = @transform_1, window_bounds = array<i64: 2048, 30>}, {pipeline_mode = #tpu.pipeline_mode<synchronous>, transform_indices = @transform_2, window_bounds = array<i64: 1, 30>}, {pipeline_mode = #tpu.pipeline_mode<synchronous>, transform_indices = @transform_3, window_bounds = array<i64: 2, 30>}]} {
    %c0 = arith.constant 0 : index
    %c0_0 = arith.constant 0 : index
    %0 = vector.load %arg1[%c0, %c0_0] : memref<2x2048xbf16, #tpu.memory_space<vmem>>, vector<2x2048xbf16>
    %c0_1 = arith.constant 0 : index
    %c0_2 = arith.constant 0 : index
    %1 = vector.load %arg2[%c0_1, %c0_2] : memref<2048x30xbf16, #tpu.memory_space<vmem>>, vector<2048x30xbf16>
    %cst = arith.constant dense<0.000000e+00> : vector<2x30xf32>
    %2 = tpu.matmul %0, %1, %cst {dimension_numbers = #tpu.dot_dimension_numbers<[1], [0], [0], [1], [0, 0, 1, 1], [], []>} : vector<2x2048xbf16>, vector<2048x30xbf16>, vector<2x30xf32> -> vector<2x30xf32>
    %c0_3 = arith.constant 0 : index
    %c0_4 = arith.constant 0 : index
    %3 = vector.load %arg3[%c0_3, %c0_4] : memref<1x30xf32, #tpu.memory_space<vmem>>, vector<1x30xf32>
    %4 = vector.broadcast %3 : vector<1x30xf32> to vector<2x30xf32>
    %5 = arith.addf %2, %4 : vector<2x30xf32>
    %c0_5 = arith.constant 0 : index
    %c0_6 = arith.constant 0 : index
    %6 = vector.load %arg4[%c0_5, %c0_6] : memref<2x30xf32, #tpu.memory_space<vmem>>, vector<2x30xf32>
    tpu.vector_store %arg4[%c0_5, %c0_6], %5 {strides = array<i32>} : memref<2x30xf32, #tpu.memory_space<vmem>>, vector<2x30xf32>,
    return
  }
  func.func @transform_0(%arg0: i32) -> (i32, i32) {
    %c0_i32 = arith.constant 0 : i32
    %c0_i32_0 = arith.constant 0 : i32
    %c0_i32_1 = arith.constant 0 : i32
    return %c0_i32, %c0_i32_0 : i32, i32
  }
  func.func @transform_1(%arg0: i32) -> (i32, i32) {
    %c0_i32 = arith.constant 0 : i32
    %c0_i32_0 = arith.constant 0 : i32
    %c0_i32_1 = arith.constant 0 : i32
    return %c0_i32, %c0_i32_0 : i32, i32
  }
  func.func @transform_2(%arg0: i32) -> (i32, i32) {
    %c0_i32 = arith.constant 0 : i32
    %c0_i32_0 = arith.constant 0 : i32
    %c0_i32_1 = arith.constant 0 : i32
    return %c0_i32, %c0_i32_0 : i32, i32
  }
  func.func @transform_3(%arg0: i32) -> (i32, i32) {
    %c0_i32 = arith.constant 0 : i32
    %c0_i32_0 = arith.constant 0 : i32
    %c0_i32_1 = arith.constant 0 : i32
    return %c0_i32, %c0_i32_0 : i32, i32
  }
}

module attributes {stable_mosaic.version = 11 : i64} {
  func.func @_fc_kernel(%arg0: i32, %arg1: memref<2x20xbf16, #tpu.memory_space<vmem>>, %arg2: memref<20x2048xbf16, #tpu.memory_space<vmem>>, %arg3: memref<1x2048xf32, #tpu.memory_space<vmem>>, %arg4: memref<2x2048xf32, #tpu.memory_space<vmem>>) attributes {dimension_semantics = [#tpu.dimension_semantics<arbitrary>], iteration_bounds = array<i64: 1>, scalar_prefetch = 0 : i64, scratch_operands = 0 : i64, tpu.core_type = #tpu.core_type<tc>, window_params = [{pipeline_mode = #tpu.pipeline_mode<synchronous>, transform_indices = @transform_0, window_bounds = array<i64: 2, 20>}, {pipeline_mode = #tpu.pipeline_mode<synchronous>, transform_indices = @transform_1, window_bounds = array<i64: 20, 2048>}, {pipeline_mode = #tpu.pipeline_mode<synchronous>, transform_indices = @transform_2, window_bounds = array<i64: 1, 2048>}, {pipeline_mode = #tpu.pipeline_mode<synchronous>, transform_indices = @transform_3, window_bounds = array<i64: 2, 2048>}]} {
    %c0 = arith.constant 0 : index
    %c0_0 = arith.constant 0 : index
    %0 = vector.load %arg1[%c0, %c0_0] : memref<2x20xbf16, #tpu.memory_space<vmem>>, vector<2x20xbf16>
    %c0_1 = arith.constant 0 : index
    %c0_2 = arith.constant 0 : index
    %1 = vector.load %arg2[%c0_1, %c0_2] : memref<20x2048xbf16, #tpu.memory_space<vmem>>, vector<20x2048xbf16>
    %cst = arith.constant dense<0.000000e+00> : vector<2x2048xf32>
    %2 = tpu.matmul %0, %1, %cst {dimension_numbers = #tpu.dot_dimension_numbers<[1], [0], [0], [1], [0, 0, 1, 1], [], []>} : vector<2x20xbf16>, vector<20x2048xbf16>, vector<2x2048xf32> -> vector<2x2048xf32>
    %c0_3 = arith.constant 0 : index
    %c0_4 = arith.constant 0 : index
    %3 = vector.load %arg3[%c0_3, %c0_4] : memref<1x2048xf32, #tpu.memory_space<vmem>>, vector<1x2048xf32>
    %4 = vector.broadcast %3 : vector<1x2048xf32> to vector<2x2048xf32>
    %5 = arith.addf %2, %4 : vector<2x2048xf32>
    %cst_5 = arith.constant 0.000000e+00 : f32
    %6 = vector.broadcast %cst_5 : f32 to vector<2x2048xf32>
    %7 = arith.maximumf %5, %6 : vector<2x2048xf32>
    %c0_6 = arith.constant 0 : index
    %c0_7 = arith.constant 0 : index
    %8 = vector.load %arg4[%c0_6, %c0_7] : memref<2x2048xf32, #tpu.memory_space<vmem>>, vector<2x2048xf32>
    tpu.vector_store %arg4[%c0_6, %c0_7], %7 {strides = array<i32>} : memref<2x2048xf32, #tpu.memory_space<vmem>>, vector<2x2048xf32>,
    return
  }
  func.func @transform_0(%arg0: i32) -> (i32, i32) {
    %c0_i32 = arith.constant 0 : i32
    %c0_i32_0 = arith.constant 0 : i32
    %c0_i32_1 = arith.constant 0 : i32
    return %c0_i32, %c0_i32_0 : i32, i32
  }
  func.func @transform_1(%arg0: i32) -> (i32, i32) {
    %c0_i32 = arith.constant 0 : i32
    %c0_i32_0 = arith.constant 0 : i32
    %c0_i32_1 = arith.constant 0 : i32
    return %c0_i32, %c0_i32_0 : i32, i32
  }
  func.func @transform_2(%arg0: i32) -> (i32, i32) {
    %c0_i32 = arith.constant 0 : i32
    %c0_i32_0 = arith.constant 0 : i32
    %c0_i32_1 = arith.constant 0 : i32
    return %c0_i32, %c0_i32_0 : i32, i32
  }
  func.func @transform_3(%arg0: i32) -> (i32, i32) {
    %c0_i32 = arith.constant 0 : i32
    %c0_i32_0 = arith.constant 0 : i32
    %c0_i32_1 = arith.constant 0 : i32
    return %c0_i32, %c0_i32_0 : i32, i32
  }
}

module attributes {stable_mosaic.version = 11 : i64} {
  func.func @_deconv_bn_act_kernel(%arg0: i32, %arg1: memref<4x32x512xbf16, #tpu.memory_space<vmem>>, %arg2: memref<4x512x64xbf16, #tpu.memory_space<vmem>>, %arg3: memref<1x1x64xf32, #tpu.memory_space<vmem>>, %arg4: memref<1x1x64xf32, #tpu.memory_space<vmem>>, %arg5: memref<4x32x64xf32, #tpu.memory_space<vmem>>) attributes {dimension_semantics = [#tpu.dimension_semantics<arbitrary>], iteration_bounds = array<i64: 1>, scalar_prefetch = 0 : i64, scratch_operands = 0 : i64, tpu.core_type = #tpu.core_type<tc>, window_params = [{pipeline_mode = #tpu.pipeline_mode<synchronous>, transform_indices = @transform_0, window_bounds = array<i64: 4, 32, 512>}, {pipeline_mode = #tpu.pipeline_mode<synchronous>, transform_indices = @transform_1, window_bounds = array<i64: 4, 512, 64>}, {pipeline_mode = #tpu.pipeline_mode<synchronous>, transform_indices = @transform_2, window_bounds = array<i64: 1, 1, 64>}, {pipeline_mode = #tpu.pipeline_mode<synchronous>, transform_indices = @transform_3, window_bounds = array<i64: 1, 1, 64>}, {pipeline_mode = #tpu.pipeline_mode<synchronous>, transform_indices = @transform_4, window_bounds = array<i64: 4, 32, 64>}]} {
    %c0 = arith.constant 0 : index
    %c0_0 = arith.constant 0 : index
    %c0_1 = arith.constant 0 : index
    %0 = vector.load %arg1[%c0, %c0_0, %c0_1] : memref<4x32x512xbf16, #tpu.memory_space<vmem>>, vector<4x32x512xbf16>
    %c0_2 = arith.constant 0 : index
    %c0_3 = arith.constant 0 : index
    %c0_4 = arith.constant 0 : index
    %1 = vector.load %arg2[%c0_2, %c0_3, %c0_4] : memref<4x512x64xbf16, #tpu.memory_space<vmem>>, vector<4x512x64xbf16>
    "tpu.trace_start"() <{level = 10 : i32, message = "pmk,pkn->pmn"}> : () -> ()
    %cst = arith.constant dense<0.000000e+00> : vector<4x32x64xf32>
    %2 = tpu.matmul %0, %1, %cst {dimension_numbers = #tpu.dot_dimension_numbers<[2], [1], [1], [2], [0, 0, 0, 1, 1, 2], [0], [0]>} : vector<4x32x512xbf16>, vector<4x512x64xbf16>, vector<4x32x64xf32> -> vector<4x32x64xf32>
    "tpu.trace_stop"() : () -> ()
    %cst_5 = arith.constant dense<0.000000e+00> : vector<4x64xf32>
    %3 = vector.multi_reduction <add>, %2, %cst_5 [1] : vector<4x32x64xf32> to vector<4x64xf32>
    %4 = vector.shape_cast %3 : vector<4x64xf32> to vector<4x1x64xf32>
    %cst_6 = arith.constant 3.200000e+01 : f32
    %5 = vector.broadcast %cst_6 : f32 to vector<4x1x64xf32>
    %6 = arith.divf %4, %5 : vector<4x1x64xf32>
    %cst_7 = arith.constant dense<0.000000e+00> : vector<1x64xf32>
    %7 = vector.multi_reduction <add>, %6, %cst_7 [0] : vector<4x1x64xf32> to vector<1x64xf32>
    %8 = vector.shape_cast %7 : vector<1x64xf32> to vector<1x1x64xf32>
    %cst_8 = arith.constant 4.000000e+00 : f32
    %9 = vector.broadcast %cst_8 : f32 to vector<1x1x64xf32>
    %10 = arith.divf %8, %9 : vector<1x1x64xf32>
    %11 = vector.broadcast %10 : vector<1x1x64xf32> to vector<4x32x64xf32>
    %12 = arith.subf %2, %11 : vector<4x32x64xf32>
    %13 = arith.mulf %12, %12 : vector<4x32x64xf32>
    %cst_9 = arith.constant dense<0.000000e+00> : vector<4x64xf32>
    %14 = vector.multi_reduction <add>, %13, %cst_9 [1] : vector<4x32x64xf32> to vector<4x64xf32>
    %15 = vector.shape_cast %14 : vector<4x64xf32> to vector<4x1x64xf32>
    %cst_10 = arith.constant 3.200000e+01 : f32
    %16 = vector.broadcast %cst_10 : f32 to vector<4x1x64xf32>
    %17 = arith.divf %15, %16 : vector<4x1x64xf32>
    %cst_11 = arith.constant dense<0.000000e+00> : vector<1x64xf32>
    %18 = vector.multi_reduction <add>, %17, %cst_11 [0] : vector<4x1x64xf32> to vector<1x64xf32>
    %19 = vector.shape_cast %18 : vector<1x64xf32> to vector<1x1x64xf32>
    %cst_12 = arith.constant 4.000000e+00 : f32
    %20 = vector.broadcast %cst_12 : f32 to vector<1x1x64xf32>
    %21 = arith.divf %19, %20 : vector<1x1x64xf32>
    %c0_13 = arith.constant 0 : index
    %c0_14 = arith.constant 0 : index
    %c0_15 = arith.constant 0 : index
    %22 = vector.load %arg3[%c0_13, %c0_14, %c0_15] : memref<1x1x64xf32, #tpu.memory_space<vmem>>, vector<1x1x64xf32>
    %cst_16 = arith.constant 9.99999974E-6 : f32
    %23 = vector.broadcast %cst_16 : f32 to vector<1x1x64xf32>
    %24 = arith.addf %21, %23 : vector<1x1x64xf32>
    %25 = math.rsqrt %24 : vector<1x1x64xf32>
    %26 = arith.mulf %22, %25 : vector<1x1x64xf32>
    %27 = vector.broadcast %26 : vector<1x1x64xf32> to vector<4x32x64xf32>
    %28 = arith.mulf %12, %27 : vector<4x32x64xf32>
    %c0_17 = arith.constant 0 : index
    %c0_18 = arith.constant 0 : index
    %c0_19 = arith.constant 0 : index
    %29 = vector.load %arg4[%c0_17, %c0_18, %c0_19] : memref<1x1x64xf32, #tpu.memory_space<vmem>>, vector<1x1x64xf32>
    %30 = vector.broadcast %29 : vector<1x1x64xf32> to vector<4x32x64xf32>
    %31 = arith.addf %28, %30 : vector<4x32x64xf32>
    %cst_20 = arith.constant 0.000000e+00 : f32
    %32 = vector.broadcast %cst_20 : f32 to vector<4x32x64xf32>
    %33 = arith.maximumf %31, %32 : vector<4x32x64xf32>
    %c0_21 = arith.constant 0 : index
    %c0_22 = arith.constant 0 : index
    %c0_23 = arith.constant 0 : index
    %34 = vector.load %arg5[%c0_21, %c0_22, %c0_23] : memref<4x32x64xf32, #tpu.memory_space<vmem>>, vector<4x32x64xf32>
    tpu.vector_store %arg5[%c0_21, %c0_22, %c0_23], %33 {strides = array<i32>} : memref<4x32x64xf32, #tpu.memory_space<vmem>>, vector<4x32x64xf32>,
    return
  }
  func.func @transform_0(%arg0: i32) -> (i32, i32, i32) {
    %c0_i32 = arith.constant 0 : i32
    %c0_i32_0 = arith.constant 0 : i32
    %c0_i32_1 = arith.constant 0 : i32
    %c0_i32_2 = arith.constant 0 : i32
    return %c0_i32, %c0_i32_0, %c0_i32_1 : i32, i32, i32
  }
  func.func @transform_1(%arg0: i32) -> (i32, i32, i32) {
    %c0_i32 = arith.constant 0 : i32
    %c0_i32_0 = arith.constant 0 : i32
    %c0_i32_1 = arith.constant 0 : i32
    %c0_i32_2 = arith.constant 0 : i32
    return %c0_i32, %c0_i32_0, %c0_i32_1 : i32, i32, i32
  }
  func.func @transform_2(%arg0: i32) -> (i32, i32, i32) {
    %c0_i32 = arith.constant 0 : i32
    %c0_i32_0 = arith.constant 0 : i32
    %c0_i32_1 = arith.constant 0 : i32
    %c0_i32_2 = arith.constant 0 : i32
    return %c0_i32, %c0_i32_0, %c0_i32_1 : i32, i32, i32
  }
  func.func @transform_3(%arg0: i32) -> (i32, i32, i32) {
    %c0_i32 = arith.constant 0 : i32
    %c0_i32_0 = arith.constant 0 : i32
    %c0_i32_1 = arith.constant 0 : i32
    %c0_i32_2 = arith.constant 0 : i32
    return %c0_i32, %c0_i32_0, %c0_i32_1 : i32, i32, i32
  }
  func.func @transform_4(%arg0: i32) -> (i32, i32, i32) {
    %c0_i32 = arith.constant 0 : i32
    %c0_i32_0 = arith.constant 0 : i32
    %c0_i32_1 = arith.constant 0 : i32
    %c0_i32_2 = arith.constant 0 : i32
    return %c0_i32, %c0_i32_0, %c0_i32_1 : i32, i32, i32
  }
}

module attributes {stable_mosaic.version = 11 : i64} {
  func.func @_deconv_bn_act_kernel(%arg0: i32, %arg1: memref<4x128x256xbf16, #tpu.memory_space<vmem>>, %arg2: memref<4x256x32xbf16, #tpu.memory_space<vmem>>, %arg3: memref<1x1x32xf32, #tpu.memory_space<vmem>>, %arg4: memref<1x1x32xf32, #tpu.memory_space<vmem>>, %arg5: memref<4x128x32xf32, #tpu.memory_space<vmem>>) attributes {dimension_semantics = [#tpu.dimension_semantics<arbitrary>], iteration_bounds = array<i64: 1>, scalar_prefetch = 0 : i64, scratch_operands = 0 : i64, tpu.core_type = #tpu.core_type<tc>, window_params = [{pipeline_mode = #tpu.pipeline_mode<synchronous>, transform_indices = @transform_0, window_bounds = array<i64: 4, 128, 256>}, {pipeline_mode = #tpu.pipeline_mode<synchronous>, transform_indices = @transform_1, window_bounds = array<i64: 4, 256, 32>}, {pipeline_mode = #tpu.pipeline_mode<synchronous>, transform_indices = @transform_2, window_bounds = array<i64: 1, 1, 32>}, {pipeline_mode = #tpu.pipeline_mode<synchronous>, transform_indices = @transform_3, window_bounds = array<i64: 1, 1, 32>}, {pipeline_mode = #tpu.pipeline_mode<synchronous>, transform_indices = @transform_4, window_bounds = array<i64: 4, 128, 32>}]} {
    %c0 = arith.constant 0 : index
    %c0_0 = arith.constant 0 : index
    %c0_1 = arith.constant 0 : index
    %0 = vector.load %arg1[%c0, %c0_0, %c0_1] : memref<4x128x256xbf16, #tpu.memory_space<vmem>>, vector<4x128x256xbf16>
    %c0_2 = arith.constant 0 : index
    %c0_3 = arith.constant 0 : index
    %c0_4 = arith.constant 0 : index
    %1 = vector.load %arg2[%c0_2, %c0_3, %c0_4] : memref<4x256x32xbf16, #tpu.memory_space<vmem>>, vector<4x256x32xbf16>
    "tpu.trace_start"() <{level = 10 : i32, message = "pmk,pkn->pmn"}> : () -> ()
    %cst = arith.constant dense<0.000000e+00> : vector<4x128x32xf32>
    %2 = tpu.matmul %0, %1, %cst {dimension_numbers = #tpu.dot_dimension_numbers<[2], [1], [1], [2], [0, 0, 0, 1, 1, 2], [0], [0]>} : vector<4x128x256xbf16>, vector<4x256x32xbf16>, vector<4x128x32xf32> -> vector<4x128x32xf32>
    "tpu.trace_stop"() : () -> ()
    %cst_5 = arith.constant dense<0.000000e+00> : vector<4x32xf32>
    %3 = vector.multi_reduction <add>, %2, %cst_5 [1] : vector<4x128x32xf32> to vector<4x32xf32>
    %4 = vector.shape_cast %3 : vector<4x32xf32> to vector<4x1x32xf32>
    %cst_6 = arith.constant 1.280000e+02 : f32
    %5 = vector.broadcast %cst_6 : f32 to vector<4x1x32xf32>
    %6 = arith.divf %4, %5 : vector<4x1x32xf32>
    %cst_7 = arith.constant dense<0.000000e+00> : vector<1x32xf32>
    %7 = vector.multi_reduction <add>, %6, %cst_7 [0] : vector<4x1x32xf32> to vector<1x32xf32>
    %8 = vector.shape_cast %7 : vector<1x32xf32> to vector<1x1x32xf32>
    %cst_8 = arith.constant 4.000000e+00 : f32
    %9 = vector.broadcast %cst_8 : f32 to vector<1x1x32xf32>
    %10 = arith.divf %8, %9 : vector<1x1x32xf32>
    %11 = vector.broadcast %10 : vector<1x1x32xf32> to vector<4x128x32xf32>
    %12 = arith.subf %2, %11 : vector<4x128x32xf32>
    %13 = arith.mulf %12, %12 : vector<4x128x32xf32>
    %cst_9 = arith.constant dense<0.000000e+00> : vector<4x32xf32>
    %14 = vector.multi_reduction <add>, %13, %cst_9 [1] : vector<4x128x32xf32> to vector<4x32xf32>
    %15 = vector.shape_cast %14 : vector<4x32xf32> to vector<4x1x32xf32>
    %cst_10 = arith.constant 1.280000e+02 : f32
    %16 = vector.broadcast %cst_10 : f32 to vector<4x1x32xf32>
    %17 = arith.divf %15, %16 : vector<4x1x32xf32>
    %cst_11 = arith.constant dense<0.000000e+00> : vector<1x32xf32>
    %18 = vector.multi_reduction <add>, %17, %cst_11 [0] : vector<4x1x32xf32> to vector<1x32xf32>
    %19 = vector.shape_cast %18 : vector<1x32xf32> to vector<1x1x32xf32>
    %cst_12 = arith.constant 4.000000e+00 : f32
    %20 = vector.broadcast %cst_12 : f32 to vector<1x1x32xf32>
    %21 = arith.divf %19, %20 : vector<1x1x32xf32>
    %c0_13 = arith.constant 0 : index
    %c0_14 = arith.constant 0 : index
    %c0_15 = arith.constant 0 : index
    %22 = vector.load %arg3[%c0_13, %c0_14, %c0_15] : memref<1x1x32xf32, #tpu.memory_space<vmem>>, vector<1x1x32xf32>
    %cst_16 = arith.constant 9.99999974E-6 : f32
    %23 = vector.broadcast %cst_16 : f32 to vector<1x1x32xf32>
    %24 = arith.addf %21, %23 : vector<1x1x32xf32>
    %25 = math.rsqrt %24 : vector<1x1x32xf32>
    %26 = arith.mulf %22, %25 : vector<1x1x32xf32>
    %27 = vector.broadcast %26 : vector<1x1x32xf32> to vector<4x128x32xf32>
    %28 = arith.mulf %12, %27 : vector<4x128x32xf32>
    %c0_17 = arith.constant 0 : index
    %c0_18 = arith.constant 0 : index
    %c0_19 = arith.constant 0 : index
    %29 = vector.load %arg4[%c0_17, %c0_18, %c0_19] : memref<1x1x32xf32, #tpu.memory_space<vmem>>, vector<1x1x32xf32>
    %30 = vector.broadcast %29 : vector<1x1x32xf32> to vector<4x128x32xf32>
    %31 = arith.addf %28, %30 : vector<4x128x32xf32>
    %cst_20 = arith.constant 0.000000e+00 : f32
    %32 = vector.broadcast %cst_20 : f32 to vector<4x128x32xf32>
    %33 = arith.maximumf %31, %32 : vector<4x128x32xf32>
    %c0_21 = arith.constant 0 : index
    %c0_22 = arith.constant 0 : index
    %c0_23 = arith.constant 0 : index
    %34 = vector.load %arg5[%c0_21, %c0_22, %c0_23] : memref<4x128x32xf32, #tpu.memory_space<vmem>>, vector<4x128x32xf32>
    tpu.vector_store %arg5[%c0_21, %c0_22, %c0_23], %33 {strides = array<i32>} : memref<4x128x32xf32, #tpu.memory_space<vmem>>, vector<4x128x32xf32>,
    return
  }
  func.func @transform_0(%arg0: i32) -> (i32, i32, i32) {
    %c0_i32 = arith.constant 0 : i32
    %c0_i32_0 = arith.constant 0 : i32
    %c0_i32_1 = arith.constant 0 : i32
    %c0_i32_2 = arith.constant 0 : i32
    return %c0_i32, %c0_i32_0, %c0_i32_1 : i32, i32, i32
  }
  func.func @transform_1(%arg0: i32) -> (i32, i32, i32) {
    %c0_i32 = arith.constant 0 : i32
    %c0_i32_0 = arith.constant 0 : i32
    %c0_i32_1 = arith.constant 0 : i32
    %c0_i32_2 = arith.constant 0 : i32
    return %c0_i32, %c0_i32_0, %c0_i32_1 : i32, i32, i32
  }
  func.func @transform_2(%arg0: i32) -> (i32, i32, i32) {
    %c0_i32 = arith.constant 0 : i32
    %c0_i32_0 = arith.constant 0 : i32
    %c0_i32_1 = arith.constant 0 : i32
    %c0_i32_2 = arith.constant 0 : i32
    return %c0_i32, %c0_i32_0, %c0_i32_1 : i32, i32, i32
  }
  func.func @transform_3(%arg0: i32) -> (i32, i32, i32) {
    %c0_i32 = arith.constant 0 : i32
    %c0_i32_0 = arith.constant 0 : i32
    %c0_i32_1 = arith.constant 0 : i32
    %c0_i32_2 = arith.constant 0 : i32
    return %c0_i32, %c0_i32_0, %c0_i32_1 : i32, i32, i32
  }
  func.func @transform_4(%arg0: i32) -> (i32, i32, i32) {
    %c0_i32 = arith.constant 0 : i32
    %c0_i32_0 = arith.constant 0 : i32
    %c0_i32_1 = arith.constant 0 : i32
    %c0_i32_2 = arith.constant 0 : i32
    return %c0_i32, %c0_i32_0, %c0_i32_1 : i32, i32, i32
  }
}

module attributes {stable_mosaic.version = 11 : i64} {
  func.func @_deconv_bn_act_kernel(%arg0: i32, %arg1: memref<4x512x128xbf16, #tpu.memory_space<vmem>>, %arg2: memref<4x128x3xbf16, #tpu.memory_space<vmem>>, %arg3: memref<1x1x3xf32, #tpu.memory_space<vmem>>, %arg4: memref<1x1x3xf32, #tpu.memory_space<vmem>>, %arg5: memref<4x512x3xf32, #tpu.memory_space<vmem>>) attributes {dimension_semantics = [#tpu.dimension_semantics<arbitrary>], iteration_bounds = array<i64: 1>, scalar_prefetch = 0 : i64, scratch_operands = 0 : i64, tpu.core_type = #tpu.core_type<tc>, window_params = [{pipeline_mode = #tpu.pipeline_mode<synchronous>, transform_indices = @transform_0, window_bounds = array<i64: 4, 512, 128>}, {pipeline_mode = #tpu.pipeline_mode<synchronous>, transform_indices = @transform_1, window_bounds = array<i64: 4, 128, 3>}, {pipeline_mode = #tpu.pipeline_mode<synchronous>, transform_indices = @transform_2, window_bounds = array<i64: 1, 1, 3>}, {pipeline_mode = #tpu.pipeline_mode<synchronous>, transform_indices = @transform_3, window_bounds = array<i64: 1, 1, 3>}, {pipeline_mode = #tpu.pipeline_mode<synchronous>, transform_indices = @transform_4, window_bounds = array<i64: 4, 512, 3>}]} {
    %c0 = arith.constant 0 : index
    %c0_0 = arith.constant 0 : index
    %c0_1 = arith.constant 0 : index
    %0 = vector.load %arg1[%c0, %c0_0, %c0_1] : memref<4x512x128xbf16, #tpu.memory_space<vmem>>, vector<4x512x128xbf16>
    %c0_2 = arith.constant 0 : index
    %c0_3 = arith.constant 0 : index
    %c0_4 = arith.constant 0 : index
    %1 = vector.load %arg2[%c0_2, %c0_3, %c0_4] : memref<4x128x3xbf16, #tpu.memory_space<vmem>>, vector<4x128x3xbf16>
    "tpu.trace_start"() <{level = 10 : i32, message = "pmk,pkn->pmn"}> : () -> ()
    %cst = arith.constant dense<0.000000e+00> : vector<4x512x3xf32>
    %2 = tpu.matmul %0, %1, %cst {dimension_numbers = #tpu.dot_dimension_numbers<[2], [1], [1], [2], [0, 0, 0, 1, 1, 2], [0], [0]>} : vector<4x512x128xbf16>, vector<4x128x3xbf16>, vector<4x512x3xf32> -> vector<4x512x3xf32>
    "tpu.trace_stop"() : () -> ()
    %cst_5 = arith.constant 0.000000e+00 : f32
    %3 = vector.broadcast %cst_5 : f32 to vector<4x512x3xf32>
    %4 = arith.subf %3, %2 : vector<4x512x3xf32>
    %5 = math.exp %4 : vector<4x512x3xf32>
    %cst_6 = arith.constant 1.000000e+00 : f32
    %6 = vector.broadcast %cst_6 : f32 to vector<4x512x3xf32>
    %7 = arith.addf %6, %5 : vector<4x512x3xf32>
    %cst_7 = arith.constant 1.000000e+00 : f32
    %8 = vector.broadcast %cst_7 : f32 to vector<4x512x3xf32>
    %9 = arith.divf %8, %7 : vector<4x512x3xf32>
    %c0_8 = arith.constant 0 : index
    %c0_9 = arith.constant 0 : index
    %c0_10 = arith.constant 0 : index
    %10 = vector.load %arg5[%c0_8, %c0_9, %c0_10] : memref<4x512x3xf32, #tpu.memory_space<vmem>>, vector<4x512x3xf32>
    tpu.vector_store %arg5[%c0_8, %c0_9, %c0_10], %9 {strides = array<i32>} : memref<4x512x3xf32, #tpu.memory_space<vmem>>, vector<4x512x3xf32>,
    return
  }
  func.func @transform_0(%arg0: i32) -> (i32, i32, i32) {
    %c0_i32 = arith.constant 0 : i32
    %c0_i32_0 = arith.constant 0 : i32
    %c0_i32_1 = arith.constant 0 : i32
    %c0_i32_2 = arith.constant 0 : i32
    return %c0_i32, %c0_i32_0, %c0_i32_1 : i32, i32, i32
  }
  func.func @transform_1(%arg0: i32) -> (i32, i32, i32) {
    %c0_i32 = arith.constant 0 : i32
    %c0_i32_0 = arith.constant 0 : i32
    %c0_i32_1 = arith.constant 0 : i32
    %c0_i32_2 = arith.constant 0 : i32
    return %c0_i32, %c0_i32_0, %c0_i32_1 : i32, i32, i32
  }
  func.func @transform_2(%arg0: i32) -> (i32, i32, i32) {
    %c0_i32 = arith.constant 0 : i32
    %c0_i32_0 = arith.constant 0 : i32
    %c0_i32_1 = arith.constant 0 : i32
    %c0_i32_2 = arith.constant 0 : i32
    return %c0_i32, %c0_i32_0, %c0_i32_1 : i32, i32, i32
  }
  func.func @transform_3(%arg0: i32) -> (i32, i32, i32) {
    %c0_i32 = arith.constant 0 : i32
    %c0_i32_0 = arith.constant 0 : i32
    %c0_i32_1 = arith.constant 0 : i32
    %c0_i32_2 = arith.constant 0 : i32
    return %c0_i32, %c0_i32_0, %c0_i32_1 : i32, i32, i32
  }
  func.func @transform_4(%arg0: i32) -> (i32, i32, i32) {
    %c0_i32 = arith.constant 0 : i32
    %c0_i32_0 = arith.constant 0 : i32
    %c0_i32_1 = arith.constant 0 : i32
    %c0_i32_2 = arith.constant 0 : i32
    return %c0_i32, %c0_i32_0, %c0_i32_1 : i32, i32, i32
  }
}

</mosaic_0001>

<llo_original>
// kernel: vae_forward.10
$region0: #{vae_forward.10}
  #allocation0 [shape = 'u32[]', space=smem, size = 0x4, offset = 0x4, fixed_abs, tag = 'smem constant byte address 0x4 - core index']
  #allocation1 [shape = 'u32[144,128]{1,0:T(1,128)}', space=vmem, size = 0x12000, scoped, tag = 'internal scratch']
  %s0 = inlined_call_operand.vmem [shape: bf16[512,48], index: 0, kind: input, shape index: {}]
  %s1 = inlined_call_operand.vmem [shape: bf16[48,32], index: 1, kind: input, shape index: {}]
  %s2 = inlined_call_operand.vmem [shape: f32[1,32], index: 2, kind: input, shape index: {}]
  %s3 = inlined_call_operand.vmem [shape: f32[1,32], index: 3, kind: input, shape index: {}]
  %s4 = inlined_call_operand.vmem [shape: f32[512,32], index: 4, kind: output, shape index: {}]
  %s5 = sld [smem:[#allocation0]]
  $region26: #{vae_forward.10} parent=0
    _
  %s7 = ssub.s32 1, %s5
  %s8 = scalar_select 0, %s7, %s5
  // Predicated region
  $region2: #{vae_forward.10} parent=0 // pred_check
    _
  $region3: #{vae_forward.10} parent=0 // pred_check_branch
    %10 = sbr.rel (0) target = $region5
  $region4: #{vae_forward.10} parent=0 // pred_region
    _
  $region5: #{vae_forward.10} parent=0 // pred_fallthru
    _
  // Predicated region
  $region6: #{vae_forward.10} parent=0 // pred_check
    _
  $region7: #{vae_forward.10} parent=0 // pred_check_branch
    %12 = sbr.rel (0) target = $region9
  $region8: #{vae_forward.10} parent=0 // pred_region
    _
  $region9: #{vae_forward.10} parent=0 // pred_fallthru
    _
  // Predicated region
  $region10: #{vae_forward.10} parent=0 // pred_check
    _
  $region11: #{vae_forward.10} parent=0 // pred_check_branch
    %14 = sbr.rel (0) target = $region13
  $region12: #{vae_forward.10} parent=0 // pred_region
    _
  $region13: #{vae_forward.10} parent=0 // pred_fallthru
    _
  // Predicated region
  $region14: #{vae_forward.10} parent=0 // pred_check
    _
  $region15: #{vae_forward.10} parent=0 // pred_check_branch
    %16 = sbr.rel (0) target = $region17
  $region16: #{vae_forward.10} parent=0 // pred_region
    _
  $region17: #{vae_forward.10} parent=0 // pred_fallthru
    _
  %v18 = vld [vmem:[%s0] sm:$0xf]
  %v19 = vld [vmem:[%s0 + $0x4] sm:$0xf]
  %v20 = vld [vmem:[%s0 + $0x8] sm:$0xf]
  %v21 = vld [vmem:[%s0 + $0xc] sm:$0xf]
  %v22 = vld [vmem:[%s0 + $0x10] sm:$0xf]
  %v23 = vld [vmem:[%s0 + $0x14] sm:$0xf]
  %v24 = vld [vmem:[%s0 + $0x18] sm:$0xf]
  %v25 = vld [vmem:[%s0 + $0x1c] sm:$0xf]
  %v26 = vld [vmem:[%s0 + $0x20] sm:$0xf]
  %v27 = vld [vmem:[%s0 + $0x24] sm:$0xf]
  %v28 = vld [vmem:[%s0 + $0x28] sm:$0xf]
  %v29 = vld [vmem:[%s0 + $0x2c] sm:$0xf]
  %v30 = vld [vmem:[%s0 + $0x30] sm:$0xf]
  %v31 = vld [vmem:[%s0 + $0x34] sm:$0xf]
  %v32 = vld [vmem:[%s0 + $0x38] sm:$0xf]
  %v33 = vld [vmem:[%s0 + $0x3c] sm:$0xf]
  %v34 = vld [vmem:[%s0 + $0x40] sm:$0xf]
  %v35 = vld [vmem:[%s0 + $0x44] sm:$0xf]
  %v36 = vld [vmem:[%s0 + $0x48] sm:$0xf]
  %v37 = vld [vmem:[%s0 + $0x4c] sm:$0xf]
  %v38 = vld [vmem:[%s0 + $0x50] sm:$0xf]
  %v39 = vld [vmem:[%s0 + $0x54] sm:$0xf]
  %v40 = vld [vmem:[%s0 + $0x58] sm:$0xf]
  %v41 = vld [vmem:[%s0 + $0x5c] sm:$0xf]
  %v42 = vld [vmem:[%s0 + $0x60] sm:$0xf]
  %v43 = vld [vmem:[%s0 + $0x64] sm:$0xf]
  %v44 = vld [vmem:[%s0 + $0x68] sm:$0xf]
  %v45 = vld [vmem:[%s0 + $0x6c] sm:$0xf]
  %v46 = vld [vmem:[%s0 + $0x70] sm:$0xf]
  %v47 = vld [vmem:[%s0 + $0x74] sm:$0xf]
  %v48 = vld [vmem:[%s0 + $0x78] sm:$0xf]
  %v49 = vld [vmem:[%s0 + $0x7c] sm:$0xf]
  %v50 = vld [vmem:[%s0 + $0x80] sm:$0xf]
  %v51 = vld [vmem:[%s0 + $0x84] sm:$0xf]
  %v52 = vld [vmem:[%s0 + $0x88] sm:$0xf]
  %v53 = vld [vmem:[%s0 + $0x8c] sm:$0xf]
  %v54 = vld [vmem:[%s0 + $0x90] sm:$0xf]
  %v55 = vld [vmem:[%s0 + $0x94] sm:$0xf]
  %v56 = vld [vmem:[%s0 + $0x98] sm:$0xf]
  %v57 = vld [vmem:[%s0 + $0x9c] sm:$0xf]
  %v58 = vld [vmem:[%s0 + $0xa0] sm:$0xf]
  %v59 = vld [vmem:[%s0 + $0xa4] sm:$0xf]
  %v60 = vld [vmem:[%s0 + $0xa8] sm:$0xf]
  %v61 = vld [vmem:[%s0 + $0xac] sm:$0xf]
  %v62 = vld [vmem:[%s0 + $0xb0] sm:$0xf]
  %v63 = vld [vmem:[%s0 + $0xb4] sm:$0xf]
  %v64 = vld [vmem:[%s0 + $0xb8] sm:$0xf]
  %v65 = vld [vmem:[%s0 + $0xbc] sm:$0xf]
  %v66 = vld [vmem:[%s0 + $0xc0] sm:$0xf]
  %v67 = vld [vmem:[%s0 + $0xc4] sm:$0xf]
  %v68 = vld [vmem:[%s0 + $0xc8] sm:$0xf]
  %v69 = vld [vmem:[%s0 + $0xcc] sm:$0xf]
  %v70 = vld [vmem:[%s0 + $0xd0] sm:$0xf]
  %v71 = vld [vmem:[%s0 + $0xd4] sm:$0xf]
  %v72 = vld [vmem:[%s0 + $0xd8] sm:$0xf]
  %v73 = vld [vmem:[%s0 + $0xdc] sm:$0xf]
  %v74 = vld [vmem:[%s0 + $0xe0] sm:$0xf]
  %v75 = vld [vmem:[%s0 + $0xe4] sm:$0xf]
  %v76 = vld [vmem:[%s0 + $0xe8] sm:$0xf]
  %v77 = vld [vmem:[%s0 + $0xec] sm:$0xf]
  %v78 = vld [vmem:[%s0 + $0xf0] sm:$0xf]
  %v79 = vld [vmem:[%s0 + $0xf4] sm:$0xf]
  %v80 = vld [vmem:[%s0 + $0xf8] sm:$0xf]
  %v81 = vld [vmem:[%s0 + $0xfc] sm:$0xf]
  %v82 = vld [vmem:[%s1] sm:$0xf]
  %v83 = vld [vmem:[%s1 + $0x4] sm:$0xf]
  %v84 = vld [vmem:[%s1 + $0x8] sm:$0xf]
  %v85 = vld [vmem:[%s1 + $0xc] sm:$0xf]
  %v86 = vld [vmem:[%s1 + $0x10] sm:$0xf]
  %v87 = vld [vmem:[%s1 + $0x14] sm:$0xf]
  %v152 = vunpack.c.l.b16 %v18
  %v153 = vunpack.c.l.b16 %v19
  %v154 = vunpack.c.l.b16 %v20
  %v155 = vunpack.c.l.b16 %v21
  %v156 = vunpack.c.l.b16 %v22
  %v157 = vunpack.c.l.b16 %v23
  %v158 = vunpack.c.l.b16 %v24
  %v159 = vunpack.c.l.b16 %v25
  %v160 = vunpack.c.l.b16 %v26
  %v161 = vunpack.c.l.b16 %v27
  %v162 = vunpack.c.l.b16 %v28
  %v163 = vunpack.c.l.b16 %v29
  %v164 = vunpack.c.l.b16 %v30
  %v165 = vunpack.c.l.b16 %v31
  %v166 = vunpack.c.l.b16 %v32
  %v167 = vunpack.c.l.b16 %v33
  %v168 = vunpack.c.l.b16 %v34
  %v169 = vunpack.c.l.b16 %v35
  %v170 = vunpack.c.l.b16 %v36
  %v171 = vunpack.c.l.b16 %v37
  %v172 = vunpack.c.l.b16 %v38
  %v173 = vunpack.c.l.b16 %v39
  %v174 = vunpack.c.l.b16 %v40
  %v175 = vunpack.c.l.b16 %v41
  %v176 = vunpack.c.l.b16 %v42
  %v177 = vunpack.c.l.b16 %v43
  %v178 = vunpack.c.l.b16 %v44
  %v179 = vunpack.c.l.b16 %v45
  %v180 = vunpack.c.l.b16 %v46
  %v181 = vunpack.c.l.b16 %v47
  %v182 = vunpack.c.l.b16 %v48
  %v183 = vunpack.c.l.b16 %v49
  %v184 = vunpack.c.l.b16 %v50
  %v185 = vunpack.c.l.b16 %v51
  %v186 = vunpack.c.l.b16 %v52
  %v187 = vunpack.c.l.b16 %v53
  %v188 = vunpack.c.l.b16 %v54
  %v189 = vunpack.c.l.b16 %v55
  %v190 = vunpack.c.l.b16 %v56
  %v191 = vunpack.c.l.b16 %v57
  %v192 = vunpack.c.l.b16 %v58
  %v193 = vunpack.c.l.b16 %v59
  %v194 = vunpack.c.l.b16 %v60
  %v195 = vunpack.c.l.b16 %v61
  %v196 = vunpack.c.l.b16 %v62
  %v197 = vunpack.c.l.b16 %v63
  %v198 = vunpack.c.l.b16 %v64
  %v199 = vunpack.c.l.b16 %v65
  %v200 = vunpack.c.l.b16 %v66
  %v201 = vunpack.c.l.b16 %v67
  %v202 = vunpack.c.l.b16 %v68
  %v203 = vunpack.c.l.b16 %v69
  %v204 = vunpack.c.l.b16 %v70
  %v205 = vunpack.c.l.b16 %v71
  %v206 = vunpack.c.l.b16 %v72
  %v207 = vunpack.c.l.b16 %v73
  %v208 = vunpack.c.l.b16 %v74
  %v209 = vunpack.c.l.b16 %v75
  %v210 = vunpack.c.l.b16 %v76
  %v211 = vunpack.c.l.b16 %v77
  %v212 = vunpack.c.l.b16 %v78
  %v213 = vunpack.c.l.b16 %v79
  %v214 = vunpack.c.l.b16 %v80
  %v215 = vunpack.c.l.b16 %v81
  %v216 = vpack.c.b16 %v153, %v152
  %v217 = vpack.c.b16 %v155, %v154
  %v218 = vpack.c.b16 %v157, %v156
  %v219 = vpack.c.b16 %v159, %v158
  %v220 = vpack.c.b16 %v161, %v160
  %v221 = vpack.c.b16 %v163, %v162
  %v222 = vpack.c.b16 %v165, %v164
  %v223 = vpack.c.b16 %v167, %v166
  %v224 = vpack.c.b16 %v169, %v168
  %v225 = vpack.c.b16 %v171, %v170
  %v226 = vpack.c.b16 %v173, %v172
  %v227 = vpack.c.b16 %v175, %v174
  %v228 = vpack.c.b16 %v177, %v176
  %v229 = vpack.c.b16 %v179, %v178
  %v230 = vpack.c.b16 %v181, %v180
  %v231 = vpack.c.b16 %v183, %v182
  %v232 = vpack.c.b16 %v185, %v184
  %v233 = vpack.c.b16 %v187, %v186
  %v234 = vpack.c.b16 %v189, %v188
  %v235 = vpack.c.b16 %v191, %v190
  %v236 = vpack.c.b16 %v193, %v192
  %v237 = vpack.c.b16 %v195, %v194
  %v238 = vpack.c.b16 %v197, %v196
  %v239 = vpack.c.b16 %v199, %v198
  %v240 = vpack.c.b16 %v201, %v200
  %v241 = vpack.c.b16 %v203, %v202
  %v242 = vpack.c.b16 %v205, %v204
  %v243 = vpack.c.b16 %v207, %v206
  %v244 = vpack.c.b16 %v209, %v208
  %v245 = vpack.c.b16 %v211, %v210
  %v246 = vpack.c.b16 %v213, %v212
  %v247 = vpack.c.b16 %v215, %v214
  %v254 = vunpack.c.l.b16 %v82
  %v255 = vunpack.c.l.b16 %v83
  %v256 = vunpack.c.l.b16 %v84
  %v257 = vunpack.c.l.b16 %v85
  %v258 = vunpack.c.l.b16 %v86
  %v259 = vunpack.c.l.b16 %v87
  %v260 = vpack.c.b16 %v255, %v254
  %v261 = vpack.c.b16 %v257, %v256
  %v262 = vpack.c.b16 %v259, %v258
  %vm266 = vcmask 392192
  %v268 = vsel %vm266, %v216, 0
  %v271 = vsel %vm266, %v217, 0
  %v274 = vsel %vm266, %v218, 0
  %v277 = vsel %vm266, %v219, 0
  %v280 = vsel %vm266, %v220, 0
  %v283 = vsel %vm266, %v221, 0
  %v286 = vsel %vm266, %v222, 0
  %v289 = vsel %vm266, %v223, 0
  %v292 = vsel %vm266, %v224, 0
  %v295 = vsel %vm266, %v225, 0
  %v298 = vsel %vm266, %v226, 0
  %v301 = vsel %vm266, %v227, 0
  %v304 = vsel %vm266, %v228, 0
  %v307 = vsel %vm266, %v229, 0
  %v310 = vsel %vm266, %v230, 0
  %v313 = vsel %vm266, %v231, 0
  %v316 = vsel %vm266, %v232, 0
  %v319 = vsel %vm266, %v233, 0
  %v322 = vsel %vm266, %v234, 0
  %v325 = vsel %vm266, %v235, 0
  %v328 = vsel %vm266, %v236, 0
  %v331 = vsel %vm266, %v237, 0
  %v334 = vsel %vm266, %v238, 0
  %v337 = vsel %vm266, %v239, 0
  %v340 = vsel %vm266, %v240, 0
  %v343 = vsel %vm266, %v241, 0
  %v346 = vsel %vm266, %v242, 0
  %v349 = vsel %vm266, %v243, 0
  %v352 = vsel %vm266, %v244, 0
  %v355 = vsel %vm266, %v245, 0
  %v358 = vsel %vm266, %v246, 0
  %v361 = vsel %vm266, %v247, 0
  %363 = vmatprep.subr.bf16.mxu0 0
  %364 = vmatpush1.bf16.msra.mxu0 %v260
  %365 = vmatprep.subr.bf16.mxu0 0
  %366 = vmatpush1.bf16.msra.mxu0 %v261
  %367 = vmatprep.subr.bf16.mxu0 0
  %368 = vmatpush1.bf16.msra.mxu0 %v262
  %369 = vmatprep.subr.bf16.mxu0 0
  %370 = vmatpush1.bf16.msra.mxu0 0
  %371 = vmatprep.subr.bf16.mxu0 0
  %372 = vmatpush1.bf16.msra.mxu0 0
  %373 = vmatprep.subr.bf16.mxu0 0
  %374 = vmatpush1.bf16.msra.mxu0 0
  %375 = vmatprep.subr.bf16.mxu0 0
  %376 = vmatpush1.bf16.msra.mxu0 0
  %377 = vmatprep.subr.bf16.mxu0 0
  %378 = vmatpush1.bf16.msra.mxu0 0
  %379 = vmatprep.subr.bf16.mxu0 0
  %380 = vmatpush1.bf16.msra.mxu0 0
  %381 = vmatprep.subr.bf16.mxu0 0
  %382 = vmatpush1.bf16.msra.mxu0 0
  %383 = vmatprep.subr.bf16.mxu0 0
  %384 = vmatpush1.bf16.msra.mxu0 0
  %385 = vmatprep.subr.bf16.mxu0 0
  %386 = vmatpush1.bf16.msra.mxu0 0
  %387 = vmatprep.subr.bf16.mxu0 0
  %388 = vmatpush1.bf16.msra.mxu0 0
  %389 = vmatprep.subr.bf16.mxu0 0
  %390 = vmatpush1.bf16.msra.mxu0 0
  %391 = vmatprep.subr.bf16.mxu0 0
  %392 = vmatpush1.bf16.msra.mxu0 0
  %393 = vmatprep.subr.bf16.mxu0 0
  %394 = vmatpush1.bf16.msra.mxu0 0
  %395 = vmatprep.mubr.bf16.mxu0 0
  %396 = vmatmul.mubr.bf16.gmra.mrb[0].mxu0 %v268
  %v397 = vpop.f32.mrb[0].mxu0
  %v398 = vadd.f32 0.0, %v397
  %v399 = vpop.f32.mrb[0].mxu0
  %v400 = vpop.f32.mrb[0].mxu0
  %v401 = vadd.f32 0.0, %v400
  %v402 = vpop.f32.mrb[0].mxu0
  %403 = vmatprep.mubr.bf16.mxu0 0
  %404 = vmatmul.mubr.bf16.gmra.mrb[0].mxu0 %v271
  %v405 = vpop.f32.mrb[0].mxu0
  %v406 = vadd.f32 0.0, %v405
  %v407 = vpop.f32.mrb[0].mxu0
  %v408 = vpop.f32.mrb[0].mxu0
  %v409 = vadd.f32 0.0, %v408
  %v410 = vpop.f32.mrb[0].mxu0
  %411 = vmatprep.mubr.bf16.mxu0 0
  %412 = vmatmul.mubr.bf16.gmra.mrb[0].mxu0 %v274
  %v413 = vpop.f32.mrb[0].mxu0
  %v414 = vadd.f32 0.0, %v413
  %v415 = vpop.f32.mrb[0].mxu0
  %v416 = vpop.f32.mrb[0].mxu0
  %v417 = vadd.f32 0.0, %v416
  %v418 = vpop.f32.mrb[0].mxu0
  %419 = vmatprep.mubr.bf16.mxu0 0
  %420 = vmatmul.mubr.bf16.gmra.mrb[0].mxu0 %v277
  %v421 = vpop.f32.mrb[0].mxu0
  %v422 = vadd.f32 0.0, %v421
  %v423 = vpop.f32.mrb[0].mxu0
  %v424 = vpop.f32.mrb[0].mxu0
  %v425 = vadd.f32 0.0, %v424
  %v426 = vpop.f32.mrb[0].mxu0
  %427 = vmatprep.mubr.bf16.mxu0 0
  %428 = vmatmul.mubr.bf16.gmra.mrb[0].mxu0 %v280
  %v429 = vpop.f32.mrb[0].mxu0
  %v430 = vadd.f32 0.0, %v429
  %v431 = vpop.f32.mrb[0].mxu0
  %v432 = vpop.f32.mrb[0].mxu0
  %v433 = vadd.f32 0.0, %v432
  %v434 = vpop.f32.mrb[0].mxu0
  %435 = vmatprep.mubr.bf16.mxu0 0
  %436 = vmatmul.mubr.bf16.gmra.mrb[0].mxu0 %v283
  %v437 = vpop.f32.mrb[0].mxu0
  %v438 = vadd.f32 0.0, %v437
  %v439 = vpop.f32.mrb[0].mxu0
  %v440 = vpop.f32.mrb[0].mxu0
  %v441 = vadd.f32 0.0, %v440
  %v442 = vpop.f32.mrb[0].mxu0
  %443 = vmatprep.mubr.bf16.mxu0 0
  %444 = vmatmul.mubr.bf16.gmra.mrb[0].mxu0 %v286
  %v445 = vpop.f32.mrb[0].mxu0
  %v446 = vadd.f32 0.0, %v445
  %v447 = vpop.f32.mrb[0].mxu0
  %v448 = vpop.f32.mrb[0].mxu0
  %v449 = vadd.f32 0.0, %v448
  %v450 = vpop.f32.mrb[0].mxu0
  %451 = vmatprep.mubr.bf16.mxu0 0
  %452 = vmatmul.mubr.bf16.gmra.mrb[0].mxu0 %v289
  %v453 = vpop.f32.mrb[0].mxu0
  %v454 = vadd.f32 0.0, %v453
  %v455 = vpop.f32.mrb[0].mxu0
  %v456 = vpop.f32.mrb[0].mxu0
  %v457 = vadd.f32 0.0, %v456
  %v458 = vpop.f32.mrb[0].mxu0
  %459 = vmatprep.mubr.bf16.mxu0 0
  %460 = vmatmul.mubr.bf16.gmra.mrb[0].mxu0 %v292
  %v461 = vpop.f32.mrb[0].mxu0
  %v462 = vadd.f32 0.0, %v461
  %v463 = vpop.f32.mrb[0].mxu0
  %v464 = vpop.f32.mrb[0].mxu0
  %v465 = vadd.f32 0.0, %v464
  %v466 = vpop.f32.mrb[0].mxu0
  %467 = vmatprep.mubr.bf16.mxu0 0
  %468 = vmatmul.mubr.bf16.gmra.mrb[0].mxu0 %v295
  %v469 = vpop.f32.mrb[0].mxu0
  %v470 = vadd.f32 0.0, %v469
  %v471 = vpop.f32.mrb[0].mxu0
  %v472 = vpop.f32.mrb[0].mxu0
  %v473 = vadd.f32 0.0, %v472
  %v474 = vpop.f32.mrb[0].mxu0
  %475 = vmatprep.mubr.bf16.mxu0 0
  %476 = vmatmul.mubr.bf16.gmra.mrb[0].mxu0 %v298
  %v477 = vpop.f32.mrb[0].mxu0
  %v478 = vadd.f32 0.0, %v477
  %v479 = vpop.f32.mrb[0].mxu0
  %v480 = vpop.f32.mrb[0].mxu0
  %v481 = vadd.f32 0.0, %v480
  %v482 = vpop.f32.mrb[0].mxu0
  %483 = vmatprep.mubr.bf16.mxu0 0
  %484 = vmatmul.mubr.bf16.gmra.mrb[0].mxu0 %v301
  %v485 = vpop.f32.mrb[0].mxu0
  %v486 = vadd.f32 0.0, %v485
  %v487 = vpop.f32.mrb[0].mxu0
  %v488 = vpop.f32.mrb[0].mxu0
  %v489 = vadd.f32 0.0, %v488
  %v490 = vpop.f32.mrb[0].mxu0
  %491 = vmatprep.mubr.bf16.mxu0 0
  %492 = vmatmul.mubr.bf16.gmra.mrb[0].mxu0 %v304
  %v493 = vpop.f32.mrb[0].mxu0
  %v494 = vadd.f32 0.0, %v493
  %v495 = vpop.f32.mrb[0].mxu0
  %v496 = vpop.f32.mrb[0].mxu0
  %v497 = vadd.f32 0.0, %v496
  %v498 = vpop.f32.mrb[0].mxu0
  %499 = vmatprep.mubr.bf16.mxu0 0
  %500 = vmatmul.mubr.bf16.gmra.mrb[0].mxu0 %v307
  %v501 = vpop.f32.mrb[0].mxu0
  %v502 = vadd.f32 0.0, %v501
  %v503 = vpop.f32.mrb[0].mxu0
  %v504 = vpop.f32.mrb[0].mxu0
  %v505 = vadd.f32 0.0, %v504
  %v506 = vpop.f32.mrb[0].mxu0
  %507 = vmatprep.mubr.bf16.mxu0 0
  %508 = vmatmul.mubr.bf16.gmra.mrb[0].mxu0 %v310
  %v509 = vpop.f32.mrb[0].mxu0
  %v510 = vadd.f32 0.0, %v509
  %v511 = vpop.f32.mrb[0].mxu0
  %v512 = vpop.f32.mrb[0].mxu0
  %v513 = vadd.f32 0.0, %v512
  %v514 = vpop.f32.mrb[0].mxu0
  %515 = vmatprep.mubr.bf16.mxu0 0
  %516 = vmatmul.mubr.bf16.gmra.mrb[0].mxu0 %v313
  %v517 = vpop.f32.mrb[0].mxu0
  %v518 = vadd.f32 0.0, %v517
  %v519 = vpop.f32.mrb[0].mxu0
  %v520 = vpop.f32.mrb[0].mxu0
  %v521 = vadd.f32 0.0, %v520
  %v522 = vpop.f32.mrb[0].mxu0
  %523 = vmatprep.mubr.bf16.mxu0 0
  %524 = vmatmul.mubr.bf16.gmra.mrb[0].mxu0 %v316
  %v525 = vpop.f32.mrb[0].mxu0
  %v526 = vadd.f32 0.0, %v525
  %v527 = vpop.f32.mrb[0].mxu0
  %v528 = vpop.f32.mrb[0].mxu0
  %v529 = vadd.f32 0.0, %v528
  %v530 = vpop.f32.mrb[0].mxu0
  %531 = vmatprep.mubr.bf16.mxu0 0
  %532 = vmatmul.mubr.bf16.gmra.mrb[0].mxu0 %v319
  %v533 = vpop.f32.mrb[0].mxu0
  %v534 = vadd.f32 0.0, %v533
  %v535 = vpop.f32.mrb[0].mxu0
  %v536 = vpop.f32.mrb[0].mxu0
  %v537 = vadd.f32 0.0, %v536
  %v538 = vpop.f32.mrb[0].mxu0
  %539 = vmatprep.mubr.bf16.mxu0 0
  %540 = vmatmul.mubr.bf16.gmra.mrb[0].mxu0 %v322
  %v541 = vpop.f32.mrb[0].mxu0
  %v542 = vadd.f32 0.0, %v541
  %v543 = vpop.f32.mrb[0].mxu0
  %v544 = vpop.f32.mrb[0].mxu0
  %v545 = vadd.f32 0.0, %v544
  %v546 = vpop.f32.mrb[0].mxu0
  %547 = vmatprep.mubr.bf16.mxu0 0
  %548 = vmatmul.mubr.bf16.gmra.mrb[0].mxu0 %v325
  %v549 = vpop.f32.mrb[0].mxu0
  %v550 = vadd.f32 0.0, %v549
  %v551 = vpop.f32.mrb[0].mxu0
  %v552 = vpop.f32.mrb[0].mxu0
  %v553 = vadd.f32 0.0, %v552
  %v554 = vpop.f32.mrb[0].mxu0
  %555 = vmatprep.mubr.bf16.mxu0 0
  %556 = vmatmul.mubr.bf16.gmra.mrb[0].mxu0 %v328
  %v557 = vpop.f32.mrb[0].mxu0
  %v558 = vadd.f32 0.0, %v557
  %v559 = vpop.f32.mrb[0].mxu0
  %v560 = vpop.f32.mrb[0].mxu0
  %v561 = vadd.f32 0.0, %v560
  %v562 = vpop.f32.mrb[0].mxu0
  %563 = vmatprep.mubr.bf16.mxu0 0
  %564 = vmatmul.mubr.bf16.gmra.mrb[0].mxu0 %v331
  %v565 = vpop.f32.mrb[0].mxu0
  %v566 = vadd.f32 0.0, %v565
  %v567 = vpop.f32.mrb[0].mxu0
  %v568 = vpop.f32.mrb[0].mxu0
  %v569 = vadd.f32 0.0, %v568
  %v570 = vpop.f32.mrb[0].mxu0
  %571 = vmatprep.mubr.bf16.mxu0 0
  %572 = vmatmul.mubr.bf16.gmra.mrb[0].mxu0 %v334
  %v573 = vpop.f32.mrb[0].mxu0
  %v574 = vadd.f32 0.0, %v573
  %v575 = vpop.f32.mrb[0].mxu0
  %v576 = vpop.f32.mrb[0].mxu0
  %v577 = vadd.f32 0.0, %v576
  %v578 = vpop.f32.mrb[0].mxu0
  %579 = vmatprep.mubr.bf16.mxu0 0
  %580 = vmatmul.mubr.bf16.gmra.mrb[0].mxu0 %v337
  %v581 = vpop.f32.mrb[0].mxu0
  %v582 = vadd.f32 0.0, %v581
  %v583 = vpop.f32.mrb[0].mxu0
  %v584 = vpop.f32.mrb[0].mxu0
  %v585 = vadd.f32 0.0, %v584
  %v586 = vpop.f32.mrb[0].mxu0
  %587 = vmatprep.mubr.bf16.mxu0 0
  %588 = vmatmul.mubr.bf16.gmra.mrb[0].mxu0 %v340
  %v589 = vpop.f32.mrb[0].mxu0
  %v590 = vadd.f32 0.0, %v589
  %v591 = vpop.f32.mrb[0].mxu0
  %v592 = vpop.f32.mrb[0].mxu0
  %v593 = vadd.f32 0.0, %v592
  %v594 = vpop.f32.mrb[0].mxu0
  %595 = vmatprep.mubr.bf16.mxu0 0
  %596 = vmatmul.mubr.bf16.gmra.mrb[0].mxu0 %v343
  %v597 = vpop.f32.mrb[0].mxu0
  %v598 = vadd.f32 0.0, %v597
  %v599 = vpop.f32.mrb[0].mxu0
  %v600 = vpop.f32.mrb[0].mxu0
  %v601 = vadd.f32 0.0, %v600
  %v602 = vpop.f32.mrb[0].mxu0
  %603 = vmatprep.mubr.bf16.mxu0 0
  %604 = vmatmul.mubr.bf16.gmra.mrb[0].mxu0 %v346
  %v605 = vpop.f32.mrb[0].mxu0
  %v606 = vadd.f32 0.0, %v605
  %v607 = vpop.f32.mrb[0].mxu0
  %v608 = vpop.f32.mrb[0].mxu0
  %v609 = vadd.f32 0.0, %v608
  %v610 = vpop.f32.mrb[0].mxu0
  %611 = vmatprep.mubr.bf16.mxu0 0
  %612 = vmatmul.mubr.bf16.gmra.mrb[0].mxu0 %v349
  %v613 = vpop.f32.mrb[0].mxu0
  %v614 = vadd.f32 0.0, %v613
  %v615 = vpop.f32.mrb[0].mxu0
  %v616 = vpop.f32.mrb[0].mxu0
  %v617 = vadd.f32 0.0, %v616
  %v618 = vpop.f32.mrb[0].mxu0
  %619 = vmatprep.mubr.bf16.mxu0 0
  %620 = vmatmul.mubr.bf16.gmra.mrb[0].mxu0 %v352
  %v621 = vpop.f32.mrb[0].mxu0
  %v622 = vadd.f32 0.0, %v621
  %v623 = vpop.f32.mrb[0].mxu0
  %v624 = vpop.f32.mrb[0].mxu0
  %v625 = vadd.f32 0.0, %v624
  %v626 = vpop.f32.mrb[0].mxu0
  %627 = vmatprep.mubr.bf16.mxu0 0
  %628 = vmatmul.mubr.bf16.gmra.mrb[0].mxu0 %v355
  %v629 = vpop.f32.mrb[0].mxu0
  %v630 = vadd.f32 0.0, %v629
  %v631 = vpop.f32.mrb[0].mxu0
  %v632 = vpop.f32.mrb[0].mxu0
  %v633 = vadd.f32 0.0, %v632
  %v634 = vpop.f32.mrb[0].mxu0
  %635 = vmatprep.mubr.bf16.mxu0 0
  %636 = vmatmul.mubr.bf16.gmra.mrb[0].mxu0 %v358
  %v637 = vpop.f32.mrb[0].mxu0
  %v638 = vadd.f32 0.0, %v637
  %v639 = vpop.f32.mrb[0].mxu0
  %v640 = vpop.f32.mrb[0].mxu0
  %v641 = vadd.f32 0.0, %v640
  %v642 = vpop.f32.mrb[0].mxu0
  %643 = vmatprep.mubr.bf16.mxu0 0
  %644 = vmatmul.mubr.bf16.gmra.mrb[0].mxu0 %v361
  %v645 = vpop.f32.mrb[0].mxu0
  %v646 = vadd.f32 0.0, %v645
  %v647 = vpop.f32.mrb[0].mxu0
  %v648 = vpop.f32.mrb[0].mxu0
  %v649 = vadd.f32 0.0, %v648
  %v650 = vpop.f32.mrb[0].mxu0
  %651 = vdwg.mxu0
  %vm652 = vcmask 261120
  %v653 = vsel %vm652, %v398, 0.0
  %v654 = vsel %vm652, %v401, 0.0
  %v655 = vadd.f32 %v653, %v654
  %v656 = vsel %vm652, %v406, 0.0
  %v657 = vadd.f32 %v655, %v656
  %v658 = vsel %vm652, %v409, 0.0
  %v659 = vadd.f32 %v657, %v658
  %v660 = vsel %vm652, %v414, 0.0
  %v661 = vadd.f32 %v659, %v660
  %v662 = vsel %vm652, %v417, 0.0
  %v663 = vadd.f32 %v661, %v662
  %v664 = vsel %vm652, %v422, 0.0
  %v665 = vadd.f32 %v663, %v664
  %v666 = vsel %vm652, %v425, 0.0
  %v667 = vadd.f32 %v665, %v666
  %v668 = vsel %vm652, %v430, 0.0
  %v669 = vadd.f32 %v667, %v668
  %v670 = vsel %vm652, %v433, 0.0
  %v671 = vadd.f32 %v669, %v670
  %v672 = vsel %vm652, %v438, 0.0
  %v673 = vadd.f32 %v671, %v672
  %v674 = vsel %vm652, %v441, 0.0
  %v675 = vadd.f32 %v673, %v674
  %v676 = vsel %vm652, %v446, 0.0
  %v677 = vadd.f32 %v675, %v676
  %v678 = vsel %vm652, %v449, 0.0
  %v679 = vadd.f32 %v677, %v678
  %v680 = vsel %vm652, %v454, 0.0
  %v681 = vadd.f32 %v679, %v680
  %v682 = vsel %vm652, %v457, 0.0
  %v683 = vadd.f32 %v681, %v682
  %v684 = vsel %vm652, %v462, 0.0
  %v685 = vadd.f32 %v683, %v684
  %v686 = vsel %vm652, %v465, 0.0
  %v687 = vadd.f32 %v685, %v686
  %v688 = vsel %vm652, %v470, 0.0
  %v689 = vadd.f32 %v687, %v688
  %v690 = vsel %vm652, %v473, 0.0
  %v691 = vadd.f32 %v689, %v690
  %v692 = vsel %vm652, %v478, 0.0
  %v693 = vadd.f32 %v691, %v692
  %v694 = vsel %vm652, %v481, 0.0
  %v695 = vadd.f32 %v693, %v694
  %v696 = vsel %vm652, %v486, 0.0
  %v697 = vadd.f32 %v695, %v696
  %v698 = vsel %vm652, %v489, 0.0
  %v699 = vadd.f32 %v697, %v698
  %v700 = vsel %vm652, %v494, 0.0
  %v701 = vadd.f32 %v699, %v700
  %v702 = vsel %vm652, %v497, 0.0
  %v703 = vadd.f32 %v701, %v702
  %v704 = vsel %vm652, %v502, 0.0
  %v705 = vadd.f32 %v703, %v704
  %v706 = vsel %vm652, %v505, 0.0
  %v707 = vadd.f32 %v705, %v706
  %v708 = vsel %vm652, %v510, 0.0
  %v709 = vadd.f32 %v707, %v708
  %v710 = vsel %vm652, %v513, 0.0
  %v711 = vadd.f32 %v709, %v710
  %v712 = vsel %vm652, %v518, 0.0
  %v713 = vadd.f32 %v711, %v712
  %v714 = vsel %vm652, %v521, 0.0
  %v715 = vadd.f32 %v713, %v714
  %v716 = vsel %vm652, %v526, 0.0
  %v717 = vadd.f32 %v715, %v716
  %v718 = vsel %vm652, %v529, 0.0
  %v719 = vadd.f32 %v717, %v718
  %v720 = vsel %vm652, %v534, 0.0
  %v721 = vadd.f32 %v719, %v720
  %v722 = vsel %vm652, %v537, 0.0
  %v723 = vadd.f32 %v721, %v722
  %v724 = vsel %vm652, %v542, 0.0
  %v725 = vadd.f32 %v723, %v724
  %v726 = vsel %vm652, %v545, 0.0
  %v727 = vadd.f32 %v725, %v726
  %v728 = vsel %vm652, %v550, 0.0
  %v729 = vadd.f32 %v727, %v728
  %v730 = vsel %vm652, %v553, 0.0
  %v731 = vadd.f32 %v729, %v730
  %v732 = vsel %vm652, %v558, 0.0
  %v733 = vadd.f32 %v731, %v732
  %v734 = vsel %vm652, %v561, 0.0
  %v735 = vadd.f32 %v733, %v734
  %v736 = vsel %vm652, %v566, 0.0
  %v737 = vadd.f32 %v735, %v736
  %v738 = vsel %vm652, %v569, 0.0
  %v739 = vadd.f32 %v737, %v738
  %v740 = vsel %vm652, %v574, 0.0
  %v741 = vadd.f32 %v739, %v740
  %v742 = vsel %vm652, %v577, 0.0
  %v743 = vadd.f32 %v741, %v742
  %v744 = vsel %vm652, %v582, 0.0
  %v745 = vadd.f32 %v743, %v744
  %v746 = vsel %vm652, %v585, 0.0
  %v747 = vadd.f32 %v745, %v746
  %v748 = vsel %vm652, %v590, 0.0
  %v749 = vadd.f32 %v747, %v748
  %v750 = vsel %vm652, %v593, 0.0
  %v751 = vadd.f32 %v749, %v750
  %v752 = vsel %vm652, %v598, 0.0
  %v753 = vadd.f32 %v751, %v752
  %v754 = vsel %vm652, %v601, 0.0
  %v755 = vadd.f32 %v753, %v754
  %v756 = vsel %vm652, %v606, 0.0
  %v757 = vadd.f32 %v755, %v756
  %v758 = vsel %vm652, %v609, 0.0
  %v759 = vadd.f32 %v757, %v758
  %v760 = vsel %vm652, %v614, 0.0
  %v761 = vadd.f32 %v759, %v760
  %v762 = vsel %vm652, %v617, 0.0
  %v763 = vadd.f32 %v761, %v762
  %v764 = vsel %vm652, %v622, 0.0
  %v765 = vadd.f32 %v763, %v764
  %v766 = vsel %vm652, %v625, 0.0
  %v767 = vadd.f32 %v765, %v766
  %v768 = vsel %vm652, %v630, 0.0
  %v769 = vadd.f32 %v767, %v768
  %v770 = vsel %vm652, %v633, 0.0
  %v771 = vadd.f32 %v769, %v770
  %v772 = vsel %vm652, %v638, 0.0
  %v773 = vadd.f32 %v771, %v772
  %v774 = vsel %vm652, %v641, 0.0
  %v775 = vadd.f32 %v773, %v774
  %v776 = vsel %vm652, %v646, 0.0
  %v777 = vadd.f32 %v775, %v776
  %v778 = vsel %vm652, %v649, 0.0
  %v779 = vadd.f32 %v777, %v778
  %v780 = vrot.slane %v779, 4
  %v781 = vadd.f32 %v779, %v780
  %v782 = vrot.slane %v781, 2
  %v783 = vadd.f32 %v781, %v782
  %v784 = vrot.slane %v783, 1
  %v785 = vadd.f32 %v783, %v784
  %v786 = vrcp.pop 512.0
  %v787 = vmul.f32 %v785, %v786
  %v788 = vsub.f32 %v398, %v787
  %v789 = vsub.f32 %v401, %v787
  %v790 = vsub.f32 %v406, %v787
  %v791 = vsub.f32 %v409, %v787
  %v792 = vsub.f32 %v414, %v787
  %v793 = vsub.f32 %v417, %v787
  %v794 = vsub.f32 %v422, %v787
  %v795 = vsub.f32 %v425, %v787
  %v796 = vsub.f32 %v430, %v787
  %v797 = vsub.f32 %v433, %v787
  %v798 = vsub.f32 %v438, %v787
  %v799 = vsub.f32 %v441, %v787
  %v800 = vsub.f32 %v446, %v787
  %v801 = vsub.f32 %v449, %v787
  %v802 = vsub.f32 %v454, %v787
  %v803 = vsub.f32 %v457, %v787
  %v804 = vsub.f32 %v462, %v787
  %v805 = vsub.f32 %v465, %v787
  %v806 = vsub.f32 %v470, %v787
  %v807 = vsub.f32 %v473, %v787
  %v808 = vsub.f32 %v478, %v787
  %v809 = vsub.f32 %v481, %v787
  %v810 = vsub.f32 %v486, %v787
  %v811 = vsub.f32 %v489, %v787
  %v812 = vsub.f32 %v494, %v787
  %v813 = vsub.f32 %v497, %v787
  %v814 = vsub.f32 %v502, %v787
  %v815 = vsub.f32 %v505, %v787
  %v816 = vsub.f32 %v510, %v787
  %v817 = vsub.f32 %v513, %v787
  %v818 = vsub.f32 %v518, %v787
  %v819 = vsub.f32 %v521, %v787
  %v820 = vsub.f32 %v526, %v787
  %v821 = vsub.f32 %v529, %v787
  %v822 = vsub.f32 %v534, %v787
  %v823 = vsub.f32 %v537, %v787
  %v824 = vsub.f32 %v542, %v787
  %v825 = vsub.f32 %v545, %v787
  %v826 = vsub.f32 %v550, %v787
  %v827 = vsub.f32 %v553, %v787
  %v828 = vsub.f32 %v558, %v787
  %v829 = vsub.f32 %v561, %v787
  %v830 = vsub.f32 %v566, %v787
  %v831 = vsub.f32 %v569, %v787
  %v832 = vsub.f32 %v574, %v787
  %v833 = vsub.f32 %v577, %v787
  %v834 = vsub.f32 %v582, %v787
  %v835 = vsub.f32 %v585, %v787
  %v836 = vsub.f32 %v590, %v787
  %v837 = vsub.f32 %v593, %v787
  %v838 = vsub.f32 %v598, %v787
  %v839 = vsub.f32 %v601, %v787
  %v840 = vsub.f32 %v606, %v787
  %v841 = vsub.f32 %v609, %v787
  %v842 = vsub.f32 %v614, %v787
  %v843 = vsub.f32 %v617, %v787
  %v844 = vsub.f32 %v622, %v787
  %v845 = vsub.f32 %v625, %v787
  %v846 = vsub.f32 %v630, %v787
  %v847 = vsub.f32 %v633, %v787
  %v848 = vsub.f32 %v638, %v787
  %v849 = vsub.f32 %v641, %v787
  %v850 = vsub.f32 %v646, %v787
  %v851 = vsub.f32 %v649, %v787
  %v852 = vmul.f32 %v788, %v788
  %v853 = vmul.f32 %v789, %v789
  %v854 = vmul.f32 %v790, %v790
  %v855 = vmul.f32 %v791, %v791
  %v856 = vmul.f32 %v792, %v792
  %v857 = vmul.f32 %v793, %v793
  %v858 = vmul.f32 %v794, %v794
  %v859 = vmul.f32 %v795, %v795
  %v860 = vmul.f32 %v796, %v796
  %v861 = vmul.f32 %v797, %v797
  %v862 = vmul.f32 %v798, %v798
  %v863 = vmul.f32 %v799, %v799
  %v864 = vmul.f32 %v800, %v800
  %v865 = vmul.f32 %v801, %v801
  %v866 = vmul.f32 %v802, %v802
  %v867 = vmul.f32 %v803, %v803
  %v868 = vmul.f32 %v804, %v804
  %v869 = vmul.f32 %v805, %v805
  %v870 = vmul.f32 %v806, %v806
  %v871 = vmul.f32 %v807, %v807
  %v872 = vmul.f32 %v808, %v808
  %v873 = vmul.f32 %v809, %v809
  %v874 = vmul.f32 %v810, %v810
  %v875 = vmul.f32 %v811, %v811
  %v876 = vmul.f32 %v812, %v812
  %v877 = vmul.f32 %v813, %v813
  %v878 = vmul.f32 %v814, %v814
  %v879 = vmul.f32 %v815, %v815
  %v880 = vmul.f32 %v816, %v816
  %v881 = vmul.f32 %v817, %v817
  %v882 = vmul.f32 %v818, %v818
  %v883 = vmul.f32 %v819, %v819
  %v884 = vmul.f32 %v820, %v820
  %v885 = vmul.f32 %v821, %v821
  %v886 = vmul.f32 %v822, %v822
  %v887 = vmul.f32 %v823, %v823
  %v888 = vmul.f32 %v824, %v824
  %v889 = vmul.f32 %v825, %v825
  %v890 = vmul.f32 %v826, %v826
  %v891 = vmul.f32 %v827, %v827
  %v892 = vmul.f32 %v828, %v828
  %v893 = vmul.f32 %v829, %v829
  %v894 = vmul.f32 %v830, %v830
  %v895 = vmul.f32 %v831, %v831
  %v896 = vmul.f32 %v832, %v832
  %v897 = vmul.f32 %v833, %v833
  %v898 = vmul.f32 %v834, %v834
  %v899 = vmul.f32 %v835, %v835
  %v900 = vmul.f32 %v836, %v836
  %v901 = vmul.f32 %v837, %v837
  %v902 = vmul.f32 %v838, %v838
  %v903 = vmul.f32 %v839, %v839
  %v904 = vmul.f32 %v840, %v840
  %v905 = vmul.f32 %v841, %v841
  %v906 = vmul.f32 %v842, %v842
  %v907 = vmul.f32 %v843, %v843
  %v908 = vmul.f32 %v844, %v844
  %v909 = vmul.f32 %v845, %v845
  %v910 = vmul.f32 %v846, %v846
  %v911 = vmul.f32 %v847, %v847
  %v912 = vmul.f32 %v848, %v848
  %v913 = vmul.f32 %v849, %v849
  %v914 = vmul.f32 %v850, %v850
  %v915 = vmul.f32 %v851, %v851
  %v916 = vsel %vm652, %v852, 0.0
  %v917 = vsel %vm652, %v853, 0.0
  %v918 = vadd.f32 %v916, %v917
  %v919 = vsel %vm652, %v854, 0.0
  %v920 = vadd.f32 %v918, %v919
  %v921 = vsel %vm652, %v855, 0.0
  %v922 = vadd.f32 %v920, %v921
  %v923 = vsel %vm652, %v856, 0.0
  %v924 = vadd.f32 %v922, %v923
  %v925 = vsel %vm652, %v857, 0.0
  %v926 = vadd.f32 %v924, %v925
  %v927 = vsel %vm652, %v858, 0.0
  %v928 = vadd.f32 %v926, %v927
  %v929 = vsel %vm652, %v859, 0.0
  %v930 = vadd.f32 %v928, %v929
  %v931 = vsel %vm652, %v860, 0.0
  %v932 = vadd.f32 %v930, %v931
  %v933 = vsel %vm652, %v861, 0.0
  %v934 = vadd.f32 %v932, %v933
  %v935 = vsel %vm652, %v862, 0.0
  %v936 = vadd.f32 %v934, %v935
  %v937 = vsel %vm652, %v863, 0.0
  %v938 = vadd.f32 %v936, %v937
  %v939 = vsel %vm652, %v864, 0.0
  %v940 = vadd.f32 %v938, %v939
  %v941 = vsel %vm652, %v865, 0.0
  %v942 = vadd.f32 %v940, %v941
  %v943 = vsel %vm652, %v866, 0.0
  %v944 = vadd.f32 %v942, %v943
  %v945 = vsel %vm652, %v867, 0.0
  %v946 = vadd.f32 %v944, %v945
  %v947 = vsel %vm652, %v868, 0.0
  %v948 = vadd.f32 %v946, %v947
  %v949 = vsel %vm652, %v869, 0.0
  %v950 = vadd.f32 %v948, %v949
  %v951 = vsel %vm652, %v870, 0.0
  %v952 = vadd.f32 %v950, %v951
  %v953 = vsel %vm652, %v871, 0.0
  %v954 = vadd.f32 %v952, %v953
  %v955 = vsel %vm652, %v872, 0.0
  %v956 = vadd.f32 %v954, %v955
  %v957 = vsel %vm652, %v873, 0.0
  %v958 = vadd.f32 %v956, %v957
  %v959 = vsel %vm652, %v874, 0.0
  %v960 = vadd.f32 %v958, %v959
  %v961 = vsel %vm652, %v875, 0.0
  %v962 = vadd.f32 %v960, %v961
  %v963 = vsel %vm652, %v876, 0.0
  %v964 = vadd.f32 %v962, %v963
  %v965 = vsel %vm652, %v877, 0.0
  %v966 = vadd.f32 %v964, %v965
  %v967 = vsel %vm652, %v878, 0.0
  %v968 = vadd.f32 %v966, %v967
  %v969 = vsel %vm652, %v879, 0.0
  %v970 = vadd.f32 %v968, %v969
  %v971 = vsel %vm652, %v880, 0.0
  %v972 = vadd.f32 %v970, %v971
  %v973 = vsel %vm652, %v881, 0.0
  %v974 = vadd.f32 %v972, %v973
  %v975 = vsel %vm652, %v882, 0.0
  %v976 = vadd.f32 %v974, %v975
  %v977 = vsel %vm652, %v883, 0.0
  %v978 = vadd.f32 %v976, %v977
  %v979 = vsel %vm652, %v884, 0.0
  %v980 = vadd.f32 %v978, %v979
  %v981 = vsel %vm652, %v885, 0.0
  %v982 = vadd.f32 %v980, %v981
  %v983 = vsel %vm652, %v886, 0.0
  %v984 = vadd.f32 %v982, %v983
  %v985 = vsel %vm652, %v887, 0.0
  %v986 = vadd.f32 %v984, %v985
  %v987 = vsel %vm652, %v888, 0.0
  %v988 = vadd.f32 %v986, %v987
  %v989 = vsel %vm652, %v889, 0.0
  %v990 = vadd.f32 %v988, %v989
  %v991 = vsel %vm652, %v890, 0.0
  %v992 = vadd.f32 %v990, %v991
  %v993 = vsel %vm652, %v891, 0.0
  %v994 = vadd.f32 %v992, %v993
  %v995 = vsel %vm652, %v892, 0.0
  %v996 = vadd.f32 %v994, %v995
  %v997 = vsel %vm652, %v893, 0.0
  %v998 = vadd.f32 %v996, %v997
  %v999 = vsel %vm652, %v894, 0.0
  %v1000 = vadd.f32 %v998, %v999
  %v1001 = vsel %vm652, %v895, 0.0
  %v1002 = vadd.f32 %v1000, %v1001
  %v1003 = vsel %vm652, %v896, 0.0
  %v1004 = vadd.f32 %v1002, %v1003
  %v1005 = vsel %vm652, %v897, 0.0
  %v1006 = vadd.f32 %v1004, %v1005
  %v1007 = vsel %vm652, %v898, 0.0
  %v1008 = vadd.f32 %v1006, %v1007
  %v1009 = vsel %vm652, %v899, 0.0
  %v1010 = vadd.f32 %v1008, %v1009
  %v1011 = vsel %vm652, %v900, 0.0
  %v1012 = vadd.f32 %v1010, %v1011
  %v1013 = vsel %vm652, %v901, 0.0
  %v1014 = vadd.f32 %v1012, %v1013
  %v1015 = vsel %vm652, %v902, 0.0
  %v1016 = vadd.f32 %v1014, %v1015
  %v1017 = vsel %vm652, %v903, 0.0
  %v1018 = vadd.f32 %v1016, %v1017
  %v1019 = vsel %vm652, %v904, 0.0
  %v1020 = vadd.f32 %v1018, %v1019
  %v1021 = vsel %vm652, %v905, 0.0
  %v1022 = vadd.f32 %v1020, %v1021
  %v1023 = vsel %vm652, %v906, 0.0
  %v1024 = vadd.f32 %v1022, %v1023
  %v1025 = vsel %vm652, %v907, 0.0
  %v1026 = vadd.f32 %v1024, %v1025
  %v1027 = vsel %vm652, %v908, 0.0
  %v1028 = vadd.f32 %v1026, %v1027
  %v1029 = vsel %vm652, %v909, 0.0
  %v1030 = vadd.f32 %v1028, %v1029
  %v1031 = vsel %vm652, %v910, 0.0
  %v1032 = vadd.f32 %v1030, %v1031
  %v1033 = vsel %vm652, %v911, 0.0
  %v1034 = vadd.f32 %v1032, %v1033
  %v1035 = vsel %vm652, %v912, 0.0
  %v1036 = vadd.f32 %v1034, %v1035
  %v1037 = vsel %vm652, %v913, 0.0
  %v1038 = vadd.f32 %v1036, %v1037
  %v1039 = vsel %vm652, %v914, 0.0
  %v1040 = vadd.f32 %v1038, %v1039
  %v1041 = vsel %vm652, %v915, 0.0
  %v1042 = vadd.f32 %v1040, %v1041
  %v1043 = vrot.slane %v1042, 4
  %v1044 = vadd.f32 %v1042, %v1043
  %v1045 = vrot.slane %v1044, 2
  %v1046 = vadd.f32 %v1044, %v1045
  %v1047 = vrot.slane %v1046, 1
  %v1048 = vadd.f32 %v1046, %v1047
  %v1049 = vmul.f32 %v1048, %v786
  %v1050 = vld [vmem:[%s2] sm:$0x1]
  %v1051 = vadd.f32 %v1049, 1e-05
  %v1052 = vrsqrt.pop %v1051
  %v1053 = vmul.f32 %v1050, %v1052
  %v1055 = vlaneseq
  %v1056 = vshrl.u32 %v1055, 7
  %v1057 = vsub.s32 0, %v1056
  %v1058 = vrot.slane %v1053, %v1057
  %v1060 = vmul.f32 %v788, %v1058
  %v1061 = vmul.f32 %v789, %v1058
  %v1062 = vmul.f32 %v790, %v1058
  %v1063 = vmul.f32 %v791, %v1058
  %v1064 = vmul.f32 %v792, %v1058
  %v1065 = vmul.f32 %v793, %v1058
  %v1066 = vmul.f32 %v794, %v1058
  %v1067 = vmul.f32 %v795, %v1058
  %v1068 = vmul.f32 %v796, %v1058
  %v1069 = vmul.f32 %v797, %v1058
  %v1070 = vmul.f32 %v798, %v1058
  %v1071 = vmul.f32 %v799, %v1058
  %v1072 = vmul.f32 %v800, %v1058
  %v1073 = vmul.f32 %v801, %v1058
  %v1074 = vmul.f32 %v802, %v1058
  %v1075 = vmul.f32 %v803, %v1058
  %v1076 = vmul.f32 %v804, %v1058
  %v1077 = vmul.f32 %v805, %v1058
  %v1078 = vmul.f32 %v806, %v1058
  %v1079 = vmul.f32 %v807, %v1058
  %v1080 = vmul.f32 %v808, %v1058
  %v1081 = vmul.f32 %v809, %v1058
  %v1082 = vmul.f32 %v810, %v1058
  %v1083 = vmul.f32 %v811, %v1058
  %v1084 = vmul.f32 %v812, %v1058
  %v1085 = vmul.f32 %v813, %v1058
  %v1086 = vmul.f32 %v814, %v1058
  %v1087 = vmul.f32 %v815, %v1058
  %v1088 = vmul.f32 %v816, %v1058
  %v1089 = vmul.f32 %v817, %v1058
  %v1090 = vmul.f32 %v818, %v1058
  %v1091 = vmul.f32 %v819, %v1058
  %v1092 = vmul.f32 %v820, %v1058
  %v1093 = vmul.f32 %v821, %v1058
  %v1094 = vmul.f32 %v822, %v1058
  %v1095 = vmul.f32 %v823, %v1058
  %v1096 = vmul.f32 %v824, %v1058
  %v1097 = vmul.f32 %v825, %v1058
  %v1098 = vmul.f32 %v826, %v1058
  %v1099 = vmul.f32 %v827, %v1058
  %v1100 = vmul.f32 %v828, %v1058
  %v1101 = vmul.f32 %v829, %v1058
  %v1102 = vmul.f32 %v830, %v1058
  %v1103 = vmul.f32 %v831, %v1058
  %v1104 = vmul.f32 %v832, %v1058
  %v1105 = vmul.f32 %v833, %v1058
  %v1106 = vmul.f32 %v834, %v1058
  %v1107 = vmul.f32 %v835, %v1058
  %v1108 = vmul.f32 %v836, %v1058
  %v1109 = vmul.f32 %v837, %v1058
  %v1110 = vmul.f32 %v838, %v1058
  %v1111 = vmul.f32 %v839, %v1058
  %v1112 = vmul.f32 %v840, %v1058
  %v1113 = vmul.f32 %v841, %v1058
  %v1114 = vmul.f32 %v842, %v1058
  %v1115 = vmul.f32 %v843, %v1058
  %v1116 = vmul.f32 %v844, %v1058
  %v1117 = vmul.f32 %v845, %v1058
  %v1118 = vmul.f32 %v846, %v1058
  %v1119 = vmul.f32 %v847, %v1058
  %v1120 = vmul.f32 %v848, %v1058
  %v1121 = vmul.f32 %v849, %v1058
  %v1122 = vmul.f32 %v850, %v1058
  %v1123 = vmul.f32 %v851, %v1058
  %v1124 = vld [vmem:[%s3] sm:$0x1]
  %v1126 = vlaneseq
  %v1127 = vshrl.u32 %v1126, 7
  %v1128 = vsub.s32 0, %v1127
  %v1129 = vrot.slane %v1124, %v1128
  %v1131 = vadd.f32 %v1060, %v1129
  %v1132 = vadd.f32 %v1061, %v1129
  %v1133 = vadd.f32 %v1062, %v1129
  %v1134 = vadd.f32 %v1063, %v1129
  %v1135 = vadd.f32 %v1064, %v1129
  %v1136 = vadd.f32 %v1065, %v1129
  %v1137 = vadd.f32 %v1066, %v1129
  %v1138 = vadd.f32 %v1067, %v1129
  %v1139 = vadd.f32 %v1068, %v1129
  %v1140 = vadd.f32 %v1069, %v1129
  %v1141 = vadd.f32 %v1070, %v1129
  %v1142 = vadd.f32 %v1071, %v1129
  %v1143 = vadd.f32 %v1072, %v1129
  %v1144 = vadd.f32 %v1073, %v1129
  %v1145 = vadd.f32 %v1074, %v1129
  %v1146 = vadd.f32 %v1075, %v1129
  %v1147 = vadd.f32 %v1076, %v1129
  %v1148 = vadd.f32 %v1077, %v1129
  %v1149 = vadd.f32 %v1078, %v1129
  %v1150 = vadd.f32 %v1079, %v1129
  %v1151 = vadd.f32 %v1080, %v1129
  %v1152 = vadd.f32 %v1081, %v1129
  %v1153 = vadd.f32 %v1082, %v1129
  %v1154 = vadd.f32 %v1083, %v1129
  %v1155 = vadd.f32 %v1084, %v1129
  %v1156 = vadd.f32 %v1085, %v1129
  %v1157 = vadd.f32 %v1086, %v1129
  %v1158 = vadd.f32 %v1087, %v1129
  %v1159 = vadd.f32 %v1088, %v1129
  %v1160 = vadd.f32 %v1089, %v1129
  %v1161 = vadd.f32 %v1090, %v1129
  %v1162 = vadd.f32 %v1091, %v1129
  %v1163 = vadd.f32 %v1092, %v1129
  %v1164 = vadd.f32 %v1093, %v1129
  %v1165 = vadd.f32 %v1094, %v1129
  %v1166 = vadd.f32 %v1095, %v1129
  %v1167 = vadd.f32 %v1096, %v1129
  %v1168 = vadd.f32 %v1097, %v1129
  %v1169 = vadd.f32 %v1098, %v1129
  %v1170 = vadd.f32 %v1099, %v1129
  %v1171 = vadd.f32 %v1100, %v1129
  %v1172 = vadd.f32 %v1101, %v1129
  %v1173 = vadd.f32 %v1102, %v1129
  %v1174 = vadd.f32 %v1103, %v1129
  %v1175 = vadd.f32 %v1104, %v1129
  %v1176 = vadd.f32 %v1105, %v1129
  %v1177 = vadd.f32 %v1106, %v1129
  %v1178 = vadd.f32 %v1107, %v1129
  %v1179 = vadd.f32 %v1108, %v1129
  %v1180 = vadd.f32 %v1109, %v1129
  %v1181 = vadd.f32 %v1110, %v1129
  %v1182 = vadd.f32 %v1111, %v1129
  %v1183 = vadd.f32 %v1112, %v1129
  %v1184 = vadd.f32 %v1113, %v1129
  %v1185 = vadd.f32 %v1114, %v1129
  %v1186 = vadd.f32 %v1115, %v1129
  %v1187 = vadd.f32 %v1116, %v1129
  %v1188 = vadd.f32 %v1117, %v1129
  %v1189 = vadd.f32 %v1118, %v1129
  %v1190 = vadd.f32 %v1119, %v1129
  %v1191 = vadd.f32 %v1120, %v1129
  %v1192 = vadd.f32 %v1121, %v1129
  %v1193 = vadd.f32 %v1122, %v1129
  %v1194 = vadd.f32 %v1123, %v1129
  %vm1195 = vcmp.ge.f32.partialorder %v1131, 0.0
  %vm1196 = vcmp.ge.f32.partialorder %v1132, 0.0
  %vm1197 = vcmp.ge.f32.partialorder %v1133, 0.0
  %vm1198 = vcmp.ge.f32.partialorder %v1134, 0.0
  %vm1199 = vcmp.ge.f32.partialorder %v1135, 0.0
  %vm1200 = vcmp.ge.f32.partialorder %v1136, 0.0
  %vm1201 = vcmp.ge.f32.partialorder %v1137, 0.0
  %vm1202 = vcmp.ge.f32.partialorder %v1138, 0.0
  %vm1203 = vcmp.ge.f32.partialorder %v1139, 0.0
  %vm1204 = vcmp.ge.f32.partialorder %v1140, 0.0
  %vm1205 = vcmp.ge.f32.partialorder %v1141, 0.0
  %vm1206 = vcmp.ge.f32.partialorder %v1142, 0.0
  %vm1207 = vcmp.ge.f32.partialorder %v1143, 0.0
  %vm1208 = vcmp.ge.f32.partialorder %v1144, 0.0
  %vm1209 = vcmp.ge.f32.partialorder %v1145, 0.0
  %vm1210 = vcmp.ge.f32.partialorder %v1146, 0.0
  %vm1211 = vcmp.ge.f32.partialorder %v1147, 0.0
  %vm1212 = vcmp.ge.f32.partialorder %v1148, 0.0
  %vm1213 = vcmp.ge.f32.partialorder %v1149, 0.0
  %vm1214 = vcmp.ge.f32.partialorder %v1150, 0.0
  %vm1215 = vcmp.ge.f32.partialorder %v1151, 0.0
  %vm1216 = vcmp.ge.f32.partialorder %v1152, 0.0
  %vm1217 = vcmp.ge.f32.partialorder %v1153, 0.0
  %vm1218 = vcmp.ge.f32.partialorder %v1154, 0.0
  %vm1219 = vcmp.ge.f32.partialorder %v1155, 0.0
  %vm1220 = vcmp.ge.f32.partialorder %v1156, 0.0
  %vm1221 = vcmp.ge.f32.partialorder %v1157, 0.0
  %vm1222 = vcmp.ge.f32.partialorder %v1158, 0.0
  %vm1223 = vcmp.ge.f32.partialorder %v1159, 0.0
  %vm1224 = vcmp.ge.f32.partialorder %v1160, 0.0
  %vm1225 = vcmp.ge.f32.partialorder %v1161, 0.0
  %vm1226 = vcmp.ge.f32.partialorder %v1162, 0.0
  %vm1227 = vcmp.ge.f32.partialorder %v1163, 0.0
  %vm1228 = vcmp.ge.f32.partialorder %v1164, 0.0
  %vm1229 = vcmp.ge.f32.partialorder %v1165, 0.0
  %vm1230 = vcmp.ge.f32.partialorder %v1166, 0.0
  %vm1231 = vcmp.ge.f32.partialorder %v1167, 0.0
  %vm1232 = vcmp.ge.f32.partialorder %v1168, 0.0
  %vm1233 = vcmp.ge.f32.partialorder %v1169, 0.0
  %vm1234 = vcmp.ge.f32.partialorder %v1170, 0.0
  %vm1235 = vcmp.ge.f32.partialorder %v1171, 0.0
  %vm1236 = vcmp.ge.f32.partialorder %v1172, 0.0
  %vm1237 = vcmp.ge.f32.partialorder %v1173, 0.0
  %vm1238 = vcmp.ge.f32.partialorder %v1174, 0.0
  %vm1239 = vcmp.ge.f32.partialorder %v1175, 0.0
  %vm1240 = vcmp.ge.f32.partialorder %v1176, 0.0
  %vm1241 = vcmp.ge.f32.partialorder %v1177, 0.0
  %vm1242 = vcmp.ge.f32.partialorder %v1178, 0.0
  %vm1243 = vcmp.ge.f32.partialorder %v1179, 0.0
  %vm1244 = vcmp.ge.f32.partialorder %v1180, 0.0
  %vm1245 = vcmp.ge.f32.partialorder %v1181, 0.0
  %vm1246 = vcmp.ge.f32.partialorder %v1182, 0.0
  %vm1247 = vcmp.ge.f32.partialorder %v1183, 0.0
  %vm1248 = vcmp.ge.f32.partialorder %v1184, 0.0
  %vm1249 = vcmp.ge.f32.partialorder %v1185, 0.0
  %vm1250 = vcmp.ge.f32.partialorder %v1186, 0.0
  %vm1251 = vcmp.ge.f32.partialorder %v1187, 0.0
  %vm1252 = vcmp.ge.f32.partialorder %v1188, 0.0
  %vm1253 = vcmp.ge.f32.partialorder %v1189, 0.0
  %vm1254 = vcmp.ge.f32.partialorder %v1190, 0.0
  %vm1255 = vcmp.ge.f32.partialorder %v1191, 0.0
  %vm1256 = vcmp.ge.f32.partialorder %v1192, 0.0
  %vm1257 = vcmp.ge.f32.partialorder %v1193, 0.0
  %vm1258 = vcmp.ge.f32.partialorder %v1194, 0.0
  %v1259 = vmul.f32 %v1131, 0.2
  %v1260 = vmul.f32 %v1132, 0.2
  %v1261 = vmul.f32 %v1133, 0.2
  %v1262 = vmul.f32 %v1134, 0.2
  %v1263 = vmul.f32 %v1135, 0.2
  %v1264 = vmul.f32 %v1136, 0.2
  %v1265 = vmul.f32 %v1137, 0.2
  %v1266 = vmul.f32 %v1138, 0.2
  %v1267 = vmul.f32 %v1139, 0.2
  %v1268 = vmul.f32 %v1140, 0.2
  %v1269 = vmul.f32 %v1141, 0.2
  %v1270 = vmul.f32 %v1142, 0.2
  %v1271 = vmul.f32 %v1143, 0.2
  %v1272 = vmul.f32 %v1144, 0.2
  %v1273 = vmul.f32 %v1145, 0.2
  %v1274 = vmul.f32 %v1146, 0.2
  %v1275 = vmul.f32 %v1147, 0.2
  %v1276 = vmul.f32 %v1148, 0.2
  %v1277 = vmul.f32 %v1149, 0.2
  %v1278 = vmul.f32 %v1150, 0.2
  %v1279 = vmul.f32 %v1151, 0.2
  %v1280 = vmul.f32 %v1152, 0.2
  %v1281 = vmul.f32 %v1153, 0.2
  %v1282 = vmul.f32 %v1154, 0.2
  %v1283 = vmul.f32 %v1155, 0.2
  %v1284 = vmul.f32 %v1156, 0.2
  %v1285 = vmul.f32 %v1157, 0.2
  %v1286 = vmul.f32 %v1158, 0.2
  %v1287 = vmul.f32 %v1159, 0.2
  %v1288 = vmul.f32 %v1160, 0.2
  %v1289 = vmul.f32 %v1161, 0.2
  %v1290 = vmul.f32 %v1162, 0.2
  %v1291 = vmul.f32 %v1163, 0.2
  %v1292 = vmul.f32 %v1164, 0.2
  %v1293 = vmul.f32 %v1165, 0.2
  %v1294 = vmul.f32 %v1166, 0.2
  %v1295 = vmul.f32 %v1167, 0.2
  %v1296 = vmul.f32 %v1168, 0.2
  %v1297 = vmul.f32 %v1169, 0.2
  %v1298 = vmul.f32 %v1170, 0.2
  %v1299 = vmul.f32 %v1171, 0.2
  %v1300 = vmul.f32 %v1172, 0.2
  %v1301 = vmul.f32 %v1173, 0.2
  %v1302 = vmul.f32 %v1174, 0.2
  %v1303 = vmul.f32 %v1175, 0.2
  %v1304 = vmul.f32 %v1176, 0.2
  %v1305 = vmul.f32 %v1177, 0.2
  %v1306 = vmul.f32 %v1178, 0.2
  %v1307 = vmul.f32 %v1179, 0.2
  %v1308 = vmul.f32 %v1180, 0.2
  %v1309 = vmul.f32 %v1181, 0.2
  %v1310 = vmul.f32 %v1182, 0.2
  %v1311 = vmul.f32 %v1183, 0.2
  %v1312 = vmul.f32 %v1184, 0.2
  %v1313 = vmul.f32 %v1185, 0.2
  %v1314 = vmul.f32 %v1186, 0.2
  %v1315 = vmul.f32 %v1187, 0.2
  %v1316 = vmul.f32 %v1188, 0.2
  %v1317 = vmul.f32 %v1189, 0.2
  %v1318 = vmul.f32 %v1190, 0.2
  %v1319 = vmul.f32 %v1191, 0.2
  %v1320 = vmul.f32 %v1192, 0.2
  %v1321 = vmul.f32 %v1193, 0.2
  %v1322 = vmul.f32 %v1194, 0.2
  %v1323 = vsel %vm1195, %v1131, %v1259
  %v1324 = vsel %vm1196, %v1132, %v1260
  %v1325 = vsel %vm1197, %v1133, %v1261
  %v1326 = vsel %vm1198, %v1134, %v1262
  %v1327 = vsel %vm1199, %v1135, %v1263
  %v1328 = vsel %vm1200, %v1136, %v1264
  %v1329 = vsel %vm1201, %v1137, %v1265
  %v1330 = vsel %vm1202, %v1138, %v1266
  %v1331 = vsel %vm1203, %v1139, %v1267
  %v1332 = vsel %vm1204, %v1140, %v1268
  %v1333 = vsel %vm1205, %v1141, %v1269
  %v1334 = vsel %vm1206, %v1142, %v1270
  %v1335 = vsel %vm1207, %v1143, %v1271
  %v1336 = vsel %vm1208, %v1144, %v1272
  %v1337 = vsel %vm1209, %v1145, %v1273
  %v1338 = vsel %vm1210, %v1146, %v1274
  %v1339 = vsel %vm1211, %v1147, %v1275
  %v1340 = vsel %vm1212, %v1148, %v1276
  %v1341 = vsel %vm1213, %v1149, %v1277
  %v1342 = vsel %vm1214, %v1150, %v1278
  %v1343 = vsel %vm1215, %v1151, %v1279
  %v1344 = vsel %vm1216, %v1152, %v1280
  %v1345 = vsel %vm1217, %v1153, %v1281
  %v1346 = vsel %vm1218, %v1154, %v1282
  %v1347 = vsel %vm1219, %v1155, %v1283
  %v1348 = vsel %vm1220, %v1156, %v1284
  %v1349 = vsel %vm1221, %v1157, %v1285
  %v1350 = vsel %vm1222, %v1158, %v1286
  %v1351 = vsel %vm1223, %v1159, %v1287
  %v1352 = vsel %vm1224, %v1160, %v1288
  %v1353 = vsel %vm1225, %v1161, %v1289
  %v1354 = vsel %vm1226, %v1162, %v1290
  %v1355 = vsel %vm1227, %v1163, %v1291
  %v1356 = vsel %vm1228, %v1164, %v1292
  %v1357 = vsel %vm1229, %v1165, %v1293
  %v1358 = vsel %vm1230, %v1166, %v1294
  %v1359 = vsel %vm1231, %v1167, %v1295
  %v1360 = vsel %vm1232, %v1168, %v1296
  %v1361 = vsel %vm1233, %v1169, %v1297
  %v1362 = vsel %vm1234, %v1170, %v1298
  %v1363 = vsel %vm1235, %v1171, %v1299
  %v1364 = vsel %vm1236, %v1172, %v1300
  %v1365 = vsel %vm1237, %v1173, %v1301
  %v1366 = vsel %vm1238, %v1174, %v1302
  %v1367 = vsel %vm1239, %v1175, %v1303
  %v1368 = vsel %vm1240, %v1176, %v1304
  %v1369 = vsel %vm1241, %v1177, %v1305
  %v1370 = vsel %vm1242, %v1178, %v1306
  %v1371 = vsel %vm1243, %v1179, %v1307
  %v1372 = vsel %vm1244, %v1180, %v1308
  %v1373 = vsel %vm1245, %v1181, %v1309
  %v1374 = vsel %vm1246, %v1182, %v1310
  %v1375 = vsel %vm1247, %v1183, %v1311
  %v1376 = vsel %vm1248, %v1184, %v1312
  %v1377 = vsel %vm1249, %v1185, %v1313
  %v1378 = vsel %vm1250, %v1186, %v1314
  %v1379 = vsel %vm1251, %v1187, %v1315
  %v1380 = vsel %vm1252, %v1188, %v1316
  %v1381 = vsel %vm1253, %v1189, %v1317
  %v1382 = vsel %vm1254, %v1190, %v1318
  %v1383 = vsel %vm1255, %v1191, %v1319
  %v1384 = vsel %vm1256, %v1192, %v1320
  %v1385 = vsel %vm1257, %v1193, %v1321
  %v1386 = vsel %vm1258, %v1194, %v1322
  %1387 = vst.msk [vmem:[%s4] sm:$0xff] %vm652, %v1323
  %1388 = vst.msk [vmem:[%s4 + $0x8] sm:$0xff] %vm652, %v1324
  %1389 = vst.msk [vmem:[%s4 + $0x10] sm:$0xff] %vm652, %v1325
  %1390 = vst.msk [vmem:[%s4 + $0x18] sm:$0xff] %vm652, %v1326
  %1391 = vst.msk [vmem:[%s4 + $0x20] sm:$0xff] %vm652, %v1327
  %1392 = vst.msk [vmem:[%s4 + $0x28] sm:$0xff] %vm652, %v1328
  %1393 = vst.msk [vmem:[%s4 + $0x30] sm:$0xff] %vm652, %v1329
  %1394 = vst.msk [vmem:[%s4 + $0x38] sm:$0xff] %vm652, %v1330
  %1395 = vst.msk [vmem:[%s4 + $0x40] sm:$0xff] %vm652, %v1331
  %1396 = vst.msk [vmem:[%s4 + $0x48] sm:$0xff] %vm652, %v1332
  %1397 = vst.msk [vmem:[%s4 + $0x50] sm:$0xff] %vm652, %v1333
  %1398 = vst.msk [vmem:[%s4 + $0x58] sm:$0xff] %vm652, %v1334
  %1399 = vst.msk [vmem:[%s4 + $0x60] sm:$0xff] %vm652, %v1335
  %1400 = vst.msk [vmem:[%s4 + $0x68] sm:$0xff] %vm652, %v1336
  %1401 = vst.msk [vmem:[%s4 + $0x70] sm:$0xff] %vm652, %v1337
  %1402 = vst.msk [vmem:[%s4 + $0x78] sm:$0xff] %vm652, %v1338
  %1403 = vst.msk [vmem:[%s4 + $0x80] sm:$0xff] %vm652, %v1339
  %1404 = vst.msk [vmem:[%s4 + $0x88] sm:$0xff] %vm652, %v1340
  %1405 = vst.msk [vmem:[%s4 + $0x90] sm:$0xff] %vm652, %v1341
  %1406 = vst.msk [vmem:[%s4 + $0x98] sm:$0xff] %vm652, %v1342
  %1407 = vst.msk [vmem:[%s4 + $0xa0] sm:$0xff] %vm652, %v1343
  %1408 = vst.msk [vmem:[%s4 + $0xa8] sm:$0xff] %vm652, %v1344
  %1409 = vst.msk [vmem:[%s4 + $0xb0] sm:$0xff] %vm652, %v1345
  %1410 = vst.msk [vmem:[%s4 + $0xb8] sm:$0xff] %vm652, %v1346
  %1411 = vst.msk [vmem:[%s4 + $0xc0] sm:$0xff] %vm652, %v1347
  %1412 = vst.msk [vmem:[%s4 + $0xc8] sm:$0xff] %vm652, %v1348
  %1413 = vst.msk [vmem:[%s4 + $0xd0] sm:$0xff] %vm652, %v1349
  %1414 = vst.msk [vmem:[%s4 + $0xd8] sm:$0xff] %vm652, %v1350
  %1415 = vst.msk [vmem:[%s4 + $0xe0] sm:$0xff] %vm652, %v1351
  %1416 = vst.msk [vmem:[%s4 + $0xe8] sm:$0xff] %vm652, %v1352
  %1417 = vst.msk [vmem:[%s4 + $0xf0] sm:$0xff] %vm652, %v1353
  %1418 = vst.msk [vmem:[%s4 + $0xf8] sm:$0xff] %vm652, %v1354
  %1419 = vst.msk [vmem:[%s4 + $0x100] sm:$0xff] %vm652, %v1355
  %1420 = vst.msk [vmem:[%s4 + $0x108] sm:$0xff] %vm652, %v1356
  %1421 = vst.msk [vmem:[%s4 + $0x110] sm:$0xff] %vm652, %v1357
  %1422 = vst.msk [vmem:[%s4 + $0x118] sm:$0xff] %vm652, %v1358
  %1423 = vst.msk [vmem:[%s4 + $0x120] sm:$0xff] %vm652, %v1359
  %1424 = vst.msk [vmem:[%s4 + $0x128] sm:$0xff] %vm652, %v1360
  %1425 = vst.msk [vmem:[%s4 + $0x130] sm:$0xff] %vm652, %v1361
  %1426 = vst.msk [vmem:[%s4 + $0x138] sm:$0xff] %vm652, %v1362
  %1427 = vst.msk [vmem:[%s4 + $0x140] sm:$0xff] %vm652, %v1363
  %1428 = vst.msk [vmem:[%s4 + $0x148] sm:$0xff] %vm652, %v1364
  %1429 = vst.msk [vmem:[%s4 + $0x150] sm:$0xff] %vm652, %v1365
  %1430 = vst.msk [vmem:[%s4 + $0x158] sm:$0xff] %vm652, %v1366
  %1431 = vst.msk [vmem:[%s4 + $0x160] sm:$0xff] %vm652, %v1367
  %1432 = vst.msk [vmem:[%s4 + $0x168] sm:$0xff] %vm652, %v1368
  %1433 = vst.msk [vmem:[%s4 + $0x170] sm:$0xff] %vm652, %v1369
  %1434 = vst.msk [vmem:[%s4 + $0x178] sm:$0xff] %vm652, %v1370
  %1435 = vst.msk [vmem:[%s4 + $0x180] sm:$0xff] %vm652, %v1371
  %1436 = vst.msk [vmem:[%s4 + $0x188] sm:$0xff] %vm652, %v1372
  %1437 = vst.msk [vmem:[%s4 + $0x190] sm:$0xff] %vm652, %v1373
  %1438 = vst.msk [vmem:[%s4 + $0x198] sm:$0xff] %vm652, %v1374
  %1439 = vst.msk [vmem:[%s4 + $0x1a0] sm:$0xff] %vm652, %v1375
  %1440 = vst.msk [vmem:[%s4 + $0x1a8] sm:$0xff] %vm652, %v1376
  %1441 = vst.msk [vmem:[%s4 + $0x1b0] sm:$0xff] %vm652, %v1377
  %1442 = vst.msk [vmem:[%s4 + $0x1b8] sm:$0xff] %vm652, %v1378
  %1443 = vst.msk [vmem:[%s4 + $0x1c0] sm:$0xff] %vm652, %v1379
  %1444 = vst.msk [vmem:[%s4 + $0x1c8] sm:$0xff] %vm652, %v1380
  %1445 = vst.msk [vmem:[%s4 + $0x1d0] sm:$0xff] %vm652, %v1381
  %1446 = vst.msk [vmem:[%s4 + $0x1d8] sm:$0xff] %vm652, %v1382
  %1447 = vst.msk [vmem:[%s4 + $0x1e0] sm:$0xff] %vm652, %v1383
  %1448 = vst.msk [vmem:[%s4 + $0x1e8] sm:$0xff] %vm652, %v1384
  %1449 = vst.msk [vmem:[%s4 + $0x1f0] sm:$0xff] %vm652, %v1385
  %1450 = vst.msk [vmem:[%s4 + $0x1f8] sm:$0xff] %vm652, %v1386
  // Predicated region
  $region18: #{vae_forward.10} parent=0 // pred_check
    _
  $region19: #{vae_forward.10} parent=0 // pred_check_branch
    %1452 = sbr.rel (0) target = $region21
  $region20: #{vae_forward.10} parent=0 // pred_region
    _
  $region21: #{vae_forward.10} parent=0 // pred_fallthru
    _
  // Predicated region
  $region22: #{vae_forward.10} parent=0 // pred_check
    _
  $region23: #{vae_forward.10} parent=0 // pred_check_branch
    %1454 = sbr.rel (0) target = $region25
  $region24: #{vae_forward.10} parent=0 // pred_region
    _
  $region25: #{vae_forward.10} parent=0 // pred_fallthru
    _

// kernel: vae_forward.11
$region0: #{vae_forward.11}
  #allocation0 [shape = 'u32[]', space=smem, size = 0x4, offset = 0x4, fixed_abs, tag = 'smem constant byte address 0x4 - core index']
  #allocation1 [shape = 'u32[144,128]{1,0:T(1,128)}', space=vmem, size = 0x12000, scoped, tag = 'internal scratch']
  %s0 = inlined_call_operand.vmem [shape: bf16[128,512], index: 0, kind: input, shape index: {}]
  %s1 = inlined_call_operand.vmem [shape: bf16[512,64], index: 1, kind: input, shape index: {}]
  %s2 = inlined_call_operand.vmem [shape: f32[1,64], index: 2, kind: input, shape index: {}]
  %s3 = inlined_call_operand.vmem [shape: f32[1,64], index: 3, kind: input, shape index: {}]
  %s4 = inlined_call_operand.vmem [shape: f32[128,64], index: 4, kind: output, shape index: {}]
  %s5 = sld [smem:[#allocation0]]
  $region26: #{vae_forward.11} parent=0
    _
  %s7 = ssub.s32 1, %s5
  %s8 = scalar_select 0, %s7, %s5
  // Predicated region
  $region2: #{vae_forward.11} parent=0 // pred_check
    _
  $region3: #{vae_forward.11} parent=0 // pred_check_branch
    %10 = sbr.rel (0) target = $region5
  $region4: #{vae_forward.11} parent=0 // pred_region
    _
  $region5: #{vae_forward.11} parent=0 // pred_fallthru
    _
  // Predicated region
  $region6: #{vae_forward.11} parent=0 // pred_check
    _
  $region7: #{vae_forward.11} parent=0 // pred_check_branch
    %12 = sbr.rel (0) target = $region9
  $region8: #{vae_forward.11} parent=0 // pred_region
    _
  $region9: #{vae_forward.11} parent=0 // pred_fallthru
    _
  // Predicated region
  $region10: #{vae_forward.11} parent=0 // pred_check
    _
  $region11: #{vae_forward.11} parent=0 // pred_check_branch
    %14 = sbr.rel (0) target = $region13
  $region12: #{vae_forward.11} parent=0 // pred_region
    _
  $region13: #{vae_forward.11} parent=0 // pred_fallthru
    _
  // Predicated region
  $region14: #{vae_forward.11} parent=0 // pred_check
    _
  $region15: #{vae_forward.11} parent=0 // pred_check_branch
    %16 = sbr.rel (0) target = $region17
  $region16: #{vae_forward.11} parent=0 // pred_region
    _
  $region17: #{vae_forward.11} parent=0 // pred_fallthru
    _
  %v18 = vld [vmem:[%s0] sm:$0xff]
  %v19 = vld [vmem:[%s0 + $0x8] sm:$0xff]
  %v20 = vld [vmem:[%s0 + $0x10] sm:$0xff]
  %v21 = vld [vmem:[%s0 + $0x18] sm:$0xff]
  %v22 = vld [vmem:[%s0 + $0x20] sm:$0xff]
  %v23 = vld [vmem:[%s0 + $0x28] sm:$0xff]
  %v24 = vld [vmem:[%s0 + $0x30] sm:$0xff]
  %v25 = vld [vmem:[%s0 + $0x38] sm:$0xff]
  %v26 = vld [vmem:[%s0 + $0x40] sm:$0xff]
  %v27 = vld [vmem:[%s0 + $0x48] sm:$0xff]
  %v28 = vld [vmem:[%s0 + $0x50] sm:$0xff]
  %v29 = vld [vmem:[%s0 + $0x58] sm:$0xff]
  %v30 = vld [vmem:[%s0 + $0x60] sm:$0xff]
  %v31 = vld [vmem:[%s0 + $0x68] sm:$0xff]
  %v32 = vld [vmem:[%s0 + $0x70] sm:$0xff]
  %v33 = vld [vmem:[%s0 + $0x78] sm:$0xff]
  %v34 = vld [vmem:[%s0 + $0x80] sm:$0xff]
  %v35 = vld [vmem:[%s0 + $0x88] sm:$0xff]
  %v36 = vld [vmem:[%s0 + $0x90] sm:$0xff]
  %v37 = vld [vmem:[%s0 + $0x98] sm:$0xff]
  %v38 = vld [vmem:[%s0 + $0xa0] sm:$0xff]
  %v39 = vld [vmem:[%s0 + $0xa8] sm:$0xff]
  %v40 = vld [vmem:[%s0 + $0xb0] sm:$0xff]
  %v41 = vld [vmem:[%s0 + $0xb8] sm:$0xff]
  %v42 = vld [vmem:[%s0 + $0xc0] sm:$0xff]
  %v43 = vld [vmem:[%s0 + $0xc8] sm:$0xff]
  %v44 = vld [vmem:[%s0 + $0xd0] sm:$0xff]
  %v45 = vld [vmem:[%s0 + $0xd8] sm:$0xff]
  %v46 = vld [vmem:[%s0 + $0xe0] sm:$0xff]
  %v47 = vld [vmem:[%s0 + $0xe8] sm:$0xff]
  %v48 = vld [vmem:[%s0 + $0xf0] sm:$0xff]
  %v49 = vld [vmem:[%s0 + $0xf8] sm:$0xff]
  %v50 = vld [vmem:[%s1] sm:$0xf]
  %v51 = vld [vmem:[%s1 + $0x4] sm:$0xf]
  %v52 = vld [vmem:[%s1 + $0x8] sm:$0xf]
  %v53 = vld [vmem:[%s1 + $0xc] sm:$0xf]
  %v54 = vld [vmem:[%s1 + $0x10] sm:$0xf]
  %v55 = vld [vmem:[%s1 + $0x14] sm:$0xf]
  %v56 = vld [vmem:[%s1 + $0x18] sm:$0xf]
  %v57 = vld [vmem:[%s1 + $0x1c] sm:$0xf]
  %v58 = vld [vmem:[%s1 + $0x20] sm:$0xf]
  %v59 = vld [vmem:[%s1 + $0x24] sm:$0xf]
  %v60 = vld [vmem:[%s1 + $0x28] sm:$0xf]
  %v61 = vld [vmem:[%s1 + $0x2c] sm:$0xf]
  %v62 = vld [vmem:[%s1 + $0x30] sm:$0xf]
  %v63 = vld [vmem:[%s1 + $0x34] sm:$0xf]
  %v64 = vld [vmem:[%s1 + $0x38] sm:$0xf]
  %v65 = vld [vmem:[%s1 + $0x3c] sm:$0xf]
  %v66 = vld [vmem:[%s1 + $0x40] sm:$0xf]
  %v67 = vld [vmem:[%s1 + $0x44] sm:$0xf]
  %v68 = vld [vmem:[%s1 + $0x48] sm:$0xf]
  %v69 = vld [vmem:[%s1 + $0x4c] sm:$0xf]
  %v70 = vld [vmem:[%s1 + $0x50] sm:$0xf]
  %v71 = vld [vmem:[%s1 + $0x54] sm:$0xf]
  %v72 = vld [vmem:[%s1 + $0x58] sm:$0xf]
  %v73 = vld [vmem:[%s1 + $0x5c] sm:$0xf]
  %v74 = vld [vmem:[%s1 + $0x60] sm:$0xf]
  %v75 = vld [vmem:[%s1 + $0x64] sm:$0xf]
  %v76 = vld [vmem:[%s1 + $0x68] sm:$0xf]
  %v77 = vld [vmem:[%s1 + $0x6c] sm:$0xf]
  %v78 = vld [vmem:[%s1 + $0x70] sm:$0xf]
  %v79 = vld [vmem:[%s1 + $0x74] sm:$0xf]
  %v80 = vld [vmem:[%s1 + $0x78] sm:$0xf]
  %v81 = vld [vmem:[%s1 + $0x7c] sm:$0xf]
  %v82 = vld [vmem:[%s1 + $0x80] sm:$0xf]
  %v83 = vld [vmem:[%s1 + $0x84] sm:$0xf]
  %v84 = vld [vmem:[%s1 + $0x88] sm:$0xf]
  %v85 = vld [vmem:[%s1 + $0x8c] sm:$0xf]
  %v86 = vld [vmem:[%s1 + $0x90] sm:$0xf]
  %v87 = vld [vmem:[%s1 + $0x94] sm:$0xf]
  %v88 = vld [vmem:[%s1 + $0x98] sm:$0xf]
  %v89 = vld [vmem:[%s1 + $0x9c] sm:$0xf]
  %v90 = vld [vmem:[%s1 + $0xa0] sm:$0xf]
  %v91 = vld [vmem:[%s1 + $0xa4] sm:$0xf]
  %v92 = vld [vmem:[%s1 + $0xa8] sm:$0xf]
  %v93 = vld [vmem:[%s1 + $0xac] sm:$0xf]
  %v94 = vld [vmem:[%s1 + $0xb0] sm:$0xf]
  %v95 = vld [vmem:[%s1 + $0xb4] sm:$0xf]
  %v96 = vld [vmem:[%s1 + $0xb8] sm:$0xf]
  %v97 = vld [vmem:[%s1 + $0xbc] sm:$0xf]
  %v98 = vld [vmem:[%s1 + $0xc0] sm:$0xf]
  %v99 = vld [vmem:[%s1 + $0xc4] sm:$0xf]
  %v100 = vld [vmem:[%s1 + $0xc8] sm:$0xf]
  %v101 = vld [vmem:[%s1 + $0xcc] sm:$0xf]
  %v102 = vld [vmem:[%s1 + $0xd0] sm:$0xf]
  %v103 = vld [vmem:[%s1 + $0xd4] sm:$0xf]
  %v104 = vld [vmem:[%s1 + $0xd8] sm:$0xf]
  %v105 = vld [vmem:[%s1 + $0xdc] sm:$0xf]
  %v106 = vld [vmem:[%s1 + $0xe0] sm:$0xf]
  %v107 = vld [vmem:[%s1 + $0xe4] sm:$0xf]
  %v108 = vld [vmem:[%s1 + $0xe8] sm:$0xf]
  %v109 = vld [vmem:[%s1 + $0xec] sm:$0xf]
  %v110 = vld [vmem:[%s1 + $0xf0] sm:$0xf]
  %v111 = vld [vmem:[%s1 + $0xf4] sm:$0xf]
  %v112 = vld [vmem:[%s1 + $0xf8] sm:$0xf]
  %v113 = vld [vmem:[%s1 + $0xfc] sm:$0xf]
  %v146 = vunpack.c.l.b16 %v18
  %v147 = vunpack.c.h.b16 %v18
  %v148 = vunpack.c.l.b16 %v19
  %v149 = vunpack.c.h.b16 %v19
  %v150 = vunpack.c.l.b16 %v20
  %v151 = vunpack.c.h.b16 %v20
  %v152 = vunpack.c.l.b16 %v21
  %v153 = vunpack.c.h.b16 %v21
  %v154 = vunpack.c.l.b16 %v22
  %v155 = vunpack.c.h.b16 %v22
  %v156 = vunpack.c.l.b16 %v23
  %v157 = vunpack.c.h.b16 %v23
  %v158 = vunpack.c.l.b16 %v24
  %v159 = vunpack.c.h.b16 %v24
  %v160 = vunpack.c.l.b16 %v25
  %v161 = vunpack.c.h.b16 %v25
  %v162 = vunpack.c.l.b16 %v26
  %v163 = vunpack.c.h.b16 %v26
  %v164 = vunpack.c.l.b16 %v27
  %v165 = vunpack.c.h.b16 %v27
  %v166 = vunpack.c.l.b16 %v28
  %v167 = vunpack.c.h.b16 %v28
  %v168 = vunpack.c.l.b16 %v29
  %v169 = vunpack.c.h.b16 %v29
  %v170 = vunpack.c.l.b16 %v30
  %v171 = vunpack.c.h.b16 %v30
  %v172 = vunpack.c.l.b16 %v31
  %v173 = vunpack.c.h.b16 %v31
  %v174 = vunpack.c.l.b16 %v32
  %v175 = vunpack.c.h.b16 %v32
  %v176 = vunpack.c.l.b16 %v33
  %v177 = vunpack.c.h.b16 %v33
  %v178 = vunpack.c.l.b16 %v34
  %v179 = vunpack.c.h.b16 %v34
  %v180 = vunpack.c.l.b16 %v35
  %v181 = vunpack.c.h.b16 %v35
  %v182 = vunpack.c.l.b16 %v36
  %v183 = vunpack.c.h.b16 %v36
  %v184 = vunpack.c.l.b16 %v37
  %v185 = vunpack.c.h.b16 %v37
  %v186 = vunpack.c.l.b16 %v38
  %v187 = vunpack.c.h.b16 %v38
  %v188 = vunpack.c.l.b16 %v39
  %v189 = vunpack.c.h.b16 %v39
  %v190 = vunpack.c.l.b16 %v40
  %v191 = vunpack.c.h.b16 %v40
  %v192 = vunpack.c.l.b16 %v41
  %v193 = vunpack.c.h.b16 %v41
  %v194 = vunpack.c.l.b16 %v42
  %v195 = vunpack.c.h.b16 %v42
  %v196 = vunpack.c.l.b16 %v43
  %v197 = vunpack.c.h.b16 %v43
  %v198 = vunpack.c.l.b16 %v44
  %v199 = vunpack.c.h.b16 %v44
  %v200 = vunpack.c.l.b16 %v45
  %v201 = vunpack.c.h.b16 %v45
  %v202 = vunpack.c.l.b16 %v46
  %v203 = vunpack.c.h.b16 %v46
  %v204 = vunpack.c.l.b16 %v47
  %v205 = vunpack.c.h.b16 %v47
  %v206 = vunpack.c.l.b16 %v48
  %v207 = vunpack.c.h.b16 %v48
  %v208 = vunpack.c.l.b16 %v49
  %v209 = vunpack.c.h.b16 %v49
  %v210 = vpack.c.b16 %v150, %v146
  %v211 = vpack.c.b16 %v151, %v147
  %v212 = vpack.c.b16 %v152, %v148
  %v213 = vpack.c.b16 %v153, %v149
  %v214 = vpack.c.b16 %v158, %v154
  %v215 = vpack.c.b16 %v159, %v155
  %v216 = vpack.c.b16 %v160, %v156
  %v217 = vpack.c.b16 %v161, %v157
  %v218 = vpack.c.b16 %v166, %v162
  %v219 = vpack.c.b16 %v167, %v163
  %v220 = vpack.c.b16 %v168, %v164
  %v221 = vpack.c.b16 %v169, %v165
  %v222 = vpack.c.b16 %v174, %v170
  %v223 = vpack.c.b16 %v175, %v171
  %v224 = vpack.c.b16 %v176, %v172
  %v225 = vpack.c.b16 %v177, %v173
  %v226 = vpack.c.b16 %v182, %v178
  %v227 = vpack.c.b16 %v183, %v179
  %v228 = vpack.c.b16 %v184, %v180
  %v229 = vpack.c.b16 %v185, %v181
  %v230 = vpack.c.b16 %v190, %v186
  %v231 = vpack.c.b16 %v191, %v187
  %v232 = vpack.c.b16 %v192, %v188
  %v233 = vpack.c.b16 %v193, %v189
  %v234 = vpack.c.b16 %v198, %v194
  %v235 = vpack.c.b16 %v199, %v195
  %v236 = vpack.c.b16 %v200, %v196
  %v237 = vpack.c.b16 %v201, %v197
  %v238 = vpack.c.b16 %v206, %v202
  %v239 = vpack.c.b16 %v207, %v203
  %v240 = vpack.c.b16 %v208, %v204
  %v241 = vpack.c.b16 %v209, %v205
  %v338 = vunpack.c.l.b16 %v50
  %v339 = vunpack.c.l.b16 %v51
  %v340 = vunpack.c.l.b16 %v52
  %v341 = vunpack.c.l.b16 %v53
  %v342 = vunpack.c.l.b16 %v54
  %v343 = vunpack.c.l.b16 %v55
  %v344 = vunpack.c.l.b16 %v56
  %v345 = vunpack.c.l.b16 %v57
  %v346 = vunpack.c.l.b16 %v58
  %v347 = vunpack.c.l.b16 %v59
  %v348 = vunpack.c.l.b16 %v60
  %v349 = vunpack.c.l.b16 %v61
  %v350 = vunpack.c.l.b16 %v62
  %v351 = vunpack.c.l.b16 %v63
  %v352 = vunpack.c.l.b16 %v64
  %v353 = vunpack.c.l.b16 %v65
  %v354 = vunpack.c.l.b16 %v66
  %v355 = vunpack.c.l.b16 %v67
  %v356 = vunpack.c.l.b16 %v68
  %v357 = vunpack.c.l.b16 %v69
  %v358 = vunpack.c.l.b16 %v70
  %v359 = vunpack.c.l.b16 %v71
  %v360 = vunpack.c.l.b16 %v72
  %v361 = vunpack.c.l.b16 %v73
  %v362 = vunpack.c.l.b16 %v74
  %v363 = vunpack.c.l.b16 %v75
  %v364 = vunpack.c.l.b16 %v76
  %v365 = vunpack.c.l.b16 %v77
  %v366 = vunpack.c.l.b16 %v78
  %v367 = vunpack.c.l.b16 %v79
  %v368 = vunpack.c.l.b16 %v80
  %v369 = vunpack.c.l.b16 %v81
  %v370 = vunpack.c.l.b16 %v82
  %v371 = vunpack.c.l.b16 %v83
  %v372 = vunpack.c.l.b16 %v84
  %v373 = vunpack.c.l.b16 %v85
  %v374 = vunpack.c.l.b16 %v86
  %v375 = vunpack.c.l.b16 %v87
  %v376 = vunpack.c.l.b16 %v88
  %v377 = vunpack.c.l.b16 %v89
  %v378 = vunpack.c.l.b16 %v90
  %v379 = vunpack.c.l.b16 %v91
  %v380 = vunpack.c.l.b16 %v92
  %v381 = vunpack.c.l.b16 %v93
  %v382 = vunpack.c.l.b16 %v94
  %v383 = vunpack.c.l.b16 %v95
  %v384 = vunpack.c.l.b16 %v96
  %v385 = vunpack.c.l.b16 %v97
  %v386 = vunpack.c.l.b16 %v98
  %v387 = vunpack.c.l.b16 %v99
  %v388 = vunpack.c.l.b16 %v100
  %v389 = vunpack.c.l.b16 %v101
  %v390 = vunpack.c.l.b16 %v102
  %v391 = vunpack.c.l.b16 %v103
  %v392 = vunpack.c.l.b16 %v104
  %v393 = vunpack.c.l.b16 %v105
  %v394 = vunpack.c.l.b16 %v106
  %v395 = vunpack.c.l.b16 %v107
  %v396 = vunpack.c.l.b16 %v108
  %v397 = vunpack.c.l.b16 %v109
  %v398 = vunpack.c.l.b16 %v110
  %v399 = vunpack.c.l.b16 %v111
  %v400 = vunpack.c.l.b16 %v112
  %v401 = vunpack.c.l.b16 %v113
  %v402 = vpack.c.b16 %v339, %v338
  %v403 = vpack.c.b16 %v341, %v340
  %v404 = vpack.c.b16 %v343, %v342
  %v405 = vpack.c.b16 %v345, %v344
  %v406 = vpack.c.b16 %v347, %v346
  %v407 = vpack.c.b16 %v349, %v348
  %v408 = vpack.c.b16 %v351, %v350
  %v409 = vpack.c.b16 %v353, %v352
  %v410 = vpack.c.b16 %v355, %v354
  %v411 = vpack.c.b16 %v357, %v356
  %v412 = vpack.c.b16 %v359, %v358
  %v413 = vpack.c.b16 %v361, %v360
  %v414 = vpack.c.b16 %v363, %v362
  %v415 = vpack.c.b16 %v365, %v364
  %v416 = vpack.c.b16 %v367, %v366
  %v417 = vpack.c.b16 %v369, %v368
  %v418 = vpack.c.b16 %v371, %v370
  %v419 = vpack.c.b16 %v373, %v372
  %v420 = vpack.c.b16 %v375, %v374
  %v421 = vpack.c.b16 %v377, %v376
  %v422 = vpack.c.b16 %v379, %v378
  %v423 = vpack.c.b16 %v381, %v380
  %v424 = vpack.c.b16 %v383, %v382
  %v425 = vpack.c.b16 %v385, %v384
  %v426 = vpack.c.b16 %v387, %v386
  %v427 = vpack.c.b16 %v389, %v388
  %v428 = vpack.c.b16 %v391, %v390
  %v429 = vpack.c.b16 %v393, %v392
  %v430 = vpack.c.b16 %v395, %v394
  %v431 = vpack.c.b16 %v397, %v396
  %v432 = vpack.c.b16 %v399, %v398
  %v433 = vpack.c.b16 %v401, %v400
  %466 = vmatprep.subr.bf16.mxu0 0
  %467 = vmatpush1.bf16.msra.mxu0 %v402
  %468 = vmatprep.subr.bf16.mxu0 0
  %469 = vmatpush1.bf16.msra.mxu0 %v403
  %470 = vmatprep.subr.bf16.mxu0 0
  %471 = vmatpush1.bf16.msra.mxu0 %v404
  %472 = vmatprep.subr.bf16.mxu0 0
  %473 = vmatpush1.bf16.msra.mxu0 %v405
  %474 = vmatprep.subr.bf16.mxu0 0
  %475 = vmatpush1.bf16.msra.mxu0 %v406
  %476 = vmatprep.subr.bf16.mxu0 0
  %477 = vmatpush1.bf16.msra.mxu0 %v407
  %478 = vmatprep.subr.bf16.mxu0 0
  %479 = vmatpush1.bf16.msra.mxu0 %v408
  %480 = vmatprep.subr.bf16.mxu0 0
  %481 = vmatpush1.bf16.msra.mxu0 %v409
  %482 = vmatprep.subr.bf16.mxu0 0
  %483 = vmatpush1.bf16.msra.mxu0 %v410
  %484 = vmatprep.subr.bf16.mxu0 0
  %485 = vmatpush1.bf16.msra.mxu0 %v411
  %486 = vmatprep.subr.bf16.mxu0 0
  %487 = vmatpush1.bf16.msra.mxu0 %v412
  %488 = vmatprep.subr.bf16.mxu0 0
  %489 = vmatpush1.bf16.msra.mxu0 %v413
  %490 = vmatprep.subr.bf16.mxu0 0
  %491 = vmatpush1.bf16.msra.mxu0 %v414
  %492 = vmatprep.subr.bf16.mxu0 0
  %493 = vmatpush1.bf16.msra.mxu0 %v415
  %494 = vmatprep.subr.bf16.mxu0 0
  %495 = vmatpush1.bf16.msra.mxu0 %v416
  %496 = vmatprep.subr.bf16.mxu0 0
  %497 = vmatpush1.bf16.msra.mxu0 %v417
  %498 = vmatprep.mubr.bf16.mxu0 %v211
  %499 = vmatmul.mubr.bf16.gmra.mrb[0].mxu0 %v210
  %v500 = vpop.f32.mrb[0].mxu0
  %v501 = vadd.f32 0.0, %v500
  %v502 = vpop.f32.mrb[0].mxu0
  %v503 = vpop.f32.mrb[0].mxu0
  %v504 = vadd.f32 0.0, %v503
  %v505 = vpop.f32.mrb[0].mxu0
  %506 = vmatprep.mubr.bf16.mxu0 %v215
  %507 = vmatmul.mubr.bf16.gmra.mrb[0].mxu0 %v214
  %v508 = vpop.f32.mrb[0].mxu0
  %v509 = vadd.f32 0.0, %v508
  %v510 = vpop.f32.mrb[0].mxu0
  %v511 = vpop.f32.mrb[0].mxu0
  %v512 = vadd.f32 0.0, %v511
  %v513 = vpop.f32.mrb[0].mxu0
  %514 = vmatprep.mubr.bf16.mxu0 %v219
  %515 = vmatmul.mubr.bf16.gmra.mrb[0].mxu0 %v218
  %v516 = vpop.f32.mrb[0].mxu0
  %v517 = vadd.f32 0.0, %v516
  %v518 = vpop.f32.mrb[0].mxu0
  %v519 = vpop.f32.mrb[0].mxu0
  %v520 = vadd.f32 0.0, %v519
  %v521 = vpop.f32.mrb[0].mxu0
  %522 = vmatprep.mubr.bf16.mxu0 %v223
  %523 = vmatmul.mubr.bf16.gmra.mrb[0].mxu0 %v222
  %v524 = vpop.f32.mrb[0].mxu0
  %v525 = vadd.f32 0.0, %v524
  %v526 = vpop.f32.mrb[0].mxu0
  %v527 = vpop.f32.mrb[0].mxu0
  %v528 = vadd.f32 0.0, %v527
  %v529 = vpop.f32.mrb[0].mxu0
  %530 = vmatprep.mubr.bf16.mxu0 %v227
  %531 = vmatmul.mubr.bf16.gmra.mrb[0].mxu0 %v226
  %v532 = vpop.f32.mrb[0].mxu0
  %v533 = vadd.f32 0.0, %v532
  %v534 = vpop.f32.mrb[0].mxu0
  %v535 = vpop.f32.mrb[0].mxu0
  %v536 = vadd.f32 0.0, %v535
  %v537 = vpop.f32.mrb[0].mxu0
  %538 = vmatprep.mubr.bf16.mxu0 %v231
  %539 = vmatmul.mubr.bf16.gmra.mrb[0].mxu0 %v230
  %v540 = vpop.f32.mrb[0].mxu0
  %v541 = vadd.f32 0.0, %v540
  %v542 = vpop.f32.mrb[0].mxu0
  %v543 = vpop.f32.mrb[0].mxu0
  %v544 = vadd.f32 0.0, %v543
  %v545 = vpop.f32.mrb[0].mxu0
  %546 = vmatprep.mubr.bf16.mxu0 %v235
  %547 = vmatmul.mubr.bf16.gmra.mrb[0].mxu0 %v234
  %v548 = vpop.f32.mrb[0].mxu0
  %v549 = vadd.f32 0.0, %v548
  %v550 = vpop.f32.mrb[0].mxu0
  %v551 = vpop.f32.mrb[0].mxu0
  %v552 = vadd.f32 0.0, %v551
  %v553 = vpop.f32.mrb[0].mxu0
  %554 = vmatprep.mubr.bf16.mxu0 %v239
  %555 = vmatmul.mubr.bf16.gmra.mrb[0].mxu0 %v238
  %v556 = vpop.f32.mrb[0].mxu0
  %v557 = vadd.f32 0.0, %v556
  %v558 = vpop.f32.mrb[0].mxu0
  %v559 = vpop.f32.mrb[0].mxu0
  %v560 = vadd.f32 0.0, %v559
  %v561 = vpop.f32.mrb[0].mxu0
  %562 = vdwg.mxu0
  %563 = vmatprep.subr.bf16.mxu0 0
  %564 = vmatpush1.bf16.msra.mxu0 %v418
  %565 = vmatprep.subr.bf16.mxu0 0
  %566 = vmatpush1.bf16.msra.mxu0 %v419
  %567 = vmatprep.subr.bf16.mxu0 0
  %568 = vmatpush1.bf16.msra.mxu0 %v420
  %569 = vmatprep.subr.bf16.mxu0 0
  %570 = vmatpush1.bf16.msra.mxu0 %v421
  %571 = vmatprep.subr.bf16.mxu0 0
  %572 = vmatpush1.bf16.msra.mxu0 %v422
  %573 = vmatprep.subr.bf16.mxu0 0
  %574 = vmatpush1.bf16.msra.mxu0 %v423
  %575 = vmatprep.subr.bf16.mxu0 0
  %576 = vmatpush1.bf16.msra.mxu0 %v424
  %577 = vmatprep.subr.bf16.mxu0 0
  %578 = vmatpush1.bf16.msra.mxu0 %v425
  %579 = vmatprep.subr.bf16.mxu0 0
  %580 = vmatpush1.bf16.msra.mxu0 %v426
  %581 = vmatprep.subr.bf16.mxu0 0
  %582 = vmatpush1.bf16.msra.mxu0 %v427
  %583 = vmatprep.subr.bf16.mxu0 0
  %584 = vmatpush1.bf16.msra.mxu0 %v428
  %585 = vmatprep.subr.bf16.mxu0 0
  %586 = vmatpush1.bf16.msra.mxu0 %v429
  %587 = vmatprep.subr.bf16.mxu0 0
  %588 = vmatpush1.bf16.msra.mxu0 %v430
  %589 = vmatprep.subr.bf16.mxu0 0
  %590 = vmatpush1.bf16.msra.mxu0 %v431
  %591 = vmatprep.subr.bf16.mxu0 0
  %592 = vmatpush1.bf16.msra.mxu0 %v432
  %593 = vmatprep.subr.bf16.mxu0 0
  %594 = vmatpush1.bf16.msra.mxu0 %v433
  %595 = vmatprep.mubr.bf16.mxu0 %v213
  %596 = vmatmul.mubr.bf16.gmra.mrb[0].mxu0 %v212
  %v597 = vpop.f32.mrb[0].mxu0
  %v598 = vadd.f32 %v501, %v597
  %v599 = vpop.f32.mrb[0].mxu0
  %v600 = vpop.f32.mrb[0].mxu0
  %v601 = vadd.f32 %v504, %v600
  %v602 = vpop.f32.mrb[0].mxu0
  %603 = vmatprep.mubr.bf16.mxu0 %v217
  %604 = vmatmul.mubr.bf16.gmra.mrb[0].mxu0 %v216
  %v605 = vpop.f32.mrb[0].mxu0
  %v606 = vadd.f32 %v509, %v605
  %v607 = vpop.f32.mrb[0].mxu0
  %v608 = vpop.f32.mrb[0].mxu0
  %v609 = vadd.f32 %v512, %v608
  %v610 = vpop.f32.mrb[0].mxu0
  %611 = vmatprep.mubr.bf16.mxu0 %v221
  %612 = vmatmul.mubr.bf16.gmra.mrb[0].mxu0 %v220
  %v613 = vpop.f32.mrb[0].mxu0
  %v614 = vadd.f32 %v517, %v613
  %v615 = vpop.f32.mrb[0].mxu0
  %v616 = vpop.f32.mrb[0].mxu0
  %v617 = vadd.f32 %v520, %v616
  %v618 = vpop.f32.mrb[0].mxu0
  %619 = vmatprep.mubr.bf16.mxu0 %v225
  %620 = vmatmul.mubr.bf16.gmra.mrb[0].mxu0 %v224
  %v621 = vpop.f32.mrb[0].mxu0
  %v622 = vadd.f32 %v525, %v621
  %v623 = vpop.f32.mrb[0].mxu0
  %v624 = vpop.f32.mrb[0].mxu0
  %v625 = vadd.f32 %v528, %v624
  %v626 = vpop.f32.mrb[0].mxu0
  %627 = vmatprep.mubr.bf16.mxu0 %v229
  %628 = vmatmul.mubr.bf16.gmra.mrb[0].mxu0 %v228
  %v629 = vpop.f32.mrb[0].mxu0
  %v630 = vadd.f32 %v533, %v629
  %v631 = vpop.f32.mrb[0].mxu0
  %v632 = vpop.f32.mrb[0].mxu0
  %v633 = vadd.f32 %v536, %v632
  %v634 = vpop.f32.mrb[0].mxu0
  %635 = vmatprep.mubr.bf16.mxu0 %v233
  %636 = vmatmul.mubr.bf16.gmra.mrb[0].mxu0 %v232
  %v637 = vpop.f32.mrb[0].mxu0
  %v638 = vadd.f32 %v541, %v637
  %v639 = vpop.f32.mrb[0].mxu0
  %v640 = vpop.f32.mrb[0].mxu0
  %v641 = vadd.f32 %v544, %v640
  %v642 = vpop.f32.mrb[0].mxu0
  %643 = vmatprep.mubr.bf16.mxu0 %v237
  %644 = vmatmul.mubr.bf16.gmra.mrb[0].mxu0 %v236
  %v645 = vpop.f32.mrb[0].mxu0
  %v646 = vadd.f32 %v549, %v645
  %v647 = vpop.f32.mrb[0].mxu0
  %v648 = vpop.f32.mrb[0].mxu0
  %v649 = vadd.f32 %v552, %v648
  %v650 = vpop.f32.mrb[0].mxu0
  %651 = vmatprep.mubr.bf16.mxu0 %v241
  %652 = vmatmul.mubr.bf16.gmra.mrb[0].mxu0 %v240
  %v653 = vpop.f32.mrb[0].mxu0
  %v654 = vadd.f32 %v557, %v653
  %v655 = vpop.f32.mrb[0].mxu0
  %v656 = vpop.f32.mrb[0].mxu0
  %v657 = vadd.f32 %v560, %v656
  %v658 = vpop.f32.mrb[0].mxu0
  %659 = vdwg.mxu0
  %vm660 = vcmask 523264
  %v661 = vsel %vm660, %v598, 0.0
  %v662 = vsel %vm660, %v601, 0.0
  %v663 = vadd.f32 %v661, %v662
  %v664 = vsel %vm660, %v606, 0.0
  %v665 = vadd.f32 %v663, %v664
  %v666 = vsel %vm660, %v609, 0.0
  %v667 = vadd.f32 %v665, %v666
  %v668 = vsel %vm660, %v614, 0.0
  %v669 = vadd.f32 %v667, %v668
  %v670 = vsel %vm660, %v617, 0.0
  %v671 = vadd.f32 %v669, %v670
  %v672 = vsel %vm660, %v622, 0.0
  %v673 = vadd.f32 %v671, %v672
  %v674 = vsel %vm660, %v625, 0.0
  %v675 = vadd.f32 %v673, %v674
  %v676 = vsel %vm660, %v630, 0.0
  %v677 = vadd.f32 %v675, %v676
  %v678 = vsel %vm660, %v633, 0.0
  %v679 = vadd.f32 %v677, %v678
  %v680 = vsel %vm660, %v638, 0.0
  %v681 = vadd.f32 %v679, %v680
  %v682 = vsel %vm660, %v641, 0.0
  %v683 = vadd.f32 %v681, %v682
  %v684 = vsel %vm660, %v646, 0.0
  %v685 = vadd.f32 %v683, %v684
  %v686 = vsel %vm660, %v649, 0.0
  %v687 = vadd.f32 %v685, %v686
  %v688 = vsel %vm660, %v654, 0.0
  %v689 = vadd.f32 %v687, %v688
  %v690 = vsel %vm660, %v657, 0.0
  %v691 = vadd.f32 %v689, %v690
  %v692 = vrot.slane %v691, 4
  %v693 = vadd.f32 %v691, %v692
  %v694 = vrot.slane %v693, 2
  %v695 = vadd.f32 %v693, %v694
  %v696 = vrot.slane %v695, 1
  %v697 = vadd.f32 %v695, %v696
  %v698 = vrcp.pop 128.0
  %v699 = vmul.f32 %v697, %v698
  %v700 = vsub.f32 %v598, %v699
  %v701 = vsub.f32 %v601, %v699
  %v702 = vsub.f32 %v606, %v699
  %v703 = vsub.f32 %v609, %v699
  %v704 = vsub.f32 %v614, %v699
  %v705 = vsub.f32 %v617, %v699
  %v706 = vsub.f32 %v622, %v699
  %v707 = vsub.f32 %v625, %v699
  %v708 = vsub.f32 %v630, %v699
  %v709 = vsub.f32 %v633, %v699
  %v710 = vsub.f32 %v638, %v699
  %v711 = vsub.f32 %v641, %v699
  %v712 = vsub.f32 %v646, %v699
  %v713 = vsub.f32 %v649, %v699
  %v714 = vsub.f32 %v654, %v699
  %v715 = vsub.f32 %v657, %v699
  %v716 = vmul.f32 %v700, %v700
  %v717 = vmul.f32 %v701, %v701
  %v718 = vmul.f32 %v702, %v702
  %v719 = vmul.f32 %v703, %v703
  %v720 = vmul.f32 %v704, %v704
  %v721 = vmul.f32 %v705, %v705
  %v722 = vmul.f32 %v706, %v706
  %v723 = vmul.f32 %v707, %v707
  %v724 = vmul.f32 %v708, %v708
  %v725 = vmul.f32 %v709, %v709
  %v726 = vmul.f32 %v710, %v710
  %v727 = vmul.f32 %v711, %v711
  %v728 = vmul.f32 %v712, %v712
  %v729 = vmul.f32 %v713, %v713
  %v730 = vmul.f32 %v714, %v714
  %v731 = vmul.f32 %v715, %v715
  %v732 = vsel %vm660, %v716, 0.0
  %v733 = vsel %vm660, %v717, 0.0
  %v734 = vadd.f32 %v732, %v733
  %v735 = vsel %vm660, %v718, 0.0
  %v736 = vadd.f32 %v734, %v735
  %v737 = vsel %vm660, %v719, 0.0
  %v738 = vadd.f32 %v736, %v737
  %v739 = vsel %vm660, %v720, 0.0
  %v740 = vadd.f32 %v738, %v739
  %v741 = vsel %vm660, %v721, 0.0
  %v742 = vadd.f32 %v740, %v741
  %v743 = vsel %vm660, %v722, 0.0
  %v744 = vadd.f32 %v742, %v743
  %v745 = vsel %vm660, %v723, 0.0
  %v746 = vadd.f32 %v744, %v745
  %v747 = vsel %vm660, %v724, 0.0
  %v748 = vadd.f32 %v746, %v747
  %v749 = vsel %vm660, %v725, 0.0
  %v750 = vadd.f32 %v748, %v749
  %v751 = vsel %vm660, %v726, 0.0
  %v752 = vadd.f32 %v750, %v751
  %v753 = vsel %vm660, %v727, 0.0
  %v754 = vadd.f32 %v752, %v753
  %v755 = vsel %vm660, %v728, 0.0
  %v756 = vadd.f32 %v754, %v755
  %v757 = vsel %vm660, %v729, 0.0
  %v758 = vadd.f32 %v756, %v757
  %v759 = vsel %vm660, %v730, 0.0
  %v760 = vadd.f32 %v758, %v759
  %v761 = vsel %vm660, %v731, 0.0
  %v762 = vadd.f32 %v760, %v761
  %v763 = vrot.slane %v762, 4
  %v764 = vadd.f32 %v762, %v763
  %v765 = vrot.slane %v764, 2
  %v766 = vadd.f32 %v764, %v765
  %v767 = vrot.slane %v766, 1
  %v768 = vadd.f32 %v766, %v767
  %v769 = vmul.f32 %v768, %v698
  %v770 = vld [vmem:[%s2] sm:$0x1]
  %v771 = vadd.f32 %v769, 1e-05
  %v772 = vrsqrt.pop %v771
  %v773 = vmul.f32 %v770, %v772
  %v775 = vlaneseq
  %v776 = vshrl.u32 %v775, 7
  %v777 = vsub.s32 0, %v776
  %v778 = vrot.slane %v773, %v777
  %v780 = vmul.f32 %v700, %v778
  %v781 = vmul.f32 %v701, %v778
  %v782 = vmul.f32 %v702, %v778
  %v783 = vmul.f32 %v703, %v778
  %v784 = vmul.f32 %v704, %v778
  %v785 = vmul.f32 %v705, %v778
  %v786 = vmul.f32 %v706, %v778
  %v787 = vmul.f32 %v707, %v778
  %v788 = vmul.f32 %v708, %v778
  %v789 = vmul.f32 %v709, %v778
  %v790 = vmul.f32 %v710, %v778
  %v791 = vmul.f32 %v711, %v778
  %v792 = vmul.f32 %v712, %v778
  %v793 = vmul.f32 %v713, %v778
  %v794 = vmul.f32 %v714, %v778
  %v795 = vmul.f32 %v715, %v778
  %v796 = vld [vmem:[%s3] sm:$0x1]
  %v798 = vlaneseq
  %v799 = vshrl.u32 %v798, 7
  %v800 = vsub.s32 0, %v799
  %v801 = vrot.slane %v796, %v800
  %v803 = vadd.f32 %v780, %v801
  %v804 = vadd.f32 %v781, %v801
  %v805 = vadd.f32 %v782, %v801
  %v806 = vadd.f32 %v783, %v801
  %v807 = vadd.f32 %v784, %v801
  %v808 = vadd.f32 %v785, %v801
  %v809 = vadd.f32 %v786, %v801
  %v810 = vadd.f32 %v787, %v801
  %v811 = vadd.f32 %v788, %v801
  %v812 = vadd.f32 %v789, %v801
  %v813 = vadd.f32 %v790, %v801
  %v814 = vadd.f32 %v791, %v801
  %v815 = vadd.f32 %v792, %v801
  %v816 = vadd.f32 %v793, %v801
  %v817 = vadd.f32 %v794, %v801
  %v818 = vadd.f32 %v795, %v801
  %vm819 = vcmp.ge.f32.partialorder %v803, 0.0
  %vm820 = vcmp.ge.f32.partialorder %v804, 0.0
  %vm821 = vcmp.ge.f32.partialorder %v805, 0.0
  %vm822 = vcmp.ge.f32.partialorder %v806, 0.0
  %vm823 = vcmp.ge.f32.partialorder %v807, 0.0
  %vm824 = vcmp.ge.f32.partialorder %v808, 0.0
  %vm825 = vcmp.ge.f32.partialorder %v809, 0.0
  %vm826 = vcmp.ge.f32.partialorder %v810, 0.0
  %vm827 = vcmp.ge.f32.partialorder %v811, 0.0
  %vm828 = vcmp.ge.f32.partialorder %v812, 0.0
  %vm829 = vcmp.ge.f32.partialorder %v813, 0.0
  %vm830 = vcmp.ge.f32.partialorder %v814, 0.0
  %vm831 = vcmp.ge.f32.partialorder %v815, 0.0
  %vm832 = vcmp.ge.f32.partialorder %v816, 0.0
  %vm833 = vcmp.ge.f32.partialorder %v817, 0.0
  %vm834 = vcmp.ge.f32.partialorder %v818, 0.0
  %v835 = vmul.f32 %v803, 0.2
  %v836 = vmul.f32 %v804, 0.2
  %v837 = vmul.f32 %v805, 0.2
  %v838 = vmul.f32 %v806, 0.2
  %v839 = vmul.f32 %v807, 0.2
  %v840 = vmul.f32 %v808, 0.2
  %v841 = vmul.f32 %v809, 0.2
  %v842 = vmul.f32 %v810, 0.2
  %v843 = vmul.f32 %v811, 0.2
  %v844 = vmul.f32 %v812, 0.2
  %v845 = vmul.f32 %v813, 0.2
  %v846 = vmul.f32 %v814, 0.2
  %v847 = vmul.f32 %v815, 0.2
  %v848 = vmul.f32 %v816, 0.2
  %v849 = vmul.f32 %v817, 0.2
  %v850 = vmul.f32 %v818, 0.2
  %v851 = vsel %vm819, %v803, %v835
  %v852 = vsel %vm820, %v804, %v836
  %v853 = vsel %vm821, %v805, %v837
  %v854 = vsel %vm822, %v806, %v838
  %v855 = vsel %vm823, %v807, %v839
  %v856 = vsel %vm824, %v808, %v840
  %v857 = vsel %vm825, %v809, %v841
  %v858 = vsel %vm826, %v810, %v842
  %v859 = vsel %vm827, %v811, %v843
  %v860 = vsel %vm828, %v812, %v844
  %v861 = vsel %vm829, %v813, %v845
  %v862 = vsel %vm830, %v814, %v846
  %v863 = vsel %vm831, %v815, %v847
  %v864 = vsel %vm832, %v816, %v848
  %v865 = vsel %vm833, %v817, %v849
  %v866 = vsel %vm834, %v818, %v850
  %867 = vst.msk [vmem:[%s4] sm:$0xff] %vm660, %v851
  %868 = vst.msk [vmem:[%s4 + $0x8] sm:$0xff] %vm660, %v852
  %869 = vst.msk [vmem:[%s4 + $0x10] sm:$0xff] %vm660, %v853
  %870 = vst.msk [vmem:[%s4 + $0x18] sm:$0xff] %vm660, %v854
  %871 = vst.msk [vmem:[%s4 + $0x20] sm:$0xff] %vm660, %v855
  %872 = vst.msk [vmem:[%s4 + $0x28] sm:$0xff] %vm660, %v856
  %873 = vst.msk [vmem:[%s4 + $0x30] sm:$0xff] %vm660, %v857
  %874 = vst.msk [vmem:[%s4 + $0x38] sm:$0xff] %vm660, %v858
  %875 = vst.msk [vmem:[%s4 + $0x40] sm:$0xff] %vm660, %v859
  %876 = vst.msk [vmem:[%s4 + $0x48] sm:$0xff] %vm660, %v860
  %877 = vst.msk [vmem:[%s4 + $0x50] sm:$0xff] %vm660, %v861
  %878 = vst.msk [vmem:[%s4 + $0x58] sm:$0xff] %vm660, %v862
  %879 = vst.msk [vmem:[%s4 + $0x60] sm:$0xff] %vm660, %v863
  %880 = vst.msk [vmem:[%s4 + $0x68] sm:$0xff] %vm660, %v864
  %881 = vst.msk [vmem:[%s4 + $0x70] sm:$0xff] %vm660, %v865
  %882 = vst.msk [vmem:[%s4 + $0x78] sm:$0xff] %vm660, %v866
  // Predicated region
  $region18: #{vae_forward.11} parent=0 // pred_check
    _
  $region19: #{vae_forward.11} parent=0 // pred_check_branch
    %884 = sbr.rel (0) target = $region21
  $region20: #{vae_forward.11} parent=0 // pred_region
    _
  $region21: #{vae_forward.11} parent=0 // pred_fallthru
    _
  // Predicated region
  $region22: #{vae_forward.11} parent=0 // pred_check
    _
  $region23: #{vae_forward.11} parent=0 // pred_check_branch
    %886 = sbr.rel (0) target = $region25
  $region24: #{vae_forward.11} parent=0 // pred_region
    _
  $region25: #{vae_forward.11} parent=0 // pred_fallthru
    _

// kernel: vae_forward.12
$region0: #{vae_forward.12}
  #allocation0 [shape = 'u32[]', space=smem, size = 0x4, offset = 0x4, fixed_abs, tag = 'smem constant byte address 0x4 - core index']
  #allocation1 [shape = 'u32[144,128]{1,0:T(1,128)}', space=vmem, size = 0x12000, scoped, tag = 'internal scratch']
  %s0 = inlined_call_operand.vmem [shape: bf16[32,1024], index: 0, kind: input, shape index: {}]
  %s1 = inlined_call_operand.vmem [shape: bf16[1024,128], index: 1, kind: input, shape index: {}]
  %s2 = inlined_call_operand.vmem [shape: f32[1,128], index: 2, kind: input, shape index: {}]
  %s3 = inlined_call_operand.vmem [shape: f32[1,128], index: 3, kind: input, shape index: {}]
  %s4 = inlined_call_operand.vmem [shape: f32[32,128], index: 4, kind: output, shape index: {}]
  %s5 = sld [smem:[#allocation0]]
  $region26: #{vae_forward.12} parent=0
    _
  %s7 = ssub.s32 1, %s5
  %s8 = scalar_select 0, %s7, %s5
  // Predicated region
  $region2: #{vae_forward.12} parent=0 // pred_check
    _
  $region3: #{vae_forward.12} parent=0 // pred_check_branch
    %10 = sbr.rel (0) target = $region5
  $region4: #{vae_forward.12} parent=0 // pred_region
    _
  $region5: #{vae_forward.12} parent=0 // pred_fallthru
    _
  // Predicated region
  $region6: #{vae_forward.12} parent=0 // pred_check
    _
  $region7: #{vae_forward.12} parent=0 // pred_check_branch
    %12 = sbr.rel (0) target = $region9
  $region8: #{vae_forward.12} parent=0 // pred_region
    _
  $region9: #{vae_forward.12} parent=0 // pred_fallthru
    _
  // Predicated region
  $region10: #{vae_forward.12} parent=0 // pred_check
    _
  $region11: #{vae_forward.12} parent=0 // pred_check_branch
    %14 = sbr.rel (0) target = $region13
  $region12: #{vae_forward.12} parent=0 // pred_region
    _
  $region13: #{vae_forward.12} parent=0 // pred_fallthru
    _
  // Predicated region
  $region14: #{vae_forward.12} parent=0 // pred_check
    _
  $region15: #{vae_forward.12} parent=0 // pred_check_branch
    %16 = sbr.rel (0) target = $region17
  $region16: #{vae_forward.12} parent=0 // pred_region
    _
  $region17: #{vae_forward.12} parent=0 // pred_fallthru
    _
  %v18 = vld [vmem:[%s0] sm:$0xff]
  %v19 = vld [vmem:[%s0 + $0x8] sm:$0xff]
  %v20 = vld [vmem:[%s0 + $0x10] sm:$0xff]
  %v21 = vld [vmem:[%s0 + $0x18] sm:$0xff]
  %v22 = vld [vmem:[%s0 + $0x20] sm:$0xff]
  %v23 = vld [vmem:[%s0 + $0x28] sm:$0xff]
  %v24 = vld [vmem:[%s0 + $0x30] sm:$0xff]
  %v25 = vld [vmem:[%s0 + $0x38] sm:$0xff]
  %v26 = vld [vmem:[%s0 + $0x40] sm:$0xff]
  %v27 = vld [vmem:[%s0 + $0x48] sm:$0xff]
  %v28 = vld [vmem:[%s0 + $0x50] sm:$0xff]
  %v29 = vld [vmem:[%s0 + $0x58] sm:$0xff]
  %v30 = vld [vmem:[%s0 + $0x60] sm:$0xff]
  %v31 = vld [vmem:[%s0 + $0x68] sm:$0xff]
  %v32 = vld [vmem:[%s0 + $0x70] sm:$0xff]
  %v33 = vld [vmem:[%s0 + $0x78] sm:$0xff]
  %v34 = vld [vmem:[%s1] sm:$0xf]
  %v35 = vld [vmem:[%s1 + $0x4] sm:$0xf]
  %v36 = vld [vmem:[%s1 + $0x8] sm:$0xf]
  %v37 = vld [vmem:[%s1 + $0xc] sm:$0xf]
  %v38 = vld [vmem:[%s1 + $0x10] sm:$0xf]
  %v39 = vld [vmem:[%s1 + $0x14] sm:$0xf]
  %v40 = vld [vmem:[%s1 + $0x18] sm:$0xf]
  %v41 = vld [vmem:[%s1 + $0x1c] sm:$0xf]
  %v42 = vld [vmem:[%s1 + $0x20] sm:$0xf]
  %v43 = vld [vmem:[%s1 + $0x24] sm:$0xf]
  %v44 = vld [vmem:[%s1 + $0x28] sm:$0xf]
  %v45 = vld [vmem:[%s1 + $0x2c] sm:$0xf]
  %v46 = vld [vmem:[%s1 + $0x30] sm:$0xf]
  %v47 = vld [vmem:[%s1 + $0x34] sm:$0xf]
  %v48 = vld [vmem:[%s1 + $0x38] sm:$0xf]
  %v49 = vld [vmem:[%s1 + $0x3c] sm:$0xf]
  %v50 = vld [vmem:[%s1 + $0x40] sm:$0xf]
  %v51 = vld [vmem:[%s1 + $0x44] sm:$0xf]
  %v52 = vld [vmem:[%s1 + $0x48] sm:$0xf]
  %v53 = vld [vmem:[%s1 + $0x4c] sm:$0xf]
  %v54 = vld [vmem:[%s1 + $0x50] sm:$0xf]
  %v55 = vld [vmem:[%s1 + $0x54] sm:$0xf]
  %v56 = vld [vmem:[%s1 + $0x58] sm:$0xf]
  %v57 = vld [vmem:[%s1 + $0x5c] sm:$0xf]
  %v58 = vld [vmem:[%s1 + $0x60] sm:$0xf]
  %v59 = vld [vmem:[%s1 + $0x64] sm:$0xf]
  %v60 = vld [vmem:[%s1 + $0x68] sm:$0xf]
  %v61 = vld [vmem:[%s1 + $0x6c] sm:$0xf]
  %v62 = vld [vmem:[%s1 + $0x70] sm:$0xf]
  %v63 = vld [vmem:[%s1 + $0x74] sm:$0xf]
  %v64 = vld [vmem:[%s1 + $0x78] sm:$0xf]
  %v65 = vld [vmem:[%s1 + $0x7c] sm:$0xf]
  %v66 = vld [vmem:[%s1 + $0x80] sm:$0xf]
  %v67 = vld [vmem:[%s1 + $0x84] sm:$0xf]
  %v68 = vld [vmem:[%s1 + $0x88] sm:$0xf]
  %v69 = vld [vmem:[%s1 + $0x8c] sm:$0xf]
  %v70 = vld [vmem:[%s1 + $0x90] sm:$0xf]
  %v71 = vld [vmem:[%s1 + $0x94] sm:$0xf]
  %v72 = vld [vmem:[%s1 + $0x98] sm:$0xf]
  %v73 = vld [vmem:[%s1 + $0x9c] sm:$0xf]
  %v74 = vld [vmem:[%s1 + $0xa0] sm:$0xf]
  %v75 = vld [vmem:[%s1 + $0xa4] sm:$0xf]
  %v76 = vld [vmem:[%s1 + $0xa8] sm:$0xf]
  %v77 = vld [vmem:[%s1 + $0xac] sm:$0xf]
  %v78 = vld [vmem:[%s1 + $0xb0] sm:$0xf]
  %v79 = vld [vmem:[%s1 + $0xb4] sm:$0xf]
  %v80 = vld [vmem:[%s1 + $0xb8] sm:$0xf]
  %v81 = vld [vmem:[%s1 + $0xbc] sm:$0xf]
  %v82 = vld [vmem:[%s1 + $0xc0] sm:$0xf]
  %v83 = vld [vmem:[%s1 + $0xc4] sm:$0xf]
  %v84 = vld [vmem:[%s1 + $0xc8] sm:$0xf]
  %v85 = vld [vmem:[%s1 + $0xcc] sm:$0xf]
  %v86 = vld [vmem:[%s1 + $0xd0] sm:$0xf]
  %v87 = vld [vmem:[%s1 + $0xd4] sm:$0xf]
  %v88 = vld [vmem:[%s1 + $0xd8] sm:$0xf]
  %v89 = vld [vmem:[%s1 + $0xdc] sm:$0xf]
  %v90 = vld [vmem:[%s1 + $0xe0] sm:$0xf]
  %v91 = vld [vmem:[%s1 + $0xe4] sm:$0xf]
  %v92 = vld [vmem:[%s1 + $0xe8] sm:$0xf]
  %v93 = vld [vmem:[%s1 + $0xec] sm:$0xf]
  %v94 = vld [vmem:[%s1 + $0xf0] sm:$0xf]
  %v95 = vld [vmem:[%s1 + $0xf4] sm:$0xf]
  %v96 = vld [vmem:[%s1 + $0xf8] sm:$0xf]
  %v97 = vld [vmem:[%s1 + $0xfc] sm:$0xf]
  %v98 = vld [vmem:[%s1 + $0x100] sm:$0xf]
  %v99 = vld [vmem:[%s1 + $0x104] sm:$0xf]
  %v100 = vld [vmem:[%s1 + $0x108] sm:$0xf]
  %v101 = vld [vmem:[%s1 + $0x10c] sm:$0xf]
  %v102 = vld [vmem:[%s1 + $0x110] sm:$0xf]
  %v103 = vld [vmem:[%s1 + $0x114] sm:$0xf]
  %v104 = vld [vmem:[%s1 + $0x118] sm:$0xf]
  %v105 = vld [vmem:[%s1 + $0x11c] sm:$0xf]
  %v106 = vld [vmem:[%s1 + $0x120] sm:$0xf]
  %v107 = vld [vmem:[%s1 + $0x124] sm:$0xf]
  %v108 = vld [vmem:[%s1 + $0x128] sm:$0xf]
  %v109 = vld [vmem:[%s1 + $0x12c] sm:$0xf]
  %v110 = vld [vmem:[%s1 + $0x130] sm:$0xf]
  %v111 = vld [vmem:[%s1 + $0x134] sm:$0xf]
  %v112 = vld [vmem:[%s1 + $0x138] sm:$0xf]
  %v113 = vld [vmem:[%s1 + $0x13c] sm:$0xf]
  %v114 = vld [vmem:[%s1 + $0x140] sm:$0xf]
  %v115 = vld [vmem:[%s1 + $0x144] sm:$0xf]
  %v116 = vld [vmem:[%s1 + $0x148] sm:$0xf]
  %v117 = vld [vmem:[%s1 + $0x14c] sm:$0xf]
  %v118 = vld [vmem:[%s1 + $0x150] sm:$0xf]
  %v119 = vld [vmem:[%s1 + $0x154] sm:$0xf]
  %v120 = vld [vmem:[%s1 + $0x158] sm:$0xf]
  %v121 = vld [vmem:[%s1 + $0x15c] sm:$0xf]
  %v122 = vld [vmem:[%s1 + $0x160] sm:$0xf]
  %v123 = vld [vmem:[%s1 + $0x164] sm:$0xf]
  %v124 = vld [vmem:[%s1 + $0x168] sm:$0xf]
  %v125 = vld [vmem:[%s1 + $0x16c] sm:$0xf]
  %v126 = vld [vmem:[%s1 + $0x170] sm:$0xf]
  %v127 = vld [vmem:[%s1 + $0x174] sm:$0xf]
  %v128 = vld [vmem:[%s1 + $0x178] sm:$0xf]
  %v129 = vld [vmem:[%s1 + $0x17c] sm:$0xf]
  %v130 = vld [vmem:[%s1 + $0x180] sm:$0xf]
  %v131 = vld [vmem:[%s1 + $0x184] sm:$0xf]
  %v132 = vld [vmem:[%s1 + $0x188] sm:$0xf]
  %v133 = vld [vmem:[%s1 + $0x18c] sm:$0xf]
  %v134 = vld [vmem:[%s1 + $0x190] sm:$0xf]
  %v135 = vld [vmem:[%s1 + $0x194] sm:$0xf]
  %v136 = vld [vmem:[%s1 + $0x198] sm:$0xf]
  %v137 = vld [vmem:[%s1 + $0x19c] sm:$0xf]
  %v138 = vld [vmem:[%s1 + $0x1a0] sm:$0xf]
  %v139 = vld [vmem:[%s1 + $0x1a4] sm:$0xf]
  %v140 = vld [vmem:[%s1 + $0x1a8] sm:$0xf]
  %v141 = vld [vmem:[%s1 + $0x1ac] sm:$0xf]
  %v142 = vld [vmem:[%s1 + $0x1b0] sm:$0xf]
  %v143 = vld [vmem:[%s1 + $0x1b4] sm:$0xf]
  %v144 = vld [vmem:[%s1 + $0x1b8] sm:$0xf]
  %v145 = vld [vmem:[%s1 + $0x1bc] sm:$0xf]
  %v146 = vld [vmem:[%s1 + $0x1c0] sm:$0xf]
  %v147 = vld [vmem:[%s1 + $0x1c4] sm:$0xf]
  %v148 = vld [vmem:[%s1 + $0x1c8] sm:$0xf]
  %v149 = vld [vmem:[%s1 + $0x1cc] sm:$0xf]
  %v150 = vld [vmem:[%s1 + $0x1d0] sm:$0xf]
  %v151 = vld [vmem:[%s1 + $0x1d4] sm:$0xf]
  %v152 = vld [vmem:[%s1 + $0x1d8] sm:$0xf]
  %v153 = vld [vmem:[%s1 + $0x1dc] sm:$0xf]
  %v154 = vld [vmem:[%s1 + $0x1e0] sm:$0xf]
  %v155 = vld [vmem:[%s1 + $0x1e4] sm:$0xf]
  %v156 = vld [vmem:[%s1 + $0x1e8] sm:$0xf]
  %v157 = vld [vmem:[%s1 + $0x1ec] sm:$0xf]
  %v158 = vld [vmem:[%s1 + $0x1f0] sm:$0xf]
  %v159 = vld [vmem:[%s1 + $0x1f4] sm:$0xf]
  %v160 = vld [vmem:[%s1 + $0x1f8] sm:$0xf]
  %v161 = vld [vmem:[%s1 + $0x1fc] sm:$0xf]
  %v178 = vunpack.c.l.b16 %v18
  %v179 = vunpack.c.h.b16 %v18
  %v180 = vunpack.c.l.b16 %v19
  %v181 = vunpack.c.h.b16 %v19
  %v182 = vunpack.c.l.b16 %v20
  %v183 = vunpack.c.h.b16 %v20
  %v184 = vunpack.c.l.b16 %v21
  %v185 = vunpack.c.h.b16 %v21
  %v186 = vunpack.c.l.b16 %v22
  %v187 = vunpack.c.h.b16 %v22
  %v188 = vunpack.c.l.b16 %v23
  %v189 = vunpack.c.h.b16 %v23
  %v190 = vunpack.c.l.b16 %v24
  %v191 = vunpack.c.h.b16 %v24
  %v192 = vunpack.c.l.b16 %v25
  %v193 = vunpack.c.h.b16 %v25
  %v194 = vunpack.c.l.b16 %v26
  %v195 = vunpack.c.h.b16 %v26
  %v196 = vunpack.c.l.b16 %v27
  %v197 = vunpack.c.h.b16 %v27
  %v198 = vunpack.c.l.b16 %v28
  %v199 = vunpack.c.h.b16 %v28
  %v200 = vunpack.c.l.b16 %v29
  %v201 = vunpack.c.h.b16 %v29
  %v202 = vunpack.c.l.b16 %v30
  %v203 = vunpack.c.h.b16 %v30
  %v204 = vunpack.c.l.b16 %v31
  %v205 = vunpack.c.h.b16 %v31
  %v206 = vunpack.c.l.b16 %v32
  %v207 = vunpack.c.h.b16 %v32
  %v208 = vunpack.c.l.b16 %v33
  %v209 = vunpack.c.h.b16 %v33
  %v210 = vpack.c.b16 %v186, %v178
  %v211 = vpack.c.b16 %v187, %v179
  %v212 = vpack.c.b16 %v188, %v180
  %v213 = vpack.c.b16 %v189, %v181
  %v214 = vpack.c.b16 %v190, %v182
  %v215 = vpack.c.b16 %v191, %v183
  %v216 = vpack.c.b16 %v192, %v184
  %v217 = vpack.c.b16 %v193, %v185
  %v218 = vpack.c.b16 %v202, %v194
  %v219 = vpack.c.b16 %v203, %v195
  %v220 = vpack.c.b16 %v204, %v196
  %v221 = vpack.c.b16 %v205, %v197
  %v222 = vpack.c.b16 %v206, %v198
  %v223 = vpack.c.b16 %v207, %v199
  %v224 = vpack.c.b16 %v208, %v200
  %v225 = vpack.c.b16 %v209, %v201
  %v370 = vunpack.c.l.b16 %v34
  %v371 = vunpack.c.l.b16 %v35
  %v372 = vunpack.c.l.b16 %v36
  %v373 = vunpack.c.l.b16 %v37
  %v374 = vunpack.c.l.b16 %v38
  %v375 = vunpack.c.l.b16 %v39
  %v376 = vunpack.c.l.b16 %v40
  %v377 = vunpack.c.l.b16 %v41
  %v378 = vunpack.c.l.b16 %v42
  %v379 = vunpack.c.l.b16 %v43
  %v380 = vunpack.c.l.b16 %v44
  %v381 = vunpack.c.l.b16 %v45
  %v382 = vunpack.c.l.b16 %v46
  %v383 = vunpack.c.l.b16 %v47
  %v384 = vunpack.c.l.b16 %v48
  %v385 = vunpack.c.l.b16 %v49
  %v386 = vunpack.c.l.b16 %v50
  %v387 = vunpack.c.l.b16 %v51
  %v388 = vunpack.c.l.b16 %v52
  %v389 = vunpack.c.l.b16 %v53
  %v390 = vunpack.c.l.b16 %v54
  %v391 = vunpack.c.l.b16 %v55
  %v392 = vunpack.c.l.b16 %v56
  %v393 = vunpack.c.l.b16 %v57
  %v394 = vunpack.c.l.b16 %v58
  %v395 = vunpack.c.l.b16 %v59
  %v396 = vunpack.c.l.b16 %v60
  %v397 = vunpack.c.l.b16 %v61
  %v398 = vunpack.c.l.b16 %v62
  %v399 = vunpack.c.l.b16 %v63
  %v400 = vunpack.c.l.b16 %v64
  %v401 = vunpack.c.l.b16 %v65
  %v402 = vunpack.c.l.b16 %v66
  %v403 = vunpack.c.l.b16 %v67
  %v404 = vunpack.c.l.b16 %v68
  %v405 = vunpack.c.l.b16 %v69
  %v406 = vunpack.c.l.b16 %v70
  %v407 = vunpack.c.l.b16 %v71
  %v408 = vunpack.c.l.b16 %v72
  %v409 = vunpack.c.l.b16 %v73
  %v410 = vunpack.c.l.b16 %v74
  %v411 = vunpack.c.l.b16 %v75
  %v412 = vunpack.c.l.b16 %v76
  %v413 = vunpack.c.l.b16 %v77
  %v414 = vunpack.c.l.b16 %v78
  %v415 = vunpack.c.l.b16 %v79
  %v416 = vunpack.c.l.b16 %v80
  %v417 = vunpack.c.l.b16 %v81
  %v418 = vunpack.c.l.b16 %v82
  %v419 = vunpack.c.l.b16 %v83
  %v420 = vunpack.c.l.b16 %v84
  %v421 = vunpack.c.l.b16 %v85
  %v422 = vunpack.c.l.b16 %v86
  %v423 = vunpack.c.l.b16 %v87
  %v424 = vunpack.c.l.b16 %v88
  %v425 = vunpack.c.l.b16 %v89
  %v426 = vunpack.c.l.b16 %v90
  %v427 = vunpack.c.l.b16 %v91
  %v428 = vunpack.c.l.b16 %v92
  %v429 = vunpack.c.l.b16 %v93
  %v430 = vunpack.c.l.b16 %v94
  %v431 = vunpack.c.l.b16 %v95
  %v432 = vunpack.c.l.b16 %v96
  %v433 = vunpack.c.l.b16 %v97
  %v434 = vunpack.c.l.b16 %v98
  %v435 = vunpack.c.l.b16 %v99
  %v436 = vunpack.c.l.b16 %v100
  %v437 = vunpack.c.l.b16 %v101
  %v438 = vunpack.c.l.b16 %v102
  %v439 = vunpack.c.l.b16 %v103
  %v440 = vunpack.c.l.b16 %v104
  %v441 = vunpack.c.l.b16 %v105
  %v442 = vunpack.c.l.b16 %v106
  %v443 = vunpack.c.l.b16 %v107
  %v444 = vunpack.c.l.b16 %v108
  %v445 = vunpack.c.l.b16 %v109
  %v446 = vunpack.c.l.b16 %v110
  %v447 = vunpack.c.l.b16 %v111
  %v448 = vunpack.c.l.b16 %v112
  %v449 = vunpack.c.l.b16 %v113
  %v450 = vunpack.c.l.b16 %v114
  %v451 = vunpack.c.l.b16 %v115
  %v452 = vunpack.c.l.b16 %v116
  %v453 = vunpack.c.l.b16 %v117
  %v454 = vunpack.c.l.b16 %v118
  %v455 = vunpack.c.l.b16 %v119
  %v456 = vunpack.c.l.b16 %v120
  %v457 = vunpack.c.l.b16 %v121
  %v458 = vunpack.c.l.b16 %v122
  %v459 = vunpack.c.l.b16 %v123
  %v460 = vunpack.c.l.b16 %v124
  %v461 = vunpack.c.l.b16 %v125
  %v462 = vunpack.c.l.b16 %v126
  %v463 = vunpack.c.l.b16 %v127
  %v464 = vunpack.c.l.b16 %v128
  %v465 = vunpack.c.l.b16 %v129
  %v466 = vunpack.c.l.b16 %v130
  %v467 = vunpack.c.l.b16 %v131
  %v468 = vunpack.c.l.b16 %v132
  %v469 = vunpack.c.l.b16 %v133
  %v470 = vunpack.c.l.b16 %v134
  %v471 = vunpack.c.l.b16 %v135
  %v472 = vunpack.c.l.b16 %v136
  %v473 = vunpack.c.l.b16 %v137
  %v474 = vunpack.c.l.b16 %v138
  %v475 = vunpack.c.l.b16 %v139
  %v476 = vunpack.c.l.b16 %v140
  %v477 = vunpack.c.l.b16 %v141
  %v478 = vunpack.c.l.b16 %v142
  %v479 = vunpack.c.l.b16 %v143
  %v480 = vunpack.c.l.b16 %v144
  %v481 = vunpack.c.l.b16 %v145
  %v482 = vunpack.c.l.b16 %v146
  %v483 = vunpack.c.l.b16 %v147
  %v484 = vunpack.c.l.b16 %v148
  %v485 = vunpack.c.l.b16 %v149
  %v486 = vunpack.c.l.b16 %v150
  %v487 = vunpack.c.l.b16 %v151
  %v488 = vunpack.c.l.b16 %v152
  %v489 = vunpack.c.l.b16 %v153
  %v490 = vunpack.c.l.b16 %v154
  %v491 = vunpack.c.l.b16 %v155
  %v492 = vunpack.c.l.b16 %v156
  %v493 = vunpack.c.l.b16 %v157
  %v494 = vunpack.c.l.b16 %v158
  %v495 = vunpack.c.l.b16 %v159
  %v496 = vunpack.c.l.b16 %v160
  %v497 = vunpack.c.l.b16 %v161
  %v498 = vpack.c.b16 %v371, %v370
  %v499 = vpack.c.b16 %v373, %v372
  %v500 = vpack.c.b16 %v375, %v374
  %v501 = vpack.c.b16 %v377, %v376
  %v502 = vpack.c.b16 %v379, %v378
  %v503 = vpack.c.b16 %v381, %v380
  %v504 = vpack.c.b16 %v383, %v382
  %v505 = vpack.c.b16 %v385, %v384
  %v506 = vpack.c.b16 %v387, %v386
  %v507 = vpack.c.b16 %v389, %v388
  %v508 = vpack.c.b16 %v391, %v390
  %v509 = vpack.c.b16 %v393, %v392
  %v510 = vpack.c.b16 %v395, %v394
  %v511 = vpack.c.b16 %v397, %v396
  %v512 = vpack.c.b16 %v399, %v398
  %v513 = vpack.c.b16 %v401, %v400
  %v514 = vpack.c.b16 %v403, %v402
  %v515 = vpack.c.b16 %v405, %v404
  %v516 = vpack.c.b16 %v407, %v406
  %v517 = vpack.c.b16 %v409, %v408
  %v518 = vpack.c.b16 %v411, %v410
  %v519 = vpack.c.b16 %v413, %v412
  %v520 = vpack.c.b16 %v415, %v414
  %v521 = vpack.c.b16 %v417, %v416
  %v522 = vpack.c.b16 %v419, %v418
  %v523 = vpack.c.b16 %v421, %v420
  %v524 = vpack.c.b16 %v423, %v422
  %v525 = vpack.c.b16 %v425, %v424
  %v526 = vpack.c.b16 %v427, %v426
  %v527 = vpack.c.b16 %v429, %v428
  %v528 = vpack.c.b16 %v431, %v430
  %v529 = vpack.c.b16 %v433, %v432
  %v530 = vpack.c.b16 %v435, %v434
  %v531 = vpack.c.b16 %v437, %v436
  %v532 = vpack.c.b16 %v439, %v438
  %v533 = vpack.c.b16 %v441, %v440
  %v534 = vpack.c.b16 %v443, %v442
  %v535 = vpack.c.b16 %v445, %v444
  %v536 = vpack.c.b16 %v447, %v446
  %v537 = vpack.c.b16 %v449, %v448
  %v538 = vpack.c.b16 %v451, %v450
  %v539 = vpack.c.b16 %v453, %v452
  %v540 = vpack.c.b16 %v455, %v454
  %v541 = vpack.c.b16 %v457, %v456
  %v542 = vpack.c.b16 %v459, %v458
  %v543 = vpack.c.b16 %v461, %v460
  %v544 = vpack.c.b16 %v463, %v462
  %v545 = vpack.c.b16 %v465, %v464
  %v546 = vpack.c.b16 %v467, %v466
  %v547 = vpack.c.b16 %v469, %v468
  %v548 = vpack.c.b16 %v471, %v470
  %v549 = vpack.c.b16 %v473, %v472
  %v550 = vpack.c.b16 %v475, %v474
  %v551 = vpack.c.b16 %v477, %v476
  %v552 = vpack.c.b16 %v479, %v478
  %v553 = vpack.c.b16 %v481, %v480
  %v554 = vpack.c.b16 %v483, %v482
  %v555 = vpack.c.b16 %v485, %v484
  %v556 = vpack.c.b16 %v487, %v486
  %v557 = vpack.c.b16 %v489, %v488
  %v558 = vpack.c.b16 %v491, %v490
  %v559 = vpack.c.b16 %v493, %v492
  %v560 = vpack.c.b16 %v495, %v494
  %v561 = vpack.c.b16 %v497, %v496
  %626 = vmatprep.subr.bf16.mxu0 0
  %627 = vmatpush1.bf16.msra.mxu0 %v498
  %628 = vmatprep.subr.bf16.mxu0 0
  %629 = vmatpush1.bf16.msra.mxu0 %v499
  %630 = vmatprep.subr.bf16.mxu0 0
  %631 = vmatpush1.bf16.msra.mxu0 %v500
  %632 = vmatprep.subr.bf16.mxu0 0
  %633 = vmatpush1.bf16.msra.mxu0 %v501
  %634 = vmatprep.subr.bf16.mxu0 0
  %635 = vmatpush1.bf16.msra.mxu0 %v502
  %636 = vmatprep.subr.bf16.mxu0 0
  %637 = vmatpush1.bf16.msra.mxu0 %v503
  %638 = vmatprep.subr.bf16.mxu0 0
  %639 = vmatpush1.bf16.msra.mxu0 %v504
  %640 = vmatprep.subr.bf16.mxu0 0
  %641 = vmatpush1.bf16.msra.mxu0 %v505
  %642 = vmatprep.subr.bf16.mxu0 0
  %643 = vmatpush1.bf16.msra.mxu0 %v506
  %644 = vmatprep.subr.bf16.mxu0 0
  %645 = vmatpush1.bf16.msra.mxu0 %v507
  %646 = vmatprep.subr.bf16.mxu0 0
  %647 = vmatpush1.bf16.msra.mxu0 %v508
  %648 = vmatprep.subr.bf16.mxu0 0
  %649 = vmatpush1.bf16.msra.mxu0 %v509
  %650 = vmatprep.subr.bf16.mxu0 0
  %651 = vmatpush1.bf16.msra.mxu0 %v510
  %652 = vmatprep.subr.bf16.mxu0 0
  %653 = vmatpush1.bf16.msra.mxu0 %v511
  %654 = vmatprep.subr.bf16.mxu0 0
  %655 = vmatpush1.bf16.msra.mxu0 %v512
  %656 = vmatprep.subr.bf16.mxu0 0
  %657 = vmatpush1.bf16.msra.mxu0 %v513
  %658 = vmatprep.mubr.bf16.mxu0 %v211
  %659 = vmatmul.mubr.bf16.gmra.mrb[0].mxu0 %v210
  %v660 = vpop.f32.mrb[0].mxu0
  %v661 = vadd.f32 0.0, %v660
  %v662 = vpop.f32.mrb[0].mxu0
  %v663 = vpop.f32.mrb[0].mxu0
  %v664 = vadd.f32 0.0, %v663
  %v665 = vpop.f32.mrb[0].mxu0
  %666 = vmatprep.mubr.bf16.mxu0 %v219
  %667 = vmatmul.mubr.bf16.gmra.mrb[0].mxu0 %v218
  %v668 = vpop.f32.mrb[0].mxu0
  %v669 = vadd.f32 0.0, %v668
  %v670 = vpop.f32.mrb[0].mxu0
  %v671 = vpop.f32.mrb[0].mxu0
  %v672 = vadd.f32 0.0, %v671
  %v673 = vpop.f32.mrb[0].mxu0
  %674 = vdwg.mxu0
  %675 = vmatprep.subr.bf16.mxu0 0
  %676 = vmatpush1.bf16.msra.mxu0 %v514
  %677 = vmatprep.subr.bf16.mxu0 0
  %678 = vmatpush1.bf16.msra.mxu0 %v515
  %679 = vmatprep.subr.bf16.mxu0 0
  %680 = vmatpush1.bf16.msra.mxu0 %v516
  %681 = vmatprep.subr.bf16.mxu0 0
  %682 = vmatpush1.bf16.msra.mxu0 %v517
  %683 = vmatprep.subr.bf16.mxu0 0
  %684 = vmatpush1.bf16.msra.mxu0 %v518
  %685 = vmatprep.subr.bf16.mxu0 0
  %686 = vmatpush1.bf16.msra.mxu0 %v519
  %687 = vmatprep.subr.bf16.mxu0 0
  %688 = vmatpush1.bf16.msra.mxu0 %v520
  %689 = vmatprep.subr.bf16.mxu0 0
  %690 = vmatpush1.bf16.msra.mxu0 %v521
  %691 = vmatprep.subr.bf16.mxu0 0
  %692 = vmatpush1.bf16.msra.mxu0 %v522
  %693 = vmatprep.subr.bf16.mxu0 0
  %694 = vmatpush1.bf16.msra.mxu0 %v523
  %695 = vmatprep.subr.bf16.mxu0 0
  %696 = vmatpush1.bf16.msra.mxu0 %v524
  %697 = vmatprep.subr.bf16.mxu0 0
  %698 = vmatpush1.bf16.msra.mxu0 %v525
  %699 = vmatprep.subr.bf16.mxu0 0
  %700 = vmatpush1.bf16.msra.mxu0 %v526
  %701 = vmatprep.subr.bf16.mxu0 0
  %702 = vmatpush1.bf16.msra.mxu0 %v527
  %703 = vmatprep.subr.bf16.mxu0 0
  %704 = vmatpush1.bf16.msra.mxu0 %v528
  %705 = vmatprep.subr.bf16.mxu0 0
  %706 = vmatpush1.bf16.msra.mxu0 %v529
  %707 = vmatprep.mubr.bf16.mxu0 %v213
  %708 = vmatmul.mubr.bf16.gmra.mrb[0].mxu0 %v212
  %v709 = vpop.f32.mrb[0].mxu0
  %v710 = vadd.f32 %v661, %v709
  %v711 = vpop.f32.mrb[0].mxu0
  %v712 = vpop.f32.mrb[0].mxu0
  %v713 = vadd.f32 %v664, %v712
  %v714 = vpop.f32.mrb[0].mxu0
  %715 = vmatprep.mubr.bf16.mxu0 %v221
  %716 = vmatmul.mubr.bf16.gmra.mrb[0].mxu0 %v220
  %v717 = vpop.f32.mrb[0].mxu0
  %v718 = vadd.f32 %v669, %v717
  %v719 = vpop.f32.mrb[0].mxu0
  %v720 = vpop.f32.mrb[0].mxu0
  %v721 = vadd.f32 %v672, %v720
  %v722 = vpop.f32.mrb[0].mxu0
  %723 = vdwg.mxu0
  %724 = vmatprep.subr.bf16.mxu0 0
  %725 = vmatpush1.bf16.msra.mxu0 %v530
  %726 = vmatprep.subr.bf16.mxu0 0
  %727 = vmatpush1.bf16.msra.mxu0 %v531
  %728 = vmatprep.subr.bf16.mxu0 0
  %729 = vmatpush1.bf16.msra.mxu0 %v532
  %730 = vmatprep.subr.bf16.mxu0 0
  %731 = vmatpush1.bf16.msra.mxu0 %v533
  %732 = vmatprep.subr.bf16.mxu0 0
  %733 = vmatpush1.bf16.msra.mxu0 %v534
  %734 = vmatprep.subr.bf16.mxu0 0
  %735 = vmatpush1.bf16.msra.mxu0 %v535
  %736 = vmatprep.subr.bf16.mxu0 0
  %737 = vmatpush1.bf16.msra.mxu0 %v536
  %738 = vmatprep.subr.bf16.mxu0 0
  %739 = vmatpush1.bf16.msra.mxu0 %v537
  %740 = vmatprep.subr.bf16.mxu0 0
  %741 = vmatpush1.bf16.msra.mxu0 %v538
  %742 = vmatprep.subr.bf16.mxu0 0
  %743 = vmatpush1.bf16.msra.mxu0 %v539
  %744 = vmatprep.subr.bf16.mxu0 0
  %745 = vmatpush1.bf16.msra.mxu0 %v540
  %746 = vmatprep.subr.bf16.mxu0 0
  %747 = vmatpush1.bf16.msra.mxu0 %v541
  %748 = vmatprep.subr.bf16.mxu0 0
  %749 = vmatpush1.bf16.msra.mxu0 %v542
  %750 = vmatprep.subr.bf16.mxu0 0
  %751 = vmatpush1.bf16.msra.mxu0 %v543
  %752 = vmatprep.subr.bf16.mxu0 0
  %753 = vmatpush1.bf16.msra.mxu0 %v544
  %754 = vmatprep.subr.bf16.mxu0 0
  %755 = vmatpush1.bf16.msra.mxu0 %v545
  %756 = vmatprep.mubr.bf16.mxu0 %v215
  %757 = vmatmul.mubr.bf16.gmra.mrb[0].mxu0 %v214
  %v758 = vpop.f32.mrb[0].mxu0
  %v759 = vadd.f32 %v710, %v758
  %v760 = vpop.f32.mrb[0].mxu0
  %v761 = vpop.f32.mrb[0].mxu0
  %v762 = vadd.f32 %v713, %v761
  %v763 = vpop.f32.mrb[0].mxu0
  %764 = vmatprep.mubr.bf16.mxu0 %v223
  %765 = vmatmul.mubr.bf16.gmra.mrb[0].mxu0 %v222
  %v766 = vpop.f32.mrb[0].mxu0
  %v767 = vadd.f32 %v718, %v766
  %v768 = vpop.f32.mrb[0].mxu0
  %v769 = vpop.f32.mrb[0].mxu0
  %v770 = vadd.f32 %v721, %v769
  %v771 = vpop.f32.mrb[0].mxu0
  %772 = vdwg.mxu0
  %773 = vmatprep.subr.bf16.mxu0 0
  %774 = vmatpush1.bf16.msra.mxu0 %v546
  %775 = vmatprep.subr.bf16.mxu0 0
  %776 = vmatpush1.bf16.msra.mxu0 %v547
  %777 = vmatprep.subr.bf16.mxu0 0
  %778 = vmatpush1.bf16.msra.mxu0 %v548
  %779 = vmatprep.subr.bf16.mxu0 0
  %780 = vmatpush1.bf16.msra.mxu0 %v549
  %781 = vmatprep.subr.bf16.mxu0 0
  %782 = vmatpush1.bf16.msra.mxu0 %v550
  %783 = vmatprep.subr.bf16.mxu0 0
  %784 = vmatpush1.bf16.msra.mxu0 %v551
  %785 = vmatprep.subr.bf16.mxu0 0
  %786 = vmatpush1.bf16.msra.mxu0 %v552
  %787 = vmatprep.subr.bf16.mxu0 0
  %788 = vmatpush1.bf16.msra.mxu0 %v553
  %789 = vmatprep.subr.bf16.mxu0 0
  %790 = vmatpush1.bf16.msra.mxu0 %v554
  %791 = vmatprep.subr.bf16.mxu0 0
  %792 = vmatpush1.bf16.msra.mxu0 %v555
  %793 = vmatprep.subr.bf16.mxu0 0
  %794 = vmatpush1.bf16.msra.mxu0 %v556
  %795 = vmatprep.subr.bf16.mxu0 0
  %796 = vmatpush1.bf16.msra.mxu0 %v557
  %797 = vmatprep.subr.bf16.mxu0 0
  %798 = vmatpush1.bf16.msra.mxu0 %v558
  %799 = vmatprep.subr.bf16.mxu0 0
  %800 = vmatpush1.bf16.msra.mxu0 %v559
  %801 = vmatprep.subr.bf16.mxu0 0
  %802 = vmatpush1.bf16.msra.mxu0 %v560
  %803 = vmatprep.subr.bf16.mxu0 0
  %804 = vmatpush1.bf16.msra.mxu0 %v561
  %805 = vmatprep.mubr.bf16.mxu0 %v217
  %806 = vmatmul.mubr.bf16.gmra.mrb[0].mxu0 %v216
  %v807 = vpop.f32.mrb[0].mxu0
  %v808 = vadd.f32 %v759, %v807
  %v809 = vpop.f32.mrb[0].mxu0
  %v810 = vpop.f32.mrb[0].mxu0
  %v811 = vadd.f32 %v762, %v810
  %v812 = vpop.f32.mrb[0].mxu0
  %813 = vmatprep.mubr.bf16.mxu0 %v225
  %814 = vmatmul.mubr.bf16.gmra.mrb[0].mxu0 %v224
  %v815 = vpop.f32.mrb[0].mxu0
  %v816 = vadd.f32 %v767, %v815
  %v817 = vpop.f32.mrb[0].mxu0
  %v818 = vpop.f32.mrb[0].mxu0
  %v819 = vadd.f32 %v770, %v818
  %v820 = vpop.f32.mrb[0].mxu0
  %821 = vdwg.mxu0
  %822 = vst [vmem:[%s4] sm:$0xff] %v808
  %823 = vst [vmem:[%s4 + $0x8] sm:$0xff] %v811
  %824 = vst [vmem:[%s4 + $0x10] sm:$0xff] %v816
  %825 = vst [vmem:[%s4 + $0x18] sm:$0xff] %v819
  // Predicated region
  $region18: #{vae_forward.12} parent=0 // pred_check
    _
  $region19: #{vae_forward.12} parent=0 // pred_check_branch
    %827 = sbr.rel (0) target = $region21
  $region20: #{vae_forward.12} parent=0 // pred_region
    _
  $region21: #{vae_forward.12} parent=0 // pred_fallthru
    _
  // Predicated region
  $region22: #{vae_forward.12} parent=0 // pred_check
    _
  $region23: #{vae_forward.12} parent=0 // pred_check_branch
    %829 = sbr.rel (0) target = $region25
  $region24: #{vae_forward.12} parent=0 // pred_region
    _
  $region25: #{vae_forward.12} parent=0 // pred_fallthru
    _

// kernel: vae_forward.13
$region0: #{vae_forward.13}
  #allocation0 [shape = 'u32[]', space=smem, size = 0x4, offset = 0x4, fixed_abs, tag = 'smem constant byte address 0x4 - core index']
  #allocation1 [shape = 'u32[144,128]{1,0:T(1,128)}', space=vmem, size = 0x12000, scoped, tag = 'internal scratch']
  %s0 = inlined_call_operand.vmem [shape: bf16[2,2048], index: 0, kind: input, shape index: {}]
  %s1 = inlined_call_operand.vmem [shape: bf16[2048,30], index: 1, kind: input, shape index: {}]
  %s2 = inlined_call_operand.vmem [shape: f32[1,30], index: 2, kind: input, shape index: {}]
  %s3 = inlined_call_operand.vmem [shape: f32[2,30], index: 3, kind: output, shape index: {}]
  %s4 = sld [smem:[#allocation0]]
  $region22: #{vae_forward.13} parent=0
    _
  %s6 = ssub.s32 1, %s4
  %s7 = scalar_select 0, %s6, %s4
  // Predicated region
  $region2: #{vae_forward.13} parent=0 // pred_check
    _
  $region3: #{vae_forward.13} parent=0 // pred_check_branch
    %9 = sbr.rel (0) target = $region5
  $region4: #{vae_forward.13} parent=0 // pred_region
    _
  $region5: #{vae_forward.13} parent=0 // pred_fallthru
    _
  // Predicated region
  $region6: #{vae_forward.13} parent=0 // pred_check
    _
  $region7: #{vae_forward.13} parent=0 // pred_check_branch
    %11 = sbr.rel (0) target = $region9
  $region8: #{vae_forward.13} parent=0 // pred_region
    _
  $region9: #{vae_forward.13} parent=0 // pred_fallthru
    _
  // Predicated region
  $region10: #{vae_forward.13} parent=0 // pred_check
    _
  $region11: #{vae_forward.13} parent=0 // pred_check_branch
    %13 = sbr.rel (0) target = $region13
  $region12: #{vae_forward.13} parent=0 // pred_region
    _
  $region13: #{vae_forward.13} parent=0 // pred_fallthru
    _
  %v15 = vld [vmem:[%s0] sm:$0xff]
  %v16 = vld [vmem:[%s0 + $0x8] sm:$0xff]
  %v17 = vld [vmem:[%s1] sm:$0xf]
  %v18 = vld [vmem:[%s1 + $0x4] sm:$0xf]
  %v19 = vld [vmem:[%s1 + $0x8] sm:$0xf]
  %v20 = vld [vmem:[%s1 + $0xc] sm:$0xf]
  %v21 = vld [vmem:[%s1 + $0x10] sm:$0xf]
  %v22 = vld [vmem:[%s1 + $0x14] sm:$0xf]
  %v23 = vld [vmem:[%s1 + $0x18] sm:$0xf]
  %v24 = vld [vmem:[%s1 + $0x1c] sm:$0xf]
  %v25 = vld [vmem:[%s1 + $0x20] sm:$0xf]
  %v26 = vld [vmem:[%s1 + $0x24] sm:$0xf]
  %v27 = vld [vmem:[%s1 + $0x28] sm:$0xf]
  %v28 = vld [vmem:[%s1 + $0x2c] sm:$0xf]
  %v29 = vld [vmem:[%s1 + $0x30] sm:$0xf]
  %v30 = vld [vmem:[%s1 + $0x34] sm:$0xf]
  %v31 = vld [vmem:[%s1 + $0x38] sm:$0xf]
  %v32 = vld [vmem:[%s1 + $0x3c] sm:$0xf]
  %v33 = vld [vmem:[%s1 + $0x40] sm:$0xf]
  %v34 = vld [vmem:[%s1 + $0x44] sm:$0xf]
  %v35 = vld [vmem:[%s1 + $0x48] sm:$0xf]
  %v36 = vld [vmem:[%s1 + $0x4c] sm:$0xf]
  %v37 = vld [vmem:[%s1 + $0x50] sm:$0xf]
  %v38 = vld [vmem:[%s1 + $0x54] sm:$0xf]
  %v39 = vld [vmem:[%s1 + $0x58] sm:$0xf]
  %v40 = vld [vmem:[%s1 + $0x5c] sm:$0xf]
  %v41 = vld [vmem:[%s1 + $0x60] sm:$0xf]
  %v42 = vld [vmem:[%s1 + $0x64] sm:$0xf]
  %v43 = vld [vmem:[%s1 + $0x68] sm:$0xf]
  %v44 = vld [vmem:[%s1 + $0x6c] sm:$0xf]
  %v45 = vld [vmem:[%s1 + $0x70] sm:$0xf]
  %v46 = vld [vmem:[%s1 + $0x74] sm:$0xf]
  %v47 = vld [vmem:[%s1 + $0x78] sm:$0xf]
  %v48 = vld [vmem:[%s1 + $0x7c] sm:$0xf]
  %v49 = vld [vmem:[%s1 + $0x80] sm:$0xf]
  %v50 = vld [vmem:[%s1 + $0x84] sm:$0xf]
  %v51 = vld [vmem:[%s1 + $0x88] sm:$0xf]
  %v52 = vld [vmem:[%s1 + $0x8c] sm:$0xf]
  %v53 = vld [vmem:[%s1 + $0x90] sm:$0xf]
  %v54 = vld [vmem:[%s1 + $0x94] sm:$0xf]
  %v55 = vld [vmem:[%s1 + $0x98] sm:$0xf]
  %v56 = vld [vmem:[%s1 + $0x9c] sm:$0xf]
  %v57 = vld [vmem:[%s1 + $0xa0] sm:$0xf]
  %v58 = vld [vmem:[%s1 + $0xa4] sm:$0xf]
  %v59 = vld [vmem:[%s1 + $0xa8] sm:$0xf]
  %v60 = vld [vmem:[%s1 + $0xac] sm:$0xf]
  %v61 = vld [vmem:[%s1 + $0xb0] sm:$0xf]
  %v62 = vld [vmem:[%s1 + $0xb4] sm:$0xf]
  %v63 = vld [vmem:[%s1 + $0xb8] sm:$0xf]
  %v64 = vld [vmem:[%s1 + $0xbc] sm:$0xf]
  %v65 = vld [vmem:[%s1 + $0xc0] sm:$0xf]
  %v66 = vld [vmem:[%s1 + $0xc4] sm:$0xf]
  %v67 = vld [vmem:[%s1 + $0xc8] sm:$0xf]
  %v68 = vld [vmem:[%s1 + $0xcc] sm:$0xf]
  %v69 = vld [vmem:[%s1 + $0xd0] sm:$0xf]
  %v70 = vld [vmem:[%s1 + $0xd4] sm:$0xf]
  %v71 = vld [vmem:[%s1 + $0xd8] sm:$0xf]
  %v72 = vld [vmem:[%s1 + $0xdc] sm:$0xf]
  %v73 = vld [vmem:[%s1 + $0xe0] sm:$0xf]
  %v74 = vld [vmem:[%s1 + $0xe4] sm:$0xf]
  %v75 = vld [vmem:[%s1 + $0xe8] sm:$0xf]
  %v76 = vld [vmem:[%s1 + $0xec] sm:$0xf]
  %v77 = vld [vmem:[%s1 + $0xf0] sm:$0xf]
  %v78 = vld [vmem:[%s1 + $0xf4] sm:$0xf]
  %v79 = vld [vmem:[%s1 + $0xf8] sm:$0xf]
  %v80 = vld [vmem:[%s1 + $0xfc] sm:$0xf]
  %v81 = vld [vmem:[%s1 + $0x100] sm:$0xf]
  %v82 = vld [vmem:[%s1 + $0x104] sm:$0xf]
  %v83 = vld [vmem:[%s1 + $0x108] sm:$0xf]
  %v84 = vld [vmem:[%s1 + $0x10c] sm:$0xf]
  %v85 = vld [vmem:[%s1 + $0x110] sm:$0xf]
  %v86 = vld [vmem:[%s1 + $0x114] sm:$0xf]
  %v87 = vld [vmem:[%s1 + $0x118] sm:$0xf]
  %v88 = vld [vmem:[%s1 + $0x11c] sm:$0xf]
  %v89 = vld [vmem:[%s1 + $0x120] sm:$0xf]
  %v90 = vld [vmem:[%s1 + $0x124] sm:$0xf]
  %v91 = vld [vmem:[%s1 + $0x128] sm:$0xf]
  %v92 = vld [vmem:[%s1 + $0x12c] sm:$0xf]
  %v93 = vld [vmem:[%s1 + $0x130] sm:$0xf]
  %v94 = vld [vmem:[%s1 + $0x134] sm:$0xf]
  %v95 = vld [vmem:[%s1 + $0x138] sm:$0xf]
  %v96 = vld [vmem:[%s1 + $0x13c] sm:$0xf]
  %v97 = vld [vmem:[%s1 + $0x140] sm:$0xf]
  %v98 = vld [vmem:[%s1 + $0x144] sm:$0xf]
  %v99 = vld [vmem:[%s1 + $0x148] sm:$0xf]
  %v100 = vld [vmem:[%s1 + $0x14c] sm:$0xf]
  %v101 = vld [vmem:[%s1 + $0x150] sm:$0xf]
  %v102 = vld [vmem:[%s1 + $0x154] sm:$0xf]
  %v103 = vld [vmem:[%s1 + $0x158] sm:$0xf]
  %v104 = vld [vmem:[%s1 + $0x15c] sm:$0xf]
  %v105 = vld [vmem:[%s1 + $0x160] sm:$0xf]
  %v106 = vld [vmem:[%s1 + $0x164] sm:$0xf]
  %v107 = vld [vmem:[%s1 + $0x168] sm:$0xf]
  %v108 = vld [vmem:[%s1 + $0x16c] sm:$0xf]
  %v109 = vld [vmem:[%s1 + $0x170] sm:$0xf]
  %v110 = vld [vmem:[%s1 + $0x174] sm:$0xf]
  %v111 = vld [vmem:[%s1 + $0x178] sm:$0xf]
  %v112 = vld [vmem:[%s1 + $0x17c] sm:$0xf]
  %v113 = vld [vmem:[%s1 + $0x180] sm:$0xf]
  %v114 = vld [vmem:[%s1 + $0x184] sm:$0xf]
  %v115 = vld [vmem:[%s1 + $0x188] sm:$0xf]
  %v116 = vld [vmem:[%s1 + $0x18c] sm:$0xf]
  %v117 = vld [vmem:[%s1 + $0x190] sm:$0xf]
  %v118 = vld [vmem:[%s1 + $0x194] sm:$0xf]
  %v119 = vld [vmem:[%s1 + $0x198] sm:$0xf]
  %v120 = vld [vmem:[%s1 + $0x19c] sm:$0xf]
  %v121 = vld [vmem:[%s1 + $0x1a0] sm:$0xf]
  %v122 = vld [vmem:[%s1 + $0x1a4] sm:$0xf]
  %v123 = vld [vmem:[%s1 + $0x1a8] sm:$0xf]
  %v124 = vld [vmem:[%s1 + $0x1ac] sm:$0xf]
  %v125 = vld [vmem:[%s1 + $0x1b0] sm:$0xf]
  %v126 = vld [vmem:[%s1 + $0x1b4] sm:$0xf]
  %v127 = vld [vmem:[%s1 + $0x1b8] sm:$0xf]
  %v128 = vld [vmem:[%s1 + $0x1bc] sm:$0xf]
  %v129 = vld [vmem:[%s1 + $0x1c0] sm:$0xf]
  %v130 = vld [vmem:[%s1 + $0x1c4] sm:$0xf]
  %v131 = vld [vmem:[%s1 + $0x1c8] sm:$0xf]
  %v132 = vld [vmem:[%s1 + $0x1cc] sm:$0xf]
  %v133 = vld [vmem:[%s1 + $0x1d0] sm:$0xf]
  %v134 = vld [vmem:[%s1 + $0x1d4] sm:$0xf]
  %v135 = vld [vmem:[%s1 + $0x1d8] sm:$0xf]
  %v136 = vld [vmem:[%s1 + $0x1dc] sm:$0xf]
  %v137 = vld [vmem:[%s1 + $0x1e0] sm:$0xf]
  %v138 = vld [vmem:[%s1 + $0x1e4] sm:$0xf]
  %v139 = vld [vmem:[%s1 + $0x1e8] sm:$0xf]
  %v140 = vld [vmem:[%s1 + $0x1ec] sm:$0xf]
  %v141 = vld [vmem:[%s1 + $0x1f0] sm:$0xf]
  %v142 = vld [vmem:[%s1 + $0x1f4] sm:$0xf]
  %v143 = vld [vmem:[%s1 + $0x1f8] sm:$0xf]
  %v144 = vld [vmem:[%s1 + $0x1fc] sm:$0xf]
  %v145 = vld [vmem:[%s1 + $0x200] sm:$0xf]
  %v146 = vld [vmem:[%s1 + $0x204] sm:$0xf]
  %v147 = vld [vmem:[%s1 + $0x208] sm:$0xf]
  %v148 = vld [vmem:[%s1 + $0x20c] sm:$0xf]
  %v149 = vld [vmem:[%s1 + $0x210] sm:$0xf]
  %v150 = vld [vmem:[%s1 + $0x214] sm:$0xf]
  %v151 = vld [vmem:[%s1 + $0x218] sm:$0xf]
  %v152 = vld [vmem:[%s1 + $0x21c] sm:$0xf]
  %v153 = vld [vmem:[%s1 + $0x220] sm:$0xf]
  %v154 = vld [vmem:[%s1 + $0x224] sm:$0xf]
  %v155 = vld [vmem:[%s1 + $0x228] sm:$0xf]
  %v156 = vld [vmem:[%s1 + $0x22c] sm:$0xf]
  %v157 = vld [vmem:[%s1 + $0x230] sm:$0xf]
  %v158 = vld [vmem:[%s1 + $0x234] sm:$0xf]
  %v159 = vld [vmem:[%s1 + $0x238] sm:$0xf]
  %v160 = vld [vmem:[%s1 + $0x23c] sm:$0xf]
  %v161 = vld [vmem:[%s1 + $0x240] sm:$0xf]
  %v162 = vld [vmem:[%s1 + $0x244] sm:$0xf]
  %v163 = vld [vmem:[%s1 + $0x248] sm:$0xf]
  %v164 = vld [vmem:[%s1 + $0x24c] sm:$0xf]
  %v165 = vld [vmem:[%s1 + $0x250] sm:$0xf]
  %v166 = vld [vmem:[%s1 + $0x254] sm:$0xf]
  %v167 = vld [vmem:[%s1 + $0x258] sm:$0xf]
  %v168 = vld [vmem:[%s1 + $0x25c] sm:$0xf]
  %v169 = vld [vmem:[%s1 + $0x260] sm:$0xf]
  %v170 = vld [vmem:[%s1 + $0x264] sm:$0xf]
  %v171 = vld [vmem:[%s1 + $0x268] sm:$0xf]
  %v172 = vld [vmem:[%s1 + $0x26c] sm:$0xf]
  %v173 = vld [vmem:[%s1 + $0x270] sm:$0xf]
  %v174 = vld [vmem:[%s1 + $0x274] sm:$0xf]
  %v175 = vld [vmem:[%s1 + $0x278] sm:$0xf]
  %v176 = vld [vmem:[%s1 + $0x27c] sm:$0xf]
  %v177 = vld [vmem:[%s1 + $0x280] sm:$0xf]
  %v178 = vld [vmem:[%s1 + $0x284] sm:$0xf]
  %v179 = vld [vmem:[%s1 + $0x288] sm:$0xf]
  %v180 = vld [vmem:[%s1 + $0x28c] sm:$0xf]
  %v181 = vld [vmem:[%s1 + $0x290] sm:$0xf]
  %v182 = vld [vmem:[%s1 + $0x294] sm:$0xf]
  %v183 = vld [vmem:[%s1 + $0x298] sm:$0xf]
  %v184 = vld [vmem:[%s1 + $0x29c] sm:$0xf]
  %v185 = vld [vmem:[%s1 + $0x2a0] sm:$0xf]
  %v186 = vld [vmem:[%s1 + $0x2a4] sm:$0xf]
  %v187 = vld [vmem:[%s1 + $0x2a8] sm:$0xf]
  %v188 = vld [vmem:[%s1 + $0x2ac] sm:$0xf]
  %v189 = vld [vmem:[%s1 + $0x2b0] sm:$0xf]
  %v190 = vld [vmem:[%s1 + $0x2b4] sm:$0xf]
  %v191 = vld [vmem:[%s1 + $0x2b8] sm:$0xf]
  %v192 = vld [vmem:[%s1 + $0x2bc] sm:$0xf]
  %v193 = vld [vmem:[%s1 + $0x2c0] sm:$0xf]
  %v194 = vld [vmem:[%s1 + $0x2c4] sm:$0xf]
  %v195 = vld [vmem:[%s1 + $0x2c8] sm:$0xf]
  %v196 = vld [vmem:[%s1 + $0x2cc] sm:$0xf]
  %v197 = vld [vmem:[%s1 + $0x2d0] sm:$0xf]
  %v198 = vld [vmem:[%s1 + $0x2d4] sm:$0xf]
  %v199 = vld [vmem:[%s1 + $0x2d8] sm:$0xf]
  %v200 = vld [vmem:[%s1 + $0x2dc] sm:$0xf]
  %v201 = vld [vmem:[%s1 + $0x2e0] sm:$0xf]
  %v202 = vld [vmem:[%s1 + $0x2e4] sm:$0xf]
  %v203 = vld [vmem:[%s1 + $0x2e8] sm:$0xf]
  %v204 = vld [vmem:[%s1 + $0x2ec] sm:$0xf]
  %v205 = vld [vmem:[%s1 + $0x2f0] sm:$0xf]
  %v206 = vld [vmem:[%s1 + $0x2f4] sm:$0xf]
  %v207 = vld [vmem:[%s1 + $0x2f8] sm:$0xf]
  %v208 = vld [vmem:[%s1 + $0x2fc] sm:$0xf]
  %v209 = vld [vmem:[%s1 + $0x300] sm:$0xf]
  %v210 = vld [vmem:[%s1 + $0x304] sm:$0xf]
  %v211 = vld [vmem:[%s1 + $0x308] sm:$0xf]
  %v212 = vld [vmem:[%s1 + $0x30c] sm:$0xf]
  %v213 = vld [vmem:[%s1 + $0x310] sm:$0xf]
  %v214 = vld [vmem:[%s1 + $0x314] sm:$0xf]
  %v215 = vld [vmem:[%s1 + $0x318] sm:$0xf]
  %v216 = vld [vmem:[%s1 + $0x31c] sm:$0xf]
  %v217 = vld [vmem:[%s1 + $0x320] sm:$0xf]
  %v218 = vld [vmem:[%s1 + $0x324] sm:$0xf]
  %v219 = vld [vmem:[%s1 + $0x328] sm:$0xf]
  %v220 = vld [vmem:[%s1 + $0x32c] sm:$0xf]
  %v221 = vld [vmem:[%s1 + $0x330] sm:$0xf]
  %v222 = vld [vmem:[%s1 + $0x334] sm:$0xf]
  %v223 = vld [vmem:[%s1 + $0x338] sm:$0xf]
  %v224 = vld [vmem:[%s1 + $0x33c] sm:$0xf]
  %v225 = vld [vmem:[%s1 + $0x340] sm:$0xf]
  %v226 = vld [vmem:[%s1 + $0x344] sm:$0xf]
  %v227 = vld [vmem:[%s1 + $0x348] sm:$0xf]
  %v228 = vld [vmem:[%s1 + $0x34c] sm:$0xf]
  %v229 = vld [vmem:[%s1 + $0x350] sm:$0xf]
  %v230 = vld [vmem:[%s1 + $0x354] sm:$0xf]
  %v231 = vld [vmem:[%s1 + $0x358] sm:$0xf]
  %v232 = vld [vmem:[%s1 + $0x35c] sm:$0xf]
  %v233 = vld [vmem:[%s1 + $0x360] sm:$0xf]
  %v234 = vld [vmem:[%s1 + $0x364] sm:$0xf]
  %v235 = vld [vmem:[%s1 + $0x368] sm:$0xf]
  %v236 = vld [vmem:[%s1 + $0x36c] sm:$0xf]
  %v237 = vld [vmem:[%s1 + $0x370] sm:$0xf]
  %v238 = vld [vmem:[%s1 + $0x374] sm:$0xf]
  %v239 = vld [vmem:[%s1 + $0x378] sm:$0xf]
  %v240 = vld [vmem:[%s1 + $0x37c] sm:$0xf]
  %v241 = vld [vmem:[%s1 + $0x380] sm:$0xf]
  %v242 = vld [vmem:[%s1 + $0x384] sm:$0xf]
  %v243 = vld [vmem:[%s1 + $0x388] sm:$0xf]
  %v244 = vld [vmem:[%s1 + $0x38c] sm:$0xf]
  %v245 = vld [vmem:[%s1 + $0x390] sm:$0xf]
  %v246 = vld [vmem:[%s1 + $0x394] sm:$0xf]
  %v247 = vld [vmem:[%s1 + $0x398] sm:$0xf]
  %v248 = vld [vmem:[%s1 + $0x39c] sm:$0xf]
  %v249 = vld [vmem:[%s1 + $0x3a0] sm:$0xf]
  %v250 = vld [vmem:[%s1 + $0x3a4] sm:$0xf]
  %v251 = vld [vmem:[%s1 + $0x3a8] sm:$0xf]
  %v252 = vld [vmem:[%s1 + $0x3ac] sm:$0xf]
  %v253 = vld [vmem:[%s1 + $0x3b0] sm:$0xf]
  %v254 = vld [vmem:[%s1 + $0x3b4] sm:$0xf]
  %v255 = vld [vmem:[%s1 + $0x3b8] sm:$0xf]
  %v256 = vld [vmem:[%s1 + $0x3bc] sm:$0xf]
  %v257 = vld [vmem:[%s1 + $0x3c0] sm:$0xf]
  %v258 = vld [vmem:[%s1 + $0x3c4] sm:$0xf]
  %v259 = vld [vmem:[%s1 + $0x3c8] sm:$0xf]
  %v260 = vld [vmem:[%s1 + $0x3cc] sm:$0xf]
  %v261 = vld [vmem:[%s1 + $0x3d0] sm:$0xf]
  %v262 = vld [vmem:[%s1 + $0x3d4] sm:$0xf]
  %v263 = vld [vmem:[%s1 + $0x3d8] sm:$0xf]
  %v264 = vld [vmem:[%s1 + $0x3dc] sm:$0xf]
  %v265 = vld [vmem:[%s1 + $0x3e0] sm:$0xf]
  %v266 = vld [vmem:[%s1 + $0x3e4] sm:$0xf]
  %v267 = vld [vmem:[%s1 + $0x3e8] sm:$0xf]
  %v268 = vld [vmem:[%s1 + $0x3ec] sm:$0xf]
  %v269 = vld [vmem:[%s1 + $0x3f0] sm:$0xf]
  %v270 = vld [vmem:[%s1 + $0x3f4] sm:$0xf]
  %v271 = vld [vmem:[%s1 + $0x3f8] sm:$0xf]
  %v272 = vld [vmem:[%s1 + $0x3fc] sm:$0xf]
  %v273 = vld [vmem:[%s2] sm:$0x1]
  %v275 = vlaneseq
  %v276 = vshrl.u32 %v275, 7
  %v277 = vsub.s32 0, %v276
  %v278 = vrot.slane %v273, %v277
  %v282 = vcombine.high %v15, %v15
  %v284 = vunpack.c.l.s4 1966171168
  %v285 = vunpack.c.0.s8 %v284
  %v286 = vlaneseq
  %v287 = vshrl.u32 %v286, 7
  %v288 = vsub.s32 %v285, %v287
  %v289 = vrot.slane %v15, %v288
  %v291 = vunpack.c.l.s4 1966171168
  %v292 = vunpack.c.0.s8 %v291
  %v293 = vlaneseq
  %v294 = vshrl.u32 %v293, 7
  %v295 = vsub.s32 %v292, %v294
  %v296 = vrot.slane %v282, %v295
  %v297 = vcombine.high %v289, %v289
  %v298 = vcombine.high %v296, %v296
  %v300 = vunpack.c.l.s4 1966171168
  %v301 = vunpack.c.0.s8 %v300
  %v302 = vlaneseq
  %v303 = vshrl.u32 %v302, 7
  %v304 = vsub.s32 %v301, %v303
  %v305 = vrot.slane %v289, %v304
  %v307 = vunpack.c.l.s4 1966171168
  %v308 = vunpack.c.0.s8 %v307
  %v309 = vlaneseq
  %v310 = vshrl.u32 %v309, 7
  %v311 = vsub.s32 %v308, %v310
  %v312 = vrot.slane %v296, %v311
  %v314 = vunpack.c.l.s4 1966171168
  %v315 = vunpack.c.0.s8 %v314
  %v316 = vlaneseq
  %v317 = vshrl.u32 %v316, 7
  %v318 = vsub.s32 %v315, %v317
  %v319 = vrot.slane %v297, %v318
  %v321 = vunpack.c.l.s4 1966171168
  %v322 = vunpack.c.0.s8 %v321
  %v323 = vlaneseq
  %v324 = vshrl.u32 %v323, 7
  %v325 = vsub.s32 %v322, %v324
  %v326 = vrot.slane %v298, %v325
  %v327 = vcombine.high %v305, %v305
  %v328 = vcombine.high %v312, %v312
  %v329 = vcombine.high %v319, %v319
  %v330 = vcombine.high %v326, %v326
  %v331 = vcombine.high %v16, %v16
  %v333 = vunpack.c.l.s4 1966171168
  %v334 = vunpack.c.0.s8 %v333
  %v335 = vlaneseq
  %v336 = vshrl.u32 %v335, 7
  %v337 = vsub.s32 %v334, %v336
  %v338 = vrot.slane %v16, %v337
  %v340 = vunpack.c.l.s4 1966171168
  %v341 = vunpack.c.0.s8 %v340
  %v342 = vlaneseq
  %v343 = vshrl.u32 %v342, 7
  %v344 = vsub.s32 %v341, %v343
  %v345 = vrot.slane %v331, %v344
  %v346 = vcombine.high %v338, %v338
  %v347 = vcombine.high %v345, %v345
  %v349 = vunpack.c.l.s4 1966171168
  %v350 = vunpack.c.0.s8 %v349
  %v351 = vlaneseq
  %v352 = vshrl.u32 %v351, 7
  %v353 = vsub.s32 %v350, %v352
  %v354 = vrot.slane %v338, %v353
  %v356 = vunpack.c.l.s4 1966171168
  %v357 = vunpack.c.0.s8 %v356
  %v358 = vlaneseq
  %v359 = vshrl.u32 %v358, 7
  %v360 = vsub.s32 %v357, %v359
  %v361 = vrot.slane %v345, %v360
  %v363 = vunpack.c.l.s4 1966171168
  %v364 = vunpack.c.0.s8 %v363
  %v365 = vlaneseq
  %v366 = vshrl.u32 %v365, 7
  %v367 = vsub.s32 %v364, %v366
  %v368 = vrot.slane %v346, %v367
  %v370 = vunpack.c.l.s4 1966171168
  %v371 = vunpack.c.0.s8 %v370
  %v372 = vlaneseq
  %v373 = vshrl.u32 %v372, 7
  %v374 = vsub.s32 %v371, %v373
  %v375 = vrot.slane %v347, %v374
  %v376 = vcombine.high %v354, %v354
  %v377 = vcombine.high %v361, %v361
  %v378 = vcombine.high %v368, %v368
  %v379 = vcombine.high %v375, %v375
  %v652 = vunpack.c.l.b16 %v17
  %v653 = vunpack.c.l.b16 %v18
  %v654 = vunpack.c.l.b16 %v19
  %v655 = vunpack.c.l.b16 %v20
  %v656 = vunpack.c.l.b16 %v21
  %v657 = vunpack.c.l.b16 %v22
  %v658 = vunpack.c.l.b16 %v23
  %v659 = vunpack.c.l.b16 %v24
  %v660 = vunpack.c.l.b16 %v25
  %v661 = vunpack.c.l.b16 %v26
  %v662 = vunpack.c.l.b16 %v27
  %v663 = vunpack.c.l.b16 %v28
  %v664 = vunpack.c.l.b16 %v29
  %v665 = vunpack.c.l.b16 %v30
  %v666 = vunpack.c.l.b16 %v31
  %v667 = vunpack.c.l.b16 %v32
  %v668 = vunpack.c.l.b16 %v33
  %v669 = vunpack.c.l.b16 %v34
  %v670 = vunpack.c.l.b16 %v35
  %v671 = vunpack.c.l.b16 %v36
  %v672 = vunpack.c.l.b16 %v37
  %v673 = vunpack.c.l.b16 %v38
  %v674 = vunpack.c.l.b16 %v39
  %v675 = vunpack.c.l.b16 %v40
  %v676 = vunpack.c.l.b16 %v41
  %v677 = vunpack.c.l.b16 %v42
  %v678 = vunpack.c.l.b16 %v43
  %v679 = vunpack.c.l.b16 %v44
  %v680 = vunpack.c.l.b16 %v45
  %v681 = vunpack.c.l.b16 %v46
  %v682 = vunpack.c.l.b16 %v47
  %v683 = vunpack.c.l.b16 %v48
  %v684 = vunpack.c.l.b16 %v49
  %v685 = vunpack.c.l.b16 %v50
  %v686 = vunpack.c.l.b16 %v51
  %v687 = vunpack.c.l.b16 %v52
  %v688 = vunpack.c.l.b16 %v53
  %v689 = vunpack.c.l.b16 %v54
  %v690 = vunpack.c.l.b16 %v55
  %v691 = vunpack.c.l.b16 %v56
  %v692 = vunpack.c.l.b16 %v57
  %v693 = vunpack.c.l.b16 %v58
  %v694 = vunpack.c.l.b16 %v59
  %v695 = vunpack.c.l.b16 %v60
  %v696 = vunpack.c.l.b16 %v61
  %v697 = vunpack.c.l.b16 %v62
  %v698 = vunpack.c.l.b16 %v63
  %v699 = vunpack.c.l.b16 %v64
  %v700 = vunpack.c.l.b16 %v65
  %v701 = vunpack.c.l.b16 %v66
  %v702 = vunpack.c.l.b16 %v67
  %v703 = vunpack.c.l.b16 %v68
  %v704 = vunpack.c.l.b16 %v69
  %v705 = vunpack.c.l.b16 %v70
  %v706 = vunpack.c.l.b16 %v71
  %v707 = vunpack.c.l.b16 %v72
  %v708 = vunpack.c.l.b16 %v73
  %v709 = vunpack.c.l.b16 %v74
  %v710 = vunpack.c.l.b16 %v75
  %v711 = vunpack.c.l.b16 %v76
  %v712 = vunpack.c.l.b16 %v77
  %v713 = vunpack.c.l.b16 %v78
  %v714 = vunpack.c.l.b16 %v79
  %v715 = vunpack.c.l.b16 %v80
  %v716 = vunpack.c.l.b16 %v81
  %v717 = vunpack.c.l.b16 %v82
  %v718 = vunpack.c.l.b16 %v83
  %v719 = vunpack.c.l.b16 %v84
  %v720 = vunpack.c.l.b16 %v85
  %v721 = vunpack.c.l.b16 %v86
  %v722 = vunpack.c.l.b16 %v87
  %v723 = vunpack.c.l.b16 %v88
  %v724 = vunpack.c.l.b16 %v89
  %v725 = vunpack.c.l.b16 %v90
  %v726 = vunpack.c.l.b16 %v91
  %v727 = vunpack.c.l.b16 %v92
  %v728 = vunpack.c.l.b16 %v93
  %v729 = vunpack.c.l.b16 %v94
  %v730 = vunpack.c.l.b16 %v95
  %v731 = vunpack.c.l.b16 %v96
  %v732 = vunpack.c.l.b16 %v97
  %v733 = vunpack.c.l.b16 %v98
  %v734 = vunpack.c.l.b16 %v99
  %v735 = vunpack.c.l.b16 %v100
  %v736 = vunpack.c.l.b16 %v101
  %v737 = vunpack.c.l.b16 %v102
  %v738 = vunpack.c.l.b16 %v103
  %v739 = vunpack.c.l.b16 %v104
  %v740 = vunpack.c.l.b16 %v105
  %v741 = vunpack.c.l.b16 %v106
  %v742 = vunpack.c.l.b16 %v107
  %v743 = vunpack.c.l.b16 %v108
  %v744 = vunpack.c.l.b16 %v109
  %v745 = vunpack.c.l.b16 %v110
  %v746 = vunpack.c.l.b16 %v111
  %v747 = vunpack.c.l.b16 %v112
  %v748 = vunpack.c.l.b16 %v113
  %v749 = vunpack.c.l.b16 %v114
  %v750 = vunpack.c.l.b16 %v115
  %v751 = vunpack.c.l.b16 %v116
  %v752 = vunpack.c.l.b16 %v117
  %v753 = vunpack.c.l.b16 %v118
  %v754 = vunpack.c.l.b16 %v119
  %v755 = vunpack.c.l.b16 %v120
  %v756 = vunpack.c.l.b16 %v121
  %v757 = vunpack.c.l.b16 %v122
  %v758 = vunpack.c.l.b16 %v123
  %v759 = vunpack.c.l.b16 %v124
  %v760 = vunpack.c.l.b16 %v125
  %v761 = vunpack.c.l.b16 %v126
  %v762 = vunpack.c.l.b16 %v127
  %v763 = vunpack.c.l.b16 %v128
  %v764 = vunpack.c.l.b16 %v129
  %v765 = vunpack.c.l.b16 %v130
  %v766 = vunpack.c.l.b16 %v131
  %v767 = vunpack.c.l.b16 %v132
  %v768 = vunpack.c.l.b16 %v133
  %v769 = vunpack.c.l.b16 %v134
  %v770 = vunpack.c.l.b16 %v135
  %v771 = vunpack.c.l.b16 %v136
  %v772 = vunpack.c.l.b16 %v137
  %v773 = vunpack.c.l.b16 %v138
  %v774 = vunpack.c.l.b16 %v139
  %v775 = vunpack.c.l.b16 %v140
  %v776 = vunpack.c.l.b16 %v141
  %v777 = vunpack.c.l.b16 %v142
  %v778 = vunpack.c.l.b16 %v143
  %v779 = vunpack.c.l.b16 %v144
  %v780 = vunpack.c.l.b16 %v145
  %v781 = vunpack.c.l.b16 %v146
  %v782 = vunpack.c.l.b16 %v147
  %v783 = vunpack.c.l.b16 %v148
  %v784 = vunpack.c.l.b16 %v149
  %v785 = vunpack.c.l.b16 %v150
  %v786 = vunpack.c.l.b16 %v151
  %v787 = vunpack.c.l.b16 %v152
  %v788 = vunpack.c.l.b16 %v153
  %v789 = vunpack.c.l.b16 %v154
  %v790 = vunpack.c.l.b16 %v155
  %v791 = vunpack.c.l.b16 %v156
  %v792 = vunpack.c.l.b16 %v157
  %v793 = vunpack.c.l.b16 %v158
  %v794 = vunpack.c.l.b16 %v159
  %v795 = vunpack.c.l.b16 %v160
  %v796 = vunpack.c.l.b16 %v161
  %v797 = vunpack.c.l.b16 %v162
  %v798 = vunpack.c.l.b16 %v163
  %v799 = vunpack.c.l.b16 %v164
  %v800 = vunpack.c.l.b16 %v165
  %v801 = vunpack.c.l.b16 %v166
  %v802 = vunpack.c.l.b16 %v167
  %v803 = vunpack.c.l.b16 %v168
  %v804 = vunpack.c.l.b16 %v169
  %v805 = vunpack.c.l.b16 %v170
  %v806 = vunpack.c.l.b16 %v171
  %v807 = vunpack.c.l.b16 %v172
  %v808 = vunpack.c.l.b16 %v173
  %v809 = vunpack.c.l.b16 %v174
  %v810 = vunpack.c.l.b16 %v175
  %v811 = vunpack.c.l.b16 %v176
  %v812 = vunpack.c.l.b16 %v177
  %v813 = vunpack.c.l.b16 %v178
  %v814 = vunpack.c.l.b16 %v179
  %v815 = vunpack.c.l.b16 %v180
  %v816 = vunpack.c.l.b16 %v181
  %v817 = vunpack.c.l.b16 %v182
  %v818 = vunpack.c.l.b16 %v183
  %v819 = vunpack.c.l.b16 %v184
  %v820 = vunpack.c.l.b16 %v185
  %v821 = vunpack.c.l.b16 %v186
  %v822 = vunpack.c.l.b16 %v187
  %v823 = vunpack.c.l.b16 %v188
  %v824 = vunpack.c.l.b16 %v189
  %v825 = vunpack.c.l.b16 %v190
  %v826 = vunpack.c.l.b16 %v191
  %v827 = vunpack.c.l.b16 %v192
  %v828 = vunpack.c.l.b16 %v193
  %v829 = vunpack.c.l.b16 %v194
  %v830 = vunpack.c.l.b16 %v195
  %v831 = vunpack.c.l.b16 %v196
  %v832 = vunpack.c.l.b16 %v197
  %v833 = vunpack.c.l.b16 %v198
  %v834 = vunpack.c.l.b16 %v199
  %v835 = vunpack.c.l.b16 %v200
  %v836 = vunpack.c.l.b16 %v201
  %v837 = vunpack.c.l.b16 %v202
  %v838 = vunpack.c.l.b16 %v203
  %v839 = vunpack.c.l.b16 %v204
  %v840 = vunpack.c.l.b16 %v205
  %v841 = vunpack.c.l.b16 %v206
  %v842 = vunpack.c.l.b16 %v207
  %v843 = vunpack.c.l.b16 %v208
  %v844 = vunpack.c.l.b16 %v209
  %v845 = vunpack.c.l.b16 %v210
  %v846 = vunpack.c.l.b16 %v211
  %v847 = vunpack.c.l.b16 %v212
  %v848 = vunpack.c.l.b16 %v213
  %v849 = vunpack.c.l.b16 %v214
  %v850 = vunpack.c.l.b16 %v215
  %v851 = vunpack.c.l.b16 %v216
  %v852 = vunpack.c.l.b16 %v217
  %v853 = vunpack.c.l.b16 %v218
  %v854 = vunpack.c.l.b16 %v219
  %v855 = vunpack.c.l.b16 %v220
  %v856 = vunpack.c.l.b16 %v221
  %v857 = vunpack.c.l.b16 %v222
  %v858 = vunpack.c.l.b16 %v223
  %v859 = vunpack.c.l.b16 %v224
  %v860 = vunpack.c.l.b16 %v225
  %v861 = vunpack.c.l.b16 %v226
  %v862 = vunpack.c.l.b16 %v227
  %v863 = vunpack.c.l.b16 %v228
  %v864 = vunpack.c.l.b16 %v229
  %v865 = vunpack.c.l.b16 %v230
  %v866 = vunpack.c.l.b16 %v231
  %v867 = vunpack.c.l.b16 %v232
  %v868 = vunpack.c.l.b16 %v233
  %v869 = vunpack.c.l.b16 %v234
  %v870 = vunpack.c.l.b16 %v235
  %v871 = vunpack.c.l.b16 %v236
  %v872 = vunpack.c.l.b16 %v237
  %v873 = vunpack.c.l.b16 %v238
  %v874 = vunpack.c.l.b16 %v239
  %v875 = vunpack.c.l.b16 %v240
  %v876 = vunpack.c.l.b16 %v241
  %v877 = vunpack.c.l.b16 %v242
  %v878 = vunpack.c.l.b16 %v243
  %v879 = vunpack.c.l.b16 %v244
  %v880 = vunpack.c.l.b16 %v245
  %v881 = vunpack.c.l.b16 %v246
  %v882 = vunpack.c.l.b16 %v247
  %v883 = vunpack.c.l.b16 %v248
  %v884 = vunpack.c.l.b16 %v249
  %v885 = vunpack.c.l.b16 %v250
  %v886 = vunpack.c.l.b16 %v251
  %v887 = vunpack.c.l.b16 %v252
  %v888 = vunpack.c.l.b16 %v253
  %v889 = vunpack.c.l.b16 %v254
  %v890 = vunpack.c.l.b16 %v255
  %v891 = vunpack.c.l.b16 %v256
  %v892 = vunpack.c.l.b16 %v257
  %v893 = vunpack.c.l.b16 %v258
  %v894 = vunpack.c.l.b16 %v259
  %v895 = vunpack.c.l.b16 %v260
  %v896 = vunpack.c.l.b16 %v261
  %v897 = vunpack.c.l.b16 %v262
  %v898 = vunpack.c.l.b16 %v263
  %v899 = vunpack.c.l.b16 %v264
  %v900 = vunpack.c.l.b16 %v265
  %v901 = vunpack.c.l.b16 %v266
  %v902 = vunpack.c.l.b16 %v267
  %v903 = vunpack.c.l.b16 %v268
  %v904 = vunpack.c.l.b16 %v269
  %v905 = vunpack.c.l.b16 %v270
  %v906 = vunpack.c.l.b16 %v271
  %v907 = vunpack.c.l.b16 %v272
  %v908 = vpack.c.b16 %v653, %v652
  %v909 = vpack.c.b16 %v655, %v654
  %v910 = vpack.c.b16 %v657, %v656
  %v911 = vpack.c.b16 %v659, %v658
  %v912 = vpack.c.b16 %v661, %v660
  %v913 = vpack.c.b16 %v663, %v662
  %v914 = vpack.c.b16 %v665, %v664
  %v915 = vpack.c.b16 %v667, %v666
  %v916 = vpack.c.b16 %v669, %v668
  %v917 = vpack.c.b16 %v671, %v670
  %v918 = vpack.c.b16 %v673, %v672
  %v919 = vpack.c.b16 %v675, %v674
  %v920 = vpack.c.b16 %v677, %v676
  %v921 = vpack.c.b16 %v679, %v678
  %v922 = vpack.c.b16 %v681, %v680
  %v923 = vpack.c.b16 %v683, %v682
  %v924 = vpack.c.b16 %v685, %v684
  %v925 = vpack.c.b16 %v687, %v686
  %v926 = vpack.c.b16 %v689, %v688
  %v927 = vpack.c.b16 %v691, %v690
  %v928 = vpack.c.b16 %v693, %v692
  %v929 = vpack.c.b16 %v695, %v694
  %v930 = vpack.c.b16 %v697, %v696
  %v931 = vpack.c.b16 %v699, %v698
  %v932 = vpack.c.b16 %v701, %v700
  %v933 = vpack.c.b16 %v703, %v702
  %v934 = vpack.c.b16 %v705, %v704
  %v935 = vpack.c.b16 %v707, %v706
  %v936 = vpack.c.b16 %v709, %v708
  %v937 = vpack.c.b16 %v711, %v710
  %v938 = vpack.c.b16 %v713, %v712
  %v939 = vpack.c.b16 %v715, %v714
  %v940 = vpack.c.b16 %v717, %v716
  %v941 = vpack.c.b16 %v719, %v718
  %v942 = vpack.c.b16 %v721, %v720
  %v943 = vpack.c.b16 %v723, %v722
  %v944 = vpack.c.b16 %v725, %v724
  %v945 = vpack.c.b16 %v727, %v726
  %v946 = vpack.c.b16 %v729, %v728
  %v947 = vpack.c.b16 %v731, %v730
  %v948 = vpack.c.b16 %v733, %v732
  %v949 = vpack.c.b16 %v735, %v734
  %v950 = vpack.c.b16 %v737, %v736
  %v951 = vpack.c.b16 %v739, %v738
  %v952 = vpack.c.b16 %v741, %v740
  %v953 = vpack.c.b16 %v743, %v742
  %v954 = vpack.c.b16 %v745, %v744
  %v955 = vpack.c.b16 %v747, %v746
  %v956 = vpack.c.b16 %v749, %v748
  %v957 = vpack.c.b16 %v751, %v750
  %v958 = vpack.c.b16 %v753, %v752
  %v959 = vpack.c.b16 %v755, %v754
  %v960 = vpack.c.b16 %v757, %v756
  %v961 = vpack.c.b16 %v759, %v758
  %v962 = vpack.c.b16 %v761, %v760
  %v963 = vpack.c.b16 %v763, %v762
  %v964 = vpack.c.b16 %v765, %v764
  %v965 = vpack.c.b16 %v767, %v766
  %v966 = vpack.c.b16 %v769, %v768
  %v967 = vpack.c.b16 %v771, %v770
  %v968 = vpack.c.b16 %v773, %v772
  %v969 = vpack.c.b16 %v775, %v774
  %v970 = vpack.c.b16 %v777, %v776
  %v971 = vpack.c.b16 %v779, %v778
  %v972 = vpack.c.b16 %v781, %v780
  %v973 = vpack.c.b16 %v783, %v782
  %v974 = vpack.c.b16 %v785, %v784
  %v975 = vpack.c.b16 %v787, %v786
  %v976 = vpack.c.b16 %v789, %v788
  %v977 = vpack.c.b16 %v791, %v790
  %v978 = vpack.c.b16 %v793, %v792
  %v979 = vpack.c.b16 %v795, %v794
  %v980 = vpack.c.b16 %v797, %v796
  %v981 = vpack.c.b16 %v799, %v798
  %v982 = vpack.c.b16 %v801, %v800
  %v983 = vpack.c.b16 %v803, %v802
  %v984 = vpack.c.b16 %v805, %v804
  %v985 = vpack.c.b16 %v807, %v806
  %v986 = vpack.c.b16 %v809, %v808
  %v987 = vpack.c.b16 %v811, %v810
  %v988 = vpack.c.b16 %v813, %v812
  %v989 = vpack.c.b16 %v815, %v814
  %v990 = vpack.c.b16 %v817, %v816
  %v991 = vpack.c.b16 %v819, %v818
  %v992 = vpack.c.b16 %v821, %v820
  %v993 = vpack.c.b16 %v823, %v822
  %v994 = vpack.c.b16 %v825, %v824
  %v995 = vpack.c.b16 %v827, %v826
  %v996 = vpack.c.b16 %v829, %v828
  %v997 = vpack.c.b16 %v831, %v830
  %v998 = vpack.c.b16 %v833, %v832
  %v999 = vpack.c.b16 %v835, %v834
  %v1000 = vpack.c.b16 %v837, %v836
  %v1001 = vpack.c.b16 %v839, %v838
  %v1002 = vpack.c.b16 %v841, %v840
  %v1003 = vpack.c.b16 %v843, %v842
  %v1004 = vpack.c.b16 %v845, %v844
  %v1005 = vpack.c.b16 %v847, %v846
  %v1006 = vpack.c.b16 %v849, %v848
  %v1007 = vpack.c.b16 %v851, %v850
  %v1008 = vpack.c.b16 %v853, %v852
  %v1009 = vpack.c.b16 %v855, %v854
  %v1010 = vpack.c.b16 %v857, %v856
  %v1011 = vpack.c.b16 %v859, %v858
  %v1012 = vpack.c.b16 %v861, %v860
  %v1013 = vpack.c.b16 %v863, %v862
  %v1014 = vpack.c.b16 %v865, %v864
  %v1015 = vpack.c.b16 %v867, %v866
  %v1016 = vpack.c.b16 %v869, %v868
  %v1017 = vpack.c.b16 %v871, %v870
  %v1018 = vpack.c.b16 %v873, %v872
  %v1019 = vpack.c.b16 %v875, %v874
  %v1020 = vpack.c.b16 %v877, %v876
  %v1021 = vpack.c.b16 %v879, %v878
  %v1022 = vpack.c.b16 %v881, %v880
  %v1023 = vpack.c.b16 %v883, %v882
  %v1024 = vpack.c.b16 %v885, %v884
  %v1025 = vpack.c.b16 %v887, %v886
  %v1026 = vpack.c.b16 %v889, %v888
  %v1027 = vpack.c.b16 %v891, %v890
  %v1028 = vpack.c.b16 %v893, %v892
  %v1029 = vpack.c.b16 %v895, %v894
  %v1030 = vpack.c.b16 %v897, %v896
  %v1031 = vpack.c.b16 %v899, %v898
  %v1032 = vpack.c.b16 %v901, %v900
  %v1033 = vpack.c.b16 %v903, %v902
  %v1034 = vpack.c.b16 %v905, %v904
  %v1035 = vpack.c.b16 %v907, %v906
  %1164 = vmatprep.subr.bf16.mxu0 0
  %1165 = vmatpush1.bf16.msra.mxu0 %v908
  %1166 = vmatprep.subr.bf16.mxu0 0
  %1167 = vmatpush1.bf16.msra.mxu0 %v909
  %1168 = vmatprep.subr.bf16.mxu0 0
  %1169 = vmatpush1.bf16.msra.mxu0 %v910
  %1170 = vmatprep.subr.bf16.mxu0 0
  %1171 = vmatpush1.bf16.msra.mxu0 %v911
  %1172 = vmatprep.subr.bf16.mxu0 0
  %1173 = vmatpush1.bf16.msra.mxu0 %v912
  %1174 = vmatprep.subr.bf16.mxu0 0
  %1175 = vmatpush1.bf16.msra.mxu0 %v913
  %1176 = vmatprep.subr.bf16.mxu0 0
  %1177 = vmatpush1.bf16.msra.mxu0 %v914
  %1178 = vmatprep.subr.bf16.mxu0 0
  %1179 = vmatpush1.bf16.msra.mxu0 %v915
  %1180 = vmatprep.subr.bf16.mxu0 0
  %1181 = vmatpush1.bf16.msra.mxu0 %v916
  %1182 = vmatprep.subr.bf16.mxu0 0
  %1183 = vmatpush1.bf16.msra.mxu0 %v917
  %1184 = vmatprep.subr.bf16.mxu0 0
  %1185 = vmatpush1.bf16.msra.mxu0 %v918
  %1186 = vmatprep.subr.bf16.mxu0 0
  %1187 = vmatpush1.bf16.msra.mxu0 %v919
  %1188 = vmatprep.subr.bf16.mxu0 0
  %1189 = vmatpush1.bf16.msra.mxu0 %v920
  %1190 = vmatprep.subr.bf16.mxu0 0
  %1191 = vmatpush1.bf16.msra.mxu0 %v921
  %1192 = vmatprep.subr.bf16.mxu0 0
  %1193 = vmatpush1.bf16.msra.mxu0 %v922
  %1194 = vmatprep.subr.bf16.mxu0 0
  %1195 = vmatpush1.bf16.msra.mxu0 %v923
  %1196 = vmatprep.mubr.bf16.mxu0 %v319
  %1197 = vmatmul.mubr.bf16.gmra.mrb[0].mxu0 %v305
  %v1198 = vpop.f32.mrb[0].mxu0
  %v1199 = vadd.f32 %v278, %v1198
  %v1200 = vpop.f32.mrb[0].mxu0
  %v1201 = vpop.f32.mrb[0].mxu0
  %v1202 = vpop.f32.mrb[0].mxu0
  %1203 = vdwg.mxu0
  %1204 = vmatprep.subr.bf16.mxu0 0
  %1205 = vmatpush1.bf16.msra.mxu0 %v924
  %1206 = vmatprep.subr.bf16.mxu0 0
  %1207 = vmatpush1.bf16.msra.mxu0 %v925
  %1208 = vmatprep.subr.bf16.mxu0 0
  %1209 = vmatpush1.bf16.msra.mxu0 %v926
  %1210 = vmatprep.subr.bf16.mxu0 0
  %1211 = vmatpush1.bf16.msra.mxu0 %v927
  %1212 = vmatprep.subr.bf16.mxu0 0
  %1213 = vmatpush1.bf16.msra.mxu0 %v928
  %1214 = vmatprep.subr.bf16.mxu0 0
  %1215 = vmatpush1.bf16.msra.mxu0 %v929
  %1216 = vmatprep.subr.bf16.mxu0 0
  %1217 = vmatpush1.bf16.msra.mxu0 %v930
  %1218 = vmatprep.subr.bf16.mxu0 0
  %1219 = vmatpush1.bf16.msra.mxu0 %v931
  %1220 = vmatprep.subr.bf16.mxu0 0
  %1221 = vmatpush1.bf16.msra.mxu0 %v932
  %1222 = vmatprep.subr.bf16.mxu0 0
  %1223 = vmatpush1.bf16.msra.mxu0 %v933
  %1224 = vmatprep.subr.bf16.mxu0 0
  %1225 = vmatpush1.bf16.msra.mxu0 %v934
  %1226 = vmatprep.subr.bf16.mxu0 0
  %1227 = vmatpush1.bf16.msra.mxu0 %v935
  %1228 = vmatprep.subr.bf16.mxu0 0
  %1229 = vmatpush1.bf16.msra.mxu0 %v936
  %1230 = vmatprep.subr.bf16.mxu0 0
  %1231 = vmatpush1.bf16.msra.mxu0 %v937
  %1232 = vmatprep.subr.bf16.mxu0 0
  %1233 = vmatpush1.bf16.msra.mxu0 %v938
  %1234 = vmatprep.subr.bf16.mxu0 0
  %1235 = vmatpush1.bf16.msra.mxu0 %v939
  %1236 = vmatprep.mubr.bf16.mxu0 %v329
  %1237 = vmatmul.mubr.bf16.gmra.mrb[0].mxu0 %v327
  %v1238 = vpop.f32.mrb[0].mxu0
  %v1239 = vadd.f32 %v1199, %v1238
  %v1240 = vpop.f32.mrb[0].mxu0
  %v1241 = vpop.f32.mrb[0].mxu0
  %v1242 = vpop.f32.mrb[0].mxu0
  %1243 = vdwg.mxu0
  %1244 = vmatprep.subr.bf16.mxu0 0
  %1245 = vmatpush1.bf16.msra.mxu0 %v940
  %1246 = vmatprep.subr.bf16.mxu0 0
  %1247 = vmatpush1.bf16.msra.mxu0 %v941
  %1248 = vmatprep.subr.bf16.mxu0 0
  %1249 = vmatpush1.bf16.msra.mxu0 %v942
  %1250 = vmatprep.subr.bf16.mxu0 0
  %1251 = vmatpush1.bf16.msra.mxu0 %v943
  %1252 = vmatprep.subr.bf16.mxu0 0
  %1253 = vmatpush1.bf16.msra.mxu0 %v944
  %1254 = vmatprep.subr.bf16.mxu0 0
  %1255 = vmatpush1.bf16.msra.mxu0 %v945
  %1256 = vmatprep.subr.bf16.mxu0 0
  %1257 = vmatpush1.bf16.msra.mxu0 %v946
  %1258 = vmatprep.subr.bf16.mxu0 0
  %1259 = vmatpush1.bf16.msra.mxu0 %v947
  %1260 = vmatprep.subr.bf16.mxu0 0
  %1261 = vmatpush1.bf16.msra.mxu0 %v948
  %1262 = vmatprep.subr.bf16.mxu0 0
  %1263 = vmatpush1.bf16.msra.mxu0 %v949
  %1264 = vmatprep.subr.bf16.mxu0 0
  %1265 = vmatpush1.bf16.msra.mxu0 %v950
  %1266 = vmatprep.subr.bf16.mxu0 0
  %1267 = vmatpush1.bf16.msra.mxu0 %v951
  %1268 = vmatprep.subr.bf16.mxu0 0
  %1269 = vmatpush1.bf16.msra.mxu0 %v952
  %1270 = vmatprep.subr.bf16.mxu0 0
  %1271 = vmatpush1.bf16.msra.mxu0 %v953
  %1272 = vmatprep.subr.bf16.mxu0 0
  %1273 = vmatpush1.bf16.msra.mxu0 %v954
  %1274 = vmatprep.subr.bf16.mxu0 0
  %1275 = vmatpush1.bf16.msra.mxu0 %v955
  %1276 = vmatprep.mubr.bf16.mxu0 %v326
  %1277 = vmatmul.mubr.bf16.gmra.mrb[0].mxu0 %v312
  %v1278 = vpop.f32.mrb[0].mxu0
  %v1279 = vadd.f32 %v1239, %v1278
  %v1280 = vpop.f32.mrb[0].mxu0
  %v1281 = vpop.f32.mrb[0].mxu0
  %v1282 = vpop.f32.mrb[0].mxu0
  %1283 = vdwg.mxu0
  %1284 = vmatprep.subr.bf16.mxu0 0
  %1285 = vmatpush1.bf16.msra.mxu0 %v956
  %1286 = vmatprep.subr.bf16.mxu0 0
  %1287 = vmatpush1.bf16.msra.mxu0 %v957
  %1288 = vmatprep.subr.bf16.mxu0 0
  %1289 = vmatpush1.bf16.msra.mxu0 %v958
  %1290 = vmatprep.subr.bf16.mxu0 0
  %1291 = vmatpush1.bf16.msra.mxu0 %v959
  %1292 = vmatprep.subr.bf16.mxu0 0
  %1293 = vmatpush1.bf16.msra.mxu0 %v960
  %1294 = vmatprep.subr.bf16.mxu0 0
  %1295 = vmatpush1.bf16.msra.mxu0 %v961
  %1296 = vmatprep.subr.bf16.mxu0 0
  %1297 = vmatpush1.bf16.msra.mxu0 %v962
  %1298 = vmatprep.subr.bf16.mxu0 0
  %1299 = vmatpush1.bf16.msra.mxu0 %v963
  %1300 = vmatprep.subr.bf16.mxu0 0
  %1301 = vmatpush1.bf16.msra.mxu0 %v964
  %1302 = vmatprep.subr.bf16.mxu0 0
  %1303 = vmatpush1.bf16.msra.mxu0 %v965
  %1304 = vmatprep.subr.bf16.mxu0 0
  %1305 = vmatpush1.bf16.msra.mxu0 %v966
  %1306 = vmatprep.subr.bf16.mxu0 0
  %1307 = vmatpush1.bf16.msra.mxu0 %v967
  %1308 = vmatprep.subr.bf16.mxu0 0
  %1309 = vmatpush1.bf16.msra.mxu0 %v968
  %1310 = vmatprep.subr.bf16.mxu0 0
  %1311 = vmatpush1.bf16.msra.mxu0 %v969
  %1312 = vmatprep.subr.bf16.mxu0 0
  %1313 = vmatpush1.bf16.msra.mxu0 %v970
  %1314 = vmatprep.subr.bf16.mxu0 0
  %1315 = vmatpush1.bf16.msra.mxu0 %v971
  %1316 = vmatprep.mubr.bf16.mxu0 %v330
  %1317 = vmatmul.mubr.bf16.gmra.mrb[0].mxu0 %v328
  %v1318 = vpop.f32.mrb[0].mxu0
  %v1319 = vadd.f32 %v1279, %v1318
  %v1320 = vpop.f32.mrb[0].mxu0
  %v1321 = vpop.f32.mrb[0].mxu0
  %v1322 = vpop.f32.mrb[0].mxu0
  %1323 = vdwg.mxu0
  %1324 = vmatprep.subr.bf16.mxu0 0
  %1325 = vmatpush1.bf16.msra.mxu0 %v972
  %1326 = vmatprep.subr.bf16.mxu0 0
  %1327 = vmatpush1.bf16.msra.mxu0 %v973
  %1328 = vmatprep.subr.bf16.mxu0 0
  %1329 = vmatpush1.bf16.msra.mxu0 %v974
  %1330 = vmatprep.subr.bf16.mxu0 0
  %1331 = vmatpush1.bf16.msra.mxu0 %v975
  %1332 = vmatprep.subr.bf16.mxu0 0
  %1333 = vmatpush1.bf16.msra.mxu0 %v976
  %1334 = vmatprep.subr.bf16.mxu0 0
  %1335 = vmatpush1.bf16.msra.mxu0 %v977
  %1336 = vmatprep.subr.bf16.mxu0 0
  %1337 = vmatpush1.bf16.msra.mxu0 %v978
  %1338 = vmatprep.subr.bf16.mxu0 0
  %1339 = vmatpush1.bf16.msra.mxu0 %v979
  %1340 = vmatprep.subr.bf16.mxu0 0
  %1341 = vmatpush1.bf16.msra.mxu0 %v980
  %1342 = vmatprep.subr.bf16.mxu0 0
  %1343 = vmatpush1.bf16.msra.mxu0 %v981
  %1344 = vmatprep.subr.bf16.mxu0 0
  %1345 = vmatpush1.bf16.msra.mxu0 %v982
  %1346 = vmatprep.subr.bf16.mxu0 0
  %1347 = vmatpush1.bf16.msra.mxu0 %v983
  %1348 = vmatprep.subr.bf16.mxu0 0
  %1349 = vmatpush1.bf16.msra.mxu0 %v984
  %1350 = vmatprep.subr.bf16.mxu0 0
  %1351 = vmatpush1.bf16.msra.mxu0 %v985
  %1352 = vmatprep.subr.bf16.mxu0 0
  %1353 = vmatpush1.bf16.msra.mxu0 %v986
  %1354 = vmatprep.subr.bf16.mxu0 0
  %1355 = vmatpush1.bf16.msra.mxu0 %v987
  %1356 = vmatprep.mubr.bf16.mxu0 %v368
  %1357 = vmatmul.mubr.bf16.gmra.mrb[0].mxu0 %v354
  %v1358 = vpop.f32.mrb[0].mxu0
  %v1359 = vadd.f32 %v1319, %v1358
  %v1360 = vpop.f32.mrb[0].mxu0
  %v1361 = vpop.f32.mrb[0].mxu0
  %v1362 = vpop.f32.mrb[0].mxu0
  %1363 = vdwg.mxu0
  %1364 = vmatprep.subr.bf16.mxu0 0
  %1365 = vmatpush1.bf16.msra.mxu0 %v988
  %1366 = vmatprep.subr.bf16.mxu0 0
  %1367 = vmatpush1.bf16.msra.mxu0 %v989
  %1368 = vmatprep.subr.bf16.mxu0 0
  %1369 = vmatpush1.bf16.msra.mxu0 %v990
  %1370 = vmatprep.subr.bf16.mxu0 0
  %1371 = vmatpush1.bf16.msra.mxu0 %v991
  %1372 = vmatprep.subr.bf16.mxu0 0
  %1373 = vmatpush1.bf16.msra.mxu0 %v992
  %1374 = vmatprep.subr.bf16.mxu0 0
  %1375 = vmatpush1.bf16.msra.mxu0 %v993
  %1376 = vmatprep.subr.bf16.mxu0 0
  %1377 = vmatpush1.bf16.msra.mxu0 %v994
  %1378 = vmatprep.subr.bf16.mxu0 0
  %1379 = vmatpush1.bf16.msra.mxu0 %v995
  %1380 = vmatprep.subr.bf16.mxu0 0
  %1381 = vmatpush1.bf16.msra.mxu0 %v996
  %1382 = vmatprep.subr.bf16.mxu0 0
  %1383 = vmatpush1.bf16.msra.mxu0 %v997
  %1384 = vmatprep.subr.bf16.mxu0 0
  %1385 = vmatpush1.bf16.msra.mxu0 %v998
  %1386 = vmatprep.subr.bf16.mxu0 0
  %1387 = vmatpush1.bf16.msra.mxu0 %v999
  %1388 = vmatprep.subr.bf16.mxu0 0
  %1389 = vmatpush1.bf16.msra.mxu0 %v1000
  %1390 = vmatprep.subr.bf16.mxu0 0
  %1391 = vmatpush1.bf16.msra.mxu0 %v1001
  %1392 = vmatprep.subr.bf16.mxu0 0
  %1393 = vmatpush1.bf16.msra.mxu0 %v1002
  %1394 = vmatprep.subr.bf16.mxu0 0
  %1395 = vmatpush1.bf16.msra.mxu0 %v1003
  %1396 = vmatprep.mubr.bf16.mxu0 %v378
  %1397 = vmatmul.mubr.bf16.gmra.mrb[0].mxu0 %v376
  %v1398 = vpop.f32.mrb[0].mxu0
  %v1399 = vadd.f32 %v1359, %v1398
  %v1400 = vpop.f32.mrb[0].mxu0
  %v1401 = vpop.f32.mrb[0].mxu0
  %v1402 = vpop.f32.mrb[0].mxu0
  %1403 = vdwg.mxu0
  %1404 = vmatprep.subr.bf16.mxu0 0
  %1405 = vmatpush1.bf16.msra.mxu0 %v1004
  %1406 = vmatprep.subr.bf16.mxu0 0
  %1407 = vmatpush1.bf16.msra.mxu0 %v1005
  %1408 = vmatprep.subr.bf16.mxu0 0
  %1409 = vmatpush1.bf16.msra.mxu0 %v1006
  %1410 = vmatprep.subr.bf16.mxu0 0
  %1411 = vmatpush1.bf16.msra.mxu0 %v1007
  %1412 = vmatprep.subr.bf16.mxu0 0
  %1413 = vmatpush1.bf16.msra.mxu0 %v1008
  %1414 = vmatprep.subr.bf16.mxu0 0
  %1415 = vmatpush1.bf16.msra.mxu0 %v1009
  %1416 = vmatprep.subr.bf16.mxu0 0
  %1417 = vmatpush1.bf16.msra.mxu0 %v1010
  %1418 = vmatprep.subr.bf16.mxu0 0
  %1419 = vmatpush1.bf16.msra.mxu0 %v1011
  %1420 = vmatprep.subr.bf16.mxu0 0
  %1421 = vmatpush1.bf16.msra.mxu0 %v1012
  %1422 = vmatprep.subr.bf16.mxu0 0
  %1423 = vmatpush1.bf16.msra.mxu0 %v1013
  %1424 = vmatprep.subr.bf16.mxu0 0
  %1425 = vmatpush1.bf16.msra.mxu0 %v1014
  %1426 = vmatprep.subr.bf16.mxu0 0
  %1427 = vmatpush1.bf16.msra.mxu0 %v1015
  %1428 = vmatprep.subr.bf16.mxu0 0
  %1429 = vmatpush1.bf16.msra.mxu0 %v1016
  %1430 = vmatprep.subr.bf16.mxu0 0
  %1431 = vmatpush1.bf16.msra.mxu0 %v1017
  %1432 = vmatprep.subr.bf16.mxu0 0
  %1433 = vmatpush1.bf16.msra.mxu0 %v1018
  %1434 = vmatprep.subr.bf16.mxu0 0
  %1435 = vmatpush1.bf16.msra.mxu0 %v1019
  %1436 = vmatprep.mubr.bf16.mxu0 %v375
  %1437 = vmatmul.mubr.bf16.gmra.mrb[0].mxu0 %v361
  %v1438 = vpop.f32.mrb[0].mxu0
  %v1439 = vadd.f32 %v1399, %v1438
  %v1440 = vpop.f32.mrb[0].mxu0
  %v1441 = vpop.f32.mrb[0].mxu0
  %v1442 = vpop.f32.mrb[0].mxu0
  %1443 = vdwg.mxu0
  %1444 = vmatprep.subr.bf16.mxu0 0
  %1445 = vmatpush1.bf16.msra.mxu0 %v1020
  %1446 = vmatprep.subr.bf16.mxu0 0
  %1447 = vmatpush1.bf16.msra.mxu0 %v1021
  %1448 = vmatprep.subr.bf16.mxu0 0
  %1449 = vmatpush1.bf16.msra.mxu0 %v1022
  %1450 = vmatprep.subr.bf16.mxu0 0
  %1451 = vmatpush1.bf16.msra.mxu0 %v1023
  %1452 = vmatprep.subr.bf16.mxu0 0
  %1453 = vmatpush1.bf16.msra.mxu0 %v1024
  %1454 = vmatprep.subr.bf16.mxu0 0
  %1455 = vmatpush1.bf16.msra.mxu0 %v1025
  %1456 = vmatprep.subr.bf16.mxu0 0
  %1457 = vmatpush1.bf16.msra.mxu0 %v1026
  %1458 = vmatprep.subr.bf16.mxu0 0
  %1459 = vmatpush1.bf16.msra.mxu0 %v1027
  %1460 = vmatprep.subr.bf16.mxu0 0
  %1461 = vmatpush1.bf16.msra.mxu0 %v1028
  %1462 = vmatprep.subr.bf16.mxu0 0
  %1463 = vmatpush1.bf16.msra.mxu0 %v1029
  %1464 = vmatprep.subr.bf16.mxu0 0
  %1465 = vmatpush1.bf16.msra.mxu0 %v1030
  %1466 = vmatprep.subr.bf16.mxu0 0
  %1467 = vmatpush1.bf16.msra.mxu0 %v1031
  %1468 = vmatprep.subr.bf16.mxu0 0
  %1469 = vmatpush1.bf16.msra.mxu0 %v1032
  %1470 = vmatprep.subr.bf16.mxu0 0
  %1471 = vmatpush1.bf16.msra.mxu0 %v1033
  %1472 = vmatprep.subr.bf16.mxu0 0
  %1473 = vmatpush1.bf16.msra.mxu0 %v1034
  %1474 = vmatprep.subr.bf16.mxu0 0
  %1475 = vmatpush1.bf16.msra.mxu0 %v1035
  %1476 = vmatprep.mubr.bf16.mxu0 %v379
  %1477 = vmatmul.mubr.bf16.gmra.mrb[0].mxu0 %v377
  %v1478 = vpop.f32.mrb[0].mxu0
  %v1479 = vadd.f32 %v1439, %v1478
  %v1480 = vpop.f32.mrb[0].mxu0
  %v1481 = vpop.f32.mrb[0].mxu0
  %v1482 = vpop.f32.mrb[0].mxu0
  %1483 = vdwg.mxu0
  %vm1484 = vcmask 238592
  %1485 = vst.msk [vmem:[%s3] sm:$0x3] %vm1484, %v1479
  // Predicated region
  $region14: #{vae_forward.13} parent=0 // pred_check
    _
  $region15: #{vae_forward.13} parent=0 // pred_check_branch
    %1487 = sbr.rel (0) target = $region17
  $region16: #{vae_forward.13} parent=0 // pred_region
    _
  $region17: #{vae_forward.13} parent=0 // pred_fallthru
    _
  // Predicated region
  $region18: #{vae_forward.13} parent=0 // pred_check
    _
  $region19: #{vae_forward.13} parent=0 // pred_check_branch
    %1489 = sbr.rel (0) target = $region21
  $region20: #{vae_forward.13} parent=0 // pred_region
    _
  $region21: #{vae_forward.13} parent=0 // pred_fallthru
    _

// kernel: vae_forward.14
$region0: #{vae_forward.14}
  #allocation0 [shape = 'u32[]', space=smem, size = 0x4, offset = 0x4, fixed_abs, tag = 'smem constant byte address 0x4 - core index']
  #allocation1 [shape = 'u32[144,128]{1,0:T(1,128)}', space=vmem, size = 0x12000, scoped, tag = 'internal scratch']
  %s0 = inlined_call_operand.vmem [shape: bf16[2,20], index: 0, kind: input, shape index: {}]
  %s1 = inlined_call_operand.vmem [shape: bf16[20,2048], index: 1, kind: input, shape index: {}]
  %s2 = inlined_call_operand.vmem [shape: f32[1,2048], index: 2, kind: input, shape index: {}]
  %s3 = inlined_call_operand.vmem [shape: f32[2,2048], index: 3, kind: output, shape index: {}]
  %s4 = sld [smem:[#allocation0]]
  $region22: #{vae_forward.14} parent=0
    _
  %s6 = ssub.s32 1, %s4
  %s7 = scalar_select 0, %s6, %s4
  // Predicated region
  $region2: #{vae_forward.14} parent=0 // pred_check
    _
  $region3: #{vae_forward.14} parent=0 // pred_check_branch
    %9 = sbr.rel (0) target = $region5
  $region4: #{vae_forward.14} parent=0 // pred_region
    _
  $region5: #{vae_forward.14} parent=0 // pred_fallthru
    _
  // Predicated region
  $region6: #{vae_forward.14} parent=0 // pred_check
    _
  $region7: #{vae_forward.14} parent=0 // pred_check_branch
    %11 = sbr.rel (0) target = $region9
  $region8: #{vae_forward.14} parent=0 // pred_region
    _
  $region9: #{vae_forward.14} parent=0 // pred_fallthru
    _
  // Predicated region
  $region10: #{vae_forward.14} parent=0 // pred_check
    _
  $region11: #{vae_forward.14} parent=0 // pred_check_branch
    %13 = sbr.rel (0) target = $region13
  $region12: #{vae_forward.14} parent=0 // pred_region
    _
  $region13: #{vae_forward.14} parent=0 // pred_fallthru
    _
  %v15 = vld [vmem:[%s0] sm:$0x1]
  %v16 = vld [vmem:[%s1] sm:$0xff]
  %v17 = vld [vmem:[%s1 + $0x8] sm:$0xff]
  %v18 = vld [vmem:[%s1 + $0x10] sm:$0xff]
  %v19 = vld [vmem:[%s1 + $0x18] sm:$0xff]
  %v20 = vld [vmem:[%s1 + $0x20] sm:$0xff]
  %v21 = vld [vmem:[%s1 + $0x28] sm:$0xff]
  %v22 = vld [vmem:[%s1 + $0x30] sm:$0xff]
  %v23 = vld [vmem:[%s1 + $0x38] sm:$0xff]
  %v24 = vld [vmem:[%s1 + $0x40] sm:$0xff]
  %v25 = vld [vmem:[%s1 + $0x48] sm:$0xff]
  %v26 = vld [vmem:[%s1 + $0x50] sm:$0xff]
  %v27 = vld [vmem:[%s1 + $0x58] sm:$0xff]
  %v28 = vld [vmem:[%s1 + $0x60] sm:$0xff]
  %v29 = vld [vmem:[%s1 + $0x68] sm:$0xff]
  %v30 = vld [vmem:[%s1 + $0x70] sm:$0xff]
  %v31 = vld [vmem:[%s1 + $0x78] sm:$0xff]
  %v32 = vld [vmem:[%s1 + $0x80] sm:$0x33]
  %v33 = vld [vmem:[%s1 + $0x88] sm:$0x33]
  %v34 = vld [vmem:[%s1 + $0x90] sm:$0x33]
  %v35 = vld [vmem:[%s1 + $0x98] sm:$0x33]
  %v36 = vld [vmem:[%s1 + $0xa0] sm:$0x33]
  %v37 = vld [vmem:[%s1 + $0xa8] sm:$0x33]
  %v38 = vld [vmem:[%s1 + $0xb0] sm:$0x33]
  %v39 = vld [vmem:[%s1 + $0xb8] sm:$0x33]
  %v40 = vld [vmem:[%s2] sm:$0xff]
  %v41 = vld [vmem:[%s2 + $0x8] sm:$0xff]
  %v44 = vlaneseq
  %v45 = vshrl.u32 %v44, 7
  %v46 = vsub.s32 0, %v45
  %v47 = vrot.slane %v40, %v46
  %v48 = vlaneseq
  %v49 = vshrl.u32 %v48, 7
  %v50 = vsub.s32 1, %v49
  %v51 = vrot.slane %v40, %v50
  %v52 = vlaneseq
  %v53 = vshrl.u32 %v52, 7
  %v54 = vsub.s32 2, %v53
  %v55 = vrot.slane %v40, %v54
  %v56 = vlaneseq
  %v57 = vshrl.u32 %v56, 7
  %v58 = vsub.s32 3, %v57
  %v59 = vrot.slane %v40, %v58
  %v60 = vlaneseq
  %v61 = vshrl.u32 %v60, 7
  %v62 = vsub.s32 4, %v61
  %v63 = vrot.slane %v40, %v62
  %v64 = vlaneseq
  %v65 = vshrl.u32 %v64, 7
  %v66 = vsub.s32 5, %v65
  %v67 = vrot.slane %v40, %v66
  %v68 = vlaneseq
  %v69 = vshrl.u32 %v68, 7
  %v70 = vsub.s32 6, %v69
  %v71 = vrot.slane %v40, %v70
  %v72 = vlaneseq
  %v73 = vshrl.u32 %v72, 7
  %v74 = vsub.s32 7, %v73
  %v75 = vrot.slane %v40, %v74
  %v76 = vlaneseq
  %v77 = vshrl.u32 %v76, 7
  %v78 = vsub.s32 0, %v77
  %v79 = vrot.slane %v41, %v78
  %v80 = vlaneseq
  %v81 = vshrl.u32 %v80, 7
  %v82 = vsub.s32 1, %v81
  %v83 = vrot.slane %v41, %v82
  %v84 = vlaneseq
  %v85 = vshrl.u32 %v84, 7
  %v86 = vsub.s32 2, %v85
  %v87 = vrot.slane %v41, %v86
  %v88 = vlaneseq
  %v89 = vshrl.u32 %v88, 7
  %v90 = vsub.s32 3, %v89
  %v91 = vrot.slane %v41, %v90
  %v92 = vlaneseq
  %v93 = vshrl.u32 %v92, 7
  %v94 = vsub.s32 4, %v93
  %v95 = vrot.slane %v41, %v94
  %v96 = vlaneseq
  %v97 = vshrl.u32 %v96, 7
  %v98 = vsub.s32 5, %v97
  %v99 = vrot.slane %v41, %v98
  %v100 = vlaneseq
  %v101 = vshrl.u32 %v100, 7
  %v102 = vsub.s32 6, %v101
  %v103 = vrot.slane %v41, %v102
  %v104 = vlaneseq
  %v105 = vshrl.u32 %v104, 7
  %v106 = vsub.s32 7, %v105
  %v107 = vrot.slane %v41, %v106
  %v148 = vunpack.c.l.b16 %v16
  %v149 = vunpack.c.h.b16 %v16
  %v150 = vunpack.c.l.b16 %v17
  %v151 = vunpack.c.h.b16 %v17
  %v152 = vunpack.c.l.b16 %v18
  %v153 = vunpack.c.h.b16 %v18
  %v154 = vunpack.c.l.b16 %v19
  %v155 = vunpack.c.h.b16 %v19
  %v156 = vunpack.c.l.b16 %v20
  %v157 = vunpack.c.h.b16 %v20
  %v158 = vunpack.c.l.b16 %v21
  %v159 = vunpack.c.h.b16 %v21
  %v160 = vunpack.c.l.b16 %v22
  %v161 = vunpack.c.h.b16 %v22
  %v162 = vunpack.c.l.b16 %v23
  %v163 = vunpack.c.h.b16 %v23
  %v164 = vunpack.c.l.b16 %v24
  %v165 = vunpack.c.h.b16 %v24
  %v166 = vunpack.c.l.b16 %v25
  %v167 = vunpack.c.h.b16 %v25
  %v168 = vunpack.c.l.b16 %v26
  %v169 = vunpack.c.h.b16 %v26
  %v170 = vunpack.c.l.b16 %v27
  %v171 = vunpack.c.h.b16 %v27
  %v172 = vunpack.c.l.b16 %v28
  %v173 = vunpack.c.h.b16 %v28
  %v174 = vunpack.c.l.b16 %v29
  %v175 = vunpack.c.h.b16 %v29
  %v176 = vunpack.c.l.b16 %v30
  %v177 = vunpack.c.h.b16 %v30
  %v178 = vunpack.c.l.b16 %v31
  %v179 = vunpack.c.h.b16 %v31
  %v180 = vunpack.c.l.b16 %v32
  %v181 = vunpack.c.h.b16 %v32
  %v182 = vunpack.c.l.b16 %v33
  %v183 = vunpack.c.h.b16 %v33
  %v184 = vunpack.c.l.b16 %v34
  %v185 = vunpack.c.h.b16 %v34
  %v186 = vunpack.c.l.b16 %v35
  %v187 = vunpack.c.h.b16 %v35
  %v188 = vunpack.c.l.b16 %v36
  %v189 = vunpack.c.h.b16 %v36
  %v190 = vunpack.c.l.b16 %v37
  %v191 = vunpack.c.h.b16 %v37
  %v192 = vunpack.c.l.b16 %v38
  %v193 = vunpack.c.h.b16 %v38
  %v194 = vunpack.c.l.b16 %v39
  %v195 = vunpack.c.h.b16 %v39
  %v196 = vpack.c.b16 %v164, %v148
  %v197 = vpack.c.b16 %v165, %v149
  %v198 = vpack.c.b16 %v166, %v150
  %v199 = vpack.c.b16 %v167, %v151
  %v200 = vpack.c.b16 %v168, %v152
  %v201 = vpack.c.b16 %v169, %v153
  %v202 = vpack.c.b16 %v170, %v154
  %v203 = vpack.c.b16 %v171, %v155
  %v204 = vpack.c.b16 %v172, %v156
  %v205 = vpack.c.b16 %v173, %v157
  %v206 = vpack.c.b16 %v174, %v158
  %v207 = vpack.c.b16 %v175, %v159
  %v208 = vpack.c.b16 %v176, %v160
  %v209 = vpack.c.b16 %v177, %v161
  %v210 = vpack.c.b16 %v178, %v162
  %v211 = vpack.c.b16 %v179, %v163
  %v212 = vpack.c.b16 %v180, %v180
  %v213 = vpack.c.b16 %v181, %v181
  %v214 = vpack.c.b16 %v182, %v182
  %v215 = vpack.c.b16 %v183, %v183
  %v216 = vpack.c.b16 %v184, %v184
  %v217 = vpack.c.b16 %v185, %v185
  %v218 = vpack.c.b16 %v186, %v186
  %v219 = vpack.c.b16 %v187, %v187
  %v220 = vpack.c.b16 %v188, %v188
  %v221 = vpack.c.b16 %v189, %v189
  %v222 = vpack.c.b16 %v190, %v190
  %v223 = vpack.c.b16 %v191, %v191
  %v224 = vpack.c.b16 %v192, %v192
  %v225 = vpack.c.b16 %v193, %v193
  %v226 = vpack.c.b16 %v194, %v194
  %v227 = vpack.c.b16 %v195, %v195
  %vm244 = vcmask 162816
  %v246 = vsel %vm244, %v15, 0
  %vm248 = vcmask 1041408
  %v250 = vsel %vm248, %v212, 0
  %v253 = vsel %vm248, %v213, 0
  %v256 = vsel %vm248, %v214, 0
  %v259 = vsel %vm248, %v215, 0
  %v262 = vsel %vm248, %v216, 0
  %v265 = vsel %vm248, %v217, 0
  %v268 = vsel %vm248, %v218, 0
  %v271 = vsel %vm248, %v219, 0
  %v274 = vsel %vm248, %v220, 0
  %v277 = vsel %vm248, %v221, 0
  %v280 = vsel %vm248, %v222, 0
  %v283 = vsel %vm248, %v223, 0
  %v286 = vsel %vm248, %v224, 0
  %v289 = vsel %vm248, %v225, 0
  %v292 = vsel %vm248, %v226, 0
  %v295 = vsel %vm248, %v227, 0
  %297 = vmatprep.subr.bf16.mxu0 %v197
  %298 = vmatpush1.bf16.msra.mxu0 %v196
  %299 = vmatprep.subr.bf16.mxu0 %v253
  %300 = vmatpush1.bf16.msra.mxu0 %v250
  %301 = vmatprep.subr.bf16.mxu0 0
  %302 = vmatpush1.bf16.msra.mxu0 0
  %303 = vmatprep.subr.bf16.mxu0 0
  %304 = vmatpush1.bf16.msra.mxu0 0
  %305 = vmatprep.subr.bf16.mxu0 0
  %306 = vmatpush1.bf16.msra.mxu0 0
  %307 = vmatprep.subr.bf16.mxu0 0
  %308 = vmatpush1.bf16.msra.mxu0 0
  %309 = vmatprep.subr.bf16.mxu0 0
  %310 = vmatpush1.bf16.msra.mxu0 0
  %311 = vmatprep.subr.bf16.mxu0 0
  %312 = vmatpush1.bf16.msra.mxu0 0
  %313 = vmatprep.subr.bf16.mxu0 0
  %314 = vmatpush1.bf16.msra.mxu0 0
  %315 = vmatprep.subr.bf16.mxu0 0
  %316 = vmatpush1.bf16.msra.mxu0 0
  %317 = vmatprep.subr.bf16.mxu0 0
  %318 = vmatpush1.bf16.msra.mxu0 0
  %319 = vmatprep.subr.bf16.mxu0 0
  %320 = vmatpush1.bf16.msra.mxu0 0
  %321 = vmatprep.subr.bf16.mxu0 0
  %322 = vmatpush1.bf16.msra.mxu0 0
  %323 = vmatprep.subr.bf16.mxu0 0
  %324 = vmatpush1.bf16.msra.mxu0 0
  %325 = vmatprep.subr.bf16.mxu0 0
  %326 = vmatpush1.bf16.msra.mxu0 0
  %327 = vmatprep.subr.bf16.mxu0 0
  %328 = vmatpush1.bf16.msra.mxu0 0
  %329 = vmatprep.mubr.bf16.mxu0 0
  %330 = vmatmul.mubr.bf16.gmra.mrb[0].mxu0 %v246
  %v331 = vpop.f32.mrb[0].mxu0
  %v332 = vadd.f32 %v47, %v331
  %v333 = vpop.f32.mrb[0].mxu0
  %v334 = vadd.f32 %v51, %v333
  %v335 = vpop.f32.mrb[0].mxu0
  %v336 = vpop.f32.mrb[0].mxu0
  %337 = vdwg.mxu0
  %338 = vmatprep.subr.bf16.mxu0 %v199
  %339 = vmatpush1.bf16.msra.mxu0 %v198
  %340 = vmatprep.subr.bf16.mxu0 %v259
  %341 = vmatpush1.bf16.msra.mxu0 %v256
  %342 = vmatprep.subr.bf16.mxu0 0
  %343 = vmatpush1.bf16.msra.mxu0 0
  %344 = vmatprep.subr.bf16.mxu0 0
  %345 = vmatpush1.bf16.msra.mxu0 0
  %346 = vmatprep.subr.bf16.mxu0 0
  %347 = vmatpush1.bf16.msra.mxu0 0
  %348 = vmatprep.subr.bf16.mxu0 0
  %349 = vmatpush1.bf16.msra.mxu0 0
  %350 = vmatprep.subr.bf16.mxu0 0
  %351 = vmatpush1.bf16.msra.mxu0 0
  %352 = vmatprep.subr.bf16.mxu0 0
  %353 = vmatpush1.bf16.msra.mxu0 0
  %354 = vmatprep.subr.bf16.mxu0 0
  %355 = vmatpush1.bf16.msra.mxu0 0
  %356 = vmatprep.subr.bf16.mxu0 0
  %357 = vmatpush1.bf16.msra.mxu0 0
  %358 = vmatprep.subr.bf16.mxu0 0
  %359 = vmatpush1.bf16.msra.mxu0 0
  %360 = vmatprep.subr.bf16.mxu0 0
  %361 = vmatpush1.bf16.msra.mxu0 0
  %362 = vmatprep.subr.bf16.mxu0 0
  %363 = vmatpush1.bf16.msra.mxu0 0
  %364 = vmatprep.subr.bf16.mxu0 0
  %365 = vmatpush1.bf16.msra.mxu0 0
  %366 = vmatprep.subr.bf16.mxu0 0
  %367 = vmatpush1.bf16.msra.mxu0 0
  %368 = vmatprep.subr.bf16.mxu0 0
  %369 = vmatpush1.bf16.msra.mxu0 0
  %370 = vmatprep.mubr.bf16.mxu0 0
  %371 = vmatmul.mubr.bf16.gmra.mrb[0].mxu0 %v246
  %v372 = vpop.f32.mrb[0].mxu0
  %v373 = vadd.f32 %v55, %v372
  %v374 = vpop.f32.mrb[0].mxu0
  %v375 = vadd.f32 %v59, %v374
  %v376 = vpop.f32.mrb[0].mxu0
  %v377 = vpop.f32.mrb[0].mxu0
  %378 = vdwg.mxu0
  %379 = vmatprep.subr.bf16.mxu0 %v201
  %380 = vmatpush1.bf16.msra.mxu0 %v200
  %381 = vmatprep.subr.bf16.mxu0 %v265
  %382 = vmatpush1.bf16.msra.mxu0 %v262
  %383 = vmatprep.subr.bf16.mxu0 0
  %384 = vmatpush1.bf16.msra.mxu0 0
  %385 = vmatprep.subr.bf16.mxu0 0
  %386 = vmatpush1.bf16.msra.mxu0 0
  %387 = vmatprep.subr.bf16.mxu0 0
  %388 = vmatpush1.bf16.msra.mxu0 0
  %389 = vmatprep.subr.bf16.mxu0 0
  %390 = vmatpush1.bf16.msra.mxu0 0
  %391 = vmatprep.subr.bf16.mxu0 0
  %392 = vmatpush1.bf16.msra.mxu0 0
  %393 = vmatprep.subr.bf16.mxu0 0
  %394 = vmatpush1.bf16.msra.mxu0 0
  %395 = vmatprep.subr.bf16.mxu0 0
  %396 = vmatpush1.bf16.msra.mxu0 0
  %397 = vmatprep.subr.bf16.mxu0 0
  %398 = vmatpush1.bf16.msra.mxu0 0
  %399 = vmatprep.subr.bf16.mxu0 0
  %400 = vmatpush1.bf16.msra.mxu0 0
  %401 = vmatprep.subr.bf16.mxu0 0
  %402 = vmatpush1.bf16.msra.mxu0 0
  %403 = vmatprep.subr.bf16.mxu0 0
  %404 = vmatpush1.bf16.msra.mxu0 0
  %405 = vmatprep.subr.bf16.mxu0 0
  %406 = vmatpush1.bf16.msra.mxu0 0
  %407 = vmatprep.subr.bf16.mxu0 0
  %408 = vmatpush1.bf16.msra.mxu0 0
  %409 = vmatprep.subr.bf16.mxu0 0
  %410 = vmatpush1.bf16.msra.mxu0 0
  %411 = vmatprep.mubr.bf16.mxu0 0
  %412 = vmatmul.mubr.bf16.gmra.mrb[0].mxu0 %v246
  %v413 = vpop.f32.mrb[0].mxu0
  %v414 = vadd.f32 %v63, %v413
  %v415 = vpop.f32.mrb[0].mxu0
  %v416 = vadd.f32 %v67, %v415
  %v417 = vpop.f32.mrb[0].mxu0
  %v418 = vpop.f32.mrb[0].mxu0
  %419 = vdwg.mxu0
  %420 = vmatprep.subr.bf16.mxu0 %v203
  %421 = vmatpush1.bf16.msra.mxu0 %v202
  %422 = vmatprep.subr.bf16.mxu0 %v271
  %423 = vmatpush1.bf16.msra.mxu0 %v268
  %424 = vmatprep.subr.bf16.mxu0 0
  %425 = vmatpush1.bf16.msra.mxu0 0
  %426 = vmatprep.subr.bf16.mxu0 0
  %427 = vmatpush1.bf16.msra.mxu0 0
  %428 = vmatprep.subr.bf16.mxu0 0
  %429 = vmatpush1.bf16.msra.mxu0 0
  %430 = vmatprep.subr.bf16.mxu0 0
  %431 = vmatpush1.bf16.msra.mxu0 0
  %432 = vmatprep.subr.bf16.mxu0 0
  %433 = vmatpush1.bf16.msra.mxu0 0
  %434 = vmatprep.subr.bf16.mxu0 0
  %435 = vmatpush1.bf16.msra.mxu0 0
  %436 = vmatprep.subr.bf16.mxu0 0
  %437 = vmatpush1.bf16.msra.mxu0 0
  %438 = vmatprep.subr.bf16.mxu0 0
  %439 = vmatpush1.bf16.msra.mxu0 0
  %440 = vmatprep.subr.bf16.mxu0 0
  %441 = vmatpush1.bf16.msra.mxu0 0
  %442 = vmatprep.subr.bf16.mxu0 0
  %443 = vmatpush1.bf16.msra.mxu0 0
  %444 = vmatprep.subr.bf16.mxu0 0
  %445 = vmatpush1.bf16.msra.mxu0 0
  %446 = vmatprep.subr.bf16.mxu0 0
  %447 = vmatpush1.bf16.msra.mxu0 0
  %448 = vmatprep.subr.bf16.mxu0 0
  %449 = vmatpush1.bf16.msra.mxu0 0
  %450 = vmatprep.subr.bf16.mxu0 0
  %451 = vmatpush1.bf16.msra.mxu0 0
  %452 = vmatprep.mubr.bf16.mxu0 0
  %453 = vmatmul.mubr.bf16.gmra.mrb[0].mxu0 %v246
  %v454 = vpop.f32.mrb[0].mxu0
  %v455 = vadd.f32 %v71, %v454
  %v456 = vpop.f32.mrb[0].mxu0
  %v457 = vadd.f32 %v75, %v456
  %v458 = vpop.f32.mrb[0].mxu0
  %v459 = vpop.f32.mrb[0].mxu0
  %460 = vdwg.mxu0
  %461 = vmatprep.subr.bf16.mxu0 %v205
  %462 = vmatpush1.bf16.msra.mxu0 %v204
  %463 = vmatprep.subr.bf16.mxu0 %v277
  %464 = vmatpush1.bf16.msra.mxu0 %v274
  %465 = vmatprep.subr.bf16.mxu0 0
  %466 = vmatpush1.bf16.msra.mxu0 0
  %467 = vmatprep.subr.bf16.mxu0 0
  %468 = vmatpush1.bf16.msra.mxu0 0
  %469 = vmatprep.subr.bf16.mxu0 0
  %470 = vmatpush1.bf16.msra.mxu0 0
  %471 = vmatprep.subr.bf16.mxu0 0
  %472 = vmatpush1.bf16.msra.mxu0 0
  %473 = vmatprep.subr.bf16.mxu0 0
  %474 = vmatpush1.bf16.msra.mxu0 0
  %475 = vmatprep.subr.bf16.mxu0 0
  %476 = vmatpush1.bf16.msra.mxu0 0
  %477 = vmatprep.subr.bf16.mxu0 0
  %478 = vmatpush1.bf16.msra.mxu0 0
  %479 = vmatprep.subr.bf16.mxu0 0
  %480 = vmatpush1.bf16.msra.mxu0 0
  %481 = vmatprep.subr.bf16.mxu0 0
  %482 = vmatpush1.bf16.msra.mxu0 0
  %483 = vmatprep.subr.bf16.mxu0 0
  %484 = vmatpush1.bf16.msra.mxu0 0
  %485 = vmatprep.subr.bf16.mxu0 0
  %486 = vmatpush1.bf16.msra.mxu0 0
  %487 = vmatprep.subr.bf16.mxu0 0
  %488 = vmatpush1.bf16.msra.mxu0 0
  %489 = vmatprep.subr.bf16.mxu0 0
  %490 = vmatpush1.bf16.msra.mxu0 0
  %491 = vmatprep.subr.bf16.mxu0 0
  %492 = vmatpush1.bf16.msra.mxu0 0
  %493 = vmatprep.mubr.bf16.mxu0 0
  %494 = vmatmul.mubr.bf16.gmra.mrb[0].mxu0 %v246
  %v495 = vpop.f32.mrb[0].mxu0
  %v496 = vadd.f32 %v79, %v495
  %v497 = vpop.f32.mrb[0].mxu0
  %v498 = vadd.f32 %v83, %v497
  %v499 = vpop.f32.mrb[0].mxu0
  %v500 = vpop.f32.mrb[0].mxu0
  %501 = vdwg.mxu0
  %502 = vmatprep.subr.bf16.mxu0 %v207
  %503 = vmatpush1.bf16.msra.mxu0 %v206
  %504 = vmatprep.subr.bf16.mxu0 %v283
  %505 = vmatpush1.bf16.msra.mxu0 %v280
  %506 = vmatprep.subr.bf16.mxu0 0
  %507 = vmatpush1.bf16.msra.mxu0 0
  %508 = vmatprep.subr.bf16.mxu0 0
  %509 = vmatpush1.bf16.msra.mxu0 0
  %510 = vmatprep.subr.bf16.mxu0 0
  %511 = vmatpush1.bf16.msra.mxu0 0
  %512 = vmatprep.subr.bf16.mxu0 0
  %513 = vmatpush1.bf16.msra.mxu0 0
  %514 = vmatprep.subr.bf16.mxu0 0
  %515 = vmatpush1.bf16.msra.mxu0 0
  %516 = vmatprep.subr.bf16.mxu0 0
  %517 = vmatpush1.bf16.msra.mxu0 0
  %518 = vmatprep.subr.bf16.mxu0 0
  %519 = vmatpush1.bf16.msra.mxu0 0
  %520 = vmatprep.subr.bf16.mxu0 0
  %521 = vmatpush1.bf16.msra.mxu0 0
  %522 = vmatprep.subr.bf16.mxu0 0
  %523 = vmatpush1.bf16.msra.mxu0 0
  %524 = vmatprep.subr.bf16.mxu0 0
  %525 = vmatpush1.bf16.msra.mxu0 0
  %526 = vmatprep.subr.bf16.mxu0 0
  %527 = vmatpush1.bf16.msra.mxu0 0
  %528 = vmatprep.subr.bf16.mxu0 0
  %529 = vmatpush1.bf16.msra.mxu0 0
  %530 = vmatprep.subr.bf16.mxu0 0
  %531 = vmatpush1.bf16.msra.mxu0 0
  %532 = vmatprep.subr.bf16.mxu0 0
  %533 = vmatpush1.bf16.msra.mxu0 0
  %534 = vmatprep.mubr.bf16.mxu0 0
  %535 = vmatmul.mubr.bf16.gmra.mrb[0].mxu0 %v246
  %v536 = vpop.f32.mrb[0].mxu0
  %v537 = vadd.f32 %v87, %v536
  %v538 = vpop.f32.mrb[0].mxu0
  %v539 = vadd.f32 %v91, %v538
  %v540 = vpop.f32.mrb[0].mxu0
  %v541 = vpop.f32.mrb[0].mxu0
  %542 = vdwg.mxu0
  %543 = vmatprep.subr.bf16.mxu0 %v209
  %544 = vmatpush1.bf16.msra.mxu0 %v208
  %545 = vmatprep.subr.bf16.mxu0 %v289
  %546 = vmatpush1.bf16.msra.mxu0 %v286
  %547 = vmatprep.subr.bf16.mxu0 0
  %548 = vmatpush1.bf16.msra.mxu0 0
  %549 = vmatprep.subr.bf16.mxu0 0
  %550 = vmatpush1.bf16.msra.mxu0 0
  %551 = vmatprep.subr.bf16.mxu0 0
  %552 = vmatpush1.bf16.msra.mxu0 0
  %553 = vmatprep.subr.bf16.mxu0 0
  %554 = vmatpush1.bf16.msra.mxu0 0
  %555 = vmatprep.subr.bf16.mxu0 0
  %556 = vmatpush1.bf16.msra.mxu0 0
  %557 = vmatprep.subr.bf16.mxu0 0
  %558 = vmatpush1.bf16.msra.mxu0 0
  %559 = vmatprep.subr.bf16.mxu0 0
  %560 = vmatpush1.bf16.msra.mxu0 0
  %561 = vmatprep.subr.bf16.mxu0 0
  %562 = vmatpush1.bf16.msra.mxu0 0
  %563 = vmatprep.subr.bf16.mxu0 0
  %564 = vmatpush1.bf16.msra.mxu0 0
  %565 = vmatprep.subr.bf16.mxu0 0
  %566 = vmatpush1.bf16.msra.mxu0 0
  %567 = vmatprep.subr.bf16.mxu0 0
  %568 = vmatpush1.bf16.msra.mxu0 0
  %569 = vmatprep.subr.bf16.mxu0 0
  %570 = vmatpush1.bf16.msra.mxu0 0
  %571 = vmatprep.subr.bf16.mxu0 0
  %572 = vmatpush1.bf16.msra.mxu0 0
  %573 = vmatprep.subr.bf16.mxu0 0
  %574 = vmatpush1.bf16.msra.mxu0 0
  %575 = vmatprep.mubr.bf16.mxu0 0
  %576 = vmatmul.mubr.bf16.gmra.mrb[0].mxu0 %v246
  %v577 = vpop.f32.mrb[0].mxu0
  %v578 = vadd.f32 %v95, %v577
  %v579 = vpop.f32.mrb[0].mxu0
  %v580 = vadd.f32 %v99, %v579
  %v581 = vpop.f32.mrb[0].mxu0
  %v582 = vpop.f32.mrb[0].mxu0
  %583 = vdwg.mxu0
  %584 = vmatprep.subr.bf16.mxu0 %v211
  %585 = vmatpush1.bf16.msra.mxu0 %v210
  %586 = vmatprep.subr.bf16.mxu0 %v295
  %587 = vmatpush1.bf16.msra.mxu0 %v292
  %588 = vmatprep.subr.bf16.mxu0 0
  %589 = vmatpush1.bf16.msra.mxu0 0
  %590 = vmatprep.subr.bf16.mxu0 0
  %591 = vmatpush1.bf16.msra.mxu0 0
  %592 = vmatprep.subr.bf16.mxu0 0
  %593 = vmatpush1.bf16.msra.mxu0 0
  %594 = vmatprep.subr.bf16.mxu0 0
  %595 = vmatpush1.bf16.msra.mxu0 0
  %596 = vmatprep.subr.bf16.mxu0 0
  %597 = vmatpush1.bf16.msra.mxu0 0
  %598 = vmatprep.subr.bf16.mxu0 0
  %599 = vmatpush1.bf16.msra.mxu0 0
  %600 = vmatprep.subr.bf16.mxu0 0
  %601 = vmatpush1.bf16.msra.mxu0 0
  %602 = vmatprep.subr.bf16.mxu0 0
  %603 = vmatpush1.bf16.msra.mxu0 0
  %604 = vmatprep.subr.bf16.mxu0 0
  %605 = vmatpush1.bf16.msra.mxu0 0
  %606 = vmatprep.subr.bf16.mxu0 0
  %607 = vmatpush1.bf16.msra.mxu0 0
  %608 = vmatprep.subr.bf16.mxu0 0
  %609 = vmatpush1.bf16.msra.mxu0 0
  %610 = vmatprep.subr.bf16.mxu0 0
  %611 = vmatpush1.bf16.msra.mxu0 0
  %612 = vmatprep.subr.bf16.mxu0 0
  %613 = vmatpush1.bf16.msra.mxu0 0
  %614 = vmatprep.subr.bf16.mxu0 0
  %615 = vmatpush1.bf16.msra.mxu0 0
  %616 = vmatprep.mubr.bf16.mxu0 0
  %617 = vmatmul.mubr.bf16.gmra.mrb[0].mxu0 %v246
  %v618 = vpop.f32.mrb[0].mxu0
  %v619 = vadd.f32 %v103, %v618
  %v620 = vpop.f32.mrb[0].mxu0
  %v621 = vadd.f32 %v107, %v620
  %v622 = vpop.f32.mrb[0].mxu0
  %v623 = vpop.f32.mrb[0].mxu0
  %624 = vdwg.mxu0
  %v625 = vmax.f32 %v332, 0.0
  %v626 = vmax.f32 %v334, 0.0
  %v627 = vmax.f32 %v373, 0.0
  %v628 = vmax.f32 %v375, 0.0
  %v629 = vmax.f32 %v414, 0.0
  %v630 = vmax.f32 %v416, 0.0
  %v631 = vmax.f32 %v455, 0.0
  %v632 = vmax.f32 %v457, 0.0
  %v633 = vmax.f32 %v496, 0.0
  %v634 = vmax.f32 %v498, 0.0
  %v635 = vmax.f32 %v537, 0.0
  %v636 = vmax.f32 %v539, 0.0
  %v637 = vmax.f32 %v578, 0.0
  %v638 = vmax.f32 %v580, 0.0
  %v639 = vmax.f32 %v619, 0.0
  %v640 = vmax.f32 %v621, 0.0
  %v657 = vcombine.low %v625, %v626
  %v658 = vcombine.low %v627, %v628
  %v660 = vunpack.c.l.s4 1983009808
  %v661 = vunpack.c.0.s8 %v660
  %v662 = vlaneseq
  %v663 = vshrl.u32 %v662, 7
  %v664 = vsub.s32 %v661, %v663
  %v665 = vrot.slane %v657, %v664
  %v667 = vunpack.c.l.s4 1983009808
  %v668 = vunpack.c.0.s8 %v667
  %v669 = vlaneseq
  %v670 = vshrl.u32 %v669, 7
  %v671 = vsub.s32 %v668, %v670
  %v672 = vrot.slane %v658, %v671
  %v673 = vcombine.low %v665, %v672
  %v674 = vcombine.low %v629, %v630
  %v675 = vcombine.low %v631, %v632
  %v677 = vunpack.c.l.s4 1983009808
  %v678 = vunpack.c.0.s8 %v677
  %v679 = vlaneseq
  %v680 = vshrl.u32 %v679, 7
  %v681 = vsub.s32 %v678, %v680
  %v682 = vrot.slane %v674, %v681
  %v684 = vunpack.c.l.s4 1983009808
  %v685 = vunpack.c.0.s8 %v684
  %v686 = vlaneseq
  %v687 = vshrl.u32 %v686, 7
  %v688 = vsub.s32 %v685, %v687
  %v689 = vrot.slane %v675, %v688
  %v690 = vcombine.low %v682, %v689
  %v691 = vcombine.low %v633, %v634
  %v692 = vcombine.low %v635, %v636
  %v694 = vunpack.c.l.s4 1983009808
  %v695 = vunpack.c.0.s8 %v694
  %v696 = vlaneseq
  %v697 = vshrl.u32 %v696, 7
  %v698 = vsub.s32 %v695, %v697
  %v699 = vrot.slane %v691, %v698
  %v701 = vunpack.c.l.s4 1983009808
  %v702 = vunpack.c.0.s8 %v701
  %v703 = vlaneseq
  %v704 = vshrl.u32 %v703, 7
  %v705 = vsub.s32 %v702, %v704
  %v706 = vrot.slane %v692, %v705
  %v707 = vcombine.low %v699, %v706
  %v708 = vcombine.low %v637, %v638
  %v709 = vcombine.low %v639, %v640
  %v711 = vunpack.c.l.s4 1983009808
  %v712 = vunpack.c.0.s8 %v711
  %v713 = vlaneseq
  %v714 = vshrl.u32 %v713, 7
  %v715 = vsub.s32 %v712, %v714
  %v716 = vrot.slane %v708, %v715
  %v718 = vunpack.c.l.s4 1983009808
  %v719 = vunpack.c.0.s8 %v718
  %v720 = vlaneseq
  %v721 = vshrl.u32 %v720, 7
  %v722 = vsub.s32 %v719, %v721
  %v723 = vrot.slane %v709, %v722
  %v724 = vcombine.low %v716, %v723
  %729 = vst [vmem:[%s3] sm:$0xff] %v673
  %730 = vst [vmem:[%s3 + $0x8] sm:$0xff] %v690
  %731 = vst [vmem:[%s3 + $0x10] sm:$0xff] %v707
  %732 = vst [vmem:[%s3 + $0x18] sm:$0xff] %v724
  // Predicated region
  $region14: #{vae_forward.14} parent=0 // pred_check
    _
  $region15: #{vae_forward.14} parent=0 // pred_check_branch
    %734 = sbr.rel (0) target = $region17
  $region16: #{vae_forward.14} parent=0 // pred_region
    _
  $region17: #{vae_forward.14} parent=0 // pred_fallthru
    _
  // Predicated region
  $region18: #{vae_forward.14} parent=0 // pred_check
    _
  $region19: #{vae_forward.14} parent=0 // pred_check_branch
    %736 = sbr.rel (0) target = $region21
  $region20: #{vae_forward.14} parent=0 // pred_region
    _
  $region21: #{vae_forward.14} parent=0 // pred_fallthru
    _

// kernel: vae_forward.15
$region0: #{vae_forward.15}
  #allocation0 [shape = 'u32[]', space=smem, size = 0x4, offset = 0x4, fixed_abs, tag = 'smem constant byte address 0x4 - core index']
  #allocation1 [shape = 'u32[144,128]{1,0:T(1,128)}', space=vmem, size = 0x12000, scoped, tag = 'internal scratch']
  %s0 = inlined_call_operand.vmem [shape: bf16[4,32,512], index: 0, kind: input, shape index: {}]
  %s1 = inlined_call_operand.vmem [shape: bf16[4,512,64], index: 1, kind: input, shape index: {}]
  %s2 = inlined_call_operand.vmem [shape: f32[1,1,64], index: 2, kind: input, shape index: {}]
  %s3 = inlined_call_operand.vmem [shape: f32[1,1,64], index: 3, kind: input, shape index: {}]
  %s4 = inlined_call_operand.vmem [shape: f32[4,32,64], index: 4, kind: output, shape index: {}]
  %s5 = sld [smem:[#allocation0]]
  $region26: #{vae_forward.15} parent=0
    _
  %s7 = ssub.s32 1, %s5
  %s8 = scalar_select 0, %s7, %s5
  // Predicated region
  $region2: #{vae_forward.15} parent=0 // pred_check
    _
  $region3: #{vae_forward.15} parent=0 // pred_check_branch
    %10 = sbr.rel (0) target = $region5
  $region4: #{vae_forward.15} parent=0 // pred_region
    _
  $region5: #{vae_forward.15} parent=0 // pred_fallthru
    _
  // Predicated region
  $region6: #{vae_forward.15} parent=0 // pred_check
    _
  $region7: #{vae_forward.15} parent=0 // pred_check_branch
    %12 = sbr.rel (0) target = $region9
  $region8: #{vae_forward.15} parent=0 // pred_region
    _
  $region9: #{vae_forward.15} parent=0 // pred_fallthru
    _
  // Predicated region
  $region10: #{vae_forward.15} parent=0 // pred_check
    _
  $region11: #{vae_forward.15} parent=0 // pred_check_branch
    %14 = sbr.rel (0) target = $region13
  $region12: #{vae_forward.15} parent=0 // pred_region
    _
  $region13: #{vae_forward.15} parent=0 // pred_fallthru
    _
  // Predicated region
  $region14: #{vae_forward.15} parent=0 // pred_check
    _
  $region15: #{vae_forward.15} parent=0 // pred_check_branch
    %16 = sbr.rel (0) target = $region17
  $region16: #{vae_forward.15} parent=0 // pred_region
    _
  $region17: #{vae_forward.15} parent=0 // pred_fallthru
    _
  %v18 = vld [vmem:[%s0] sm:$0xff]
  %v19 = vld [vmem:[%s0 + $0x8] sm:$0xff]
  %v20 = vld [vmem:[%s0 + $0x10] sm:$0xff]
  %v21 = vld [vmem:[%s0 + $0x18] sm:$0xff]
  %v22 = vld [vmem:[%s0 + $0x20] sm:$0xff]
  %v23 = vld [vmem:[%s0 + $0x28] sm:$0xff]
  %v24 = vld [vmem:[%s0 + $0x30] sm:$0xff]
  %v25 = vld [vmem:[%s0 + $0x38] sm:$0xff]
  %v26 = vld [vmem:[%s0 + $0x40] sm:$0xff]
  %v27 = vld [vmem:[%s0 + $0x48] sm:$0xff]
  %v28 = vld [vmem:[%s0 + $0x50] sm:$0xff]
  %v29 = vld [vmem:[%s0 + $0x58] sm:$0xff]
  %v30 = vld [vmem:[%s0 + $0x60] sm:$0xff]
  %v31 = vld [vmem:[%s0 + $0x68] sm:$0xff]
  %v32 = vld [vmem:[%s0 + $0x70] sm:$0xff]
  %v33 = vld [vmem:[%s0 + $0x78] sm:$0xff]
  %v34 = vld [vmem:[%s0 + $0x80] sm:$0xff]
  %v35 = vld [vmem:[%s0 + $0x88] sm:$0xff]
  %v36 = vld [vmem:[%s0 + $0x90] sm:$0xff]
  %v37 = vld [vmem:[%s0 + $0x98] sm:$0xff]
  %v38 = vld [vmem:[%s0 + $0xa0] sm:$0xff]
  %v39 = vld [vmem:[%s0 + $0xa8] sm:$0xff]
  %v40 = vld [vmem:[%s0 + $0xb0] sm:$0xff]
  %v41 = vld [vmem:[%s0 + $0xb8] sm:$0xff]
  %v42 = vld [vmem:[%s0 + $0xc0] sm:$0xff]
  %v43 = vld [vmem:[%s0 + $0xc8] sm:$0xff]
  %v44 = vld [vmem:[%s0 + $0xd0] sm:$0xff]
  %v45 = vld [vmem:[%s0 + $0xd8] sm:$0xff]
  %v46 = vld [vmem:[%s0 + $0xe0] sm:$0xff]
  %v47 = vld [vmem:[%s0 + $0xe8] sm:$0xff]
  %v48 = vld [vmem:[%s0 + $0xf0] sm:$0xff]
  %v49 = vld [vmem:[%s0 + $0xf8] sm:$0xff]
  %v50 = vld [vmem:[%s1] sm:$0xf]
  %v51 = vld [vmem:[%s1 + $0x4] sm:$0xf]
  %v52 = vld [vmem:[%s1 + $0x8] sm:$0xf]
  %v53 = vld [vmem:[%s1 + $0xc] sm:$0xf]
  %v54 = vld [vmem:[%s1 + $0x10] sm:$0xf]
  %v55 = vld [vmem:[%s1 + $0x14] sm:$0xf]
  %v56 = vld [vmem:[%s1 + $0x18] sm:$0xf]
  %v57 = vld [vmem:[%s1 + $0x1c] sm:$0xf]
  %v58 = vld [vmem:[%s1 + $0x20] sm:$0xf]
  %v59 = vld [vmem:[%s1 + $0x24] sm:$0xf]
  %v60 = vld [vmem:[%s1 + $0x28] sm:$0xf]
  %v61 = vld [vmem:[%s1 + $0x2c] sm:$0xf]
  %v62 = vld [vmem:[%s1 + $0x30] sm:$0xf]
  %v63 = vld [vmem:[%s1 + $0x34] sm:$0xf]
  %v64 = vld [vmem:[%s1 + $0x38] sm:$0xf]
  %v65 = vld [vmem:[%s1 + $0x3c] sm:$0xf]
  %v66 = vld [vmem:[%s1 + $0x40] sm:$0xf]
  %v67 = vld [vmem:[%s1 + $0x44] sm:$0xf]
  %v68 = vld [vmem:[%s1 + $0x48] sm:$0xf]
  %v69 = vld [vmem:[%s1 + $0x4c] sm:$0xf]
  %v70 = vld [vmem:[%s1 + $0x50] sm:$0xf]
  %v71 = vld [vmem:[%s1 + $0x54] sm:$0xf]
  %v72 = vld [vmem:[%s1 + $0x58] sm:$0xf]
  %v73 = vld [vmem:[%s1 + $0x5c] sm:$0xf]
  %v74 = vld [vmem:[%s1 + $0x60] sm:$0xf]
  %v75 = vld [vmem:[%s1 + $0x64] sm:$0xf]
  %v76 = vld [vmem:[%s1 + $0x68] sm:$0xf]
  %v77 = vld [vmem:[%s1 + $0x6c] sm:$0xf]
  %v78 = vld [vmem:[%s1 + $0x70] sm:$0xf]
  %v79 = vld [vmem:[%s1 + $0x74] sm:$0xf]
  %v80 = vld [vmem:[%s1 + $0x78] sm:$0xf]
  %v81 = vld [vmem:[%s1 + $0x7c] sm:$0xf]
  %v82 = vld [vmem:[%s1 + $0x80] sm:$0xf]
  %v83 = vld [vmem:[%s1 + $0x84] sm:$0xf]
  %v84 = vld [vmem:[%s1 + $0x88] sm:$0xf]
  %v85 = vld [vmem:[%s1 + $0x8c] sm:$0xf]
  %v86 = vld [vmem:[%s1 + $0x90] sm:$0xf]
  %v87 = vld [vmem:[%s1 + $0x94] sm:$0xf]
  %v88 = vld [vmem:[%s1 + $0x98] sm:$0xf]
  %v89 = vld [vmem:[%s1 + $0x9c] sm:$0xf]
  %v90 = vld [vmem:[%s1 + $0xa0] sm:$0xf]
  %v91 = vld [vmem:[%s1 + $0xa4] sm:$0xf]
  %v92 = vld [vmem:[%s1 + $0xa8] sm:$0xf]
  %v93 = vld [vmem:[%s1 + $0xac] sm:$0xf]
  %v94 = vld [vmem:[%s1 + $0xb0] sm:$0xf]
  %v95 = vld [vmem:[%s1 + $0xb4] sm:$0xf]
  %v96 = vld [vmem:[%s1 + $0xb8] sm:$0xf]
  %v97 = vld [vmem:[%s1 + $0xbc] sm:$0xf]
  %v98 = vld [vmem:[%s1 + $0xc0] sm:$0xf]
  %v99 = vld [vmem:[%s1 + $0xc4] sm:$0xf]
  %v100 = vld [vmem:[%s1 + $0xc8] sm:$0xf]
  %v101 = vld [vmem:[%s1 + $0xcc] sm:$0xf]
  %v102 = vld [vmem:[%s1 + $0xd0] sm:$0xf]
  %v103 = vld [vmem:[%s1 + $0xd4] sm:$0xf]
  %v104 = vld [vmem:[%s1 + $0xd8] sm:$0xf]
  %v105 = vld [vmem:[%s1 + $0xdc] sm:$0xf]
  %v106 = vld [vmem:[%s1 + $0xe0] sm:$0xf]
  %v107 = vld [vmem:[%s1 + $0xe4] sm:$0xf]
  %v108 = vld [vmem:[%s1 + $0xe8] sm:$0xf]
  %v109 = vld [vmem:[%s1 + $0xec] sm:$0xf]
  %v110 = vld [vmem:[%s1 + $0xf0] sm:$0xf]
  %v111 = vld [vmem:[%s1 + $0xf4] sm:$0xf]
  %v112 = vld [vmem:[%s1 + $0xf8] sm:$0xf]
  %v113 = vld [vmem:[%s1 + $0xfc] sm:$0xf]
  %v114 = vld [vmem:[%s1 + $0x100] sm:$0xf]
  %v115 = vld [vmem:[%s1 + $0x104] sm:$0xf]
  %v116 = vld [vmem:[%s1 + $0x108] sm:$0xf]
  %v117 = vld [vmem:[%s1 + $0x10c] sm:$0xf]
  %v118 = vld [vmem:[%s1 + $0x110] sm:$0xf]
  %v119 = vld [vmem:[%s1 + $0x114] sm:$0xf]
  %v120 = vld [vmem:[%s1 + $0x118] sm:$0xf]
  %v121 = vld [vmem:[%s1 + $0x11c] sm:$0xf]
  %v122 = vld [vmem:[%s1 + $0x120] sm:$0xf]
  %v123 = vld [vmem:[%s1 + $0x124] sm:$0xf]
  %v124 = vld [vmem:[%s1 + $0x128] sm:$0xf]
  %v125 = vld [vmem:[%s1 + $0x12c] sm:$0xf]
  %v126 = vld [vmem:[%s1 + $0x130] sm:$0xf]
  %v127 = vld [vmem:[%s1 + $0x134] sm:$0xf]
  %v128 = vld [vmem:[%s1 + $0x138] sm:$0xf]
  %v129 = vld [vmem:[%s1 + $0x13c] sm:$0xf]
  %v130 = vld [vmem:[%s1 + $0x140] sm:$0xf]
  %v131 = vld [vmem:[%s1 + $0x144] sm:$0xf]
  %v132 = vld [vmem:[%s1 + $0x148] sm:$0xf]
  %v133 = vld [vmem:[%s1 + $0x14c] sm:$0xf]
  %v134 = vld [vmem:[%s1 + $0x150] sm:$0xf]
  %v135 = vld [vmem:[%s1 + $0x154] sm:$0xf]
  %v136 = vld [vmem:[%s1 + $0x158] sm:$0xf]
  %v137 = vld [vmem:[%s1 + $0x15c] sm:$0xf]
  %v138 = vld [vmem:[%s1 + $0x160] sm:$0xf]
  %v139 = vld [vmem:[%s1 + $0x164] sm:$0xf]
  %v140 = vld [vmem:[%s1 + $0x168] sm:$0xf]
  %v141 = vld [vmem:[%s1 + $0x16c] sm:$0xf]
  %v142 = vld [vmem:[%s1 + $0x170] sm:$0xf]
  %v143 = vld [vmem:[%s1 + $0x174] sm:$0xf]
  %v144 = vld [vmem:[%s1 + $0x178] sm:$0xf]
  %v145 = vld [vmem:[%s1 + $0x17c] sm:$0xf]
  %v146 = vld [vmem:[%s1 + $0x180] sm:$0xf]
  %v147 = vld [vmem:[%s1 + $0x184] sm:$0xf]
  %v148 = vld [vmem:[%s1 + $0x188] sm:$0xf]
  %v149 = vld [vmem:[%s1 + $0x18c] sm:$0xf]
  %v150 = vld [vmem:[%s1 + $0x190] sm:$0xf]
  %v151 = vld [vmem:[%s1 + $0x194] sm:$0xf]
  %v152 = vld [vmem:[%s1 + $0x198] sm:$0xf]
  %v153 = vld [vmem:[%s1 + $0x19c] sm:$0xf]
  %v154 = vld [vmem:[%s1 + $0x1a0] sm:$0xf]
  %v155 = vld [vmem:[%s1 + $0x1a4] sm:$0xf]
  %v156 = vld [vmem:[%s1 + $0x1a8] sm:$0xf]
  %v157 = vld [vmem:[%s1 + $0x1ac] sm:$0xf]
  %v158 = vld [vmem:[%s1 + $0x1b0] sm:$0xf]
  %v159 = vld [vmem:[%s1 + $0x1b4] sm:$0xf]
  %v160 = vld [vmem:[%s1 + $0x1b8] sm:$0xf]
  %v161 = vld [vmem:[%s1 + $0x1bc] sm:$0xf]
  %v162 = vld [vmem:[%s1 + $0x1c0] sm:$0xf]
  %v163 = vld [vmem:[%s1 + $0x1c4] sm:$0xf]
  %v164 = vld [vmem:[%s1 + $0x1c8] sm:$0xf]
  %v165 = vld [vmem:[%s1 + $0x1cc] sm:$0xf]
  %v166 = vld [vmem:[%s1 + $0x1d0] sm:$0xf]
  %v167 = vld [vmem:[%s1 + $0x1d4] sm:$0xf]
  %v168 = vld [vmem:[%s1 + $0x1d8] sm:$0xf]
  %v169 = vld [vmem:[%s1 + $0x1dc] sm:$0xf]
  %v170 = vld [vmem:[%s1 + $0x1e0] sm:$0xf]
  %v171 = vld [vmem:[%s1 + $0x1e4] sm:$0xf]
  %v172 = vld [vmem:[%s1 + $0x1e8] sm:$0xf]
  %v173 = vld [vmem:[%s1 + $0x1ec] sm:$0xf]
  %v174 = vld [vmem:[%s1 + $0x1f0] sm:$0xf]
  %v175 = vld [vmem:[%s1 + $0x1f4] sm:$0xf]
  %v176 = vld [vmem:[%s1 + $0x1f8] sm:$0xf]
  %v177 = vld [vmem:[%s1 + $0x1fc] sm:$0xf]
  %v178 = vld [vmem:[%s1 + $0x200] sm:$0xf]
  %v179 = vld [vmem:[%s1 + $0x204] sm:$0xf]
  %v180 = vld [vmem:[%s1 + $0x208] sm:$0xf]
  %v181 = vld [vmem:[%s1 + $0x20c] sm:$0xf]
  %v182 = vld [vmem:[%s1 + $0x210] sm:$0xf]
  %v183 = vld [vmem:[%s1 + $0x214] sm:$0xf]
  %v184 = vld [vmem:[%s1 + $0x218] sm:$0xf]
  %v185 = vld [vmem:[%s1 + $0x21c] sm:$0xf]
  %v186 = vld [vmem:[%s1 + $0x220] sm:$0xf]
  %v187 = vld [vmem:[%s1 + $0x224] sm:$0xf]
  %v188 = vld [vmem:[%s1 + $0x228] sm:$0xf]
  %v189 = vld [vmem:[%s1 + $0x22c] sm:$0xf]
  %v190 = vld [vmem:[%s1 + $0x230] sm:$0xf]
  %v191 = vld [vmem:[%s1 + $0x234] sm:$0xf]
  %v192 = vld [vmem:[%s1 + $0x238] sm:$0xf]
  %v193 = vld [vmem:[%s1 + $0x23c] sm:$0xf]
  %v194 = vld [vmem:[%s1 + $0x240] sm:$0xf]
  %v195 = vld [vmem:[%s1 + $0x244] sm:$0xf]
  %v196 = vld [vmem:[%s1 + $0x248] sm:$0xf]
  %v197 = vld [vmem:[%s1 + $0x24c] sm:$0xf]
  %v198 = vld [vmem:[%s1 + $0x250] sm:$0xf]
  %v199 = vld [vmem:[%s1 + $0x254] sm:$0xf]
  %v200 = vld [vmem:[%s1 + $0x258] sm:$0xf]
  %v201 = vld [vmem:[%s1 + $0x25c] sm:$0xf]
  %v202 = vld [vmem:[%s1 + $0x260] sm:$0xf]
  %v203 = vld [vmem:[%s1 + $0x264] sm:$0xf]
  %v204 = vld [vmem:[%s1 + $0x268] sm:$0xf]
  %v205 = vld [vmem:[%s1 + $0x26c] sm:$0xf]
  %v206 = vld [vmem:[%s1 + $0x270] sm:$0xf]
  %v207 = vld [vmem:[%s1 + $0x274] sm:$0xf]
  %v208 = vld [vmem:[%s1 + $0x278] sm:$0xf]
  %v209 = vld [vmem:[%s1 + $0x27c] sm:$0xf]
  %v210 = vld [vmem:[%s1 + $0x280] sm:$0xf]
  %v211 = vld [vmem:[%s1 + $0x284] sm:$0xf]
  %v212 = vld [vmem:[%s1 + $0x288] sm:$0xf]
  %v213 = vld [vmem:[%s1 + $0x28c] sm:$0xf]
  %v214 = vld [vmem:[%s1 + $0x290] sm:$0xf]
  %v215 = vld [vmem:[%s1 + $0x294] sm:$0xf]
  %v216 = vld [vmem:[%s1 + $0x298] sm:$0xf]
  %v217 = vld [vmem:[%s1 + $0x29c] sm:$0xf]
  %v218 = vld [vmem:[%s1 + $0x2a0] sm:$0xf]
  %v219 = vld [vmem:[%s1 + $0x2a4] sm:$0xf]
  %v220 = vld [vmem:[%s1 + $0x2a8] sm:$0xf]
  %v221 = vld [vmem:[%s1 + $0x2ac] sm:$0xf]
  %v222 = vld [vmem:[%s1 + $0x2b0] sm:$0xf]
  %v223 = vld [vmem:[%s1 + $0x2b4] sm:$0xf]
  %v224 = vld [vmem:[%s1 + $0x2b8] sm:$0xf]
  %v225 = vld [vmem:[%s1 + $0x2bc] sm:$0xf]
  %v226 = vld [vmem:[%s1 + $0x2c0] sm:$0xf]
  %v227 = vld [vmem:[%s1 + $0x2c4] sm:$0xf]
  %v228 = vld [vmem:[%s1 + $0x2c8] sm:$0xf]
  %v229 = vld [vmem:[%s1 + $0x2cc] sm:$0xf]
  %v230 = vld [vmem:[%s1 + $0x2d0] sm:$0xf]
  %v231 = vld [vmem:[%s1 + $0x2d4] sm:$0xf]
  %v232 = vld [vmem:[%s1 + $0x2d8] sm:$0xf]
  %v233 = vld [vmem:[%s1 + $0x2dc] sm:$0xf]
  %v234 = vld [vmem:[%s1 + $0x2e0] sm:$0xf]
  %v235 = vld [vmem:[%s1 + $0x2e4] sm:$0xf]
  %v236 = vld [vmem:[%s1 + $0x2e8] sm:$0xf]
  %v237 = vld [vmem:[%s1 + $0x2ec] sm:$0xf]
  %v238 = vld [vmem:[%s1 + $0x2f0] sm:$0xf]
  %v239 = vld [vmem:[%s1 + $0x2f4] sm:$0xf]
  %v240 = vld [vmem:[%s1 + $0x2f8] sm:$0xf]
  %v241 = vld [vmem:[%s1 + $0x2fc] sm:$0xf]
  %v242 = vld [vmem:[%s1 + $0x300] sm:$0xf]
  %v243 = vld [vmem:[%s1 + $0x304] sm:$0xf]
  %v244 = vld [vmem:[%s1 + $0x308] sm:$0xf]
  %v245 = vld [vmem:[%s1 + $0x30c] sm:$0xf]
  %v246 = vld [vmem:[%s1 + $0x310] sm:$0xf]
  %v247 = vld [vmem:[%s1 + $0x314] sm:$0xf]
  %v248 = vld [vmem:[%s1 + $0x318] sm:$0xf]
  %v249 = vld [vmem:[%s1 + $0x31c] sm:$0xf]
  %v250 = vld [vmem:[%s1 + $0x320] sm:$0xf]
  %v251 = vld [vmem:[%s1 + $0x324] sm:$0xf]
  %v252 = vld [vmem:[%s1 + $0x328] sm:$0xf]
  %v253 = vld [vmem:[%s1 + $0x32c] sm:$0xf]
  %v254 = vld [vmem:[%s1 + $0x330] sm:$0xf]
  %v255 = vld [vmem:[%s1 + $0x334] sm:$0xf]
  %v256 = vld [vmem:[%s1 + $0x338] sm:$0xf]
  %v257 = vld [vmem:[%s1 + $0x33c] sm:$0xf]
  %v258 = vld [vmem:[%s1 + $0x340] sm:$0xf]
  %v259 = vld [vmem:[%s1 + $0x344] sm:$0xf]
  %v260 = vld [vmem:[%s1 + $0x348] sm:$0xf]
  %v261 = vld [vmem:[%s1 + $0x34c] sm:$0xf]
  %v262 = vld [vmem:[%s1 + $0x350] sm:$0xf]
  %v263 = vld [vmem:[%s1 + $0x354] sm:$0xf]
  %v264 = vld [vmem:[%s1 + $0x358] sm:$0xf]
  %v265 = vld [vmem:[%s1 + $0x35c] sm:$0xf]
  %v266 = vld [vmem:[%s1 + $0x360] sm:$0xf]
  %v267 = vld [vmem:[%s1 + $0x364] sm:$0xf]
  %v268 = vld [vmem:[%s1 + $0x368] sm:$0xf]
  %v269 = vld [vmem:[%s1 + $0x36c] sm:$0xf]
  %v270 = vld [vmem:[%s1 + $0x370] sm:$0xf]
  %v271 = vld [vmem:[%s1 + $0x374] sm:$0xf]
  %v272 = vld [vmem:[%s1 + $0x378] sm:$0xf]
  %v273 = vld [vmem:[%s1 + $0x37c] sm:$0xf]
  %v274 = vld [vmem:[%s1 + $0x380] sm:$0xf]
  %v275 = vld [vmem:[%s1 + $0x384] sm:$0xf]
  %v276 = vld [vmem:[%s1 + $0x388] sm:$0xf]
  %v277 = vld [vmem:[%s1 + $0x38c] sm:$0xf]
  %v278 = vld [vmem:[%s1 + $0x390] sm:$0xf]
  %v279 = vld [vmem:[%s1 + $0x394] sm:$0xf]
  %v280 = vld [vmem:[%s1 + $0x398] sm:$0xf]
  %v281 = vld [vmem:[%s1 + $0x39c] sm:$0xf]
  %v282 = vld [vmem:[%s1 + $0x3a0] sm:$0xf]
  %v283 = vld [vmem:[%s1 + $0x3a4] sm:$0xf]
  %v284 = vld [vmem:[%s1 + $0x3a8] sm:$0xf]
  %v285 = vld [vmem:[%s1 + $0x3ac] sm:$0xf]
  %v286 = vld [vmem:[%s1 + $0x3b0] sm:$0xf]
  %v287 = vld [vmem:[%s1 + $0x3b4] sm:$0xf]
  %v288 = vld [vmem:[%s1 + $0x3b8] sm:$0xf]
  %v289 = vld [vmem:[%s1 + $0x3bc] sm:$0xf]
  %v290 = vld [vmem:[%s1 + $0x3c0] sm:$0xf]
  %v291 = vld [vmem:[%s1 + $0x3c4] sm:$0xf]
  %v292 = vld [vmem:[%s1 + $0x3c8] sm:$0xf]
  %v293 = vld [vmem:[%s1 + $0x3cc] sm:$0xf]
  %v294 = vld [vmem:[%s1 + $0x3d0] sm:$0xf]
  %v295 = vld [vmem:[%s1 + $0x3d4] sm:$0xf]
  %v296 = vld [vmem:[%s1 + $0x3d8] sm:$0xf]
  %v297 = vld [vmem:[%s1 + $0x3dc] sm:$0xf]
  %v298 = vld [vmem:[%s1 + $0x3e0] sm:$0xf]
  %v299 = vld [vmem:[%s1 + $0x3e4] sm:$0xf]
  %v300 = vld [vmem:[%s1 + $0x3e8] sm:$0xf]
  %v301 = vld [vmem:[%s1 + $0x3ec] sm:$0xf]
  %v302 = vld [vmem:[%s1 + $0x3f0] sm:$0xf]
  %v303 = vld [vmem:[%s1 + $0x3f4] sm:$0xf]
  %v304 = vld [vmem:[%s1 + $0x3f8] sm:$0xf]
  %v305 = vld [vmem:[%s1 + $0x3fc] sm:$0xf]
  %v314 = vunpack.c.l.b16 %v18
  %v315 = vunpack.c.h.b16 %v18
  %v316 = vunpack.c.l.b16 %v19
  %v317 = vunpack.c.h.b16 %v19
  %v318 = vunpack.c.l.b16 %v20
  %v319 = vunpack.c.h.b16 %v20
  %v320 = vunpack.c.l.b16 %v21
  %v321 = vunpack.c.h.b16 %v21
  %v322 = vunpack.c.l.b16 %v22
  %v323 = vunpack.c.h.b16 %v22
  %v324 = vunpack.c.l.b16 %v23
  %v325 = vunpack.c.h.b16 %v23
  %v326 = vunpack.c.l.b16 %v24
  %v327 = vunpack.c.h.b16 %v24
  %v328 = vunpack.c.l.b16 %v25
  %v329 = vunpack.c.h.b16 %v25
  %v330 = vpack.c.b16 %v318, %v314
  %v331 = vpack.c.b16 %v319, %v315
  %v332 = vpack.c.b16 %v320, %v316
  %v333 = vpack.c.b16 %v321, %v317
  %v334 = vpack.c.b16 %v326, %v322
  %v335 = vpack.c.b16 %v327, %v323
  %v336 = vpack.c.b16 %v328, %v324
  %v337 = vpack.c.b16 %v329, %v325
  %v410 = vunpack.c.l.b16 %v50
  %v411 = vunpack.c.l.b16 %v51
  %v412 = vunpack.c.l.b16 %v52
  %v413 = vunpack.c.l.b16 %v53
  %v414 = vunpack.c.l.b16 %v54
  %v415 = vunpack.c.l.b16 %v55
  %v416 = vunpack.c.l.b16 %v56
  %v417 = vunpack.c.l.b16 %v57
  %v418 = vunpack.c.l.b16 %v58
  %v419 = vunpack.c.l.b16 %v59
  %v420 = vunpack.c.l.b16 %v60
  %v421 = vunpack.c.l.b16 %v61
  %v422 = vunpack.c.l.b16 %v62
  %v423 = vunpack.c.l.b16 %v63
  %v424 = vunpack.c.l.b16 %v64
  %v425 = vunpack.c.l.b16 %v65
  %v426 = vunpack.c.l.b16 %v66
  %v427 = vunpack.c.l.b16 %v67
  %v428 = vunpack.c.l.b16 %v68
  %v429 = vunpack.c.l.b16 %v69
  %v430 = vunpack.c.l.b16 %v70
  %v431 = vunpack.c.l.b16 %v71
  %v432 = vunpack.c.l.b16 %v72
  %v433 = vunpack.c.l.b16 %v73
  %v434 = vunpack.c.l.b16 %v74
  %v435 = vunpack.c.l.b16 %v75
  %v436 = vunpack.c.l.b16 %v76
  %v437 = vunpack.c.l.b16 %v77
  %v438 = vunpack.c.l.b16 %v78
  %v439 = vunpack.c.l.b16 %v79
  %v440 = vunpack.c.l.b16 %v80
  %v441 = vunpack.c.l.b16 %v81
  %v442 = vunpack.c.l.b16 %v82
  %v443 = vunpack.c.l.b16 %v83
  %v444 = vunpack.c.l.b16 %v84
  %v445 = vunpack.c.l.b16 %v85
  %v446 = vunpack.c.l.b16 %v86
  %v447 = vunpack.c.l.b16 %v87
  %v448 = vunpack.c.l.b16 %v88
  %v449 = vunpack.c.l.b16 %v89
  %v450 = vunpack.c.l.b16 %v90
  %v451 = vunpack.c.l.b16 %v91
  %v452 = vunpack.c.l.b16 %v92
  %v453 = vunpack.c.l.b16 %v93
  %v454 = vunpack.c.l.b16 %v94
  %v455 = vunpack.c.l.b16 %v95
  %v456 = vunpack.c.l.b16 %v96
  %v457 = vunpack.c.l.b16 %v97
  %v458 = vunpack.c.l.b16 %v98
  %v459 = vunpack.c.l.b16 %v99
  %v460 = vunpack.c.l.b16 %v100
  %v461 = vunpack.c.l.b16 %v101
  %v462 = vunpack.c.l.b16 %v102
  %v463 = vunpack.c.l.b16 %v103
  %v464 = vunpack.c.l.b16 %v104
  %v465 = vunpack.c.l.b16 %v105
  %v466 = vunpack.c.l.b16 %v106
  %v467 = vunpack.c.l.b16 %v107
  %v468 = vunpack.c.l.b16 %v108
  %v469 = vunpack.c.l.b16 %v109
  %v470 = vunpack.c.l.b16 %v110
  %v471 = vunpack.c.l.b16 %v111
  %v472 = vunpack.c.l.b16 %v112
  %v473 = vunpack.c.l.b16 %v113
  %v474 = vpack.c.b16 %v411, %v410
  %v475 = vpack.c.b16 %v413, %v412
  %v476 = vpack.c.b16 %v415, %v414
  %v477 = vpack.c.b16 %v417, %v416
  %v478 = vpack.c.b16 %v419, %v418
  %v479 = vpack.c.b16 %v421, %v420
  %v480 = vpack.c.b16 %v423, %v422
  %v481 = vpack.c.b16 %v425, %v424
  %v482 = vpack.c.b16 %v427, %v426
  %v483 = vpack.c.b16 %v429, %v428
  %v484 = vpack.c.b16 %v431, %v430
  %v485 = vpack.c.b16 %v433, %v432
  %v486 = vpack.c.b16 %v435, %v434
  %v487 = vpack.c.b16 %v437, %v436
  %v488 = vpack.c.b16 %v439, %v438
  %v489 = vpack.c.b16 %v441, %v440
  %v490 = vpack.c.b16 %v443, %v442
  %v491 = vpack.c.b16 %v445, %v444
  %v492 = vpack.c.b16 %v447, %v446
  %v493 = vpack.c.b16 %v449, %v448
  %v494 = vpack.c.b16 %v451, %v450
  %v495 = vpack.c.b16 %v453, %v452
  %v496 = vpack.c.b16 %v455, %v454
  %v497 = vpack.c.b16 %v457, %v456
  %v498 = vpack.c.b16 %v459, %v458
  %v499 = vpack.c.b16 %v461, %v460
  %v500 = vpack.c.b16 %v463, %v462
  %v501 = vpack.c.b16 %v465, %v464
  %v502 = vpack.c.b16 %v467, %v466
  %v503 = vpack.c.b16 %v469, %v468
  %v504 = vpack.c.b16 %v471, %v470
  %v505 = vpack.c.b16 %v473, %v472
  %538 = vmatprep.subr.bf16.mxu0 0
  %539 = vmatpush1.bf16.msra.mxu0 %v474
  %540 = vmatprep.subr.bf16.mxu0 0
  %541 = vmatpush1.bf16.msra.mxu0 %v475
  %542 = vmatprep.subr.bf16.mxu0 0
  %543 = vmatpush1.bf16.msra.mxu0 %v476
  %544 = vmatprep.subr.bf16.mxu0 0
  %545 = vmatpush1.bf16.msra.mxu0 %v477
  %546 = vmatprep.subr.bf16.mxu0 0
  %547 = vmatpush1.bf16.msra.mxu0 %v478
  %548 = vmatprep.subr.bf16.mxu0 0
  %549 = vmatpush1.bf16.msra.mxu0 %v479
  %550 = vmatprep.subr.bf16.mxu0 0
  %551 = vmatpush1.bf16.msra.mxu0 %v480
  %552 = vmatprep.subr.bf16.mxu0 0
  %553 = vmatpush1.bf16.msra.mxu0 %v481
  %554 = vmatprep.subr.bf16.mxu0 0
  %555 = vmatpush1.bf16.msra.mxu0 %v482
  %556 = vmatprep.subr.bf16.mxu0 0
  %557 = vmatpush1.bf16.msra.mxu0 %v483
  %558 = vmatprep.subr.bf16.mxu0 0
  %559 = vmatpush1.bf16.msra.mxu0 %v484
  %560 = vmatprep.subr.bf16.mxu0 0
  %561 = vmatpush1.bf16.msra.mxu0 %v485
  %562 = vmatprep.subr.bf16.mxu0 0
  %563 = vmatpush1.bf16.msra.mxu0 %v486
  %564 = vmatprep.subr.bf16.mxu0 0
  %565 = vmatpush1.bf16.msra.mxu0 %v487
  %566 = vmatprep.subr.bf16.mxu0 0
  %567 = vmatpush1.bf16.msra.mxu0 %v488
  %568 = vmatprep.subr.bf16.mxu0 0
  %569 = vmatpush1.bf16.msra.mxu0 %v489
  %570 = vmatprep.mubr.bf16.mxu0 %v331
  %571 = vmatmul.mubr.bf16.gmra.mrb[0].mxu0 %v330
  %v572 = vpop.f32.mrb[0].mxu0
  %v573 = vadd.f32 0.0, %v572
  %v574 = vpop.f32.mrb[0].mxu0
  %v575 = vpop.f32.mrb[0].mxu0
  %v576 = vadd.f32 0.0, %v575
  %v577 = vpop.f32.mrb[0].mxu0
  %578 = vmatprep.mubr.bf16.mxu0 %v335
  %579 = vmatmul.mubr.bf16.gmra.mrb[0].mxu0 %v334
  %v580 = vpop.f32.mrb[0].mxu0
  %v581 = vadd.f32 0.0, %v580
  %v582 = vpop.f32.mrb[0].mxu0
  %v583 = vpop.f32.mrb[0].mxu0
  %v584 = vadd.f32 0.0, %v583
  %v585 = vpop.f32.mrb[0].mxu0
  %586 = vdwg.mxu0
  %587 = vmatprep.subr.bf16.mxu0 0
  %588 = vmatpush1.bf16.msra.mxu0 %v490
  %589 = vmatprep.subr.bf16.mxu0 0
  %590 = vmatpush1.bf16.msra.mxu0 %v491
  %591 = vmatprep.subr.bf16.mxu0 0
  %592 = vmatpush1.bf16.msra.mxu0 %v492
  %593 = vmatprep.subr.bf16.mxu0 0
  %594 = vmatpush1.bf16.msra.mxu0 %v493
  %595 = vmatprep.subr.bf16.mxu0 0
  %596 = vmatpush1.bf16.msra.mxu0 %v494
  %597 = vmatprep.subr.bf16.mxu0 0
  %598 = vmatpush1.bf16.msra.mxu0 %v495
  %599 = vmatprep.subr.bf16.mxu0 0
  %600 = vmatpush1.bf16.msra.mxu0 %v496
  %601 = vmatprep.subr.bf16.mxu0 0
  %602 = vmatpush1.bf16.msra.mxu0 %v497
  %603 = vmatprep.subr.bf16.mxu0 0
  %604 = vmatpush1.bf16.msra.mxu0 %v498
  %605 = vmatprep.subr.bf16.mxu0 0
  %606 = vmatpush1.bf16.msra.mxu0 %v499
  %607 = vmatprep.subr.bf16.mxu0 0
  %608 = vmatpush1.bf16.msra.mxu0 %v500
  %609 = vmatprep.subr.bf16.mxu0 0
  %610 = vmatpush1.bf16.msra.mxu0 %v501
  %611 = vmatprep.subr.bf16.mxu0 0
  %612 = vmatpush1.bf16.msra.mxu0 %v502
  %613 = vmatprep.subr.bf16.mxu0 0
  %614 = vmatpush1.bf16.msra.mxu0 %v503
  %615 = vmatprep.subr.bf16.mxu0 0
  %616 = vmatpush1.bf16.msra.mxu0 %v504
  %617 = vmatprep.subr.bf16.mxu0 0
  %618 = vmatpush1.bf16.msra.mxu0 %v505
  %619 = vmatprep.mubr.bf16.mxu0 %v333
  %620 = vmatmul.mubr.bf16.gmra.mrb[0].mxu0 %v332
  %v621 = vpop.f32.mrb[0].mxu0
  %v622 = vadd.f32 %v573, %v621
  %v623 = vpop.f32.mrb[0].mxu0
  %v624 = vpop.f32.mrb[0].mxu0
  %v625 = vadd.f32 %v576, %v624
  %v626 = vpop.f32.mrb[0].mxu0
  %627 = vmatprep.mubr.bf16.mxu0 %v337
  %628 = vmatmul.mubr.bf16.gmra.mrb[0].mxu0 %v336
  %v629 = vpop.f32.mrb[0].mxu0
  %v630 = vadd.f32 %v581, %v629
  %v631 = vpop.f32.mrb[0].mxu0
  %v632 = vpop.f32.mrb[0].mxu0
  %v633 = vadd.f32 %v584, %v632
  %v634 = vpop.f32.mrb[0].mxu0
  %635 = vdwg.mxu0
  %v644 = vunpack.c.l.b16 %v26
  %v645 = vunpack.c.h.b16 %v26
  %v646 = vunpack.c.l.b16 %v27
  %v647 = vunpack.c.h.b16 %v27
  %v648 = vunpack.c.l.b16 %v28
  %v649 = vunpack.c.h.b16 %v28
  %v650 = vunpack.c.l.b16 %v29
  %v651 = vunpack.c.h.b16 %v29
  %v652 = vunpack.c.l.b16 %v30
  %v653 = vunpack.c.h.b16 %v30
  %v654 = vunpack.c.l.b16 %v31
  %v655 = vunpack.c.h.b16 %v31
  %v656 = vunpack.c.l.b16 %v32
  %v657 = vunpack.c.h.b16 %v32
  %v658 = vunpack.c.l.b16 %v33
  %v659 = vunpack.c.h.b16 %v33
  %v660 = vpack.c.b16 %v648, %v644
  %v661 = vpack.c.b16 %v649, %v645
  %v662 = vpack.c.b16 %v650, %v646
  %v663 = vpack.c.b16 %v651, %v647
  %v664 = vpack.c.b16 %v656, %v652
  %v665 = vpack.c.b16 %v657, %v653
  %v666 = vpack.c.b16 %v658, %v654
  %v667 = vpack.c.b16 %v659, %v655
  %v740 = vunpack.c.l.b16 %v114
  %v741 = vunpack.c.l.b16 %v115
  %v742 = vunpack.c.l.b16 %v116
  %v743 = vunpack.c.l.b16 %v117
  %v744 = vunpack.c.l.b16 %v118
  %v745 = vunpack.c.l.b16 %v119
  %v746 = vunpack.c.l.b16 %v120
  %v747 = vunpack.c.l.b16 %v121
  %v748 = vunpack.c.l.b16 %v122
  %v749 = vunpack.c.l.b16 %v123
  %v750 = vunpack.c.l.b16 %v124
  %v751 = vunpack.c.l.b16 %v125
  %v752 = vunpack.c.l.b16 %v126
  %v753 = vunpack.c.l.b16 %v127
  %v754 = vunpack.c.l.b16 %v128
  %v755 = vunpack.c.l.b16 %v129
  %v756 = vunpack.c.l.b16 %v130
  %v757 = vunpack.c.l.b16 %v131
  %v758 = vunpack.c.l.b16 %v132
  %v759 = vunpack.c.l.b16 %v133
  %v760 = vunpack.c.l.b16 %v134
  %v761 = vunpack.c.l.b16 %v135
  %v762 = vunpack.c.l.b16 %v136
  %v763 = vunpack.c.l.b16 %v137
  %v764 = vunpack.c.l.b16 %v138
  %v765 = vunpack.c.l.b16 %v139
  %v766 = vunpack.c.l.b16 %v140
  %v767 = vunpack.c.l.b16 %v141
  %v768 = vunpack.c.l.b16 %v142
  %v769 = vunpack.c.l.b16 %v143
  %v770 = vunpack.c.l.b16 %v144
  %v771 = vunpack.c.l.b16 %v145
  %v772 = vunpack.c.l.b16 %v146
  %v773 = vunpack.c.l.b16 %v147
  %v774 = vunpack.c.l.b16 %v148
  %v775 = vunpack.c.l.b16 %v149
  %v776 = vunpack.c.l.b16 %v150
  %v777 = vunpack.c.l.b16 %v151
  %v778 = vunpack.c.l.b16 %v152
  %v779 = vunpack.c.l.b16 %v153
  %v780 = vunpack.c.l.b16 %v154
  %v781 = vunpack.c.l.b16 %v155
  %v782 = vunpack.c.l.b16 %v156
  %v783 = vunpack.c.l.b16 %v157
  %v784 = vunpack.c.l.b16 %v158
  %v785 = vunpack.c.l.b16 %v159
  %v786 = vunpack.c.l.b16 %v160
  %v787 = vunpack.c.l.b16 %v161
  %v788 = vunpack.c.l.b16 %v162
  %v789 = vunpack.c.l.b16 %v163
  %v790 = vunpack.c.l.b16 %v164
  %v791 = vunpack.c.l.b16 %v165
  %v792 = vunpack.c.l.b16 %v166
  %v793 = vunpack.c.l.b16 %v167
  %v794 = vunpack.c.l.b16 %v168
  %v795 = vunpack.c.l.b16 %v169
  %v796 = vunpack.c.l.b16 %v170
  %v797 = vunpack.c.l.b16 %v171
  %v798 = vunpack.c.l.b16 %v172
  %v799 = vunpack.c.l.b16 %v173
  %v800 = vunpack.c.l.b16 %v174
  %v801 = vunpack.c.l.b16 %v175
  %v802 = vunpack.c.l.b16 %v176
  %v803 = vunpack.c.l.b16 %v177
  %v804 = vpack.c.b16 %v741, %v740
  %v805 = vpack.c.b16 %v743, %v742
  %v806 = vpack.c.b16 %v745, %v744
  %v807 = vpack.c.b16 %v747, %v746
  %v808 = vpack.c.b16 %v749, %v748
  %v809 = vpack.c.b16 %v751, %v750
  %v810 = vpack.c.b16 %v753, %v752
  %v811 = vpack.c.b16 %v755, %v754
  %v812 = vpack.c.b16 %v757, %v756
  %v813 = vpack.c.b16 %v759, %v758
  %v814 = vpack.c.b16 %v761, %v760
  %v815 = vpack.c.b16 %v763, %v762
  %v816 = vpack.c.b16 %v765, %v764
  %v817 = vpack.c.b16 %v767, %v766
  %v818 = vpack.c.b16 %v769, %v768
  %v819 = vpack.c.b16 %v771, %v770
  %v820 = vpack.c.b16 %v773, %v772
  %v821 = vpack.c.b16 %v775, %v774
  %v822 = vpack.c.b16 %v777, %v776
  %v823 = vpack.c.b16 %v779, %v778
  %v824 = vpack.c.b16 %v781, %v780
  %v825 = vpack.c.b16 %v783, %v782
  %v826 = vpack.c.b16 %v785, %v784
  %v827 = vpack.c.b16 %v787, %v786
  %v828 = vpack.c.b16 %v789, %v788
  %v829 = vpack.c.b16 %v791, %v790
  %v830 = vpack.c.b16 %v793, %v792
  %v831 = vpack.c.b16 %v795, %v794
  %v832 = vpack.c.b16 %v797, %v796
  %v833 = vpack.c.b16 %v799, %v798
  %v834 = vpack.c.b16 %v801, %v800
  %v835 = vpack.c.b16 %v803, %v802
  %868 = vmatprep.subr.bf16.mxu0 0
  %869 = vmatpush1.bf16.msra.mxu0 %v804
  %870 = vmatprep.subr.bf16.mxu0 0
  %871 = vmatpush1.bf16.msra.mxu0 %v805
  %872 = vmatprep.subr.bf16.mxu0 0
  %873 = vmatpush1.bf16.msra.mxu0 %v806
  %874 = vmatprep.subr.bf16.mxu0 0
  %875 = vmatpush1.bf16.msra.mxu0 %v807
  %876 = vmatprep.subr.bf16.mxu0 0
  %877 = vmatpush1.bf16.msra.mxu0 %v808
  %878 = vmatprep.subr.bf16.mxu0 0
  %879 = vmatpush1.bf16.msra.mxu0 %v809
  %880 = vmatprep.subr.bf16.mxu0 0
  %881 = vmatpush1.bf16.msra.mxu0 %v810
  %882 = vmatprep.subr.bf16.mxu0 0
  %883 = vmatpush1.bf16.msra.mxu0 %v811
  %884 = vmatprep.subr.bf16.mxu0 0
  %885 = vmatpush1.bf16.msra.mxu0 %v812
  %886 = vmatprep.subr.bf16.mxu0 0
  %887 = vmatpush1.bf16.msra.mxu0 %v813
  %888 = vmatprep.subr.bf16.mxu0 0
  %889 = vmatpush1.bf16.msra.mxu0 %v814
  %890 = vmatprep.subr.bf16.mxu0 0
  %891 = vmatpush1.bf16.msra.mxu0 %v815
  %892 = vmatprep.subr.bf16.mxu0 0
  %893 = vmatpush1.bf16.msra.mxu0 %v816
  %894 = vmatprep.subr.bf16.mxu0 0
  %895 = vmatpush1.bf16.msra.mxu0 %v817
  %896 = vmatprep.subr.bf16.mxu0 0
  %897 = vmatpush1.bf16.msra.mxu0 %v818
  %898 = vmatprep.subr.bf16.mxu0 0
  %899 = vmatpush1.bf16.msra.mxu0 %v819
  %900 = vmatprep.mubr.bf16.mxu0 %v661
  %901 = vmatmul.mubr.bf16.gmra.mrb[0].mxu0 %v660
  %v902 = vpop.f32.mrb[0].mxu0
  %v903 = vadd.f32 0.0, %v902
  %v904 = vpop.f32.mrb[0].mxu0
  %v905 = vpop.f32.mrb[0].mxu0
  %v906 = vadd.f32 0.0, %v905
  %v907 = vpop.f32.mrb[0].mxu0
  %908 = vmatprep.mubr.bf16.mxu0 %v665
  %909 = vmatmul.mubr.bf16.gmra.mrb[0].mxu0 %v664
  %v910 = vpop.f32.mrb[0].mxu0
  %v911 = vadd.f32 0.0, %v910
  %v912 = vpop.f32.mrb[0].mxu0
  %v913 = vpop.f32.mrb[0].mxu0
  %v914 = vadd.f32 0.0, %v913
  %v915 = vpop.f32.mrb[0].mxu0
  %916 = vdwg.mxu0
  %917 = vmatprep.subr.bf16.mxu0 0
  %918 = vmatpush1.bf16.msra.mxu0 %v820
  %919 = vmatprep.subr.bf16.mxu0 0
  %920 = vmatpush1.bf16.msra.mxu0 %v821
  %921 = vmatprep.subr.bf16.mxu0 0
  %922 = vmatpush1.bf16.msra.mxu0 %v822
  %923 = vmatprep.subr.bf16.mxu0 0
  %924 = vmatpush1.bf16.msra.mxu0 %v823
  %925 = vmatprep.subr.bf16.mxu0 0
  %926 = vmatpush1.bf16.msra.mxu0 %v824
  %927 = vmatprep.subr.bf16.mxu0 0
  %928 = vmatpush1.bf16.msra.mxu0 %v825
  %929 = vmatprep.subr.bf16.mxu0 0
  %930 = vmatpush1.bf16.msra.mxu0 %v826
  %931 = vmatprep.subr.bf16.mxu0 0
  %932 = vmatpush1.bf16.msra.mxu0 %v827
  %933 = vmatprep.subr.bf16.mxu0 0
  %934 = vmatpush1.bf16.msra.mxu0 %v828
  %935 = vmatprep.subr.bf16.mxu0 0
  %936 = vmatpush1.bf16.msra.mxu0 %v829
  %937 = vmatprep.subr.bf16.mxu0 0
  %938 = vmatpush1.bf16.msra.mxu0 %v830
  %939 = vmatprep.subr.bf16.mxu0 0
  %940 = vmatpush1.bf16.msra.mxu0 %v831
  %941 = vmatprep.subr.bf16.mxu0 0
  %942 = vmatpush1.bf16.msra.mxu0 %v832
  %943 = vmatprep.subr.bf16.mxu0 0
  %944 = vmatpush1.bf16.msra.mxu0 %v833
  %945 = vmatprep.subr.bf16.mxu0 0
  %946 = vmatpush1.bf16.msra.mxu0 %v834
  %947 = vmatprep.subr.bf16.mxu0 0
  %948 = vmatpush1.bf16.msra.mxu0 %v835
  %949 = vmatprep.mubr.bf16.mxu0 %v663
  %950 = vmatmul.mubr.bf16.gmra.mrb[0].mxu0 %v662
  %v951 = vpop.f32.mrb[0].mxu0
  %v952 = vadd.f32 %v903, %v951
  %v953 = vpop.f32.mrb[0].mxu0
  %v954 = vpop.f32.mrb[0].mxu0
  %v955 = vadd.f32 %v906, %v954
  %v956 = vpop.f32.mrb[0].mxu0
  %957 = vmatprep.mubr.bf16.mxu0 %v667
  %958 = vmatmul.mubr.bf16.gmra.mrb[0].mxu0 %v666
  %v959 = vpop.f32.mrb[0].mxu0
  %v960 = vadd.f32 %v911, %v959
  %v961 = vpop.f32.mrb[0].mxu0
  %v962 = vpop.f32.mrb[0].mxu0
  %v963 = vadd.f32 %v914, %v962
  %v964 = vpop.f32.mrb[0].mxu0
  %965 = vdwg.mxu0
  %v974 = vunpack.c.l.b16 %v34
  %v975 = vunpack.c.h.b16 %v34
  %v976 = vunpack.c.l.b16 %v35
  %v977 = vunpack.c.h.b16 %v35
  %v978 = vunpack.c.l.b16 %v36
  %v979 = vunpack.c.h.b16 %v36
  %v980 = vunpack.c.l.b16 %v37
  %v981 = vunpack.c.h.b16 %v37
  %v982 = vunpack.c.l.b16 %v38
  %v983 = vunpack.c.h.b16 %v38
  %v984 = vunpack.c.l.b16 %v39
  %v985 = vunpack.c.h.b16 %v39
  %v986 = vunpack.c.l.b16 %v40
  %v987 = vunpack.c.h.b16 %v40
  %v988 = vunpack.c.l.b16 %v41
  %v989 = vunpack.c.h.b16 %v41
  %v990 = vpack.c.b16 %v978, %v974
  %v991 = vpack.c.b16 %v979, %v975
  %v992 = vpack.c.b16 %v980, %v976
  %v993 = vpack.c.b16 %v981, %v977
  %v994 = vpack.c.b16 %v986, %v982
  %v995 = vpack.c.b16 %v987, %v983
  %v996 = vpack.c.b16 %v988, %v984
  %v997 = vpack.c.b16 %v989, %v985
  %v1070 = vunpack.c.l.b16 %v178
  %v1071 = vunpack.c.l.b16 %v179
  %v1072 = vunpack.c.l.b16 %v180
  %v1073 = vunpack.c.l.b16 %v181
  %v1074 = vunpack.c.l.b16 %v182
  %v1075 = vunpack.c.l.b16 %v183
  %v1076 = vunpack.c.l.b16 %v184
  %v1077 = vunpack.c.l.b16 %v185
  %v1078 = vunpack.c.l.b16 %v186
  %v1079 = vunpack.c.l.b16 %v187
  %v1080 = vunpack.c.l.b16 %v188
  %v1081 = vunpack.c.l.b16 %v189
  %v1082 = vunpack.c.l.b16 %v190
  %v1083 = vunpack.c.l.b16 %v191
  %v1084 = vunpack.c.l.b16 %v192
  %v1085 = vunpack.c.l.b16 %v193
  %v1086 = vunpack.c.l.b16 %v194
  %v1087 = vunpack.c.l.b16 %v195
  %v1088 = vunpack.c.l.b16 %v196
  %v1089 = vunpack.c.l.b16 %v197
  %v1090 = vunpack.c.l.b16 %v198
  %v1091 = vunpack.c.l.b16 %v199
  %v1092 = vunpack.c.l.b16 %v200
  %v1093 = vunpack.c.l.b16 %v201
  %v1094 = vunpack.c.l.b16 %v202
  %v1095 = vunpack.c.l.b16 %v203
  %v1096 = vunpack.c.l.b16 %v204
  %v1097 = vunpack.c.l.b16 %v205
  %v1098 = vunpack.c.l.b16 %v206
  %v1099 = vunpack.c.l.b16 %v207
  %v1100 = vunpack.c.l.b16 %v208
  %v1101 = vunpack.c.l.b16 %v209
  %v1102 = vunpack.c.l.b16 %v210
  %v1103 = vunpack.c.l.b16 %v211
  %v1104 = vunpack.c.l.b16 %v212
  %v1105 = vunpack.c.l.b16 %v213
  %v1106 = vunpack.c.l.b16 %v214
  %v1107 = vunpack.c.l.b16 %v215
  %v1108 = vunpack.c.l.b16 %v216
  %v1109 = vunpack.c.l.b16 %v217
  %v1110 = vunpack.c.l.b16 %v218
  %v1111 = vunpack.c.l.b16 %v219
  %v1112 = vunpack.c.l.b16 %v220
  %v1113 = vunpack.c.l.b16 %v221
  %v1114 = vunpack.c.l.b16 %v222
  %v1115 = vunpack.c.l.b16 %v223
  %v1116 = vunpack.c.l.b16 %v224
  %v1117 = vunpack.c.l.b16 %v225
  %v1118 = vunpack.c.l.b16 %v226
  %v1119 = vunpack.c.l.b16 %v227
  %v1120 = vunpack.c.l.b16 %v228
  %v1121 = vunpack.c.l.b16 %v229
  %v1122 = vunpack.c.l.b16 %v230
  %v1123 = vunpack.c.l.b16 %v231
  %v1124 = vunpack.c.l.b16 %v232
  %v1125 = vunpack.c.l.b16 %v233
  %v1126 = vunpack.c.l.b16 %v234
  %v1127 = vunpack.c.l.b16 %v235
  %v1128 = vunpack.c.l.b16 %v236
  %v1129 = vunpack.c.l.b16 %v237
  %v1130 = vunpack.c.l.b16 %v238
  %v1131 = vunpack.c.l.b16 %v239
  %v1132 = vunpack.c.l.b16 %v240
  %v1133 = vunpack.c.l.b16 %v241
  %v1134 = vpack.c.b16 %v1071, %v1070
  %v1135 = vpack.c.b16 %v1073, %v1072
  %v1136 = vpack.c.b16 %v1075, %v1074
  %v1137 = vpack.c.b16 %v1077, %v1076
  %v1138 = vpack.c.b16 %v1079, %v1078
  %v1139 = vpack.c.b16 %v1081, %v1080
  %v1140 = vpack.c.b16 %v1083, %v1082
  %v1141 = vpack.c.b16 %v1085, %v1084
  %v1142 = vpack.c.b16 %v1087, %v1086
  %v1143 = vpack.c.b16 %v1089, %v1088
  %v1144 = vpack.c.b16 %v1091, %v1090
  %v1145 = vpack.c.b16 %v1093, %v1092
  %v1146 = vpack.c.b16 %v1095, %v1094
  %v1147 = vpack.c.b16 %v1097, %v1096
  %v1148 = vpack.c.b16 %v1099, %v1098
  %v1149 = vpack.c.b16 %v1101, %v1100
  %v1150 = vpack.c.b16 %v1103, %v1102
  %v1151 = vpack.c.b16 %v1105, %v1104
  %v1152 = vpack.c.b16 %v1107, %v1106
  %v1153 = vpack.c.b16 %v1109, %v1108
  %v1154 = vpack.c.b16 %v1111, %v1110
  %v1155 = vpack.c.b16 %v1113, %v1112
  %v1156 = vpack.c.b16 %v1115, %v1114
  %v1157 = vpack.c.b16 %v1117, %v1116
  %v1158 = vpack.c.b16 %v1119, %v1118
  %v1159 = vpack.c.b16 %v1121, %v1120
  %v1160 = vpack.c.b16 %v1123, %v1122
  %v1161 = vpack.c.b16 %v1125, %v1124
  %v1162 = vpack.c.b16 %v1127, %v1126
  %v1163 = vpack.c.b16 %v1129, %v1128
  %v1164 = vpack.c.b16 %v1131, %v1130
  %v1165 = vpack.c.b16 %v1133, %v1132
  %1198 = vmatprep.subr.bf16.mxu0 0
  %1199 = vmatpush1.bf16.msra.mxu0 %v1134
  %1200 = vmatprep.subr.bf16.mxu0 0
  %1201 = vmatpush1.bf16.msra.mxu0 %v1135
  %1202 = vmatprep.subr.bf16.mxu0 0
  %1203 = vmatpush1.bf16.msra.mxu0 %v1136
  %1204 = vmatprep.subr.bf16.mxu0 0
  %1205 = vmatpush1.bf16.msra.mxu0 %v1137
  %1206 = vmatprep.subr.bf16.mxu0 0
  %1207 = vmatpush1.bf16.msra.mxu0 %v1138
  %1208 = vmatprep.subr.bf16.mxu0 0
  %1209 = vmatpush1.bf16.msra.mxu0 %v1139
  %1210 = vmatprep.subr.bf16.mxu0 0
  %1211 = vmatpush1.bf16.msra.mxu0 %v1140
  %1212 = vmatprep.subr.bf16.mxu0 0
  %1213 = vmatpush1.bf16.msra.mxu0 %v1141
  %1214 = vmatprep.subr.bf16.mxu0 0
  %1215 = vmatpush1.bf16.msra.mxu0 %v1142
  %1216 = vmatprep.subr.bf16.mxu0 0
  %1217 = vmatpush1.bf16.msra.mxu0 %v1143
  %1218 = vmatprep.subr.bf16.mxu0 0
  %1219 = vmatpush1.bf16.msra.mxu0 %v1144
  %1220 = vmatprep.subr.bf16.mxu0 0
  %1221 = vmatpush1.bf16.msra.mxu0 %v1145
  %1222 = vmatprep.subr.bf16.mxu0 0
  %1223 = vmatpush1.bf16.msra.mxu0 %v1146
  %1224 = vmatprep.subr.bf16.mxu0 0
  %1225 = vmatpush1.bf16.msra.mxu0 %v1147
  %1226 = vmatprep.subr.bf16.mxu0 0
  %1227 = vmatpush1.bf16.msra.mxu0 %v1148
  %1228 = vmatprep.subr.bf16.mxu0 0
  %1229 = vmatpush1.bf16.msra.mxu0 %v1149
  %1230 = vmatprep.mubr.bf16.mxu0 %v991
  %1231 = vmatmul.mubr.bf16.gmra.mrb[0].mxu0 %v990
  %v1232 = vpop.f32.mrb[0].mxu0
  %v1233 = vadd.f32 0.0, %v1232
  %v1234 = vpop.f32.mrb[0].mxu0
  %v1235 = vpop.f32.mrb[0].mxu0
  %v1236 = vadd.f32 0.0, %v1235
  %v1237 = vpop.f32.mrb[0].mxu0
  %1238 = vmatprep.mubr.bf16.mxu0 %v995
  %1239 = vmatmul.mubr.bf16.gmra.mrb[0].mxu0 %v994
  %v1240 = vpop.f32.mrb[0].mxu0
  %v1241 = vadd.f32 0.0, %v1240
  %v1242 = vpop.f32.mrb[0].mxu0
  %v1243 = vpop.f32.mrb[0].mxu0
  %v1244 = vadd.f32 0.0, %v1243
  %v1245 = vpop.f32.mrb[0].mxu0
  %1246 = vdwg.mxu0
  %1247 = vmatprep.subr.bf16.mxu0 0
  %1248 = vmatpush1.bf16.msra.mxu0 %v1150
  %1249 = vmatprep.subr.bf16.mxu0 0
  %1250 = vmatpush1.bf16.msra.mxu0 %v1151
  %1251 = vmatprep.subr.bf16.mxu0 0
  %1252 = vmatpush1.bf16.msra.mxu0 %v1152
  %1253 = vmatprep.subr.bf16.mxu0 0
  %1254 = vmatpush1.bf16.msra.mxu0 %v1153
  %1255 = vmatprep.subr.bf16.mxu0 0
  %1256 = vmatpush1.bf16.msra.mxu0 %v1154
  %1257 = vmatprep.subr.bf16.mxu0 0
  %1258 = vmatpush1.bf16.msra.mxu0 %v1155
  %1259 = vmatprep.subr.bf16.mxu0 0
  %1260 = vmatpush1.bf16.msra.mxu0 %v1156
  %1261 = vmatprep.subr.bf16.mxu0 0
  %1262 = vmatpush1.bf16.msra.mxu0 %v1157
  %1263 = vmatprep.subr.bf16.mxu0 0
  %1264 = vmatpush1.bf16.msra.mxu0 %v1158
  %1265 = vmatprep.subr.bf16.mxu0 0
  %1266 = vmatpush1.bf16.msra.mxu0 %v1159
  %1267 = vmatprep.subr.bf16.mxu0 0
  %1268 = vmatpush1.bf16.msra.mxu0 %v1160
  %1269 = vmatprep.subr.bf16.mxu0 0
  %1270 = vmatpush1.bf16.msra.mxu0 %v1161
  %1271 = vmatprep.subr.bf16.mxu0 0
  %1272 = vmatpush1.bf16.msra.mxu0 %v1162
  %1273 = vmatprep.subr.bf16.mxu0 0
  %1274 = vmatpush1.bf16.msra.mxu0 %v1163
  %1275 = vmatprep.subr.bf16.mxu0 0
  %1276 = vmatpush1.bf16.msra.mxu0 %v1164
  %1277 = vmatprep.subr.bf16.mxu0 0
  %1278 = vmatpush1.bf16.msra.mxu0 %v1165
  %1279 = vmatprep.mubr.bf16.mxu0 %v993
  %1280 = vmatmul.mubr.bf16.gmra.mrb[0].mxu0 %v992
  %v1281 = vpop.f32.mrb[0].mxu0
  %v1282 = vadd.f32 %v1233, %v1281
  %v1283 = vpop.f32.mrb[0].mxu0
  %v1284 = vpop.f32.mrb[0].mxu0
  %v1285 = vadd.f32 %v1236, %v1284
  %v1286 = vpop.f32.mrb[0].mxu0
  %1287 = vmatprep.mubr.bf16.mxu0 %v997
  %1288 = vmatmul.mubr.bf16.gmra.mrb[0].mxu0 %v996
  %v1289 = vpop.f32.mrb[0].mxu0
  %v1290 = vadd.f32 %v1241, %v1289
  %v1291 = vpop.f32.mrb[0].mxu0
  %v1292 = vpop.f32.mrb[0].mxu0
  %v1293 = vadd.f32 %v1244, %v1292
  %v1294 = vpop.f32.mrb[0].mxu0
  %1295 = vdwg.mxu0
  %v1304 = vunpack.c.l.b16 %v42
  %v1305 = vunpack.c.h.b16 %v42
  %v1306 = vunpack.c.l.b16 %v43
  %v1307 = vunpack.c.h.b16 %v43
  %v1308 = vunpack.c.l.b16 %v44
  %v1309 = vunpack.c.h.b16 %v44
  %v1310 = vunpack.c.l.b16 %v45
  %v1311 = vunpack.c.h.b16 %v45
  %v1312 = vunpack.c.l.b16 %v46
  %v1313 = vunpack.c.h.b16 %v46
  %v1314 = vunpack.c.l.b16 %v47
  %v1315 = vunpack.c.h.b16 %v47
  %v1316 = vunpack.c.l.b16 %v48
  %v1317 = vunpack.c.h.b16 %v48
  %v1318 = vunpack.c.l.b16 %v49
  %v1319 = vunpack.c.h.b16 %v49
  %v1320 = vpack.c.b16 %v1308, %v1304
  %v1321 = vpack.c.b16 %v1309, %v1305
  %v1322 = vpack.c.b16 %v1310, %v1306
  %v1323 = vpack.c.b16 %v1311, %v1307
  %v1324 = vpack.c.b16 %v1316, %v1312
  %v1325 = vpack.c.b16 %v1317, %v1313
  %v1326 = vpack.c.b16 %v1318, %v1314
  %v1327 = vpack.c.b16 %v1319, %v1315
  %v1400 = vunpack.c.l.b16 %v242
  %v1401 = vunpack.c.l.b16 %v243
  %v1402 = vunpack.c.l.b16 %v244
  %v1403 = vunpack.c.l.b16 %v245
  %v1404 = vunpack.c.l.b16 %v246
  %v1405 = vunpack.c.l.b16 %v247
  %v1406 = vunpack.c.l.b16 %v248
  %v1407 = vunpack.c.l.b16 %v249
  %v1408 = vunpack.c.l.b16 %v250
  %v1409 = vunpack.c.l.b16 %v251
  %v1410 = vunpack.c.l.b16 %v252
  %v1411 = vunpack.c.l.b16 %v253
  %v1412 = vunpack.c.l.b16 %v254
  %v1413 = vunpack.c.l.b16 %v255
  %v1414 = vunpack.c.l.b16 %v256
  %v1415 = vunpack.c.l.b16 %v257
  %v1416 = vunpack.c.l.b16 %v258
  %v1417 = vunpack.c.l.b16 %v259
  %v1418 = vunpack.c.l.b16 %v260
  %v1419 = vunpack.c.l.b16 %v261
  %v1420 = vunpack.c.l.b16 %v262
  %v1421 = vunpack.c.l.b16 %v263
  %v1422 = vunpack.c.l.b16 %v264
  %v1423 = vunpack.c.l.b16 %v265
  %v1424 = vunpack.c.l.b16 %v266
  %v1425 = vunpack.c.l.b16 %v267
  %v1426 = vunpack.c.l.b16 %v268
  %v1427 = vunpack.c.l.b16 %v269
  %v1428 = vunpack.c.l.b16 %v270
  %v1429 = vunpack.c.l.b16 %v271
  %v1430 = vunpack.c.l.b16 %v272
  %v1431 = vunpack.c.l.b16 %v273
  %v1432 = vunpack.c.l.b16 %v274
  %v1433 = vunpack.c.l.b16 %v275
  %v1434 = vunpack.c.l.b16 %v276
  %v1435 = vunpack.c.l.b16 %v277
  %v1436 = vunpack.c.l.b16 %v278
  %v1437 = vunpack.c.l.b16 %v279
  %v1438 = vunpack.c.l.b16 %v280
  %v1439 = vunpack.c.l.b16 %v281
  %v1440 = vunpack.c.l.b16 %v282
  %v1441 = vunpack.c.l.b16 %v283
  %v1442 = vunpack.c.l.b16 %v284
  %v1443 = vunpack.c.l.b16 %v285
  %v1444 = vunpack.c.l.b16 %v286
  %v1445 = vunpack.c.l.b16 %v287
  %v1446 = vunpack.c.l.b16 %v288
  %v1447 = vunpack.c.l.b16 %v289
  %v1448 = vunpack.c.l.b16 %v290
  %v1449 = vunpack.c.l.b16 %v291
  %v1450 = vunpack.c.l.b16 %v292
  %v1451 = vunpack.c.l.b16 %v293
  %v1452 = vunpack.c.l.b16 %v294
  %v1453 = vunpack.c.l.b16 %v295
  %v1454 = vunpack.c.l.b16 %v296
  %v1455 = vunpack.c.l.b16 %v297
  %v1456 = vunpack.c.l.b16 %v298
  %v1457 = vunpack.c.l.b16 %v299
  %v1458 = vunpack.c.l.b16 %v300
  %v1459 = vunpack.c.l.b16 %v301
  %v1460 = vunpack.c.l.b16 %v302
  %v1461 = vunpack.c.l.b16 %v303
  %v1462 = vunpack.c.l.b16 %v304
  %v1463 = vunpack.c.l.b16 %v305
  %v1464 = vpack.c.b16 %v1401, %v1400
  %v1465 = vpack.c.b16 %v1403, %v1402
  %v1466 = vpack.c.b16 %v1405, %v1404
  %v1467 = vpack.c.b16 %v1407, %v1406
  %v1468 = vpack.c.b16 %v1409, %v1408
  %v1469 = vpack.c.b16 %v1411, %v1410
  %v1470 = vpack.c.b16 %v1413, %v1412
  %v1471 = vpack.c.b16 %v1415, %v1414
  %v1472 = vpack.c.b16 %v1417, %v1416
  %v1473 = vpack.c.b16 %v1419, %v1418
  %v1474 = vpack.c.b16 %v1421, %v1420
  %v1475 = vpack.c.b16 %v1423, %v1422
  %v1476 = vpack.c.b16 %v1425, %v1424
  %v1477 = vpack.c.b16 %v1427, %v1426
  %v1478 = vpack.c.b16 %v1429, %v1428
  %v1479 = vpack.c.b16 %v1431, %v1430
  %v1480 = vpack.c.b16 %v1433, %v1432
  %v1481 = vpack.c.b16 %v1435, %v1434
  %v1482 = vpack.c.b16 %v1437, %v1436
  %v1483 = vpack.c.b16 %v1439, %v1438
  %v1484 = vpack.c.b16 %v1441, %v1440
  %v1485 = vpack.c.b16 %v1443, %v1442
  %v1486 = vpack.c.b16 %v1445, %v1444
  %v1487 = vpack.c.b16 %v1447, %v1446
  %v1488 = vpack.c.b16 %v1449, %v1448
  %v1489 = vpack.c.b16 %v1451, %v1450
  %v1490 = vpack.c.b16 %v1453, %v1452
  %v1491 = vpack.c.b16 %v1455, %v1454
  %v1492 = vpack.c.b16 %v1457, %v1456
  %v1493 = vpack.c.b16 %v1459, %v1458
  %v1494 = vpack.c.b16 %v1461, %v1460
  %v1495 = vpack.c.b16 %v1463, %v1462
  %1528 = vmatprep.subr.bf16.mxu0 0
  %1529 = vmatpush1.bf16.msra.mxu0 %v1464
  %1530 = vmatprep.subr.bf16.mxu0 0
  %1531 = vmatpush1.bf16.msra.mxu0 %v1465
  %1532 = vmatprep.subr.bf16.mxu0 0
  %1533 = vmatpush1.bf16.msra.mxu0 %v1466
  %1534 = vmatprep.subr.bf16.mxu0 0
  %1535 = vmatpush1.bf16.msra.mxu0 %v1467
  %1536 = vmatprep.subr.bf16.mxu0 0
  %1537 = vmatpush1.bf16.msra.mxu0 %v1468
  %1538 = vmatprep.subr.bf16.mxu0 0
  %1539 = vmatpush1.bf16.msra.mxu0 %v1469
  %1540 = vmatprep.subr.bf16.mxu0 0
  %1541 = vmatpush1.bf16.msra.mxu0 %v1470
  %1542 = vmatprep.subr.bf16.mxu0 0
  %1543 = vmatpush1.bf16.msra.mxu0 %v1471
  %1544 = vmatprep.subr.bf16.mxu0 0
  %1545 = vmatpush1.bf16.msra.mxu0 %v1472
  %1546 = vmatprep.subr.bf16.mxu0 0
  %1547 = vmatpush1.bf16.msra.mxu0 %v1473
  %1548 = vmatprep.subr.bf16.mxu0 0
  %1549 = vmatpush1.bf16.msra.mxu0 %v1474
  %1550 = vmatprep.subr.bf16.mxu0 0
  %1551 = vmatpush1.bf16.msra.mxu0 %v1475
  %1552 = vmatprep.subr.bf16.mxu0 0
  %1553 = vmatpush1.bf16.msra.mxu0 %v1476
  %1554 = vmatprep.subr.bf16.mxu0 0
  %1555 = vmatpush1.bf16.msra.mxu0 %v1477
  %1556 = vmatprep.subr.bf16.mxu0 0
  %1557 = vmatpush1.bf16.msra.mxu0 %v1478
  %1558 = vmatprep.subr.bf16.mxu0 0
  %1559 = vmatpush1.bf16.msra.mxu0 %v1479
  %1560 = vmatprep.mubr.bf16.mxu0 %v1321
  %1561 = vmatmul.mubr.bf16.gmra.mrb[0].mxu0 %v1320
  %v1562 = vpop.f32.mrb[0].mxu0
  %v1563 = vadd.f32 0.0, %v1562
  %v1564 = vpop.f32.mrb[0].mxu0
  %v1565 = vpop.f32.mrb[0].mxu0
  %v1566 = vadd.f32 0.0, %v1565
  %v1567 = vpop.f32.mrb[0].mxu0
  %1568 = vmatprep.mubr.bf16.mxu0 %v1325
  %1569 = vmatmul.mubr.bf16.gmra.mrb[0].mxu0 %v1324
  %v1570 = vpop.f32.mrb[0].mxu0
  %v1571 = vadd.f32 0.0, %v1570
  %v1572 = vpop.f32.mrb[0].mxu0
  %v1573 = vpop.f32.mrb[0].mxu0
  %v1574 = vadd.f32 0.0, %v1573
  %v1575 = vpop.f32.mrb[0].mxu0
  %1576 = vdwg.mxu0
  %1577 = vmatprep.subr.bf16.mxu0 0
  %1578 = vmatpush1.bf16.msra.mxu0 %v1480
  %1579 = vmatprep.subr.bf16.mxu0 0
  %1580 = vmatpush1.bf16.msra.mxu0 %v1481
  %1581 = vmatprep.subr.bf16.mxu0 0
  %1582 = vmatpush1.bf16.msra.mxu0 %v1482
  %1583 = vmatprep.subr.bf16.mxu0 0
  %1584 = vmatpush1.bf16.msra.mxu0 %v1483
  %1585 = vmatprep.subr.bf16.mxu0 0
  %1586 = vmatpush1.bf16.msra.mxu0 %v1484
  %1587 = vmatprep.subr.bf16.mxu0 0
  %1588 = vmatpush1.bf16.msra.mxu0 %v1485
  %1589 = vmatprep.subr.bf16.mxu0 0
  %1590 = vmatpush1.bf16.msra.mxu0 %v1486
  %1591 = vmatprep.subr.bf16.mxu0 0
  %1592 = vmatpush1.bf16.msra.mxu0 %v1487
  %1593 = vmatprep.subr.bf16.mxu0 0
  %1594 = vmatpush1.bf16.msra.mxu0 %v1488
  %1595 = vmatprep.subr.bf16.mxu0 0
  %1596 = vmatpush1.bf16.msra.mxu0 %v1489
  %1597 = vmatprep.subr.bf16.mxu0 0
  %1598 = vmatpush1.bf16.msra.mxu0 %v1490
  %1599 = vmatprep.subr.bf16.mxu0 0
  %1600 = vmatpush1.bf16.msra.mxu0 %v1491
  %1601 = vmatprep.subr.bf16.mxu0 0
  %1602 = vmatpush1.bf16.msra.mxu0 %v1492
  %1603 = vmatprep.subr.bf16.mxu0 0
  %1604 = vmatpush1.bf16.msra.mxu0 %v1493
  %1605 = vmatprep.subr.bf16.mxu0 0
  %1606 = vmatpush1.bf16.msra.mxu0 %v1494
  %1607 = vmatprep.subr.bf16.mxu0 0
  %1608 = vmatpush1.bf16.msra.mxu0 %v1495
  %1609 = vmatprep.mubr.bf16.mxu0 %v1323
  %1610 = vmatmul.mubr.bf16.gmra.mrb[0].mxu0 %v1322
  %v1611 = vpop.f32.mrb[0].mxu0
  %v1612 = vadd.f32 %v1563, %v1611
  %v1613 = vpop.f32.mrb[0].mxu0
  %v1614 = vpop.f32.mrb[0].mxu0
  %v1615 = vadd.f32 %v1566, %v1614
  %v1616 = vpop.f32.mrb[0].mxu0
  %1617 = vmatprep.mubr.bf16.mxu0 %v1327
  %1618 = vmatmul.mubr.bf16.gmra.mrb[0].mxu0 %v1326
  %v1619 = vpop.f32.mrb[0].mxu0
  %v1620 = vadd.f32 %v1571, %v1619
  %v1621 = vpop.f32.mrb[0].mxu0
  %v1622 = vpop.f32.mrb[0].mxu0
  %v1623 = vadd.f32 %v1574, %v1622
  %v1624 = vpop.f32.mrb[0].mxu0
  %1625 = vdwg.mxu0
  %vm1626 = vcmask 523264
  %v1627 = vsel %vm1626, %v622, 0.0
  %v1628 = vsel %vm1626, %v625, 0.0
  %v1629 = vadd.f32 %v1627, %v1628
  %v1630 = vsel %vm1626, %v630, 0.0
  %v1631 = vadd.f32 %v1629, %v1630
  %v1632 = vsel %vm1626, %v633, 0.0
  %v1633 = vadd.f32 %v1631, %v1632
  %v1634 = vrot.slane %v1633, 4
  %v1635 = vadd.f32 %v1633, %v1634
  %v1636 = vrot.slane %v1635, 2
  %v1637 = vadd.f32 %v1635, %v1636
  %v1638 = vrot.slane %v1637, 1
  %v1639 = vadd.f32 %v1637, %v1638
  %v1640 = vsel %vm1626, %v952, 0.0
  %v1641 = vsel %vm1626, %v955, 0.0
  %v1642 = vadd.f32 %v1640, %v1641
  %v1643 = vsel %vm1626, %v960, 0.0
  %v1644 = vadd.f32 %v1642, %v1643
  %v1645 = vsel %vm1626, %v963, 0.0
  %v1646 = vadd.f32 %v1644, %v1645
  %v1647 = vrot.slane %v1646, 4
  %v1648 = vadd.f32 %v1646, %v1647
  %v1649 = vrot.slane %v1648, 2
  %v1650 = vadd.f32 %v1648, %v1649
  %v1651 = vrot.slane %v1650, 1
  %v1652 = vadd.f32 %v1650, %v1651
  %v1653 = vsel %vm1626, %v1282, 0.0
  %v1654 = vsel %vm1626, %v1285, 0.0
  %v1655 = vadd.f32 %v1653, %v1654
  %v1656 = vsel %vm1626, %v1290, 0.0
  %v1657 = vadd.f32 %v1655, %v1656
  %v1658 = vsel %vm1626, %v1293, 0.0
  %v1659 = vadd.f32 %v1657, %v1658
  %v1660 = vrot.slane %v1659, 4
  %v1661 = vadd.f32 %v1659, %v1660
  %v1662 = vrot.slane %v1661, 2
  %v1663 = vadd.f32 %v1661, %v1662
  %v1664 = vrot.slane %v1663, 1
  %v1665 = vadd.f32 %v1663, %v1664
  %v1666 = vsel %vm1626, %v1612, 0.0
  %v1667 = vsel %vm1626, %v1615, 0.0
  %v1668 = vadd.f32 %v1666, %v1667
  %v1669 = vsel %vm1626, %v1620, 0.0
  %v1670 = vadd.f32 %v1668, %v1669
  %v1671 = vsel %vm1626, %v1623, 0.0
  %v1672 = vadd.f32 %v1670, %v1671
  %v1673 = vrot.slane %v1672, 4
  %v1674 = vadd.f32 %v1672, %v1673
  %v1675 = vrot.slane %v1674, 2
  %v1676 = vadd.f32 %v1674, %v1675
  %v1677 = vrot.slane %v1676, 1
  %v1678 = vadd.f32 %v1676, %v1677
  %v1679 = vrcp.pop 32.0
  %v1680 = vmul.f32 %v1639, %v1679
  %v1681 = vmul.f32 %v1652, %v1679
  %v1682 = vmul.f32 %v1665, %v1679
  %v1683 = vmul.f32 %v1678, %v1679
  %v1684 = vsel %vm1626, %v1680, 0.0
  %v1685 = vsel %vm1626, %v1681, 0.0
  %v1686 = vadd.f32 %v1684, %v1685
  %v1687 = vsel %vm1626, %v1682, 0.0
  %v1688 = vadd.f32 %v1686, %v1687
  %v1689 = vsel %vm1626, %v1683, 0.0
  %v1690 = vadd.f32 %v1688, %v1689
  %v1691 = vrcp.pop 4.0
  %v1692 = vmul.f32 %v1690, %v1691
  %v1693 = vsub.f32 %v622, %v1692
  %v1694 = vsub.f32 %v625, %v1692
  %v1695 = vsub.f32 %v630, %v1692
  %v1696 = vsub.f32 %v633, %v1692
  %v1697 = vsub.f32 %v952, %v1692
  %v1698 = vsub.f32 %v955, %v1692
  %v1699 = vsub.f32 %v960, %v1692
  %v1700 = vsub.f32 %v963, %v1692
  %v1701 = vsub.f32 %v1282, %v1692
  %v1702 = vsub.f32 %v1285, %v1692
  %v1703 = vsub.f32 %v1290, %v1692
  %v1704 = vsub.f32 %v1293, %v1692
  %v1705 = vsub.f32 %v1612, %v1692
  %v1706 = vsub.f32 %v1615, %v1692
  %v1707 = vsub.f32 %v1620, %v1692
  %v1708 = vsub.f32 %v1623, %v1692
  %v1709 = vmul.f32 %v1693, %v1693
  %v1710 = vmul.f32 %v1694, %v1694
  %v1711 = vmul.f32 %v1695, %v1695
  %v1712 = vmul.f32 %v1696, %v1696
  %v1713 = vmul.f32 %v1697, %v1697
  %v1714 = vmul.f32 %v1698, %v1698
  %v1715 = vmul.f32 %v1699, %v1699
  %v1716 = vmul.f32 %v1700, %v1700
  %v1717 = vmul.f32 %v1701, %v1701
  %v1718 = vmul.f32 %v1702, %v1702
  %v1719 = vmul.f32 %v1703, %v1703
  %v1720 = vmul.f32 %v1704, %v1704
  %v1721 = vmul.f32 %v1705, %v1705
  %v1722 = vmul.f32 %v1706, %v1706
  %v1723 = vmul.f32 %v1707, %v1707
  %v1724 = vmul.f32 %v1708, %v1708
  %v1725 = vsel %vm1626, %v1709, 0.0
  %v1726 = vsel %vm1626, %v1710, 0.0
  %v1727 = vadd.f32 %v1725, %v1726
  %v1728 = vsel %vm1626, %v1711, 0.0
  %v1729 = vadd.f32 %v1727, %v1728
  %v1730 = vsel %vm1626, %v1712, 0.0
  %v1731 = vadd.f32 %v1729, %v1730
  %v1732 = vrot.slane %v1731, 4
  %v1733 = vadd.f32 %v1731, %v1732
  %v1734 = vrot.slane %v1733, 2
  %v1735 = vadd.f32 %v1733, %v1734
  %v1736 = vrot.slane %v1735, 1
  %v1737 = vadd.f32 %v1735, %v1736
  %v1738 = vsel %vm1626, %v1713, 0.0
  %v1739 = vsel %vm1626, %v1714, 0.0
  %v1740 = vadd.f32 %v1738, %v1739
  %v1741 = vsel %vm1626, %v1715, 0.0
  %v1742 = vadd.f32 %v1740, %v1741
  %v1743 = vsel %vm1626, %v1716, 0.0
  %v1744 = vadd.f32 %v1742, %v1743
  %v1745 = vrot.slane %v1744, 4
  %v1746 = vadd.f32 %v1744, %v1745
  %v1747 = vrot.slane %v1746, 2
  %v1748 = vadd.f32 %v1746, %v1747
  %v1749 = vrot.slane %v1748, 1
  %v1750 = vadd.f32 %v1748, %v1749
  %v1751 = vsel %vm1626, %v1717, 0.0
  %v1752 = vsel %vm1626, %v1718, 0.0
  %v1753 = vadd.f32 %v1751, %v1752
  %v1754 = vsel %vm1626, %v1719, 0.0
  %v1755 = vadd.f32 %v1753, %v1754
  %v1756 = vsel %vm1626, %v1720, 0.0
  %v1757 = vadd.f32 %v1755, %v1756
  %v1758 = vrot.slane %v1757, 4
  %v1759 = vadd.f32 %v1757, %v1758
  %v1760 = vrot.slane %v1759, 2
  %v1761 = vadd.f32 %v1759, %v1760
  %v1762 = vrot.slane %v1761, 1
  %v1763 = vadd.f32 %v1761, %v1762
  %v1764 = vsel %vm1626, %v1721, 0.0
  %v1765 = vsel %vm1626, %v1722, 0.0
  %v1766 = vadd.f32 %v1764, %v1765
  %v1767 = vsel %vm1626, %v1723, 0.0
  %v1768 = vadd.f32 %v1766, %v1767
  %v1769 = vsel %vm1626, %v1724, 0.0
  %v1770 = vadd.f32 %v1768, %v1769
  %v1771 = vrot.slane %v1770, 4
  %v1772 = vadd.f32 %v1770, %v1771
  %v1773 = vrot.slane %v1772, 2
  %v1774 = vadd.f32 %v1772, %v1773
  %v1775 = vrot.slane %v1774, 1
  %v1776 = vadd.f32 %v1774, %v1775
  %v1777 = vmul.f32 %v1737, %v1679
  %v1778 = vmul.f32 %v1750, %v1679
  %v1779 = vmul.f32 %v1763, %v1679
  %v1780 = vmul.f32 %v1776, %v1679
  %v1781 = vsel %vm1626, %v1777, 0.0
  %v1782 = vsel %vm1626, %v1778, 0.0
  %v1783 = vadd.f32 %v1781, %v1782
  %v1784 = vsel %vm1626, %v1779, 0.0
  %v1785 = vadd.f32 %v1783, %v1784
  %v1786 = vsel %vm1626, %v1780, 0.0
  %v1787 = vadd.f32 %v1785, %v1786
  %v1788 = vmul.f32 %v1787, %v1691
  %v1789 = vld [vmem:[%s2] sm:$0x1]
  %v1790 = vadd.f32 %v1788, 1e-05
  %v1791 = vrsqrt.pop %v1790
  %v1792 = vmul.f32 %v1789, %v1791
  %v1794 = vlaneseq
  %v1795 = vshrl.u32 %v1794, 7
  %v1796 = vsub.s32 0, %v1795
  %v1797 = vrot.slane %v1792, %v1796
  %v1799 = vmul.f32 %v1693, %v1797
  %v1800 = vmul.f32 %v1694, %v1797
  %v1801 = vmul.f32 %v1695, %v1797
  %v1802 = vmul.f32 %v1696, %v1797
  %v1803 = vmul.f32 %v1697, %v1797
  %v1804 = vmul.f32 %v1698, %v1797
  %v1805 = vmul.f32 %v1699, %v1797
  %v1806 = vmul.f32 %v1700, %v1797
  %v1807 = vmul.f32 %v1701, %v1797
  %v1808 = vmul.f32 %v1702, %v1797
  %v1809 = vmul.f32 %v1703, %v1797
  %v1810 = vmul.f32 %v1704, %v1797
  %v1811 = vmul.f32 %v1705, %v1797
  %v1812 = vmul.f32 %v1706, %v1797
  %v1813 = vmul.f32 %v1707, %v1797
  %v1814 = vmul.f32 %v1708, %v1797
  %v1815 = vld [vmem:[%s3] sm:$0x1]
  %v1817 = vlaneseq
  %v1818 = vshrl.u32 %v1817, 7
  %v1819 = vsub.s32 0, %v1818
  %v1820 = vrot.slane %v1815, %v1819
  %v1822 = vadd.f32 %v1799, %v1820
  %v1823 = vadd.f32 %v1800, %v1820
  %v1824 = vadd.f32 %v1801, %v1820
  %v1825 = vadd.f32 %v1802, %v1820
  %v1826 = vadd.f32 %v1803, %v1820
  %v1827 = vadd.f32 %v1804, %v1820
  %v1828 = vadd.f32 %v1805, %v1820
  %v1829 = vadd.f32 %v1806, %v1820
  %v1830 = vadd.f32 %v1807, %v1820
  %v1831 = vadd.f32 %v1808, %v1820
  %v1832 = vadd.f32 %v1809, %v1820
  %v1833 = vadd.f32 %v1810, %v1820
  %v1834 = vadd.f32 %v1811, %v1820
  %v1835 = vadd.f32 %v1812, %v1820
  %v1836 = vadd.f32 %v1813, %v1820
  %v1837 = vadd.f32 %v1814, %v1820
  %v1838 = vmax.f32 %v1822, 0.0
  %v1839 = vmax.f32 %v1823, 0.0
  %v1840 = vmax.f32 %v1824, 0.0
  %v1841 = vmax.f32 %v1825, 0.0
  %v1842 = vmax.f32 %v1826, 0.0
  %v1843 = vmax.f32 %v1827, 0.0
  %v1844 = vmax.f32 %v1828, 0.0
  %v1845 = vmax.f32 %v1829, 0.0
  %v1846 = vmax.f32 %v1830, 0.0
  %v1847 = vmax.f32 %v1831, 0.0
  %v1848 = vmax.f32 %v1832, 0.0
  %v1849 = vmax.f32 %v1833, 0.0
  %v1850 = vmax.f32 %v1834, 0.0
  %v1851 = vmax.f32 %v1835, 0.0
  %v1852 = vmax.f32 %v1836, 0.0
  %v1853 = vmax.f32 %v1837, 0.0
  %1854 = vst.msk [vmem:[%s4] sm:$0xff] %vm1626, %v1838
  %1855 = vst.msk [vmem:[%s4 + $0x8] sm:$0xff] %vm1626, %v1839
  %1856 = vst.msk [vmem:[%s4 + $0x10] sm:$0xff] %vm1626, %v1840
  %1857 = vst.msk [vmem:[%s4 + $0x18] sm:$0xff] %vm1626, %v1841
  %1858 = vst.msk [vmem:[%s4 + $0x20] sm:$0xff] %vm1626, %v1842
  %1859 = vst.msk [vmem:[%s4 + $0x28] sm:$0xff] %vm1626, %v1843
  %1860 = vst.msk [vmem:[%s4 + $0x30] sm:$0xff] %vm1626, %v1844
  %1861 = vst.msk [vmem:[%s4 + $0x38] sm:$0xff] %vm1626, %v1845
  %1862 = vst.msk [vmem:[%s4 + $0x40] sm:$0xff] %vm1626, %v1846
  %1863 = vst.msk [vmem:[%s4 + $0x48] sm:$0xff] %vm1626, %v1847
  %1864 = vst.msk [vmem:[%s4 + $0x50] sm:$0xff] %vm1626, %v1848
  %1865 = vst.msk [vmem:[%s4 + $0x58] sm:$0xff] %vm1626, %v1849
  %1866 = vst.msk [vmem:[%s4 + $0x60] sm:$0xff] %vm1626, %v1850
  %1867 = vst.msk [vmem:[%s4 + $0x68] sm:$0xff] %vm1626, %v1851
  %1868 = vst.msk [vmem:[%s4 + $0x70] sm:$0xff] %vm1626, %v1852
  %1869 = vst.msk [vmem:[%s4 + $0x78] sm:$0xff] %vm1626, %v1853
  // Predicated region
  $region18: #{vae_forward.15} parent=0 // pred_check
    _
  $region19: #{vae_forward.15} parent=0 // pred_check_branch
    %1871 = sbr.rel (0) target = $region21
  $region20: #{vae_forward.15} parent=0 // pred_region
    _
  $region21: #{vae_forward.15} parent=0 // pred_fallthru
    _
  // Predicated region
  $region22: #{vae_forward.15} parent=0 // pred_check
    _
  $region23: #{vae_forward.15} parent=0 // pred_check_branch
    %1873 = sbr.rel (0) target = $region25
  $region24: #{vae_forward.15} parent=0 // pred_region
    _
  $region25: #{vae_forward.15} parent=0 // pred_fallthru
    _

// kernel: vae_forward.16
$region0: #{vae_forward.16}
  #allocation0 [shape = 'u32[]', space=smem, size = 0x4, offset = 0x4, fixed_abs, tag = 'smem constant byte address 0x4 - core index']
  #allocation1 [shape = 'u32[144,128]{1,0:T(1,128)}', space=vmem, size = 0x12000, scoped, tag = 'internal scratch']
  %s0 = inlined_call_operand.vmem [shape: bf16[4,128,256], index: 0, kind: input, shape index: {}]
  %s1 = inlined_call_operand.vmem [shape: bf16[4,256,32], index: 1, kind: input, shape index: {}]
  %s2 = inlined_call_operand.vmem [shape: f32[1,1,32], index: 2, kind: input, shape index: {}]
  %s3 = inlined_call_operand.vmem [shape: f32[1,1,32], index: 3, kind: input, shape index: {}]
  %s4 = inlined_call_operand.vmem [shape: f32[4,128,32], index: 4, kind: output, shape index: {}]
  %s5 = sld [smem:[#allocation0]]
  $region26: #{vae_forward.16} parent=0
    _
  %s7 = ssub.s32 1, %s5
  %s8 = scalar_select 0, %s7, %s5
  // Predicated region
  $region2: #{vae_forward.16} parent=0 // pred_check
    _
  $region3: #{vae_forward.16} parent=0 // pred_check_branch
    %10 = sbr.rel (0) target = $region5
  $region4: #{vae_forward.16} parent=0 // pred_region
    _
  $region5: #{vae_forward.16} parent=0 // pred_fallthru
    _
  // Predicated region
  $region6: #{vae_forward.16} parent=0 // pred_check
    _
  $region7: #{vae_forward.16} parent=0 // pred_check_branch
    %12 = sbr.rel (0) target = $region9
  $region8: #{vae_forward.16} parent=0 // pred_region
    _
  $region9: #{vae_forward.16} parent=0 // pred_fallthru
    _
  // Predicated region
  $region10: #{vae_forward.16} parent=0 // pred_check
    _
  $region11: #{vae_forward.16} parent=0 // pred_check_branch
    %14 = sbr.rel (0) target = $region13
  $region12: #{vae_forward.16} parent=0 // pred_region
    _
  $region13: #{vae_forward.16} parent=0 // pred_fallthru
    _
  // Predicated region
  $region14: #{vae_forward.16} parent=0 // pred_check
    _
  $region15: #{vae_forward.16} parent=0 // pred_check_branch
    %16 = sbr.rel (0) target = $region17
  $region16: #{vae_forward.16} parent=0 // pred_region
    _
  $region17: #{vae_forward.16} parent=0 // pred_fallthru
    _
  %v18 = vld [vmem:[%s0] sm:$0xff]
  %v19 = vld [vmem:[%s0 + $0x8] sm:$0xff]
  %v20 = vld [vmem:[%s0 + $0x10] sm:$0xff]
  %v21 = vld [vmem:[%s0 + $0x18] sm:$0xff]
  %v22 = vld [vmem:[%s0 + $0x20] sm:$0xff]
  %v23 = vld [vmem:[%s0 + $0x28] sm:$0xff]
  %v24 = vld [vmem:[%s0 + $0x30] sm:$0xff]
  %v25 = vld [vmem:[%s0 + $0x38] sm:$0xff]
  %v26 = vld [vmem:[%s0 + $0x40] sm:$0xff]
  %v27 = vld [vmem:[%s0 + $0x48] sm:$0xff]
  %v28 = vld [vmem:[%s0 + $0x50] sm:$0xff]
  %v29 = vld [vmem:[%s0 + $0x58] sm:$0xff]
  %v30 = vld [vmem:[%s0 + $0x60] sm:$0xff]
  %v31 = vld [vmem:[%s0 + $0x68] sm:$0xff]
  %v32 = vld [vmem:[%s0 + $0x70] sm:$0xff]
  %v33 = vld [vmem:[%s0 + $0x78] sm:$0xff]
  %v34 = vld [vmem:[%s0 + $0x80] sm:$0xff]
  %v35 = vld [vmem:[%s0 + $0x88] sm:$0xff]
  %v36 = vld [vmem:[%s0 + $0x90] sm:$0xff]
  %v37 = vld [vmem:[%s0 + $0x98] sm:$0xff]
  %v38 = vld [vmem:[%s0 + $0xa0] sm:$0xff]
  %v39 = vld [vmem:[%s0 + $0xa8] sm:$0xff]
  %v40 = vld [vmem:[%s0 + $0xb0] sm:$0xff]
  %v41 = vld [vmem:[%s0 + $0xb8] sm:$0xff]
  %v42 = vld [vmem:[%s0 + $0xc0] sm:$0xff]
  %v43 = vld [vmem:[%s0 + $0xc8] sm:$0xff]
  %v44 = vld [vmem:[%s0 + $0xd0] sm:$0xff]
  %v45 = vld [vmem:[%s0 + $0xd8] sm:$0xff]
  %v46 = vld [vmem:[%s0 + $0xe0] sm:$0xff]
  %v47 = vld [vmem:[%s0 + $0xe8] sm:$0xff]
  %v48 = vld [vmem:[%s0 + $0xf0] sm:$0xff]
  %v49 = vld [vmem:[%s0 + $0xf8] sm:$0xff]
  %v50 = vld [vmem:[%s0 + $0x100] sm:$0xff]
  %v51 = vld [vmem:[%s0 + $0x108] sm:$0xff]
  %v52 = vld [vmem:[%s0 + $0x110] sm:$0xff]
  %v53 = vld [vmem:[%s0 + $0x118] sm:$0xff]
  %v54 = vld [vmem:[%s0 + $0x120] sm:$0xff]
  %v55 = vld [vmem:[%s0 + $0x128] sm:$0xff]
  %v56 = vld [vmem:[%s0 + $0x130] sm:$0xff]
  %v57 = vld [vmem:[%s0 + $0x138] sm:$0xff]
  %v58 = vld [vmem:[%s0 + $0x140] sm:$0xff]
  %v59 = vld [vmem:[%s0 + $0x148] sm:$0xff]
  %v60 = vld [vmem:[%s0 + $0x150] sm:$0xff]
  %v61 = vld [vmem:[%s0 + $0x158] sm:$0xff]
  %v62 = vld [vmem:[%s0 + $0x160] sm:$0xff]
  %v63 = vld [vmem:[%s0 + $0x168] sm:$0xff]
  %v64 = vld [vmem:[%s0 + $0x170] sm:$0xff]
  %v65 = vld [vmem:[%s0 + $0x178] sm:$0xff]
  %v66 = vld [vmem:[%s0 + $0x180] sm:$0xff]
  %v67 = vld [vmem:[%s0 + $0x188] sm:$0xff]
  %v68 = vld [vmem:[%s0 + $0x190] sm:$0xff]
  %v69 = vld [vmem:[%s0 + $0x198] sm:$0xff]
  %v70 = vld [vmem:[%s0 + $0x1a0] sm:$0xff]
  %v71 = vld [vmem:[%s0 + $0x1a8] sm:$0xff]
  %v72 = vld [vmem:[%s0 + $0x1b0] sm:$0xff]
  %v73 = vld [vmem:[%s0 + $0x1b8] sm:$0xff]
  %v74 = vld [vmem:[%s0 + $0x1c0] sm:$0xff]
  %v75 = vld [vmem:[%s0 + $0x1c8] sm:$0xff]
  %v76 = vld [vmem:[%s0 + $0x1d0] sm:$0xff]
  %v77 = vld [vmem:[%s0 + $0x1d8] sm:$0xff]
  %v78 = vld [vmem:[%s0 + $0x1e0] sm:$0xff]
  %v79 = vld [vmem:[%s0 + $0x1e8] sm:$0xff]
  %v80 = vld [vmem:[%s0 + $0x1f0] sm:$0xff]
  %v81 = vld [vmem:[%s0 + $0x1f8] sm:$0xff]
  %v82 = vld [vmem:[%s1] sm:$0xf]
  %v83 = vld [vmem:[%s1 + $0x4] sm:$0xf]
  %v84 = vld [vmem:[%s1 + $0x8] sm:$0xf]
  %v85 = vld [vmem:[%s1 + $0xc] sm:$0xf]
  %v86 = vld [vmem:[%s1 + $0x10] sm:$0xf]
  %v87 = vld [vmem:[%s1 + $0x14] sm:$0xf]
  %v88 = vld [vmem:[%s1 + $0x18] sm:$0xf]
  %v89 = vld [vmem:[%s1 + $0x1c] sm:$0xf]
  %v90 = vld [vmem:[%s1 + $0x20] sm:$0xf]
  %v91 = vld [vmem:[%s1 + $0x24] sm:$0xf]
  %v92 = vld [vmem:[%s1 + $0x28] sm:$0xf]
  %v93 = vld [vmem:[%s1 + $0x2c] sm:$0xf]
  %v94 = vld [vmem:[%s1 + $0x30] sm:$0xf]
  %v95 = vld [vmem:[%s1 + $0x34] sm:$0xf]
  %v96 = vld [vmem:[%s1 + $0x38] sm:$0xf]
  %v97 = vld [vmem:[%s1 + $0x3c] sm:$0xf]
  %v98 = vld [vmem:[%s1 + $0x40] sm:$0xf]
  %v99 = vld [vmem:[%s1 + $0x44] sm:$0xf]
  %v100 = vld [vmem:[%s1 + $0x48] sm:$0xf]
  %v101 = vld [vmem:[%s1 + $0x4c] sm:$0xf]
  %v102 = vld [vmem:[%s1 + $0x50] sm:$0xf]
  %v103 = vld [vmem:[%s1 + $0x54] sm:$0xf]
  %v104 = vld [vmem:[%s1 + $0x58] sm:$0xf]
  %v105 = vld [vmem:[%s1 + $0x5c] sm:$0xf]
  %v106 = vld [vmem:[%s1 + $0x60] sm:$0xf]
  %v107 = vld [vmem:[%s1 + $0x64] sm:$0xf]
  %v108 = vld [vmem:[%s1 + $0x68] sm:$0xf]
  %v109 = vld [vmem:[%s1 + $0x6c] sm:$0xf]
  %v110 = vld [vmem:[%s1 + $0x70] sm:$0xf]
  %v111 = vld [vmem:[%s1 + $0x74] sm:$0xf]
  %v112 = vld [vmem:[%s1 + $0x78] sm:$0xf]
  %v113 = vld [vmem:[%s1 + $0x7c] sm:$0xf]
  %v114 = vld [vmem:[%s1 + $0x80] sm:$0xf]
  %v115 = vld [vmem:[%s1 + $0x84] sm:$0xf]
  %v116 = vld [vmem:[%s1 + $0x88] sm:$0xf]
  %v117 = vld [vmem:[%s1 + $0x8c] sm:$0xf]
  %v118 = vld [vmem:[%s1 + $0x90] sm:$0xf]
  %v119 = vld [vmem:[%s1 + $0x94] sm:$0xf]
  %v120 = vld [vmem:[%s1 + $0x98] sm:$0xf]
  %v121 = vld [vmem:[%s1 + $0x9c] sm:$0xf]
  %v122 = vld [vmem:[%s1 + $0xa0] sm:$0xf]
  %v123 = vld [vmem:[%s1 + $0xa4] sm:$0xf]
  %v124 = vld [vmem:[%s1 + $0xa8] sm:$0xf]
  %v125 = vld [vmem:[%s1 + $0xac] sm:$0xf]
  %v126 = vld [vmem:[%s1 + $0xb0] sm:$0xf]
  %v127 = vld [vmem:[%s1 + $0xb4] sm:$0xf]
  %v128 = vld [vmem:[%s1 + $0xb8] sm:$0xf]
  %v129 = vld [vmem:[%s1 + $0xbc] sm:$0xf]
  %v130 = vld [vmem:[%s1 + $0xc0] sm:$0xf]
  %v131 = vld [vmem:[%s1 + $0xc4] sm:$0xf]
  %v132 = vld [vmem:[%s1 + $0xc8] sm:$0xf]
  %v133 = vld [vmem:[%s1 + $0xcc] sm:$0xf]
  %v134 = vld [vmem:[%s1 + $0xd0] sm:$0xf]
  %v135 = vld [vmem:[%s1 + $0xd4] sm:$0xf]
  %v136 = vld [vmem:[%s1 + $0xd8] sm:$0xf]
  %v137 = vld [vmem:[%s1 + $0xdc] sm:$0xf]
  %v138 = vld [vmem:[%s1 + $0xe0] sm:$0xf]
  %v139 = vld [vmem:[%s1 + $0xe4] sm:$0xf]
  %v140 = vld [vmem:[%s1 + $0xe8] sm:$0xf]
  %v141 = vld [vmem:[%s1 + $0xec] sm:$0xf]
  %v142 = vld [vmem:[%s1 + $0xf0] sm:$0xf]
  %v143 = vld [vmem:[%s1 + $0xf4] sm:$0xf]
  %v144 = vld [vmem:[%s1 + $0xf8] sm:$0xf]
  %v145 = vld [vmem:[%s1 + $0xfc] sm:$0xf]
  %v146 = vld [vmem:[%s1 + $0x100] sm:$0xf]
  %v147 = vld [vmem:[%s1 + $0x104] sm:$0xf]
  %v148 = vld [vmem:[%s1 + $0x108] sm:$0xf]
  %v149 = vld [vmem:[%s1 + $0x10c] sm:$0xf]
  %v150 = vld [vmem:[%s1 + $0x110] sm:$0xf]
  %v151 = vld [vmem:[%s1 + $0x114] sm:$0xf]
  %v152 = vld [vmem:[%s1 + $0x118] sm:$0xf]
  %v153 = vld [vmem:[%s1 + $0x11c] sm:$0xf]
  %v154 = vld [vmem:[%s1 + $0x120] sm:$0xf]
  %v155 = vld [vmem:[%s1 + $0x124] sm:$0xf]
  %v156 = vld [vmem:[%s1 + $0x128] sm:$0xf]
  %v157 = vld [vmem:[%s1 + $0x12c] sm:$0xf]
  %v158 = vld [vmem:[%s1 + $0x130] sm:$0xf]
  %v159 = vld [vmem:[%s1 + $0x134] sm:$0xf]
  %v160 = vld [vmem:[%s1 + $0x138] sm:$0xf]
  %v161 = vld [vmem:[%s1 + $0x13c] sm:$0xf]
  %v162 = vld [vmem:[%s1 + $0x140] sm:$0xf]
  %v163 = vld [vmem:[%s1 + $0x144] sm:$0xf]
  %v164 = vld [vmem:[%s1 + $0x148] sm:$0xf]
  %v165 = vld [vmem:[%s1 + $0x14c] sm:$0xf]
  %v166 = vld [vmem:[%s1 + $0x150] sm:$0xf]
  %v167 = vld [vmem:[%s1 + $0x154] sm:$0xf]
  %v168 = vld [vmem:[%s1 + $0x158] sm:$0xf]
  %v169 = vld [vmem:[%s1 + $0x15c] sm:$0xf]
  %v170 = vld [vmem:[%s1 + $0x160] sm:$0xf]
  %v171 = vld [vmem:[%s1 + $0x164] sm:$0xf]
  %v172 = vld [vmem:[%s1 + $0x168] sm:$0xf]
  %v173 = vld [vmem:[%s1 + $0x16c] sm:$0xf]
  %v174 = vld [vmem:[%s1 + $0x170] sm:$0xf]
  %v175 = vld [vmem:[%s1 + $0x174] sm:$0xf]
  %v176 = vld [vmem:[%s1 + $0x178] sm:$0xf]
  %v177 = vld [vmem:[%s1 + $0x17c] sm:$0xf]
  %v178 = vld [vmem:[%s1 + $0x180] sm:$0xf]
  %v179 = vld [vmem:[%s1 + $0x184] sm:$0xf]
  %v180 = vld [vmem:[%s1 + $0x188] sm:$0xf]
  %v181 = vld [vmem:[%s1 + $0x18c] sm:$0xf]
  %v182 = vld [vmem:[%s1 + $0x190] sm:$0xf]
  %v183 = vld [vmem:[%s1 + $0x194] sm:$0xf]
  %v184 = vld [vmem:[%s1 + $0x198] sm:$0xf]
  %v185 = vld [vmem:[%s1 + $0x19c] sm:$0xf]
  %v186 = vld [vmem:[%s1 + $0x1a0] sm:$0xf]
  %v187 = vld [vmem:[%s1 + $0x1a4] sm:$0xf]
  %v188 = vld [vmem:[%s1 + $0x1a8] sm:$0xf]
  %v189 = vld [vmem:[%s1 + $0x1ac] sm:$0xf]
  %v190 = vld [vmem:[%s1 + $0x1b0] sm:$0xf]
  %v191 = vld [vmem:[%s1 + $0x1b4] sm:$0xf]
  %v192 = vld [vmem:[%s1 + $0x1b8] sm:$0xf]
  %v193 = vld [vmem:[%s1 + $0x1bc] sm:$0xf]
  %v194 = vld [vmem:[%s1 + $0x1c0] sm:$0xf]
  %v195 = vld [vmem:[%s1 + $0x1c4] sm:$0xf]
  %v196 = vld [vmem:[%s1 + $0x1c8] sm:$0xf]
  %v197 = vld [vmem:[%s1 + $0x1cc] sm:$0xf]
  %v198 = vld [vmem:[%s1 + $0x1d0] sm:$0xf]
  %v199 = vld [vmem:[%s1 + $0x1d4] sm:$0xf]
  %v200 = vld [vmem:[%s1 + $0x1d8] sm:$0xf]
  %v201 = vld [vmem:[%s1 + $0x1dc] sm:$0xf]
  %v202 = vld [vmem:[%s1 + $0x1e0] sm:$0xf]
  %v203 = vld [vmem:[%s1 + $0x1e4] sm:$0xf]
  %v204 = vld [vmem:[%s1 + $0x1e8] sm:$0xf]
  %v205 = vld [vmem:[%s1 + $0x1ec] sm:$0xf]
  %v206 = vld [vmem:[%s1 + $0x1f0] sm:$0xf]
  %v207 = vld [vmem:[%s1 + $0x1f4] sm:$0xf]
  %v208 = vld [vmem:[%s1 + $0x1f8] sm:$0xf]
  %v209 = vld [vmem:[%s1 + $0x1fc] sm:$0xf]
  %v226 = vunpack.c.l.b16 %v18
  %v227 = vunpack.c.h.b16 %v18
  %v228 = vunpack.c.l.b16 %v19
  %v229 = vunpack.c.h.b16 %v19
  %v230 = vunpack.c.l.b16 %v20
  %v231 = vunpack.c.h.b16 %v20
  %v232 = vunpack.c.l.b16 %v21
  %v233 = vunpack.c.h.b16 %v21
  %v234 = vunpack.c.l.b16 %v22
  %v235 = vunpack.c.h.b16 %v22
  %v236 = vunpack.c.l.b16 %v23
  %v237 = vunpack.c.h.b16 %v23
  %v238 = vunpack.c.l.b16 %v24
  %v239 = vunpack.c.h.b16 %v24
  %v240 = vunpack.c.l.b16 %v25
  %v241 = vunpack.c.h.b16 %v25
  %v242 = vunpack.c.l.b16 %v26
  %v243 = vunpack.c.h.b16 %v26
  %v244 = vunpack.c.l.b16 %v27
  %v245 = vunpack.c.h.b16 %v27
  %v246 = vunpack.c.l.b16 %v28
  %v247 = vunpack.c.h.b16 %v28
  %v248 = vunpack.c.l.b16 %v29
  %v249 = vunpack.c.h.b16 %v29
  %v250 = vunpack.c.l.b16 %v30
  %v251 = vunpack.c.h.b16 %v30
  %v252 = vunpack.c.l.b16 %v31
  %v253 = vunpack.c.h.b16 %v31
  %v254 = vunpack.c.l.b16 %v32
  %v255 = vunpack.c.h.b16 %v32
  %v256 = vunpack.c.l.b16 %v33
  %v257 = vunpack.c.h.b16 %v33
  %v258 = vpack.c.b16 %v228, %v226
  %v259 = vpack.c.b16 %v229, %v227
  %v260 = vpack.c.b16 %v232, %v230
  %v261 = vpack.c.b16 %v233, %v231
  %v262 = vpack.c.b16 %v236, %v234
  %v263 = vpack.c.b16 %v237, %v235
  %v264 = vpack.c.b16 %v240, %v238
  %v265 = vpack.c.b16 %v241, %v239
  %v266 = vpack.c.b16 %v244, %v242
  %v267 = vpack.c.b16 %v245, %v243
  %v268 = vpack.c.b16 %v248, %v246
  %v269 = vpack.c.b16 %v249, %v247
  %v270 = vpack.c.b16 %v252, %v250
  %v271 = vpack.c.b16 %v253, %v251
  %v272 = vpack.c.b16 %v256, %v254
  %v273 = vpack.c.b16 %v257, %v255
  %v322 = vunpack.c.l.b16 %v82
  %v323 = vunpack.c.l.b16 %v83
  %v324 = vunpack.c.l.b16 %v84
  %v325 = vunpack.c.l.b16 %v85
  %v326 = vunpack.c.l.b16 %v86
  %v327 = vunpack.c.l.b16 %v87
  %v328 = vunpack.c.l.b16 %v88
  %v329 = vunpack.c.l.b16 %v89
  %v330 = vunpack.c.l.b16 %v90
  %v331 = vunpack.c.l.b16 %v91
  %v332 = vunpack.c.l.b16 %v92
  %v333 = vunpack.c.l.b16 %v93
  %v334 = vunpack.c.l.b16 %v94
  %v335 = vunpack.c.l.b16 %v95
  %v336 = vunpack.c.l.b16 %v96
  %v337 = vunpack.c.l.b16 %v97
  %v338 = vunpack.c.l.b16 %v98
  %v339 = vunpack.c.l.b16 %v99
  %v340 = vunpack.c.l.b16 %v100
  %v341 = vunpack.c.l.b16 %v101
  %v342 = vunpack.c.l.b16 %v102
  %v343 = vunpack.c.l.b16 %v103
  %v344 = vunpack.c.l.b16 %v104
  %v345 = vunpack.c.l.b16 %v105
  %v346 = vunpack.c.l.b16 %v106
  %v347 = vunpack.c.l.b16 %v107
  %v348 = vunpack.c.l.b16 %v108
  %v349 = vunpack.c.l.b16 %v109
  %v350 = vunpack.c.l.b16 %v110
  %v351 = vunpack.c.l.b16 %v111
  %v352 = vunpack.c.l.b16 %v112
  %v353 = vunpack.c.l.b16 %v113
  %v354 = vpack.c.b16 %v323, %v322
  %v355 = vpack.c.b16 %v325, %v324
  %v356 = vpack.c.b16 %v327, %v326
  %v357 = vpack.c.b16 %v329, %v328
  %v358 = vpack.c.b16 %v331, %v330
  %v359 = vpack.c.b16 %v333, %v332
  %v360 = vpack.c.b16 %v335, %v334
  %v361 = vpack.c.b16 %v337, %v336
  %v362 = vpack.c.b16 %v339, %v338
  %v363 = vpack.c.b16 %v341, %v340
  %v364 = vpack.c.b16 %v343, %v342
  %v365 = vpack.c.b16 %v345, %v344
  %v366 = vpack.c.b16 %v347, %v346
  %v367 = vpack.c.b16 %v349, %v348
  %v368 = vpack.c.b16 %v351, %v350
  %v369 = vpack.c.b16 %v353, %v352
  %386 = vmatprep.subr.bf16.mxu0 0
  %387 = vmatpush1.bf16.msra.mxu0 %v354
  %388 = vmatprep.subr.bf16.mxu0 0
  %389 = vmatpush1.bf16.msra.mxu0 %v355
  %390 = vmatprep.subr.bf16.mxu0 0
  %391 = vmatpush1.bf16.msra.mxu0 %v356
  %392 = vmatprep.subr.bf16.mxu0 0
  %393 = vmatpush1.bf16.msra.mxu0 %v357
  %394 = vmatprep.subr.bf16.mxu0 0
  %395 = vmatpush1.bf16.msra.mxu0 %v358
  %396 = vmatprep.subr.bf16.mxu0 0
  %397 = vmatpush1.bf16.msra.mxu0 %v359
  %398 = vmatprep.subr.bf16.mxu0 0
  %399 = vmatpush1.bf16.msra.mxu0 %v360
  %400 = vmatprep.subr.bf16.mxu0 0
  %401 = vmatpush1.bf16.msra.mxu0 %v361
  %402 = vmatprep.subr.bf16.mxu0 0
  %403 = vmatpush1.bf16.msra.mxu0 %v362
  %404 = vmatprep.subr.bf16.mxu0 0
  %405 = vmatpush1.bf16.msra.mxu0 %v363
  %406 = vmatprep.subr.bf16.mxu0 0
  %407 = vmatpush1.bf16.msra.mxu0 %v364
  %408 = vmatprep.subr.bf16.mxu0 0
  %409 = vmatpush1.bf16.msra.mxu0 %v365
  %410 = vmatprep.subr.bf16.mxu0 0
  %411 = vmatpush1.bf16.msra.mxu0 %v366
  %412 = vmatprep.subr.bf16.mxu0 0
  %413 = vmatpush1.bf16.msra.mxu0 %v367
  %414 = vmatprep.subr.bf16.mxu0 0
  %415 = vmatpush1.bf16.msra.mxu0 %v368
  %416 = vmatprep.subr.bf16.mxu0 0
  %417 = vmatpush1.bf16.msra.mxu0 %v369
  %418 = vmatprep.mubr.bf16.mxu0 %v259
  %419 = vmatmul.mubr.bf16.gmra.mrb[0].mxu0 %v258
  %v420 = vpop.f32.mrb[0].mxu0
  %v421 = vadd.f32 0.0, %v420
  %v422 = vpop.f32.mrb[0].mxu0
  %v423 = vpop.f32.mrb[0].mxu0
  %v424 = vadd.f32 0.0, %v423
  %v425 = vpop.f32.mrb[0].mxu0
  %426 = vmatprep.mubr.bf16.mxu0 %v261
  %427 = vmatmul.mubr.bf16.gmra.mrb[0].mxu0 %v260
  %v428 = vpop.f32.mrb[0].mxu0
  %v429 = vadd.f32 0.0, %v428
  %v430 = vpop.f32.mrb[0].mxu0
  %v431 = vpop.f32.mrb[0].mxu0
  %v432 = vadd.f32 0.0, %v431
  %v433 = vpop.f32.mrb[0].mxu0
  %434 = vmatprep.mubr.bf16.mxu0 %v263
  %435 = vmatmul.mubr.bf16.gmra.mrb[0].mxu0 %v262
  %v436 = vpop.f32.mrb[0].mxu0
  %v437 = vadd.f32 0.0, %v436
  %v438 = vpop.f32.mrb[0].mxu0
  %v439 = vpop.f32.mrb[0].mxu0
  %v440 = vadd.f32 0.0, %v439
  %v441 = vpop.f32.mrb[0].mxu0
  %442 = vmatprep.mubr.bf16.mxu0 %v265
  %443 = vmatmul.mubr.bf16.gmra.mrb[0].mxu0 %v264
  %v444 = vpop.f32.mrb[0].mxu0
  %v445 = vadd.f32 0.0, %v444
  %v446 = vpop.f32.mrb[0].mxu0
  %v447 = vpop.f32.mrb[0].mxu0
  %v448 = vadd.f32 0.0, %v447
  %v449 = vpop.f32.mrb[0].mxu0
  %450 = vmatprep.mubr.bf16.mxu0 %v267
  %451 = vmatmul.mubr.bf16.gmra.mrb[0].mxu0 %v266
  %v452 = vpop.f32.mrb[0].mxu0
  %v453 = vadd.f32 0.0, %v452
  %v454 = vpop.f32.mrb[0].mxu0
  %v455 = vpop.f32.mrb[0].mxu0
  %v456 = vadd.f32 0.0, %v455
  %v457 = vpop.f32.mrb[0].mxu0
  %458 = vmatprep.mubr.bf16.mxu0 %v269
  %459 = vmatmul.mubr.bf16.gmra.mrb[0].mxu0 %v268
  %v460 = vpop.f32.mrb[0].mxu0
  %v461 = vadd.f32 0.0, %v460
  %v462 = vpop.f32.mrb[0].mxu0
  %v463 = vpop.f32.mrb[0].mxu0
  %v464 = vadd.f32 0.0, %v463
  %v465 = vpop.f32.mrb[0].mxu0
  %466 = vmatprep.mubr.bf16.mxu0 %v271
  %467 = vmatmul.mubr.bf16.gmra.mrb[0].mxu0 %v270
  %v468 = vpop.f32.mrb[0].mxu0
  %v469 = vadd.f32 0.0, %v468
  %v470 = vpop.f32.mrb[0].mxu0
  %v471 = vpop.f32.mrb[0].mxu0
  %v472 = vadd.f32 0.0, %v471
  %v473 = vpop.f32.mrb[0].mxu0
  %474 = vmatprep.mubr.bf16.mxu0 %v273
  %475 = vmatmul.mubr.bf16.gmra.mrb[0].mxu0 %v272
  %v476 = vpop.f32.mrb[0].mxu0
  %v477 = vadd.f32 0.0, %v476
  %v478 = vpop.f32.mrb[0].mxu0
  %v479 = vpop.f32.mrb[0].mxu0
  %v480 = vadd.f32 0.0, %v479
  %v481 = vpop.f32.mrb[0].mxu0
  %482 = vdwg.mxu0
  %v499 = vunpack.c.l.b16 %v34
  %v500 = vunpack.c.h.b16 %v34
  %v501 = vunpack.c.l.b16 %v35
  %v502 = vunpack.c.h.b16 %v35
  %v503 = vunpack.c.l.b16 %v36
  %v504 = vunpack.c.h.b16 %v36
  %v505 = vunpack.c.l.b16 %v37
  %v506 = vunpack.c.h.b16 %v37
  %v507 = vunpack.c.l.b16 %v38
  %v508 = vunpack.c.h.b16 %v38
  %v509 = vunpack.c.l.b16 %v39
  %v510 = vunpack.c.h.b16 %v39
  %v511 = vunpack.c.l.b16 %v40
  %v512 = vunpack.c.h.b16 %v40
  %v513 = vunpack.c.l.b16 %v41
  %v514 = vunpack.c.h.b16 %v41
  %v515 = vunpack.c.l.b16 %v42
  %v516 = vunpack.c.h.b16 %v42
  %v517 = vunpack.c.l.b16 %v43
  %v518 = vunpack.c.h.b16 %v43
  %v519 = vunpack.c.l.b16 %v44
  %v520 = vunpack.c.h.b16 %v44
  %v521 = vunpack.c.l.b16 %v45
  %v522 = vunpack.c.h.b16 %v45
  %v523 = vunpack.c.l.b16 %v46
  %v524 = vunpack.c.h.b16 %v46
  %v525 = vunpack.c.l.b16 %v47
  %v526 = vunpack.c.h.b16 %v47
  %v527 = vunpack.c.l.b16 %v48
  %v528 = vunpack.c.h.b16 %v48
  %v529 = vunpack.c.l.b16 %v49
  %v530 = vunpack.c.h.b16 %v49
  %v531 = vpack.c.b16 %v501, %v499
  %v532 = vpack.c.b16 %v502, %v500
  %v533 = vpack.c.b16 %v505, %v503
  %v534 = vpack.c.b16 %v506, %v504
  %v535 = vpack.c.b16 %v509, %v507
  %v536 = vpack.c.b16 %v510, %v508
  %v537 = vpack.c.b16 %v513, %v511
  %v538 = vpack.c.b16 %v514, %v512
  %v539 = vpack.c.b16 %v517, %v515
  %v540 = vpack.c.b16 %v518, %v516
  %v541 = vpack.c.b16 %v521, %v519
  %v542 = vpack.c.b16 %v522, %v520
  %v543 = vpack.c.b16 %v525, %v523
  %v544 = vpack.c.b16 %v526, %v524
  %v545 = vpack.c.b16 %v529, %v527
  %v546 = vpack.c.b16 %v530, %v528
  %v595 = vunpack.c.l.b16 %v114
  %v596 = vunpack.c.l.b16 %v115
  %v597 = vunpack.c.l.b16 %v116
  %v598 = vunpack.c.l.b16 %v117
  %v599 = vunpack.c.l.b16 %v118
  %v600 = vunpack.c.l.b16 %v119
  %v601 = vunpack.c.l.b16 %v120
  %v602 = vunpack.c.l.b16 %v121
  %v603 = vunpack.c.l.b16 %v122
  %v604 = vunpack.c.l.b16 %v123
  %v605 = vunpack.c.l.b16 %v124
  %v606 = vunpack.c.l.b16 %v125
  %v607 = vunpack.c.l.b16 %v126
  %v608 = vunpack.c.l.b16 %v127
  %v609 = vunpack.c.l.b16 %v128
  %v610 = vunpack.c.l.b16 %v129
  %v611 = vunpack.c.l.b16 %v130
  %v612 = vunpack.c.l.b16 %v131
  %v613 = vunpack.c.l.b16 %v132
  %v614 = vunpack.c.l.b16 %v133
  %v615 = vunpack.c.l.b16 %v134
  %v616 = vunpack.c.l.b16 %v135
  %v617 = vunpack.c.l.b16 %v136
  %v618 = vunpack.c.l.b16 %v137
  %v619 = vunpack.c.l.b16 %v138
  %v620 = vunpack.c.l.b16 %v139
  %v621 = vunpack.c.l.b16 %v140
  %v622 = vunpack.c.l.b16 %v141
  %v623 = vunpack.c.l.b16 %v142
  %v624 = vunpack.c.l.b16 %v143
  %v625 = vunpack.c.l.b16 %v144
  %v626 = vunpack.c.l.b16 %v145
  %v627 = vpack.c.b16 %v596, %v595
  %v628 = vpack.c.b16 %v598, %v597
  %v629 = vpack.c.b16 %v600, %v599
  %v630 = vpack.c.b16 %v602, %v601
  %v631 = vpack.c.b16 %v604, %v603
  %v632 = vpack.c.b16 %v606, %v605
  %v633 = vpack.c.b16 %v608, %v607
  %v634 = vpack.c.b16 %v610, %v609
  %v635 = vpack.c.b16 %v612, %v611
  %v636 = vpack.c.b16 %v614, %v613
  %v637 = vpack.c.b16 %v616, %v615
  %v638 = vpack.c.b16 %v618, %v617
  %v639 = vpack.c.b16 %v620, %v619
  %v640 = vpack.c.b16 %v622, %v621
  %v641 = vpack.c.b16 %v624, %v623
  %v642 = vpack.c.b16 %v626, %v625
  %659 = vmatprep.subr.bf16.mxu0 0
  %660 = vmatpush1.bf16.msra.mxu0 %v627
  %661 = vmatprep.subr.bf16.mxu0 0
  %662 = vmatpush1.bf16.msra.mxu0 %v628
  %663 = vmatprep.subr.bf16.mxu0 0
  %664 = vmatpush1.bf16.msra.mxu0 %v629
  %665 = vmatprep.subr.bf16.mxu0 0
  %666 = vmatpush1.bf16.msra.mxu0 %v630
  %667 = vmatprep.subr.bf16.mxu0 0
  %668 = vmatpush1.bf16.msra.mxu0 %v631
  %669 = vmatprep.subr.bf16.mxu0 0
  %670 = vmatpush1.bf16.msra.mxu0 %v632
  %671 = vmatprep.subr.bf16.mxu0 0
  %672 = vmatpush1.bf16.msra.mxu0 %v633
  %673 = vmatprep.subr.bf16.mxu0 0
  %674 = vmatpush1.bf16.msra.mxu0 %v634
  %675 = vmatprep.subr.bf16.mxu0 0
  %676 = vmatpush1.bf16.msra.mxu0 %v635
  %677 = vmatprep.subr.bf16.mxu0 0
  %678 = vmatpush1.bf16.msra.mxu0 %v636
  %679 = vmatprep.subr.bf16.mxu0 0
  %680 = vmatpush1.bf16.msra.mxu0 %v637
  %681 = vmatprep.subr.bf16.mxu0 0
  %682 = vmatpush1.bf16.msra.mxu0 %v638
  %683 = vmatprep.subr.bf16.mxu0 0
  %684 = vmatpush1.bf16.msra.mxu0 %v639
  %685 = vmatprep.subr.bf16.mxu0 0
  %686 = vmatpush1.bf16.msra.mxu0 %v640
  %687 = vmatprep.subr.bf16.mxu0 0
  %688 = vmatpush1.bf16.msra.mxu0 %v641
  %689 = vmatprep.subr.bf16.mxu0 0
  %690 = vmatpush1.bf16.msra.mxu0 %v642
  %691 = vmatprep.mubr.bf16.mxu0 %v532
  %692 = vmatmul.mubr.bf16.gmra.mrb[0].mxu0 %v531
  %v693 = vpop.f32.mrb[0].mxu0
  %v694 = vadd.f32 0.0, %v693
  %v695 = vpop.f32.mrb[0].mxu0
  %v696 = vpop.f32.mrb[0].mxu0
  %v697 = vadd.f32 0.0, %v696
  %v698 = vpop.f32.mrb[0].mxu0
  %699 = vmatprep.mubr.bf16.mxu0 %v534
  %700 = vmatmul.mubr.bf16.gmra.mrb[0].mxu0 %v533
  %v701 = vpop.f32.mrb[0].mxu0
  %v702 = vadd.f32 0.0, %v701
  %v703 = vpop.f32.mrb[0].mxu0
  %v704 = vpop.f32.mrb[0].mxu0
  %v705 = vadd.f32 0.0, %v704
  %v706 = vpop.f32.mrb[0].mxu0
  %707 = vmatprep.mubr.bf16.mxu0 %v536
  %708 = vmatmul.mubr.bf16.gmra.mrb[0].mxu0 %v535
  %v709 = vpop.f32.mrb[0].mxu0
  %v710 = vadd.f32 0.0, %v709
  %v711 = vpop.f32.mrb[0].mxu0
  %v712 = vpop.f32.mrb[0].mxu0
  %v713 = vadd.f32 0.0, %v712
  %v714 = vpop.f32.mrb[0].mxu0
  %715 = vmatprep.mubr.bf16.mxu0 %v538
  %716 = vmatmul.mubr.bf16.gmra.mrb[0].mxu0 %v537
  %v717 = vpop.f32.mrb[0].mxu0
  %v718 = vadd.f32 0.0, %v717
  %v719 = vpop.f32.mrb[0].mxu0
  %v720 = vpop.f32.mrb[0].mxu0
  %v721 = vadd.f32 0.0, %v720
  %v722 = vpop.f32.mrb[0].mxu0
  %723 = vmatprep.mubr.bf16.mxu0 %v540
  %724 = vmatmul.mubr.bf16.gmra.mrb[0].mxu0 %v539
  %v725 = vpop.f32.mrb[0].mxu0
  %v726 = vadd.f32 0.0, %v725
  %v727 = vpop.f32.mrb[0].mxu0
  %v728 = vpop.f32.mrb[0].mxu0
  %v729 = vadd.f32 0.0, %v728
  %v730 = vpop.f32.mrb[0].mxu0
  %731 = vmatprep.mubr.bf16.mxu0 %v542
  %732 = vmatmul.mubr.bf16.gmra.mrb[0].mxu0 %v541
  %v733 = vpop.f32.mrb[0].mxu0
  %v734 = vadd.f32 0.0, %v733
  %v735 = vpop.f32.mrb[0].mxu0
  %v736 = vpop.f32.mrb[0].mxu0
  %v737 = vadd.f32 0.0, %v736
  %v738 = vpop.f32.mrb[0].mxu0
  %739 = vmatprep.mubr.bf16.mxu0 %v544
  %740 = vmatmul.mubr.bf16.gmra.mrb[0].mxu0 %v543
  %v741 = vpop.f32.mrb[0].mxu0
  %v742 = vadd.f32 0.0, %v741
  %v743 = vpop.f32.mrb[0].mxu0
  %v744 = vpop.f32.mrb[0].mxu0
  %v745 = vadd.f32 0.0, %v744
  %v746 = vpop.f32.mrb[0].mxu0
  %747 = vmatprep.mubr.bf16.mxu0 %v546
  %748 = vmatmul.mubr.bf16.gmra.mrb[0].mxu0 %v545
  %v749 = vpop.f32.mrb[0].mxu0
  %v750 = vadd.f32 0.0, %v749
  %v751 = vpop.f32.mrb[0].mxu0
  %v752 = vpop.f32.mrb[0].mxu0
  %v753 = vadd.f32 0.0, %v752
  %v754 = vpop.f32.mrb[0].mxu0
  %755 = vdwg.mxu0
  %v772 = vunpack.c.l.b16 %v50
  %v773 = vunpack.c.h.b16 %v50
  %v774 = vunpack.c.l.b16 %v51
  %v775 = vunpack.c.h.b16 %v51
  %v776 = vunpack.c.l.b16 %v52
  %v777 = vunpack.c.h.b16 %v52
  %v778 = vunpack.c.l.b16 %v53
  %v779 = vunpack.c.h.b16 %v53
  %v780 = vunpack.c.l.b16 %v54
  %v781 = vunpack.c.h.b16 %v54
  %v782 = vunpack.c.l.b16 %v55
  %v783 = vunpack.c.h.b16 %v55
  %v784 = vunpack.c.l.b16 %v56
  %v785 = vunpack.c.h.b16 %v56
  %v786 = vunpack.c.l.b16 %v57
  %v787 = vunpack.c.h.b16 %v57
  %v788 = vunpack.c.l.b16 %v58
  %v789 = vunpack.c.h.b16 %v58
  %v790 = vunpack.c.l.b16 %v59
  %v791 = vunpack.c.h.b16 %v59
  %v792 = vunpack.c.l.b16 %v60
  %v793 = vunpack.c.h.b16 %v60
  %v794 = vunpack.c.l.b16 %v61
  %v795 = vunpack.c.h.b16 %v61
  %v796 = vunpack.c.l.b16 %v62
  %v797 = vunpack.c.h.b16 %v62
  %v798 = vunpack.c.l.b16 %v63
  %v799 = vunpack.c.h.b16 %v63
  %v800 = vunpack.c.l.b16 %v64
  %v801 = vunpack.c.h.b16 %v64
  %v802 = vunpack.c.l.b16 %v65
  %v803 = vunpack.c.h.b16 %v65
  %v804 = vpack.c.b16 %v774, %v772
  %v805 = vpack.c.b16 %v775, %v773
  %v806 = vpack.c.b16 %v778, %v776
  %v807 = vpack.c.b16 %v779, %v777
  %v808 = vpack.c.b16 %v782, %v780
  %v809 = vpack.c.b16 %v783, %v781
  %v810 = vpack.c.b16 %v786, %v784
  %v811 = vpack.c.b16 %v787, %v785
  %v812 = vpack.c.b16 %v790, %v788
  %v813 = vpack.c.b16 %v791, %v789
  %v814 = vpack.c.b16 %v794, %v792
  %v815 = vpack.c.b16 %v795, %v793
  %v816 = vpack.c.b16 %v798, %v796
  %v817 = vpack.c.b16 %v799, %v797
  %v818 = vpack.c.b16 %v802, %v800
  %v819 = vpack.c.b16 %v803, %v801
  %v868 = vunpack.c.l.b16 %v146
  %v869 = vunpack.c.l.b16 %v147
  %v870 = vunpack.c.l.b16 %v148
  %v871 = vunpack.c.l.b16 %v149
  %v872 = vunpack.c.l.b16 %v150
  %v873 = vunpack.c.l.b16 %v151
  %v874 = vunpack.c.l.b16 %v152
  %v875 = vunpack.c.l.b16 %v153
  %v876 = vunpack.c.l.b16 %v154
  %v877 = vunpack.c.l.b16 %v155
  %v878 = vunpack.c.l.b16 %v156
  %v879 = vunpack.c.l.b16 %v157
  %v880 = vunpack.c.l.b16 %v158
  %v881 = vunpack.c.l.b16 %v159
  %v882 = vunpack.c.l.b16 %v160
  %v883 = vunpack.c.l.b16 %v161
  %v884 = vunpack.c.l.b16 %v162
  %v885 = vunpack.c.l.b16 %v163
  %v886 = vunpack.c.l.b16 %v164
  %v887 = vunpack.c.l.b16 %v165
  %v888 = vunpack.c.l.b16 %v166
  %v889 = vunpack.c.l.b16 %v167
  %v890 = vunpack.c.l.b16 %v168
  %v891 = vunpack.c.l.b16 %v169
  %v892 = vunpack.c.l.b16 %v170
  %v893 = vunpack.c.l.b16 %v171
  %v894 = vunpack.c.l.b16 %v172
  %v895 = vunpack.c.l.b16 %v173
  %v896 = vunpack.c.l.b16 %v174
  %v897 = vunpack.c.l.b16 %v175
  %v898 = vunpack.c.l.b16 %v176
  %v899 = vunpack.c.l.b16 %v177
  %v900 = vpack.c.b16 %v869, %v868
  %v901 = vpack.c.b16 %v871, %v870
  %v902 = vpack.c.b16 %v873, %v872
  %v903 = vpack.c.b16 %v875, %v874
  %v904 = vpack.c.b16 %v877, %v876
  %v905 = vpack.c.b16 %v879, %v878
  %v906 = vpack.c.b16 %v881, %v880
  %v907 = vpack.c.b16 %v883, %v882
  %v908 = vpack.c.b16 %v885, %v884
  %v909 = vpack.c.b16 %v887, %v886
  %v910 = vpack.c.b16 %v889, %v888
  %v911 = vpack.c.b16 %v891, %v890
  %v912 = vpack.c.b16 %v893, %v892
  %v913 = vpack.c.b16 %v895, %v894
  %v914 = vpack.c.b16 %v897, %v896
  %v915 = vpack.c.b16 %v899, %v898
  %932 = vmatprep.subr.bf16.mxu0 0
  %933 = vmatpush1.bf16.msra.mxu0 %v900
  %934 = vmatprep.subr.bf16.mxu0 0
  %935 = vmatpush1.bf16.msra.mxu0 %v901
  %936 = vmatprep.subr.bf16.mxu0 0
  %937 = vmatpush1.bf16.msra.mxu0 %v902
  %938 = vmatprep.subr.bf16.mxu0 0
  %939 = vmatpush1.bf16.msra.mxu0 %v903
  %940 = vmatprep.subr.bf16.mxu0 0
  %941 = vmatpush1.bf16.msra.mxu0 %v904
  %942 = vmatprep.subr.bf16.mxu0 0
  %943 = vmatpush1.bf16.msra.mxu0 %v905
  %944 = vmatprep.subr.bf16.mxu0 0
  %945 = vmatpush1.bf16.msra.mxu0 %v906
  %946 = vmatprep.subr.bf16.mxu0 0
  %947 = vmatpush1.bf16.msra.mxu0 %v907
  %948 = vmatprep.subr.bf16.mxu0 0
  %949 = vmatpush1.bf16.msra.mxu0 %v908
  %950 = vmatprep.subr.bf16.mxu0 0
  %951 = vmatpush1.bf16.msra.mxu0 %v909
  %952 = vmatprep.subr.bf16.mxu0 0
  %953 = vmatpush1.bf16.msra.mxu0 %v910
  %954 = vmatprep.subr.bf16.mxu0 0
  %955 = vmatpush1.bf16.msra.mxu0 %v911
  %956 = vmatprep.subr.bf16.mxu0 0
  %957 = vmatpush1.bf16.msra.mxu0 %v912
  %958 = vmatprep.subr.bf16.mxu0 0
  %959 = vmatpush1.bf16.msra.mxu0 %v913
  %960 = vmatprep.subr.bf16.mxu0 0
  %961 = vmatpush1.bf16.msra.mxu0 %v914
  %962 = vmatprep.subr.bf16.mxu0 0
  %963 = vmatpush1.bf16.msra.mxu0 %v915
  %964 = vmatprep.mubr.bf16.mxu0 %v805
  %965 = vmatmul.mubr.bf16.gmra.mrb[0].mxu0 %v804
  %v966 = vpop.f32.mrb[0].mxu0
  %v967 = vadd.f32 0.0, %v966
  %v968 = vpop.f32.mrb[0].mxu0
  %v969 = vpop.f32.mrb[0].mxu0
  %v970 = vadd.f32 0.0, %v969
  %v971 = vpop.f32.mrb[0].mxu0
  %972 = vmatprep.mubr.bf16.mxu0 %v807
  %973 = vmatmul.mubr.bf16.gmra.mrb[0].mxu0 %v806
  %v974 = vpop.f32.mrb[0].mxu0
  %v975 = vadd.f32 0.0, %v974
  %v976 = vpop.f32.mrb[0].mxu0
  %v977 = vpop.f32.mrb[0].mxu0
  %v978 = vadd.f32 0.0, %v977
  %v979 = vpop.f32.mrb[0].mxu0
  %980 = vmatprep.mubr.bf16.mxu0 %v809
  %981 = vmatmul.mubr.bf16.gmra.mrb[0].mxu0 %v808
  %v982 = vpop.f32.mrb[0].mxu0
  %v983 = vadd.f32 0.0, %v982
  %v984 = vpop.f32.mrb[0].mxu0
  %v985 = vpop.f32.mrb[0].mxu0
  %v986 = vadd.f32 0.0, %v985
  %v987 = vpop.f32.mrb[0].mxu0
  %988 = vmatprep.mubr.bf16.mxu0 %v811
  %989 = vmatmul.mubr.bf16.gmra.mrb[0].mxu0 %v810
  %v990 = vpop.f32.mrb[0].mxu0
  %v991 = vadd.f32 0.0, %v990
  %v992 = vpop.f32.mrb[0].mxu0
  %v993 = vpop.f32.mrb[0].mxu0
  %v994 = vadd.f32 0.0, %v993
  %v995 = vpop.f32.mrb[0].mxu0
  %996 = vmatprep.mubr.bf16.mxu0 %v813
  %997 = vmatmul.mubr.bf16.gmra.mrb[0].mxu0 %v812
  %v998 = vpop.f32.mrb[0].mxu0
  %v999 = vadd.f32 0.0, %v998
  %v1000 = vpop.f32.mrb[0].mxu0
  %v1001 = vpop.f32.mrb[0].mxu0
  %v1002 = vadd.f32 0.0, %v1001
  %v1003 = vpop.f32.mrb[0].mxu0
  %1004 = vmatprep.mubr.bf16.mxu0 %v815
  %1005 = vmatmul.mubr.bf16.gmra.mrb[0].mxu0 %v814
  %v1006 = vpop.f32.mrb[0].mxu0
  %v1007 = vadd.f32 0.0, %v1006
  %v1008 = vpop.f32.mrb[0].mxu0
  %v1009 = vpop.f32.mrb[0].mxu0
  %v1010 = vadd.f32 0.0, %v1009
  %v1011 = vpop.f32.mrb[0].mxu0
  %1012 = vmatprep.mubr.bf16.mxu0 %v817
  %1013 = vmatmul.mubr.bf16.gmra.mrb[0].mxu0 %v816
  %v1014 = vpop.f32.mrb[0].mxu0
  %v1015 = vadd.f32 0.0, %v1014
  %v1016 = vpop.f32.mrb[0].mxu0
  %v1017 = vpop.f32.mrb[0].mxu0
  %v1018 = vadd.f32 0.0, %v1017
  %v1019 = vpop.f32.mrb[0].mxu0
  %1020 = vmatprep.mubr.bf16.mxu0 %v819
  %1021 = vmatmul.mubr.bf16.gmra.mrb[0].mxu0 %v818
  %v1022 = vpop.f32.mrb[0].mxu0
  %v1023 = vadd.f32 0.0, %v1022
  %v1024 = vpop.f32.mrb[0].mxu0
  %v1025 = vpop.f32.mrb[0].mxu0
  %v1026 = vadd.f32 0.0, %v1025
  %v1027 = vpop.f32.mrb[0].mxu0
  %1028 = vdwg.mxu0
  %v1045 = vunpack.c.l.b16 %v66
  %v1046 = vunpack.c.h.b16 %v66
  %v1047 = vunpack.c.l.b16 %v67
  %v1048 = vunpack.c.h.b16 %v67
  %v1049 = vunpack.c.l.b16 %v68
  %v1050 = vunpack.c.h.b16 %v68
  %v1051 = vunpack.c.l.b16 %v69
  %v1052 = vunpack.c.h.b16 %v69
  %v1053 = vunpack.c.l.b16 %v70
  %v1054 = vunpack.c.h.b16 %v70
  %v1055 = vunpack.c.l.b16 %v71
  %v1056 = vunpack.c.h.b16 %v71
  %v1057 = vunpack.c.l.b16 %v72
  %v1058 = vunpack.c.h.b16 %v72
  %v1059 = vunpack.c.l.b16 %v73
  %v1060 = vunpack.c.h.b16 %v73
  %v1061 = vunpack.c.l.b16 %v74
  %v1062 = vunpack.c.h.b16 %v74
  %v1063 = vunpack.c.l.b16 %v75
  %v1064 = vunpack.c.h.b16 %v75
  %v1065 = vunpack.c.l.b16 %v76
  %v1066 = vunpack.c.h.b16 %v76
  %v1067 = vunpack.c.l.b16 %v77
  %v1068 = vunpack.c.h.b16 %v77
  %v1069 = vunpack.c.l.b16 %v78
  %v1070 = vunpack.c.h.b16 %v78
  %v1071 = vunpack.c.l.b16 %v79
  %v1072 = vunpack.c.h.b16 %v79
  %v1073 = vunpack.c.l.b16 %v80
  %v1074 = vunpack.c.h.b16 %v80
  %v1075 = vunpack.c.l.b16 %v81
  %v1076 = vunpack.c.h.b16 %v81
  %v1077 = vpack.c.b16 %v1047, %v1045
  %v1078 = vpack.c.b16 %v1048, %v1046
  %v1079 = vpack.c.b16 %v1051, %v1049
  %v1080 = vpack.c.b16 %v1052, %v1050
  %v1081 = vpack.c.b16 %v1055, %v1053
  %v1082 = vpack.c.b16 %v1056, %v1054
  %v1083 = vpack.c.b16 %v1059, %v1057
  %v1084 = vpack.c.b16 %v1060, %v1058
  %v1085 = vpack.c.b16 %v1063, %v1061
  %v1086 = vpack.c.b16 %v1064, %v1062
  %v1087 = vpack.c.b16 %v1067, %v1065
  %v1088 = vpack.c.b16 %v1068, %v1066
  %v1089 = vpack.c.b16 %v1071, %v1069
  %v1090 = vpack.c.b16 %v1072, %v1070
  %v1091 = vpack.c.b16 %v1075, %v1073
  %v1092 = vpack.c.b16 %v1076, %v1074
  %v1141 = vunpack.c.l.b16 %v178
  %v1142 = vunpack.c.l.b16 %v179
  %v1143 = vunpack.c.l.b16 %v180
  %v1144 = vunpack.c.l.b16 %v181
  %v1145 = vunpack.c.l.b16 %v182
  %v1146 = vunpack.c.l.b16 %v183
  %v1147 = vunpack.c.l.b16 %v184
  %v1148 = vunpack.c.l.b16 %v185
  %v1149 = vunpack.c.l.b16 %v186
  %v1150 = vunpack.c.l.b16 %v187
  %v1151 = vunpack.c.l.b16 %v188
  %v1152 = vunpack.c.l.b16 %v189
  %v1153 = vunpack.c.l.b16 %v190
  %v1154 = vunpack.c.l.b16 %v191
  %v1155 = vunpack.c.l.b16 %v192
  %v1156 = vunpack.c.l.b16 %v193
  %v1157 = vunpack.c.l.b16 %v194
  %v1158 = vunpack.c.l.b16 %v195
  %v1159 = vunpack.c.l.b16 %v196
  %v1160 = vunpack.c.l.b16 %v197
  %v1161 = vunpack.c.l.b16 %v198
  %v1162 = vunpack.c.l.b16 %v199
  %v1163 = vunpack.c.l.b16 %v200
  %v1164 = vunpack.c.l.b16 %v201
  %v1165 = vunpack.c.l.b16 %v202
  %v1166 = vunpack.c.l.b16 %v203
  %v1167 = vunpack.c.l.b16 %v204
  %v1168 = vunpack.c.l.b16 %v205
  %v1169 = vunpack.c.l.b16 %v206
  %v1170 = vunpack.c.l.b16 %v207
  %v1171 = vunpack.c.l.b16 %v208
  %v1172 = vunpack.c.l.b16 %v209
  %v1173 = vpack.c.b16 %v1142, %v1141
  %v1174 = vpack.c.b16 %v1144, %v1143
  %v1175 = vpack.c.b16 %v1146, %v1145
  %v1176 = vpack.c.b16 %v1148, %v1147
  %v1177 = vpack.c.b16 %v1150, %v1149
  %v1178 = vpack.c.b16 %v1152, %v1151
  %v1179 = vpack.c.b16 %v1154, %v1153
  %v1180 = vpack.c.b16 %v1156, %v1155
  %v1181 = vpack.c.b16 %v1158, %v1157
  %v1182 = vpack.c.b16 %v1160, %v1159
  %v1183 = vpack.c.b16 %v1162, %v1161
  %v1184 = vpack.c.b16 %v1164, %v1163
  %v1185 = vpack.c.b16 %v1166, %v1165
  %v1186 = vpack.c.b16 %v1168, %v1167
  %v1187 = vpack.c.b16 %v1170, %v1169
  %v1188 = vpack.c.b16 %v1172, %v1171
  %1205 = vmatprep.subr.bf16.mxu0 0
  %1206 = vmatpush1.bf16.msra.mxu0 %v1173
  %1207 = vmatprep.subr.bf16.mxu0 0
  %1208 = vmatpush1.bf16.msra.mxu0 %v1174
  %1209 = vmatprep.subr.bf16.mxu0 0
  %1210 = vmatpush1.bf16.msra.mxu0 %v1175
  %1211 = vmatprep.subr.bf16.mxu0 0
  %1212 = vmatpush1.bf16.msra.mxu0 %v1176
  %1213 = vmatprep.subr.bf16.mxu0 0
  %1214 = vmatpush1.bf16.msra.mxu0 %v1177
  %1215 = vmatprep.subr.bf16.mxu0 0
  %1216 = vmatpush1.bf16.msra.mxu0 %v1178
  %1217 = vmatprep.subr.bf16.mxu0 0
  %1218 = vmatpush1.bf16.msra.mxu0 %v1179
  %1219 = vmatprep.subr.bf16.mxu0 0
  %1220 = vmatpush1.bf16.msra.mxu0 %v1180
  %1221 = vmatprep.subr.bf16.mxu0 0
  %1222 = vmatpush1.bf16.msra.mxu0 %v1181
  %1223 = vmatprep.subr.bf16.mxu0 0
  %1224 = vmatpush1.bf16.msra.mxu0 %v1182
  %1225 = vmatprep.subr.bf16.mxu0 0
  %1226 = vmatpush1.bf16.msra.mxu0 %v1183
  %1227 = vmatprep.subr.bf16.mxu0 0
  %1228 = vmatpush1.bf16.msra.mxu0 %v1184
  %1229 = vmatprep.subr.bf16.mxu0 0
  %1230 = vmatpush1.bf16.msra.mxu0 %v1185
  %1231 = vmatprep.subr.bf16.mxu0 0
  %1232 = vmatpush1.bf16.msra.mxu0 %v1186
  %1233 = vmatprep.subr.bf16.mxu0 0
  %1234 = vmatpush1.bf16.msra.mxu0 %v1187
  %1235 = vmatprep.subr.bf16.mxu0 0
  %1236 = vmatpush1.bf16.msra.mxu0 %v1188
  %1237 = vmatprep.mubr.bf16.mxu0 %v1078
  %1238 = vmatmul.mubr.bf16.gmra.mrb[0].mxu0 %v1077
  %v1239 = vpop.f32.mrb[0].mxu0
  %v1240 = vadd.f32 0.0, %v1239
  %v1241 = vpop.f32.mrb[0].mxu0
  %v1242 = vpop.f32.mrb[0].mxu0
  %v1243 = vadd.f32 0.0, %v1242
  %v1244 = vpop.f32.mrb[0].mxu0
  %1245 = vmatprep.mubr.bf16.mxu0 %v1080
  %1246 = vmatmul.mubr.bf16.gmra.mrb[0].mxu0 %v1079
  %v1247 = vpop.f32.mrb[0].mxu0
  %v1248 = vadd.f32 0.0, %v1247
  %v1249 = vpop.f32.mrb[0].mxu0
  %v1250 = vpop.f32.mrb[0].mxu0
  %v1251 = vadd.f32 0.0, %v1250
  %v1252 = vpop.f32.mrb[0].mxu0
  %1253 = vmatprep.mubr.bf16.mxu0 %v1082
  %1254 = vmatmul.mubr.bf16.gmra.mrb[0].mxu0 %v1081
  %v1255 = vpop.f32.mrb[0].mxu0
  %v1256 = vadd.f32 0.0, %v1255
  %v1257 = vpop.f32.mrb[0].mxu0
  %v1258 = vpop.f32.mrb[0].mxu0
  %v1259 = vadd.f32 0.0, %v1258
  %v1260 = vpop.f32.mrb[0].mxu0
  %1261 = vmatprep.mubr.bf16.mxu0 %v1084
  %1262 = vmatmul.mubr.bf16.gmra.mrb[0].mxu0 %v1083
  %v1263 = vpop.f32.mrb[0].mxu0
  %v1264 = vadd.f32 0.0, %v1263
  %v1265 = vpop.f32.mrb[0].mxu0
  %v1266 = vpop.f32.mrb[0].mxu0
  %v1267 = vadd.f32 0.0, %v1266
  %v1268 = vpop.f32.mrb[0].mxu0
  %1269 = vmatprep.mubr.bf16.mxu0 %v1086
  %1270 = vmatmul.mubr.bf16.gmra.mrb[0].mxu0 %v1085
  %v1271 = vpop.f32.mrb[0].mxu0
  %v1272 = vadd.f32 0.0, %v1271
  %v1273 = vpop.f32.mrb[0].mxu0
  %v1274 = vpop.f32.mrb[0].mxu0
  %v1275 = vadd.f32 0.0, %v1274
  %v1276 = vpop.f32.mrb[0].mxu0
  %1277 = vmatprep.mubr.bf16.mxu0 %v1088
  %1278 = vmatmul.mubr.bf16.gmra.mrb[0].mxu0 %v1087
  %v1279 = vpop.f32.mrb[0].mxu0
  %v1280 = vadd.f32 0.0, %v1279
  %v1281 = vpop.f32.mrb[0].mxu0
  %v1282 = vpop.f32.mrb[0].mxu0
  %v1283 = vadd.f32 0.0, %v1282
  %v1284 = vpop.f32.mrb[0].mxu0
  %1285 = vmatprep.mubr.bf16.mxu0 %v1090
  %1286 = vmatmul.mubr.bf16.gmra.mrb[0].mxu0 %v1089
  %v1287 = vpop.f32.mrb[0].mxu0
  %v1288 = vadd.f32 0.0, %v1287
  %v1289 = vpop.f32.mrb[0].mxu0
  %v1290 = vpop.f32.mrb[0].mxu0
  %v1291 = vadd.f32 0.0, %v1290
  %v1292 = vpop.f32.mrb[0].mxu0
  %1293 = vmatprep.mubr.bf16.mxu0 %v1092
  %1294 = vmatmul.mubr.bf16.gmra.mrb[0].mxu0 %v1091
  %v1295 = vpop.f32.mrb[0].mxu0
  %v1296 = vadd.f32 0.0, %v1295
  %v1297 = vpop.f32.mrb[0].mxu0
  %v1298 = vpop.f32.mrb[0].mxu0
  %v1299 = vadd.f32 0.0, %v1298
  %v1300 = vpop.f32.mrb[0].mxu0
  %1301 = vdwg.mxu0
  %vm1302 = vcmask 261120
  %v1303 = vsel %vm1302, %v421, 0.0
  %v1304 = vsel %vm1302, %v424, 0.0
  %v1305 = vadd.f32 %v1303, %v1304
  %v1306 = vsel %vm1302, %v429, 0.0
  %v1307 = vadd.f32 %v1305, %v1306
  %v1308 = vsel %vm1302, %v432, 0.0
  %v1309 = vadd.f32 %v1307, %v1308
  %v1310 = vsel %vm1302, %v437, 0.0
  %v1311 = vadd.f32 %v1309, %v1310
  %v1312 = vsel %vm1302, %v440, 0.0
  %v1313 = vadd.f32 %v1311, %v1312
  %v1314 = vsel %vm1302, %v445, 0.0
  %v1315 = vadd.f32 %v1313, %v1314
  %v1316 = vsel %vm1302, %v448, 0.0
  %v1317 = vadd.f32 %v1315, %v1316
  %v1318 = vsel %vm1302, %v453, 0.0
  %v1319 = vadd.f32 %v1317, %v1318
  %v1320 = vsel %vm1302, %v456, 0.0
  %v1321 = vadd.f32 %v1319, %v1320
  %v1322 = vsel %vm1302, %v461, 0.0
  %v1323 = vadd.f32 %v1321, %v1322
  %v1324 = vsel %vm1302, %v464, 0.0
  %v1325 = vadd.f32 %v1323, %v1324
  %v1326 = vsel %vm1302, %v469, 0.0
  %v1327 = vadd.f32 %v1325, %v1326
  %v1328 = vsel %vm1302, %v472, 0.0
  %v1329 = vadd.f32 %v1327, %v1328
  %v1330 = vsel %vm1302, %v477, 0.0
  %v1331 = vadd.f32 %v1329, %v1330
  %v1332 = vsel %vm1302, %v480, 0.0
  %v1333 = vadd.f32 %v1331, %v1332
  %v1334 = vrot.slane %v1333, 4
  %v1335 = vadd.f32 %v1333, %v1334
  %v1336 = vrot.slane %v1335, 2
  %v1337 = vadd.f32 %v1335, %v1336
  %v1338 = vrot.slane %v1337, 1
  %v1339 = vadd.f32 %v1337, %v1338
  %v1340 = vsel %vm1302, %v694, 0.0
  %v1341 = vsel %vm1302, %v697, 0.0
  %v1342 = vadd.f32 %v1340, %v1341
  %v1343 = vsel %vm1302, %v702, 0.0
  %v1344 = vadd.f32 %v1342, %v1343
  %v1345 = vsel %vm1302, %v705, 0.0
  %v1346 = vadd.f32 %v1344, %v1345
  %v1347 = vsel %vm1302, %v710, 0.0
  %v1348 = vadd.f32 %v1346, %v1347
  %v1349 = vsel %vm1302, %v713, 0.0
  %v1350 = vadd.f32 %v1348, %v1349
  %v1351 = vsel %vm1302, %v718, 0.0
  %v1352 = vadd.f32 %v1350, %v1351
  %v1353 = vsel %vm1302, %v721, 0.0
  %v1354 = vadd.f32 %v1352, %v1353
  %v1355 = vsel %vm1302, %v726, 0.0
  %v1356 = vadd.f32 %v1354, %v1355
  %v1357 = vsel %vm1302, %v729, 0.0
  %v1358 = vadd.f32 %v1356, %v1357
  %v1359 = vsel %vm1302, %v734, 0.0
  %v1360 = vadd.f32 %v1358, %v1359
  %v1361 = vsel %vm1302, %v737, 0.0
  %v1362 = vadd.f32 %v1360, %v1361
  %v1363 = vsel %vm1302, %v742, 0.0
  %v1364 = vadd.f32 %v1362, %v1363
  %v1365 = vsel %vm1302, %v745, 0.0
  %v1366 = vadd.f32 %v1364, %v1365
  %v1367 = vsel %vm1302, %v750, 0.0
  %v1368 = vadd.f32 %v1366, %v1367
  %v1369 = vsel %vm1302, %v753, 0.0
  %v1370 = vadd.f32 %v1368, %v1369
  %v1371 = vrot.slane %v1370, 4
  %v1372 = vadd.f32 %v1370, %v1371
  %v1373 = vrot.slane %v1372, 2
  %v1374 = vadd.f32 %v1372, %v1373
  %v1375 = vrot.slane %v1374, 1
  %v1376 = vadd.f32 %v1374, %v1375
  %v1377 = vsel %vm1302, %v967, 0.0
  %v1378 = vsel %vm1302, %v970, 0.0
  %v1379 = vadd.f32 %v1377, %v1378
  %v1380 = vsel %vm1302, %v975, 0.0
  %v1381 = vadd.f32 %v1379, %v1380
  %v1382 = vsel %vm1302, %v978, 0.0
  %v1383 = vadd.f32 %v1381, %v1382
  %v1384 = vsel %vm1302, %v983, 0.0
  %v1385 = vadd.f32 %v1383, %v1384
  %v1386 = vsel %vm1302, %v986, 0.0
  %v1387 = vadd.f32 %v1385, %v1386
  %v1388 = vsel %vm1302, %v991, 0.0
  %v1389 = vadd.f32 %v1387, %v1388
  %v1390 = vsel %vm1302, %v994, 0.0
  %v1391 = vadd.f32 %v1389, %v1390
  %v1392 = vsel %vm1302, %v999, 0.0
  %v1393 = vadd.f32 %v1391, %v1392
  %v1394 = vsel %vm1302, %v1002, 0.0
  %v1395 = vadd.f32 %v1393, %v1394
  %v1396 = vsel %vm1302, %v1007, 0.0
  %v1397 = vadd.f32 %v1395, %v1396
  %v1398 = vsel %vm1302, %v1010, 0.0
  %v1399 = vadd.f32 %v1397, %v1398
  %v1400 = vsel %vm1302, %v1015, 0.0
  %v1401 = vadd.f32 %v1399, %v1400
  %v1402 = vsel %vm1302, %v1018, 0.0
  %v1403 = vadd.f32 %v1401, %v1402
  %v1404 = vsel %vm1302, %v1023, 0.0
  %v1405 = vadd.f32 %v1403, %v1404
  %v1406 = vsel %vm1302, %v1026, 0.0
  %v1407 = vadd.f32 %v1405, %v1406
  %v1408 = vrot.slane %v1407, 4
  %v1409 = vadd.f32 %v1407, %v1408
  %v1410 = vrot.slane %v1409, 2
  %v1411 = vadd.f32 %v1409, %v1410
  %v1412 = vrot.slane %v1411, 1
  %v1413 = vadd.f32 %v1411, %v1412
  %v1414 = vsel %vm1302, %v1240, 0.0
  %v1415 = vsel %vm1302, %v1243, 0.0
  %v1416 = vadd.f32 %v1414, %v1415
  %v1417 = vsel %vm1302, %v1248, 0.0
  %v1418 = vadd.f32 %v1416, %v1417
  %v1419 = vsel %vm1302, %v1251, 0.0
  %v1420 = vadd.f32 %v1418, %v1419
  %v1421 = vsel %vm1302, %v1256, 0.0
  %v1422 = vadd.f32 %v1420, %v1421
  %v1423 = vsel %vm1302, %v1259, 0.0
  %v1424 = vadd.f32 %v1422, %v1423
  %v1425 = vsel %vm1302, %v1264, 0.0
  %v1426 = vadd.f32 %v1424, %v1425
  %v1427 = vsel %vm1302, %v1267, 0.0
  %v1428 = vadd.f32 %v1426, %v1427
  %v1429 = vsel %vm1302, %v1272, 0.0
  %v1430 = vadd.f32 %v1428, %v1429
  %v1431 = vsel %vm1302, %v1275, 0.0
  %v1432 = vadd.f32 %v1430, %v1431
  %v1433 = vsel %vm1302, %v1280, 0.0
  %v1434 = vadd.f32 %v1432, %v1433
  %v1435 = vsel %vm1302, %v1283, 0.0
  %v1436 = vadd.f32 %v1434, %v1435
  %v1437 = vsel %vm1302, %v1288, 0.0
  %v1438 = vadd.f32 %v1436, %v1437
  %v1439 = vsel %vm1302, %v1291, 0.0
  %v1440 = vadd.f32 %v1438, %v1439
  %v1441 = vsel %vm1302, %v1296, 0.0
  %v1442 = vadd.f32 %v1440, %v1441
  %v1443 = vsel %vm1302, %v1299, 0.0
  %v1444 = vadd.f32 %v1442, %v1443
  %v1445 = vrot.slane %v1444, 4
  %v1446 = vadd.f32 %v1444, %v1445
  %v1447 = vrot.slane %v1446, 2
  %v1448 = vadd.f32 %v1446, %v1447
  %v1449 = vrot.slane %v1448, 1
  %v1450 = vadd.f32 %v1448, %v1449
  %v1451 = vrcp.pop 128.0
  %v1452 = vmul.f32 %v1339, %v1451
  %v1453 = vmul.f32 %v1376, %v1451
  %v1454 = vmul.f32 %v1413, %v1451
  %v1455 = vmul.f32 %v1450, %v1451
  %v1456 = vsel %vm1302, %v1452, 0.0
  %v1457 = vsel %vm1302, %v1453, 0.0
  %v1458 = vadd.f32 %v1456, %v1457
  %v1459 = vsel %vm1302, %v1454, 0.0
  %v1460 = vadd.f32 %v1458, %v1459
  %v1461 = vsel %vm1302, %v1455, 0.0
  %v1462 = vadd.f32 %v1460, %v1461
  %v1463 = vrcp.pop 4.0
  %v1464 = vmul.f32 %v1462, %v1463
  %v1465 = vsub.f32 %v421, %v1464
  %v1466 = vsub.f32 %v424, %v1464
  %v1467 = vsub.f32 %v429, %v1464
  %v1468 = vsub.f32 %v432, %v1464
  %v1469 = vsub.f32 %v437, %v1464
  %v1470 = vsub.f32 %v440, %v1464
  %v1471 = vsub.f32 %v445, %v1464
  %v1472 = vsub.f32 %v448, %v1464
  %v1473 = vsub.f32 %v453, %v1464
  %v1474 = vsub.f32 %v456, %v1464
  %v1475 = vsub.f32 %v461, %v1464
  %v1476 = vsub.f32 %v464, %v1464
  %v1477 = vsub.f32 %v469, %v1464
  %v1478 = vsub.f32 %v472, %v1464
  %v1479 = vsub.f32 %v477, %v1464
  %v1480 = vsub.f32 %v480, %v1464
  %v1481 = vsub.f32 %v694, %v1464
  %v1482 = vsub.f32 %v697, %v1464
  %v1483 = vsub.f32 %v702, %v1464
  %v1484 = vsub.f32 %v705, %v1464
  %v1485 = vsub.f32 %v710, %v1464
  %v1486 = vsub.f32 %v713, %v1464
  %v1487 = vsub.f32 %v718, %v1464
  %v1488 = vsub.f32 %v721, %v1464
  %v1489 = vsub.f32 %v726, %v1464
  %v1490 = vsub.f32 %v729, %v1464
  %v1491 = vsub.f32 %v734, %v1464
  %v1492 = vsub.f32 %v737, %v1464
  %v1493 = vsub.f32 %v742, %v1464
  %v1494 = vsub.f32 %v745, %v1464
  %v1495 = vsub.f32 %v750, %v1464
  %v1496 = vsub.f32 %v753, %v1464
  %v1497 = vsub.f32 %v967, %v1464
  %v1498 = vsub.f32 %v970, %v1464
  %v1499 = vsub.f32 %v975, %v1464
  %v1500 = vsub.f32 %v978, %v1464
  %v1501 = vsub.f32 %v983, %v1464
  %v1502 = vsub.f32 %v986, %v1464
  %v1503 = vsub.f32 %v991, %v1464
  %v1504 = vsub.f32 %v994, %v1464
  %v1505 = vsub.f32 %v999, %v1464
  %v1506 = vsub.f32 %v1002, %v1464
  %v1507 = vsub.f32 %v1007, %v1464
  %v1508 = vsub.f32 %v1010, %v1464
  %v1509 = vsub.f32 %v1015, %v1464
  %v1510 = vsub.f32 %v1018, %v1464
  %v1511 = vsub.f32 %v1023, %v1464
  %v1512 = vsub.f32 %v1026, %v1464
  %v1513 = vsub.f32 %v1240, %v1464
  %v1514 = vsub.f32 %v1243, %v1464
  %v1515 = vsub.f32 %v1248, %v1464
  %v1516 = vsub.f32 %v1251, %v1464
  %v1517 = vsub.f32 %v1256, %v1464
  %v1518 = vsub.f32 %v1259, %v1464
  %v1519 = vsub.f32 %v1264, %v1464
  %v1520 = vsub.f32 %v1267, %v1464
  %v1521 = vsub.f32 %v1272, %v1464
  %v1522 = vsub.f32 %v1275, %v1464
  %v1523 = vsub.f32 %v1280, %v1464
  %v1524 = vsub.f32 %v1283, %v1464
  %v1525 = vsub.f32 %v1288, %v1464
  %v1526 = vsub.f32 %v1291, %v1464
  %v1527 = vsub.f32 %v1296, %v1464
  %v1528 = vsub.f32 %v1299, %v1464
  %v1529 = vmul.f32 %v1465, %v1465
  %v1530 = vmul.f32 %v1466, %v1466
  %v1531 = vmul.f32 %v1467, %v1467
  %v1532 = vmul.f32 %v1468, %v1468
  %v1533 = vmul.f32 %v1469, %v1469
  %v1534 = vmul.f32 %v1470, %v1470
  %v1535 = vmul.f32 %v1471, %v1471
  %v1536 = vmul.f32 %v1472, %v1472
  %v1537 = vmul.f32 %v1473, %v1473
  %v1538 = vmul.f32 %v1474, %v1474
  %v1539 = vmul.f32 %v1475, %v1475
  %v1540 = vmul.f32 %v1476, %v1476
  %v1541 = vmul.f32 %v1477, %v1477
  %v1542 = vmul.f32 %v1478, %v1478
  %v1543 = vmul.f32 %v1479, %v1479
  %v1544 = vmul.f32 %v1480, %v1480
  %v1545 = vmul.f32 %v1481, %v1481
  %v1546 = vmul.f32 %v1482, %v1482
  %v1547 = vmul.f32 %v1483, %v1483
  %v1548 = vmul.f32 %v1484, %v1484
  %v1549 = vmul.f32 %v1485, %v1485
  %v1550 = vmul.f32 %v1486, %v1486
  %v1551 = vmul.f32 %v1487, %v1487
  %v1552 = vmul.f32 %v1488, %v1488
  %v1553 = vmul.f32 %v1489, %v1489
  %v1554 = vmul.f32 %v1490, %v1490
  %v1555 = vmul.f32 %v1491, %v1491
  %v1556 = vmul.f32 %v1492, %v1492
  %v1557 = vmul.f32 %v1493, %v1493
  %v1558 = vmul.f32 %v1494, %v1494
  %v1559 = vmul.f32 %v1495, %v1495
  %v1560 = vmul.f32 %v1496, %v1496
  %v1561 = vmul.f32 %v1497, %v1497
  %v1562 = vmul.f32 %v1498, %v1498
  %v1563 = vmul.f32 %v1499, %v1499
  %v1564 = vmul.f32 %v1500, %v1500
  %v1565 = vmul.f32 %v1501, %v1501
  %v1566 = vmul.f32 %v1502, %v1502
  %v1567 = vmul.f32 %v1503, %v1503
  %v1568 = vmul.f32 %v1504, %v1504
  %v1569 = vmul.f32 %v1505, %v1505
  %v1570 = vmul.f32 %v1506, %v1506
  %v1571 = vmul.f32 %v1507, %v1507
  %v1572 = vmul.f32 %v1508, %v1508
  %v1573 = vmul.f32 %v1509, %v1509
  %v1574 = vmul.f32 %v1510, %v1510
  %v1575 = vmul.f32 %v1511, %v1511
  %v1576 = vmul.f32 %v1512, %v1512
  %v1577 = vmul.f32 %v1513, %v1513
  %v1578 = vmul.f32 %v1514, %v1514
  %v1579 = vmul.f32 %v1515, %v1515
  %v1580 = vmul.f32 %v1516, %v1516
  %v1581 = vmul.f32 %v1517, %v1517
  %v1582 = vmul.f32 %v1518, %v1518
  %v1583 = vmul.f32 %v1519, %v1519
  %v1584 = vmul.f32 %v1520, %v1520
  %v1585 = vmul.f32 %v1521, %v1521
  %v1586 = vmul.f32 %v1522, %v1522
  %v1587 = vmul.f32 %v1523, %v1523
  %v1588 = vmul.f32 %v1524, %v1524
  %v1589 = vmul.f32 %v1525, %v1525
  %v1590 = vmul.f32 %v1526, %v1526
  %v1591 = vmul.f32 %v1527, %v1527
  %v1592 = vmul.f32 %v1528, %v1528
  %v1593 = vsel %vm1302, %v1529, 0.0
  %v1594 = vsel %vm1302, %v1530, 0.0
  %v1595 = vadd.f32 %v1593, %v1594
  %v1596 = vsel %vm1302, %v1531, 0.0
  %v1597 = vadd.f32 %v1595, %v1596
  %v1598 = vsel %vm1302, %v1532, 0.0
  %v1599 = vadd.f32 %v1597, %v1598
  %v1600 = vsel %vm1302, %v1533, 0.0
  %v1601 = vadd.f32 %v1599, %v1600
  %v1602 = vsel %vm1302, %v1534, 0.0
  %v1603 = vadd.f32 %v1601, %v1602
  %v1604 = vsel %vm1302, %v1535, 0.0
  %v1605 = vadd.f32 %v1603, %v1604
  %v1606 = vsel %vm1302, %v1536, 0.0
  %v1607 = vadd.f32 %v1605, %v1606
  %v1608 = vsel %vm1302, %v1537, 0.0
  %v1609 = vadd.f32 %v1607, %v1608
  %v1610 = vsel %vm1302, %v1538, 0.0
  %v1611 = vadd.f32 %v1609, %v1610
  %v1612 = vsel %vm1302, %v1539, 0.0
  %v1613 = vadd.f32 %v1611, %v1612
  %v1614 = vsel %vm1302, %v1540, 0.0
  %v1615 = vadd.f32 %v1613, %v1614
  %v1616 = vsel %vm1302, %v1541, 0.0
  %v1617 = vadd.f32 %v1615, %v1616
  %v1618 = vsel %vm1302, %v1542, 0.0
  %v1619 = vadd.f32 %v1617, %v1618
  %v1620 = vsel %vm1302, %v1543, 0.0
  %v1621 = vadd.f32 %v1619, %v1620
  %v1622 = vsel %vm1302, %v1544, 0.0
  %v1623 = vadd.f32 %v1621, %v1622
  %v1624 = vrot.slane %v1623, 4
  %v1625 = vadd.f32 %v1623, %v1624
  %v1626 = vrot.slane %v1625, 2
  %v1627 = vadd.f32 %v1625, %v1626
  %v1628 = vrot.slane %v1627, 1
  %v1629 = vadd.f32 %v1627, %v1628
  %v1630 = vsel %vm1302, %v1545, 0.0
  %v1631 = vsel %vm1302, %v1546, 0.0
  %v1632 = vadd.f32 %v1630, %v1631
  %v1633 = vsel %vm1302, %v1547, 0.0
  %v1634 = vadd.f32 %v1632, %v1633
  %v1635 = vsel %vm1302, %v1548, 0.0
  %v1636 = vadd.f32 %v1634, %v1635
  %v1637 = vsel %vm1302, %v1549, 0.0
  %v1638 = vadd.f32 %v1636, %v1637
  %v1639 = vsel %vm1302, %v1550, 0.0
  %v1640 = vadd.f32 %v1638, %v1639
  %v1641 = vsel %vm1302, %v1551, 0.0
  %v1642 = vadd.f32 %v1640, %v1641
  %v1643 = vsel %vm1302, %v1552, 0.0
  %v1644 = vadd.f32 %v1642, %v1643
  %v1645 = vsel %vm1302, %v1553, 0.0
  %v1646 = vadd.f32 %v1644, %v1645
  %v1647 = vsel %vm1302, %v1554, 0.0
  %v1648 = vadd.f32 %v1646, %v1647
  %v1649 = vsel %vm1302, %v1555, 0.0
  %v1650 = vadd.f32 %v1648, %v1649
  %v1651 = vsel %vm1302, %v1556, 0.0
  %v1652 = vadd.f32 %v1650, %v1651
  %v1653 = vsel %vm1302, %v1557, 0.0
  %v1654 = vadd.f32 %v1652, %v1653
  %v1655 = vsel %vm1302, %v1558, 0.0
  %v1656 = vadd.f32 %v1654, %v1655
  %v1657 = vsel %vm1302, %v1559, 0.0
  %v1658 = vadd.f32 %v1656, %v1657
  %v1659 = vsel %vm1302, %v1560, 0.0
  %v1660 = vadd.f32 %v1658, %v1659
  %v1661 = vrot.slane %v1660, 4
  %v1662 = vadd.f32 %v1660, %v1661
  %v1663 = vrot.slane %v1662, 2
  %v1664 = vadd.f32 %v1662, %v1663
  %v1665 = vrot.slane %v1664, 1
  %v1666 = vadd.f32 %v1664, %v1665
  %v1667 = vsel %vm1302, %v1561, 0.0
  %v1668 = vsel %vm1302, %v1562, 0.0
  %v1669 = vadd.f32 %v1667, %v1668
  %v1670 = vsel %vm1302, %v1563, 0.0
  %v1671 = vadd.f32 %v1669, %v1670
  %v1672 = vsel %vm1302, %v1564, 0.0
  %v1673 = vadd.f32 %v1671, %v1672
  %v1674 = vsel %vm1302, %v1565, 0.0
  %v1675 = vadd.f32 %v1673, %v1674
  %v1676 = vsel %vm1302, %v1566, 0.0
  %v1677 = vadd.f32 %v1675, %v1676
  %v1678 = vsel %vm1302, %v1567, 0.0
  %v1679 = vadd.f32 %v1677, %v1678
  %v1680 = vsel %vm1302, %v1568, 0.0
  %v1681 = vadd.f32 %v1679, %v1680
  %v1682 = vsel %vm1302, %v1569, 0.0
  %v1683 = vadd.f32 %v1681, %v1682
  %v1684 = vsel %vm1302, %v1570, 0.0
  %v1685 = vadd.f32 %v1683, %v1684
  %v1686 = vsel %vm1302, %v1571, 0.0
  %v1687 = vadd.f32 %v1685, %v1686
  %v1688 = vsel %vm1302, %v1572, 0.0
  %v1689 = vadd.f32 %v1687, %v1688
  %v1690 = vsel %vm1302, %v1573, 0.0
  %v1691 = vadd.f32 %v1689, %v1690
  %v1692 = vsel %vm1302, %v1574, 0.0
  %v1693 = vadd.f32 %v1691, %v1692
  %v1694 = vsel %vm1302, %v1575, 0.0
  %v1695 = vadd.f32 %v1693, %v1694
  %v1696 = vsel %vm1302, %v1576, 0.0
  %v1697 = vadd.f32 %v1695, %v1696
  %v1698 = vrot.slane %v1697, 4
  %v1699 = vadd.f32 %v1697, %v1698
  %v1700 = vrot.slane %v1699, 2
  %v1701 = vadd.f32 %v1699, %v1700
  %v1702 = vrot.slane %v1701, 1
  %v1703 = vadd.f32 %v1701, %v1702
  %v1704 = vsel %vm1302, %v1577, 0.0
  %v1705 = vsel %vm1302, %v1578, 0.0
  %v1706 = vadd.f32 %v1704, %v1705
  %v1707 = vsel %vm1302, %v1579, 0.0
  %v1708 = vadd.f32 %v1706, %v1707
  %v1709 = vsel %vm1302, %v1580, 0.0
  %v1710 = vadd.f32 %v1708, %v1709
  %v1711 = vsel %vm1302, %v1581, 0.0
  %v1712 = vadd.f32 %v1710, %v1711
  %v1713 = vsel %vm1302, %v1582, 0.0
  %v1714 = vadd.f32 %v1712, %v1713
  %v1715 = vsel %vm1302, %v1583, 0.0
  %v1716 = vadd.f32 %v1714, %v1715
  %v1717 = vsel %vm1302, %v1584, 0.0
  %v1718 = vadd.f32 %v1716, %v1717
  %v1719 = vsel %vm1302, %v1585, 0.0
  %v1720 = vadd.f32 %v1718, %v1719
  %v1721 = vsel %vm1302, %v1586, 0.0
  %v1722 = vadd.f32 %v1720, %v1721
  %v1723 = vsel %vm1302, %v1587, 0.0
  %v1724 = vadd.f32 %v1722, %v1723
  %v1725 = vsel %vm1302, %v1588, 0.0
  %v1726 = vadd.f32 %v1724, %v1725
  %v1727 = vsel %vm1302, %v1589, 0.0
  %v1728 = vadd.f32 %v1726, %v1727
  %v1729 = vsel %vm1302, %v1590, 0.0
  %v1730 = vadd.f32 %v1728, %v1729
  %v1731 = vsel %vm1302, %v1591, 0.0
  %v1732 = vadd.f32 %v1730, %v1731
  %v1733 = vsel %vm1302, %v1592, 0.0
  %v1734 = vadd.f32 %v1732, %v1733
  %v1735 = vrot.slane %v1734, 4
  %v1736 = vadd.f32 %v1734, %v1735
  %v1737 = vrot.slane %v1736, 2
  %v1738 = vadd.f32 %v1736, %v1737
  %v1739 = vrot.slane %v1738, 1
  %v1740 = vadd.f32 %v1738, %v1739
  %v1741 = vmul.f32 %v1629, %v1451
  %v1742 = vmul.f32 %v1666, %v1451
  %v1743 = vmul.f32 %v1703, %v1451
  %v1744 = vmul.f32 %v1740, %v1451
  %v1745 = vsel %vm1302, %v1741, 0.0
  %v1746 = vsel %vm1302, %v1742, 0.0
  %v1747 = vadd.f32 %v1745, %v1746
  %v1748 = vsel %vm1302, %v1743, 0.0
  %v1749 = vadd.f32 %v1747, %v1748
  %v1750 = vsel %vm1302, %v1744, 0.0
  %v1751 = vadd.f32 %v1749, %v1750
  %v1752 = vmul.f32 %v1751, %v1463
  %v1753 = vld [vmem:[%s2] sm:$0x1]
  %v1754 = vadd.f32 %v1752, 1e-05
  %v1755 = vrsqrt.pop %v1754
  %v1756 = vmul.f32 %v1753, %v1755
  %v1758 = vlaneseq
  %v1759 = vshrl.u32 %v1758, 7
  %v1760 = vsub.s32 0, %v1759
  %v1761 = vrot.slane %v1756, %v1760
  %v1763 = vmul.f32 %v1465, %v1761
  %v1764 = vmul.f32 %v1466, %v1761
  %v1765 = vmul.f32 %v1467, %v1761
  %v1766 = vmul.f32 %v1468, %v1761
  %v1767 = vmul.f32 %v1469, %v1761
  %v1768 = vmul.f32 %v1470, %v1761
  %v1769 = vmul.f32 %v1471, %v1761
  %v1770 = vmul.f32 %v1472, %v1761
  %v1771 = vmul.f32 %v1473, %v1761
  %v1772 = vmul.f32 %v1474, %v1761
  %v1773 = vmul.f32 %v1475, %v1761
  %v1774 = vmul.f32 %v1476, %v1761
  %v1775 = vmul.f32 %v1477, %v1761
  %v1776 = vmul.f32 %v1478, %v1761
  %v1777 = vmul.f32 %v1479, %v1761
  %v1778 = vmul.f32 %v1480, %v1761
  %v1779 = vmul.f32 %v1481, %v1761
  %v1780 = vmul.f32 %v1482, %v1761
  %v1781 = vmul.f32 %v1483, %v1761
  %v1782 = vmul.f32 %v1484, %v1761
  %v1783 = vmul.f32 %v1485, %v1761
  %v1784 = vmul.f32 %v1486, %v1761
  %v1785 = vmul.f32 %v1487, %v1761
  %v1786 = vmul.f32 %v1488, %v1761
  %v1787 = vmul.f32 %v1489, %v1761
  %v1788 = vmul.f32 %v1490, %v1761
  %v1789 = vmul.f32 %v1491, %v1761
  %v1790 = vmul.f32 %v1492, %v1761
  %v1791 = vmul.f32 %v1493, %v1761
  %v1792 = vmul.f32 %v1494, %v1761
  %v1793 = vmul.f32 %v1495, %v1761
  %v1794 = vmul.f32 %v1496, %v1761
  %v1795 = vmul.f32 %v1497, %v1761
  %v1796 = vmul.f32 %v1498, %v1761
  %v1797 = vmul.f32 %v1499, %v1761
  %v1798 = vmul.f32 %v1500, %v1761
  %v1799 = vmul.f32 %v1501, %v1761
  %v1800 = vmul.f32 %v1502, %v1761
  %v1801 = vmul.f32 %v1503, %v1761
  %v1802 = vmul.f32 %v1504, %v1761
  %v1803 = vmul.f32 %v1505, %v1761
  %v1804 = vmul.f32 %v1506, %v1761
  %v1805 = vmul.f32 %v1507, %v1761
  %v1806 = vmul.f32 %v1508, %v1761
  %v1807 = vmul.f32 %v1509, %v1761
  %v1808 = vmul.f32 %v1510, %v1761
  %v1809 = vmul.f32 %v1511, %v1761
  %v1810 = vmul.f32 %v1512, %v1761
  %v1811 = vmul.f32 %v1513, %v1761
  %v1812 = vmul.f32 %v1514, %v1761
  %v1813 = vmul.f32 %v1515, %v1761
  %v1814 = vmul.f32 %v1516, %v1761
  %v1815 = vmul.f32 %v1517, %v1761
  %v1816 = vmul.f32 %v1518, %v1761
  %v1817 = vmul.f32 %v1519, %v1761
  %v1818 = vmul.f32 %v1520, %v1761
  %v1819 = vmul.f32 %v1521, %v1761
  %v1820 = vmul.f32 %v1522, %v1761
  %v1821 = vmul.f32 %v1523, %v1761
  %v1822 = vmul.f32 %v1524, %v1761
  %v1823 = vmul.f32 %v1525, %v1761
  %v1824 = vmul.f32 %v1526, %v1761
  %v1825 = vmul.f32 %v1527, %v1761
  %v1826 = vmul.f32 %v1528, %v1761
  %v1827 = vld [vmem:[%s3] sm:$0x1]
  %v1829 = vlaneseq
  %v1830 = vshrl.u32 %v1829, 7
  %v1831 = vsub.s32 0, %v1830
  %v1832 = vrot.slane %v1827, %v1831
  %v1834 = vadd.f32 %v1763, %v1832
  %v1835 = vadd.f32 %v1764, %v1832
  %v1836 = vadd.f32 %v1765, %v1832
  %v1837 = vadd.f32 %v1766, %v1832
  %v1838 = vadd.f32 %v1767, %v1832
  %v1839 = vadd.f32 %v1768, %v1832
  %v1840 = vadd.f32 %v1769, %v1832
  %v1841 = vadd.f32 %v1770, %v1832
  %v1842 = vadd.f32 %v1771, %v1832
  %v1843 = vadd.f32 %v1772, %v1832
  %v1844 = vadd.f32 %v1773, %v1832
  %v1845 = vadd.f32 %v1774, %v1832
  %v1846 = vadd.f32 %v1775, %v1832
  %v1847 = vadd.f32 %v1776, %v1832
  %v1848 = vadd.f32 %v1777, %v1832
  %v1849 = vadd.f32 %v1778, %v1832
  %v1850 = vadd.f32 %v1779, %v1832
  %v1851 = vadd.f32 %v1780, %v1832
  %v1852 = vadd.f32 %v1781, %v1832
  %v1853 = vadd.f32 %v1782, %v1832
  %v1854 = vadd.f32 %v1783, %v1832
  %v1855 = vadd.f32 %v1784, %v1832
  %v1856 = vadd.f32 %v1785, %v1832
  %v1857 = vadd.f32 %v1786, %v1832
  %v1858 = vadd.f32 %v1787, %v1832
  %v1859 = vadd.f32 %v1788, %v1832
  %v1860 = vadd.f32 %v1789, %v1832
  %v1861 = vadd.f32 %v1790, %v1832
  %v1862 = vadd.f32 %v1791, %v1832
  %v1863 = vadd.f32 %v1792, %v1832
  %v1864 = vadd.f32 %v1793, %v1832
  %v1865 = vadd.f32 %v1794, %v1832
  %v1866 = vadd.f32 %v1795, %v1832
  %v1867 = vadd.f32 %v1796, %v1832
  %v1868 = vadd.f32 %v1797, %v1832
  %v1869 = vadd.f32 %v1798, %v1832
  %v1870 = vadd.f32 %v1799, %v1832
  %v1871 = vadd.f32 %v1800, %v1832
  %v1872 = vadd.f32 %v1801, %v1832
  %v1873 = vadd.f32 %v1802, %v1832
  %v1874 = vadd.f32 %v1803, %v1832
  %v1875 = vadd.f32 %v1804, %v1832
  %v1876 = vadd.f32 %v1805, %v1832
  %v1877 = vadd.f32 %v1806, %v1832
  %v1878 = vadd.f32 %v1807, %v1832
  %v1879 = vadd.f32 %v1808, %v1832
  %v1880 = vadd.f32 %v1809, %v1832
  %v1881 = vadd.f32 %v1810, %v1832
  %v1882 = vadd.f32 %v1811, %v1832
  %v1883 = vadd.f32 %v1812, %v1832
  %v1884 = vadd.f32 %v1813, %v1832
  %v1885 = vadd.f32 %v1814, %v1832
  %v1886 = vadd.f32 %v1815, %v1832
  %v1887 = vadd.f32 %v1816, %v1832
  %v1888 = vadd.f32 %v1817, %v1832
  %v1889 = vadd.f32 %v1818, %v1832
  %v1890 = vadd.f32 %v1819, %v1832
  %v1891 = vadd.f32 %v1820, %v1832
  %v1892 = vadd.f32 %v1821, %v1832
  %v1893 = vadd.f32 %v1822, %v1832
  %v1894 = vadd.f32 %v1823, %v1832
  %v1895 = vadd.f32 %v1824, %v1832
  %v1896 = vadd.f32 %v1825, %v1832
  %v1897 = vadd.f32 %v1826, %v1832
  %v1898 = vmax.f32 %v1834, 0.0
  %v1899 = vmax.f32 %v1835, 0.0
  %v1900 = vmax.f32 %v1836, 0.0
  %v1901 = vmax.f32 %v1837, 0.0
  %v1902 = vmax.f32 %v1838, 0.0
  %v1903 = vmax.f32 %v1839, 0.0
  %v1904 = vmax.f32 %v1840, 0.0
  %v1905 = vmax.f32 %v1841, 0.0
  %v1906 = vmax.f32 %v1842, 0.0
  %v1907 = vmax.f32 %v1843, 0.0
  %v1908 = vmax.f32 %v1844, 0.0
  %v1909 = vmax.f32 %v1845, 0.0
  %v1910 = vmax.f32 %v1846, 0.0
  %v1911 = vmax.f32 %v1847, 0.0
  %v1912 = vmax.f32 %v1848, 0.0
  %v1913 = vmax.f32 %v1849, 0.0
  %v1914 = vmax.f32 %v1850, 0.0
  %v1915 = vmax.f32 %v1851, 0.0
  %v1916 = vmax.f32 %v1852, 0.0
  %v1917 = vmax.f32 %v1853, 0.0
  %v1918 = vmax.f32 %v1854, 0.0
  %v1919 = vmax.f32 %v1855, 0.0
  %v1920 = vmax.f32 %v1856, 0.0
  %v1921 = vmax.f32 %v1857, 0.0
  %v1922 = vmax.f32 %v1858, 0.0
  %v1923 = vmax.f32 %v1859, 0.0
  %v1924 = vmax.f32 %v1860, 0.0
  %v1925 = vmax.f32 %v1861, 0.0
  %v1926 = vmax.f32 %v1862, 0.0
  %v1927 = vmax.f32 %v1863, 0.0
  %v1928 = vmax.f32 %v1864, 0.0
  %v1929 = vmax.f32 %v1865, 0.0
  %v1930 = vmax.f32 %v1866, 0.0
  %v1931 = vmax.f32 %v1867, 0.0
  %v1932 = vmax.f32 %v1868, 0.0
  %v1933 = vmax.f32 %v1869, 0.0
  %v1934 = vmax.f32 %v1870, 0.0
  %v1935 = vmax.f32 %v1871, 0.0
  %v1936 = vmax.f32 %v1872, 0.0
  %v1937 = vmax.f32 %v1873, 0.0
  %v1938 = vmax.f32 %v1874, 0.0
  %v1939 = vmax.f32 %v1875, 0.0
  %v1940 = vmax.f32 %v1876, 0.0
  %v1941 = vmax.f32 %v1877, 0.0
  %v1942 = vmax.f32 %v1878, 0.0
  %v1943 = vmax.f32 %v1879, 0.0
  %v1944 = vmax.f32 %v1880, 0.0
  %v1945 = vmax.f32 %v1881, 0.0
  %v1946 = vmax.f32 %v1882, 0.0
  %v1947 = vmax.f32 %v1883, 0.0
  %v1948 = vmax.f32 %v1884, 0.0
  %v1949 = vmax.f32 %v1885, 0.0
  %v1950 = vmax.f32 %v1886, 0.0
  %v1951 = vmax.f32 %v1887, 0.0
  %v1952 = vmax.f32 %v1888, 0.0
  %v1953 = vmax.f32 %v1889, 0.0
  %v1954 = vmax.f32 %v1890, 0.0
  %v1955 = vmax.f32 %v1891, 0.0
  %v1956 = vmax.f32 %v1892, 0.0
  %v1957 = vmax.f32 %v1893, 0.0
  %v1958 = vmax.f32 %v1894, 0.0
  %v1959 = vmax.f32 %v1895, 0.0
  %v1960 = vmax.f32 %v1896, 0.0
  %v1961 = vmax.f32 %v1897, 0.0
  %1962 = vst.msk [vmem:[%s4] sm:$0xff] %vm1302, %v1898
  %1963 = vst.msk [vmem:[%s4 + $0x8] sm:$0xff] %vm1302, %v1899
  %1964 = vst.msk [vmem:[%s4 + $0x10] sm:$0xff] %vm1302, %v1900
  %1965 = vst.msk [vmem:[%s4 + $0x18] sm:$0xff] %vm1302, %v1901
  %1966 = vst.msk [vmem:[%s4 + $0x20] sm:$0xff] %vm1302, %v1902
  %1967 = vst.msk [vmem:[%s4 + $0x28] sm:$0xff] %vm1302, %v1903
  %1968 = vst.msk [vmem:[%s4 + $0x30] sm:$0xff] %vm1302, %v1904
  %1969 = vst.msk [vmem:[%s4 + $0x38] sm:$0xff] %vm1302, %v1905
  %1970 = vst.msk [vmem:[%s4 + $0x40] sm:$0xff] %vm1302, %v1906
  %1971 = vst.msk [vmem:[%s4 + $0x48] sm:$0xff] %vm1302, %v1907
  %1972 = vst.msk [vmem:[%s4 + $0x50] sm:$0xff] %vm1302, %v1908
  %1973 = vst.msk [vmem:[%s4 + $0x58] sm:$0xff] %vm1302, %v1909
  %1974 = vst.msk [vmem:[%s4 + $0x60] sm:$0xff] %vm1302, %v1910
  %1975 = vst.msk [vmem:[%s4 + $0x68] sm:$0xff] %vm1302, %v1911
  %1976 = vst.msk [vmem:[%s4 + $0x70] sm:$0xff] %vm1302, %v1912
  %1977 = vst.msk [vmem:[%s4 + $0x78] sm:$0xff] %vm1302, %v1913
  %1978 = vst.msk [vmem:[%s4 + $0x80] sm:$0xff] %vm1302, %v1914
  %1979 = vst.msk [vmem:[%s4 + $0x88] sm:$0xff] %vm1302, %v1915
  %1980 = vst.msk [vmem:[%s4 + $0x90] sm:$0xff] %vm1302, %v1916
  %1981 = vst.msk [vmem:[%s4 + $0x98] sm:$0xff] %vm1302, %v1917
  %1982 = vst.msk [vmem:[%s4 + $0xa0] sm:$0xff] %vm1302, %v1918
  %1983 = vst.msk [vmem:[%s4 + $0xa8] sm:$0xff] %vm1302, %v1919
  %1984 = vst.msk [vmem:[%s4 + $0xb0] sm:$0xff] %vm1302, %v1920
  %1985 = vst.msk [vmem:[%s4 + $0xb8] sm:$0xff] %vm1302, %v1921
  %1986 = vst.msk [vmem:[%s4 + $0xc0] sm:$0xff] %vm1302, %v1922
  %1987 = vst.msk [vmem:[%s4 + $0xc8] sm:$0xff] %vm1302, %v1923
  %1988 = vst.msk [vmem:[%s4 + $0xd0] sm:$0xff] %vm1302, %v1924
  %1989 = vst.msk [vmem:[%s4 + $0xd8] sm:$0xff] %vm1302, %v1925
  %1990 = vst.msk [vmem:[%s4 + $0xe0] sm:$0xff] %vm1302, %v1926
  %1991 = vst.msk [vmem:[%s4 + $0xe8] sm:$0xff] %vm1302, %v1927
  %1992 = vst.msk [vmem:[%s4 + $0xf0] sm:$0xff] %vm1302, %v1928
  %1993 = vst.msk [vmem:[%s4 + $0xf8] sm:$0xff] %vm1302, %v1929
  %1994 = vst.msk [vmem:[%s4 + $0x100] sm:$0xff] %vm1302, %v1930
  %1995 = vst.msk [vmem:[%s4 + $0x108] sm:$0xff] %vm1302, %v1931
  %1996 = vst.msk [vmem:[%s4 + $0x110] sm:$0xff] %vm1302, %v1932
  %1997 = vst.msk [vmem:[%s4 + $0x118] sm:$0xff] %vm1302, %v1933
  %1998 = vst.msk [vmem:[%s4 + $0x120] sm:$0xff] %vm1302, %v1934
  %1999 = vst.msk [vmem:[%s4 + $0x128] sm:$0xff] %vm1302, %v1935
  %2000 = vst.msk [vmem:[%s4 + $0x130] sm:$0xff] %vm1302, %v1936
  %2001 = vst.msk [vmem:[%s4 + $0x138] sm:$0xff] %vm1302, %v1937
  %2002 = vst.msk [vmem:[%s4 + $0x140] sm:$0xff] %vm1302, %v1938
  %2003 = vst.msk [vmem:[%s4 + $0x148] sm:$0xff] %vm1302, %v1939
  %2004 = vst.msk [vmem:[%s4 + $0x150] sm:$0xff] %vm1302, %v1940
  %2005 = vst.msk [vmem:[%s4 + $0x158] sm:$0xff] %vm1302, %v1941
  %2006 = vst.msk [vmem:[%s4 + $0x160] sm:$0xff] %vm1302, %v1942
  %2007 = vst.msk [vmem:[%s4 + $0x168] sm:$0xff] %vm1302, %v1943
  %2008 = vst.msk [vmem:[%s4 + $0x170] sm:$0xff] %vm1302, %v1944
  %2009 = vst.msk [vmem:[%s4 + $0x178] sm:$0xff] %vm1302, %v1945
  %2010 = vst.msk [vmem:[%s4 + $0x180] sm:$0xff] %vm1302, %v1946
  %2011 = vst.msk [vmem:[%s4 + $0x188] sm:$0xff] %vm1302, %v1947
  %2012 = vst.msk [vmem:[%s4 + $0x190] sm:$0xff] %vm1302, %v1948
  %2013 = vst.msk [vmem:[%s4 + $0x198] sm:$0xff] %vm1302, %v1949
  %2014 = vst.msk [vmem:[%s4 + $0x1a0] sm:$0xff] %vm1302, %v1950
  %2015 = vst.msk [vmem:[%s4 + $0x1a8] sm:$0xff] %vm1302, %v1951
  %2016 = vst.msk [vmem:[%s4 + $0x1b0] sm:$0xff] %vm1302, %v1952
  %2017 = vst.msk [vmem:[%s4 + $0x1b8] sm:$0xff] %vm1302, %v1953
  %2018 = vst.msk [vmem:[%s4 + $0x1c0] sm:$0xff] %vm1302, %v1954
  %2019 = vst.msk [vmem:[%s4 + $0x1c8] sm:$0xff] %vm1302, %v1955
  %2020 = vst.msk [vmem:[%s4 + $0x1d0] sm:$0xff] %vm1302, %v1956
  %2021 = vst.msk [vmem:[%s4 + $0x1d8] sm:$0xff] %vm1302, %v1957
  %2022 = vst.msk [vmem:[%s4 + $0x1e0] sm:$0xff] %vm1302, %v1958
  %2023 = vst.msk [vmem:[%s4 + $0x1e8] sm:$0xff] %vm1302, %v1959
  %2024 = vst.msk [vmem:[%s4 + $0x1f0] sm:$0xff] %vm1302, %v1960
  %2025 = vst.msk [vmem:[%s4 + $0x1f8] sm:$0xff] %vm1302, %v1961
  // Predicated region
  $region18: #{vae_forward.16} parent=0 // pred_check
    _
  $region19: #{vae_forward.16} parent=0 // pred_check_branch
    %2027 = sbr.rel (0) target = $region21
  $region20: #{vae_forward.16} parent=0 // pred_region
    _
  $region21: #{vae_forward.16} parent=0 // pred_fallthru
    _
  // Predicated region
  $region22: #{vae_forward.16} parent=0 // pred_check
    _
  $region23: #{vae_forward.16} parent=0 // pred_check_branch
    %2029 = sbr.rel (0) target = $region25
  $region24: #{vae_forward.16} parent=0 // pred_region
    _
  $region25: #{vae_forward.16} parent=0 // pred_fallthru
    _

// kernel: vae_forward.17
$region0: #{vae_forward.17}
  #allocation0 [shape = 'u32[]', space=smem, size = 0x4, offset = 0x4, fixed_abs, tag = 'smem constant byte address 0x4 - core index']
  #allocation1 [shape = 'u32[144,128]{1,0:T(1,128)}', space=vmem, size = 0x12000, scoped, tag = 'internal scratch']
  %s0 = inlined_call_operand.vmem [shape: bf16[4,512,128], index: 0, kind: input, shape index: {}]
  %s1 = inlined_call_operand.vmem [shape: bf16[4,128,3], index: 1, kind: input, shape index: {}]
  %s2 = inlined_call_operand.vmem [shape: f32[1,1,3], index: 2, kind: input, shape index: {}]
  %s3 = inlined_call_operand.vmem [shape: f32[1,1,3], index: 3, kind: input, shape index: {}]
  %s4 = inlined_call_operand.vmem [shape: f32[4,512,3], index: 4, kind: output, shape index: {}]
  %s5 = sld [smem:[#allocation0]]
  $region26: #{vae_forward.17} parent=0
    _
  %s7 = ssub.s32 1, %s5
  %s8 = scalar_select 0, %s7, %s5
  // Predicated region
  $region2: #{vae_forward.17} parent=0 // pred_check
    _
  $region3: #{vae_forward.17} parent=0 // pred_check_branch
    %10 = sbr.rel (0) target = $region5
  $region4: #{vae_forward.17} parent=0 // pred_region
    _
  $region5: #{vae_forward.17} parent=0 // pred_fallthru
    _
  // Predicated region
  $region6: #{vae_forward.17} parent=0 // pred_check
    _
  $region7: #{vae_forward.17} parent=0 // pred_check_branch
    %12 = sbr.rel (0) target = $region9
  $region8: #{vae_forward.17} parent=0 // pred_region
    _
  $region9: #{vae_forward.17} parent=0 // pred_fallthru
    _
  // Predicated region
  $region10: #{vae_forward.17} parent=0 // pred_check
    _
  $region11: #{vae_forward.17} parent=0 // pred_check_branch
    %14 = sbr.rel (0) target = $region13
  $region12: #{vae_forward.17} parent=0 // pred_region
    _
  $region13: #{vae_forward.17} parent=0 // pred_fallthru
    _
  // Predicated region
  $region14: #{vae_forward.17} parent=0 // pred_check
    _
  $region15: #{vae_forward.17} parent=0 // pred_check_branch
    %16 = sbr.rel (0) target = $region17
  $region16: #{vae_forward.17} parent=0 // pred_region
    _
  $region17: #{vae_forward.17} parent=0 // pred_fallthru
    _
  %v18 = vld [vmem:[%s0] sm:$0xf]
  %v19 = vld [vmem:[%s0 + $0x4] sm:$0xf]
  %v20 = vld [vmem:[%s0 + $0x8] sm:$0xf]
  %v21 = vld [vmem:[%s0 + $0xc] sm:$0xf]
  %v22 = vld [vmem:[%s0 + $0x10] sm:$0xf]
  %v23 = vld [vmem:[%s0 + $0x14] sm:$0xf]
  %v24 = vld [vmem:[%s0 + $0x18] sm:$0xf]
  %v25 = vld [vmem:[%s0 + $0x1c] sm:$0xf]
  %v26 = vld [vmem:[%s0 + $0x20] sm:$0xf]
  %v27 = vld [vmem:[%s0 + $0x24] sm:$0xf]
  %v28 = vld [vmem:[%s0 + $0x28] sm:$0xf]
  %v29 = vld [vmem:[%s0 + $0x2c] sm:$0xf]
  %v30 = vld [vmem:[%s0 + $0x30] sm:$0xf]
  %v31 = vld [vmem:[%s0 + $0x34] sm:$0xf]
  %v32 = vld [vmem:[%s0 + $0x38] sm:$0xf]
  %v33 = vld [vmem:[%s0 + $0x3c] sm:$0xf]
  %v34 = vld [vmem:[%s0 + $0x40] sm:$0xf]
  %v35 = vld [vmem:[%s0 + $0x44] sm:$0xf]
  %v36 = vld [vmem:[%s0 + $0x48] sm:$0xf]
  %v37 = vld [vmem:[%s0 + $0x4c] sm:$0xf]
  %v38 = vld [vmem:[%s0 + $0x50] sm:$0xf]
  %v39 = vld [vmem:[%s0 + $0x54] sm:$0xf]
  %v40 = vld [vmem:[%s0 + $0x58] sm:$0xf]
  %v41 = vld [vmem:[%s0 + $0x5c] sm:$0xf]
  %v42 = vld [vmem:[%s0 + $0x60] sm:$0xf]
  %v43 = vld [vmem:[%s0 + $0x64] sm:$0xf]
  %v44 = vld [vmem:[%s0 + $0x68] sm:$0xf]
  %v45 = vld [vmem:[%s0 + $0x6c] sm:$0xf]
  %v46 = vld [vmem:[%s0 + $0x70] sm:$0xf]
  %v47 = vld [vmem:[%s0 + $0x74] sm:$0xf]
  %v48 = vld [vmem:[%s0 + $0x78] sm:$0xf]
  %v49 = vld [vmem:[%s0 + $0x7c] sm:$0xf]
  %v50 = vld [vmem:[%s0 + $0x80] sm:$0xf]
  %v51 = vld [vmem:[%s0 + $0x84] sm:$0xf]
  %v52 = vld [vmem:[%s0 + $0x88] sm:$0xf]
  %v53 = vld [vmem:[%s0 + $0x8c] sm:$0xf]
  %v54 = vld [vmem:[%s0 + $0x90] sm:$0xf]
  %v55 = vld [vmem:[%s0 + $0x94] sm:$0xf]
  %v56 = vld [vmem:[%s0 + $0x98] sm:$0xf]
  %v57 = vld [vmem:[%s0 + $0x9c] sm:$0xf]
  %v58 = vld [vmem:[%s0 + $0xa0] sm:$0xf]
  %v59 = vld [vmem:[%s0 + $0xa4] sm:$0xf]
  %v60 = vld [vmem:[%s0 + $0xa8] sm:$0xf]
  %v61 = vld [vmem:[%s0 + $0xac] sm:$0xf]
  %v62 = vld [vmem:[%s0 + $0xb0] sm:$0xf]
  %v63 = vld [vmem:[%s0 + $0xb4] sm:$0xf]
  %v64 = vld [vmem:[%s0 + $0xb8] sm:$0xf]
  %v65 = vld [vmem:[%s0 + $0xbc] sm:$0xf]
  %v66 = vld [vmem:[%s0 + $0xc0] sm:$0xf]
  %v67 = vld [vmem:[%s0 + $0xc4] sm:$0xf]
  %v68 = vld [vmem:[%s0 + $0xc8] sm:$0xf]
  %v69 = vld [vmem:[%s0 + $0xcc] sm:$0xf]
  %v70 = vld [vmem:[%s0 + $0xd0] sm:$0xf]
  %v71 = vld [vmem:[%s0 + $0xd4] sm:$0xf]
  %v72 = vld [vmem:[%s0 + $0xd8] sm:$0xf]
  %v73 = vld [vmem:[%s0 + $0xdc] sm:$0xf]
  %v74 = vld [vmem:[%s0 + $0xe0] sm:$0xf]
  %v75 = vld [vmem:[%s0 + $0xe4] sm:$0xf]
  %v76 = vld [vmem:[%s0 + $0xe8] sm:$0xf]
  %v77 = vld [vmem:[%s0 + $0xec] sm:$0xf]
  %v78 = vld [vmem:[%s0 + $0xf0] sm:$0xf]
  %v79 = vld [vmem:[%s0 + $0xf4] sm:$0xf]
  %v80 = vld [vmem:[%s0 + $0xf8] sm:$0xf]
  %v81 = vld [vmem:[%s0 + $0xfc] sm:$0xf]
  %v82 = vld [vmem:[%s0 + $0x100] sm:$0xf]
  %v83 = vld [vmem:[%s0 + $0x104] sm:$0xf]
  %v84 = vld [vmem:[%s0 + $0x108] sm:$0xf]
  %v85 = vld [vmem:[%s0 + $0x10c] sm:$0xf]
  %v86 = vld [vmem:[%s0 + $0x110] sm:$0xf]
  %v87 = vld [vmem:[%s0 + $0x114] sm:$0xf]
  %v88 = vld [vmem:[%s0 + $0x118] sm:$0xf]
  %v89 = vld [vmem:[%s0 + $0x11c] sm:$0xf]
  %v90 = vld [vmem:[%s0 + $0x120] sm:$0xf]
  %v91 = vld [vmem:[%s0 + $0x124] sm:$0xf]
  %v92 = vld [vmem:[%s0 + $0x128] sm:$0xf]
  %v93 = vld [vmem:[%s0 + $0x12c] sm:$0xf]
  %v94 = vld [vmem:[%s0 + $0x130] sm:$0xf]
  %v95 = vld [vmem:[%s0 + $0x134] sm:$0xf]
  %v96 = vld [vmem:[%s0 + $0x138] sm:$0xf]
  %v97 = vld [vmem:[%s0 + $0x13c] sm:$0xf]
  %v98 = vld [vmem:[%s0 + $0x140] sm:$0xf]
  %v99 = vld [vmem:[%s0 + $0x144] sm:$0xf]
  %v100 = vld [vmem:[%s0 + $0x148] sm:$0xf]
  %v101 = vld [vmem:[%s0 + $0x14c] sm:$0xf]
  %v102 = vld [vmem:[%s0 + $0x150] sm:$0xf]
  %v103 = vld [vmem:[%s0 + $0x154] sm:$0xf]
  %v104 = vld [vmem:[%s0 + $0x158] sm:$0xf]
  %v105 = vld [vmem:[%s0 + $0x15c] sm:$0xf]
  %v106 = vld [vmem:[%s0 + $0x160] sm:$0xf]
  %v107 = vld [vmem:[%s0 + $0x164] sm:$0xf]
  %v108 = vld [vmem:[%s0 + $0x168] sm:$0xf]
  %v109 = vld [vmem:[%s0 + $0x16c] sm:$0xf]
  %v110 = vld [vmem:[%s0 + $0x170] sm:$0xf]
  %v111 = vld [vmem:[%s0 + $0x174] sm:$0xf]
  %v112 = vld [vmem:[%s0 + $0x178] sm:$0xf]
  %v113 = vld [vmem:[%s0 + $0x17c] sm:$0xf]
  %v114 = vld [vmem:[%s0 + $0x180] sm:$0xf]
  %v115 = vld [vmem:[%s0 + $0x184] sm:$0xf]
  %v116 = vld [vmem:[%s0 + $0x188] sm:$0xf]
  %v117 = vld [vmem:[%s0 + $0x18c] sm:$0xf]
  %v118 = vld [vmem:[%s0 + $0x190] sm:$0xf]
  %v119 = vld [vmem:[%s0 + $0x194] sm:$0xf]
  %v120 = vld [vmem:[%s0 + $0x198] sm:$0xf]
  %v121 = vld [vmem:[%s0 + $0x19c] sm:$0xf]
  %v122 = vld [vmem:[%s0 + $0x1a0] sm:$0xf]
  %v123 = vld [vmem:[%s0 + $0x1a4] sm:$0xf]
  %v124 = vld [vmem:[%s0 + $0x1a8] sm:$0xf]
  %v125 = vld [vmem:[%s0 + $0x1ac] sm:$0xf]
  %v126 = vld [vmem:[%s0 + $0x1b0] sm:$0xf]
  %v127 = vld [vmem:[%s0 + $0x1b4] sm:$0xf]
  %v128 = vld [vmem:[%s0 + $0x1b8] sm:$0xf]
  %v129 = vld [vmem:[%s0 + $0x1bc] sm:$0xf]
  %v130 = vld [vmem:[%s0 + $0x1c0] sm:$0xf]
  %v131 = vld [vmem:[%s0 + $0x1c4] sm:$0xf]
  %v132 = vld [vmem:[%s0 + $0x1c8] sm:$0xf]
  %v133 = vld [vmem:[%s0 + $0x1cc] sm:$0xf]
  %v134 = vld [vmem:[%s0 + $0x1d0] sm:$0xf]
  %v135 = vld [vmem:[%s0 + $0x1d4] sm:$0xf]
  %v136 = vld [vmem:[%s0 + $0x1d8] sm:$0xf]
  %v137 = vld [vmem:[%s0 + $0x1dc] sm:$0xf]
  %v138 = vld [vmem:[%s0 + $0x1e0] sm:$0xf]
  %v139 = vld [vmem:[%s0 + $0x1e4] sm:$0xf]
  %v140 = vld [vmem:[%s0 + $0x1e8] sm:$0xf]
  %v141 = vld [vmem:[%s0 + $0x1ec] sm:$0xf]
  %v142 = vld [vmem:[%s0 + $0x1f0] sm:$0xf]
  %v143 = vld [vmem:[%s0 + $0x1f4] sm:$0xf]
  %v144 = vld [vmem:[%s0 + $0x1f8] sm:$0xf]
  %v145 = vld [vmem:[%s0 + $0x1fc] sm:$0xf]
  %v146 = vld [vmem:[%s0 + $0x200] sm:$0xf]
  %v147 = vld [vmem:[%s0 + $0x204] sm:$0xf]
  %v148 = vld [vmem:[%s0 + $0x208] sm:$0xf]
  %v149 = vld [vmem:[%s0 + $0x20c] sm:$0xf]
  %v150 = vld [vmem:[%s0 + $0x210] sm:$0xf]
  %v151 = vld [vmem:[%s0 + $0x214] sm:$0xf]
  %v152 = vld [vmem:[%s0 + $0x218] sm:$0xf]
  %v153 = vld [vmem:[%s0 + $0x21c] sm:$0xf]
  %v154 = vld [vmem:[%s0 + $0x220] sm:$0xf]
  %v155 = vld [vmem:[%s0 + $0x224] sm:$0xf]
  %v156 = vld [vmem:[%s0 + $0x228] sm:$0xf]
  %v157 = vld [vmem:[%s0 + $0x22c] sm:$0xf]
  %v158 = vld [vmem:[%s0 + $0x230] sm:$0xf]
  %v159 = vld [vmem:[%s0 + $0x234] sm:$0xf]
  %v160 = vld [vmem:[%s0 + $0x238] sm:$0xf]
  %v161 = vld [vmem:[%s0 + $0x23c] sm:$0xf]
  %v162 = vld [vmem:[%s0 + $0x240] sm:$0xf]
  %v163 = vld [vmem:[%s0 + $0x244] sm:$0xf]
  %v164 = vld [vmem:[%s0 + $0x248] sm:$0xf]
  %v165 = vld [vmem:[%s0 + $0x24c] sm:$0xf]
  %v166 = vld [vmem:[%s0 + $0x250] sm:$0xf]
  %v167 = vld [vmem:[%s0 + $0x254] sm:$0xf]
  %v168 = vld [vmem:[%s0 + $0x258] sm:$0xf]
  %v169 = vld [vmem:[%s0 + $0x25c] sm:$0xf]
  %v170 = vld [vmem:[%s0 + $0x260] sm:$0xf]
  %v171 = vld [vmem:[%s0 + $0x264] sm:$0xf]
  %v172 = vld [vmem:[%s0 + $0x268] sm:$0xf]
  %v173 = vld [vmem:[%s0 + $0x26c] sm:$0xf]
  %v174 = vld [vmem:[%s0 + $0x270] sm:$0xf]
  %v175 = vld [vmem:[%s0 + $0x274] sm:$0xf]
  %v176 = vld [vmem:[%s0 + $0x278] sm:$0xf]
  %v177 = vld [vmem:[%s0 + $0x27c] sm:$0xf]
  %v178 = vld [vmem:[%s0 + $0x280] sm:$0xf]
  %v179 = vld [vmem:[%s0 + $0x284] sm:$0xf]
  %v180 = vld [vmem:[%s0 + $0x288] sm:$0xf]
  %v181 = vld [vmem:[%s0 + $0x28c] sm:$0xf]
  %v182 = vld [vmem:[%s0 + $0x290] sm:$0xf]
  %v183 = vld [vmem:[%s0 + $0x294] sm:$0xf]
  %v184 = vld [vmem:[%s0 + $0x298] sm:$0xf]
  %v185 = vld [vmem:[%s0 + $0x29c] sm:$0xf]
  %v186 = vld [vmem:[%s0 + $0x2a0] sm:$0xf]
  %v187 = vld [vmem:[%s0 + $0x2a4] sm:$0xf]
  %v188 = vld [vmem:[%s0 + $0x2a8] sm:$0xf]
  %v189 = vld [vmem:[%s0 + $0x2ac] sm:$0xf]
  %v190 = vld [vmem:[%s0 + $0x2b0] sm:$0xf]
  %v191 = vld [vmem:[%s0 + $0x2b4] sm:$0xf]
  %v192 = vld [vmem:[%s0 + $0x2b8] sm:$0xf]
  %v193 = vld [vmem:[%s0 + $0x2bc] sm:$0xf]
  %v194 = vld [vmem:[%s0 + $0x2c0] sm:$0xf]
  %v195 = vld [vmem:[%s0 + $0x2c4] sm:$0xf]
  %v196 = vld [vmem:[%s0 + $0x2c8] sm:$0xf]
  %v197 = vld [vmem:[%s0 + $0x2cc] sm:$0xf]
  %v198 = vld [vmem:[%s0 + $0x2d0] sm:$0xf]
  %v199 = vld [vmem:[%s0 + $0x2d4] sm:$0xf]
  %v200 = vld [vmem:[%s0 + $0x2d8] sm:$0xf]
  %v201 = vld [vmem:[%s0 + $0x2dc] sm:$0xf]
  %v202 = vld [vmem:[%s0 + $0x2e0] sm:$0xf]
  %v203 = vld [vmem:[%s0 + $0x2e4] sm:$0xf]
  %v204 = vld [vmem:[%s0 + $0x2e8] sm:$0xf]
  %v205 = vld [vmem:[%s0 + $0x2ec] sm:$0xf]
  %v206 = vld [vmem:[%s0 + $0x2f0] sm:$0xf]
  %v207 = vld [vmem:[%s0 + $0x2f4] sm:$0xf]
  %v208 = vld [vmem:[%s0 + $0x2f8] sm:$0xf]
  %v209 = vld [vmem:[%s0 + $0x2fc] sm:$0xf]
  %v210 = vld [vmem:[%s0 + $0x300] sm:$0xf]
  %v211 = vld [vmem:[%s0 + $0x304] sm:$0xf]
  %v212 = vld [vmem:[%s0 + $0x308] sm:$0xf]
  %v213 = vld [vmem:[%s0 + $0x30c] sm:$0xf]
  %v214 = vld [vmem:[%s0 + $0x310] sm:$0xf]
  %v215 = vld [vmem:[%s0 + $0x314] sm:$0xf]
  %v216 = vld [vmem:[%s0 + $0x318] sm:$0xf]
  %v217 = vld [vmem:[%s0 + $0x31c] sm:$0xf]
  %v218 = vld [vmem:[%s0 + $0x320] sm:$0xf]
  %v219 = vld [vmem:[%s0 + $0x324] sm:$0xf]
  %v220 = vld [vmem:[%s0 + $0x328] sm:$0xf]
  %v221 = vld [vmem:[%s0 + $0x32c] sm:$0xf]
  %v222 = vld [vmem:[%s0 + $0x330] sm:$0xf]
  %v223 = vld [vmem:[%s0 + $0x334] sm:$0xf]
  %v224 = vld [vmem:[%s0 + $0x338] sm:$0xf]
  %v225 = vld [vmem:[%s0 + $0x33c] sm:$0xf]
  %v226 = vld [vmem:[%s0 + $0x340] sm:$0xf]
  %v227 = vld [vmem:[%s0 + $0x344] sm:$0xf]
  %v228 = vld [vmem:[%s0 + $0x348] sm:$0xf]
  %v229 = vld [vmem:[%s0 + $0x34c] sm:$0xf]
  %v230 = vld [vmem:[%s0 + $0x350] sm:$0xf]
  %v231 = vld [vmem:[%s0 + $0x354] sm:$0xf]
  %v232 = vld [vmem:[%s0 + $0x358] sm:$0xf]
  %v233 = vld [vmem:[%s0 + $0x35c] sm:$0xf]
  %v234 = vld [vmem:[%s0 + $0x360] sm:$0xf]
  %v235 = vld [vmem:[%s0 + $0x364] sm:$0xf]
  %v236 = vld [vmem:[%s0 + $0x368] sm:$0xf]
  %v237 = vld [vmem:[%s0 + $0x36c] sm:$0xf]
  %v238 = vld [vmem:[%s0 + $0x370] sm:$0xf]
  %v239 = vld [vmem:[%s0 + $0x374] sm:$0xf]
  %v240 = vld [vmem:[%s0 + $0x378] sm:$0xf]
  %v241 = vld [vmem:[%s0 + $0x37c] sm:$0xf]
  %v242 = vld [vmem:[%s0 + $0x380] sm:$0xf]
  %v243 = vld [vmem:[%s0 + $0x384] sm:$0xf]
  %v244 = vld [vmem:[%s0 + $0x388] sm:$0xf]
  %v245 = vld [vmem:[%s0 + $0x38c] sm:$0xf]
  %v246 = vld [vmem:[%s0 + $0x390] sm:$0xf]
  %v247 = vld [vmem:[%s0 + $0x394] sm:$0xf]
  %v248 = vld [vmem:[%s0 + $0x398] sm:$0xf]
  %v249 = vld [vmem:[%s0 + $0x39c] sm:$0xf]
  %v250 = vld [vmem:[%s0 + $0x3a0] sm:$0xf]
  %v251 = vld [vmem:[%s0 + $0x3a4] sm:$0xf]
  %v252 = vld [vmem:[%s0 + $0x3a8] sm:$0xf]
  %v253 = vld [vmem:[%s0 + $0x3ac] sm:$0xf]
  %v254 = vld [vmem:[%s0 + $0x3b0] sm:$0xf]
  %v255 = vld [vmem:[%s0 + $0x3b4] sm:$0xf]
  %v256 = vld [vmem:[%s0 + $0x3b8] sm:$0xf]
  %v257 = vld [vmem:[%s0 + $0x3bc] sm:$0xf]
  %v258 = vld [vmem:[%s0 + $0x3c0] sm:$0xf]
  %v259 = vld [vmem:[%s0 + $0x3c4] sm:$0xf]
  %v260 = vld [vmem:[%s0 + $0x3c8] sm:$0xf]
  %v261 = vld [vmem:[%s0 + $0x3cc] sm:$0xf]
  %v262 = vld [vmem:[%s0 + $0x3d0] sm:$0xf]
  %v263 = vld [vmem:[%s0 + $0x3d4] sm:$0xf]
  %v264 = vld [vmem:[%s0 + $0x3d8] sm:$0xf]
  %v265 = vld [vmem:[%s0 + $0x3dc] sm:$0xf]
  %v266 = vld [vmem:[%s0 + $0x3e0] sm:$0xf]
  %v267 = vld [vmem:[%s0 + $0x3e4] sm:$0xf]
  %v268 = vld [vmem:[%s0 + $0x3e8] sm:$0xf]
  %v269 = vld [vmem:[%s0 + $0x3ec] sm:$0xf]
  %v270 = vld [vmem:[%s0 + $0x3f0] sm:$0xf]
  %v271 = vld [vmem:[%s0 + $0x3f4] sm:$0xf]
  %v272 = vld [vmem:[%s0 + $0x3f8] sm:$0xf]
  %v273 = vld [vmem:[%s0 + $0x3fc] sm:$0xf]
  %v274 = vld [vmem:[%s1] sm:$0xf]
  %v275 = vld [vmem:[%s1 + $0x4] sm:$0xf]
  %v276 = vld [vmem:[%s1 + $0x8] sm:$0xf]
  %v277 = vld [vmem:[%s1 + $0xc] sm:$0xf]
  %v278 = vld [vmem:[%s1 + $0x10] sm:$0xf]
  %v279 = vld [vmem:[%s1 + $0x14] sm:$0xf]
  %v280 = vld [vmem:[%s1 + $0x18] sm:$0xf]
  %v281 = vld [vmem:[%s1 + $0x1c] sm:$0xf]
  %v282 = vld [vmem:[%s1 + $0x20] sm:$0xf]
  %v283 = vld [vmem:[%s1 + $0x24] sm:$0xf]
  %v284 = vld [vmem:[%s1 + $0x28] sm:$0xf]
  %v285 = vld [vmem:[%s1 + $0x2c] sm:$0xf]
  %v286 = vld [vmem:[%s1 + $0x30] sm:$0xf]
  %v287 = vld [vmem:[%s1 + $0x34] sm:$0xf]
  %v288 = vld [vmem:[%s1 + $0x38] sm:$0xf]
  %v289 = vld [vmem:[%s1 + $0x3c] sm:$0xf]
  %v290 = vld [vmem:[%s1 + $0x40] sm:$0xf]
  %v291 = vld [vmem:[%s1 + $0x44] sm:$0xf]
  %v292 = vld [vmem:[%s1 + $0x48] sm:$0xf]
  %v293 = vld [vmem:[%s1 + $0x4c] sm:$0xf]
  %v294 = vld [vmem:[%s1 + $0x50] sm:$0xf]
  %v295 = vld [vmem:[%s1 + $0x54] sm:$0xf]
  %v296 = vld [vmem:[%s1 + $0x58] sm:$0xf]
  %v297 = vld [vmem:[%s1 + $0x5c] sm:$0xf]
  %v298 = vld [vmem:[%s1 + $0x60] sm:$0xf]
  %v299 = vld [vmem:[%s1 + $0x64] sm:$0xf]
  %v300 = vld [vmem:[%s1 + $0x68] sm:$0xf]
  %v301 = vld [vmem:[%s1 + $0x6c] sm:$0xf]
  %v302 = vld [vmem:[%s1 + $0x70] sm:$0xf]
  %v303 = vld [vmem:[%s1 + $0x74] sm:$0xf]
  %v304 = vld [vmem:[%s1 + $0x78] sm:$0xf]
  %v305 = vld [vmem:[%s1 + $0x7c] sm:$0xf]
  %v306 = vld [vmem:[%s1 + $0x80] sm:$0xf]
  %v307 = vld [vmem:[%s1 + $0x84] sm:$0xf]
  %v308 = vld [vmem:[%s1 + $0x88] sm:$0xf]
  %v309 = vld [vmem:[%s1 + $0x8c] sm:$0xf]
  %v310 = vld [vmem:[%s1 + $0x90] sm:$0xf]
  %v311 = vld [vmem:[%s1 + $0x94] sm:$0xf]
  %v312 = vld [vmem:[%s1 + $0x98] sm:$0xf]
  %v313 = vld [vmem:[%s1 + $0x9c] sm:$0xf]
  %v314 = vld [vmem:[%s1 + $0xa0] sm:$0xf]
  %v315 = vld [vmem:[%s1 + $0xa4] sm:$0xf]
  %v316 = vld [vmem:[%s1 + $0xa8] sm:$0xf]
  %v317 = vld [vmem:[%s1 + $0xac] sm:$0xf]
  %v318 = vld [vmem:[%s1 + $0xb0] sm:$0xf]
  %v319 = vld [vmem:[%s1 + $0xb4] sm:$0xf]
  %v320 = vld [vmem:[%s1 + $0xb8] sm:$0xf]
  %v321 = vld [vmem:[%s1 + $0xbc] sm:$0xf]
  %v322 = vld [vmem:[%s1 + $0xc0] sm:$0xf]
  %v323 = vld [vmem:[%s1 + $0xc4] sm:$0xf]
  %v324 = vld [vmem:[%s1 + $0xc8] sm:$0xf]
  %v325 = vld [vmem:[%s1 + $0xcc] sm:$0xf]
  %v326 = vld [vmem:[%s1 + $0xd0] sm:$0xf]
  %v327 = vld [vmem:[%s1 + $0xd4] sm:$0xf]
  %v328 = vld [vmem:[%s1 + $0xd8] sm:$0xf]
  %v329 = vld [vmem:[%s1 + $0xdc] sm:$0xf]
  %v330 = vld [vmem:[%s1 + $0xe0] sm:$0xf]
  %v331 = vld [vmem:[%s1 + $0xe4] sm:$0xf]
  %v332 = vld [vmem:[%s1 + $0xe8] sm:$0xf]
  %v333 = vld [vmem:[%s1 + $0xec] sm:$0xf]
  %v334 = vld [vmem:[%s1 + $0xf0] sm:$0xf]
  %v335 = vld [vmem:[%s1 + $0xf4] sm:$0xf]
  %v336 = vld [vmem:[%s1 + $0xf8] sm:$0xf]
  %v337 = vld [vmem:[%s1 + $0xfc] sm:$0xf]
  %v402 = vunpack.c.l.b16 %v18
  %v403 = vunpack.c.l.b16 %v19
  %v404 = vunpack.c.l.b16 %v20
  %v405 = vunpack.c.l.b16 %v21
  %v406 = vunpack.c.l.b16 %v22
  %v407 = vunpack.c.l.b16 %v23
  %v408 = vunpack.c.l.b16 %v24
  %v409 = vunpack.c.l.b16 %v25
  %v410 = vunpack.c.l.b16 %v26
  %v411 = vunpack.c.l.b16 %v27
  %v412 = vunpack.c.l.b16 %v28
  %v413 = vunpack.c.l.b16 %v29
  %v414 = vunpack.c.l.b16 %v30
  %v415 = vunpack.c.l.b16 %v31
  %v416 = vunpack.c.l.b16 %v32
  %v417 = vunpack.c.l.b16 %v33
  %v418 = vunpack.c.l.b16 %v34
  %v419 = vunpack.c.l.b16 %v35
  %v420 = vunpack.c.l.b16 %v36
  %v421 = vunpack.c.l.b16 %v37
  %v422 = vunpack.c.l.b16 %v38
  %v423 = vunpack.c.l.b16 %v39
  %v424 = vunpack.c.l.b16 %v40
  %v425 = vunpack.c.l.b16 %v41
  %v426 = vunpack.c.l.b16 %v42
  %v427 = vunpack.c.l.b16 %v43
  %v428 = vunpack.c.l.b16 %v44
  %v429 = vunpack.c.l.b16 %v45
  %v430 = vunpack.c.l.b16 %v46
  %v431 = vunpack.c.l.b16 %v47
  %v432 = vunpack.c.l.b16 %v48
  %v433 = vunpack.c.l.b16 %v49
  %v434 = vunpack.c.l.b16 %v50
  %v435 = vunpack.c.l.b16 %v51
  %v436 = vunpack.c.l.b16 %v52
  %v437 = vunpack.c.l.b16 %v53
  %v438 = vunpack.c.l.b16 %v54
  %v439 = vunpack.c.l.b16 %v55
  %v440 = vunpack.c.l.b16 %v56
  %v441 = vunpack.c.l.b16 %v57
  %v442 = vunpack.c.l.b16 %v58
  %v443 = vunpack.c.l.b16 %v59
  %v444 = vunpack.c.l.b16 %v60
  %v445 = vunpack.c.l.b16 %v61
  %v446 = vunpack.c.l.b16 %v62
  %v447 = vunpack.c.l.b16 %v63
  %v448 = vunpack.c.l.b16 %v64
  %v449 = vunpack.c.l.b16 %v65
  %v450 = vunpack.c.l.b16 %v66
  %v451 = vunpack.c.l.b16 %v67
  %v452 = vunpack.c.l.b16 %v68
  %v453 = vunpack.c.l.b16 %v69
  %v454 = vunpack.c.l.b16 %v70
  %v455 = vunpack.c.l.b16 %v71
  %v456 = vunpack.c.l.b16 %v72
  %v457 = vunpack.c.l.b16 %v73
  %v458 = vunpack.c.l.b16 %v74
  %v459 = vunpack.c.l.b16 %v75
  %v460 = vunpack.c.l.b16 %v76
  %v461 = vunpack.c.l.b16 %v77
  %v462 = vunpack.c.l.b16 %v78
  %v463 = vunpack.c.l.b16 %v79
  %v464 = vunpack.c.l.b16 %v80
  %v465 = vunpack.c.l.b16 %v81
  %v466 = vpack.c.b16 %v403, %v402
  %v467 = vpack.c.b16 %v405, %v404
  %v468 = vpack.c.b16 %v407, %v406
  %v469 = vpack.c.b16 %v409, %v408
  %v470 = vpack.c.b16 %v411, %v410
  %v471 = vpack.c.b16 %v413, %v412
  %v472 = vpack.c.b16 %v415, %v414
  %v473 = vpack.c.b16 %v417, %v416
  %v474 = vpack.c.b16 %v419, %v418
  %v475 = vpack.c.b16 %v421, %v420
  %v476 = vpack.c.b16 %v423, %v422
  %v477 = vpack.c.b16 %v425, %v424
  %v478 = vpack.c.b16 %v427, %v426
  %v479 = vpack.c.b16 %v429, %v428
  %v480 = vpack.c.b16 %v431, %v430
  %v481 = vpack.c.b16 %v433, %v432
  %v482 = vpack.c.b16 %v435, %v434
  %v483 = vpack.c.b16 %v437, %v436
  %v484 = vpack.c.b16 %v439, %v438
  %v485 = vpack.c.b16 %v441, %v440
  %v486 = vpack.c.b16 %v443, %v442
  %v487 = vpack.c.b16 %v445, %v444
  %v488 = vpack.c.b16 %v447, %v446
  %v489 = vpack.c.b16 %v449, %v448
  %v490 = vpack.c.b16 %v451, %v450
  %v491 = vpack.c.b16 %v453, %v452
  %v492 = vpack.c.b16 %v455, %v454
  %v493 = vpack.c.b16 %v457, %v456
  %v494 = vpack.c.b16 %v459, %v458
  %v495 = vpack.c.b16 %v461, %v460
  %v496 = vpack.c.b16 %v463, %v462
  %v497 = vpack.c.b16 %v465, %v464
  %v546 = vunpack.c.l.b16 %v274
  %v547 = vunpack.c.l.b16 %v275
  %v548 = vunpack.c.l.b16 %v276
  %v549 = vunpack.c.l.b16 %v277
  %v550 = vunpack.c.l.b16 %v278
  %v551 = vunpack.c.l.b16 %v279
  %v552 = vunpack.c.l.b16 %v280
  %v553 = vunpack.c.l.b16 %v281
  %v554 = vunpack.c.l.b16 %v282
  %v555 = vunpack.c.l.b16 %v283
  %v556 = vunpack.c.l.b16 %v284
  %v557 = vunpack.c.l.b16 %v285
  %v558 = vunpack.c.l.b16 %v286
  %v559 = vunpack.c.l.b16 %v287
  %v560 = vunpack.c.l.b16 %v288
  %v561 = vunpack.c.l.b16 %v289
  %v562 = vpack.c.b16 %v547, %v546
  %v563 = vpack.c.b16 %v549, %v548
  %v564 = vpack.c.b16 %v551, %v550
  %v565 = vpack.c.b16 %v553, %v552
  %v566 = vpack.c.b16 %v555, %v554
  %v567 = vpack.c.b16 %v557, %v556
  %v568 = vpack.c.b16 %v559, %v558
  %v569 = vpack.c.b16 %v561, %v560
  %578 = vmatprep.subr.bf16.mxu0 0
  %579 = vmatpush1.bf16.msra.mxu0 %v562
  %580 = vmatprep.subr.bf16.mxu0 0
  %581 = vmatpush1.bf16.msra.mxu0 %v563
  %582 = vmatprep.subr.bf16.mxu0 0
  %583 = vmatpush1.bf16.msra.mxu0 %v564
  %584 = vmatprep.subr.bf16.mxu0 0
  %585 = vmatpush1.bf16.msra.mxu0 %v565
  %586 = vmatprep.subr.bf16.mxu0 0
  %587 = vmatpush1.bf16.msra.mxu0 %v566
  %588 = vmatprep.subr.bf16.mxu0 0
  %589 = vmatpush1.bf16.msra.mxu0 %v567
  %590 = vmatprep.subr.bf16.mxu0 0
  %591 = vmatpush1.bf16.msra.mxu0 %v568
  %592 = vmatprep.subr.bf16.mxu0 0
  %593 = vmatpush1.bf16.msra.mxu0 %v569
  %594 = vmatprep.subr.bf16.mxu0 0
  %595 = vmatpush1.bf16.msra.mxu0 0
  %596 = vmatprep.subr.bf16.mxu0 0
  %597 = vmatpush1.bf16.msra.mxu0 0
  %598 = vmatprep.subr.bf16.mxu0 0
  %599 = vmatpush1.bf16.msra.mxu0 0
  %600 = vmatprep.subr.bf16.mxu0 0
  %601 = vmatpush1.bf16.msra.mxu0 0
  %602 = vmatprep.subr.bf16.mxu0 0
  %603 = vmatpush1.bf16.msra.mxu0 0
  %604 = vmatprep.subr.bf16.mxu0 0
  %605 = vmatpush1.bf16.msra.mxu0 0
  %606 = vmatprep.subr.bf16.mxu0 0
  %607 = vmatpush1.bf16.msra.mxu0 0
  %608 = vmatprep.subr.bf16.mxu0 0
  %609 = vmatpush1.bf16.msra.mxu0 0
  %610 = vmatprep.mubr.bf16.mxu0 0
  %611 = vmatmul.mubr.bf16.gmra.mrb[0].mxu0 %v466
  %v612 = vpop.f32.mrb[0].mxu0
  %v613 = vadd.f32 0.0, %v612
  %v614 = vpop.f32.mrb[0].mxu0
  %v615 = vpop.f32.mrb[0].mxu0
  %v616 = vadd.f32 0.0, %v615
  %v617 = vpop.f32.mrb[0].mxu0
  %618 = vmatprep.mubr.bf16.mxu0 0
  %619 = vmatmul.mubr.bf16.gmra.mrb[0].mxu0 %v467
  %v620 = vpop.f32.mrb[0].mxu0
  %v621 = vadd.f32 0.0, %v620
  %v622 = vpop.f32.mrb[0].mxu0
  %v623 = vpop.f32.mrb[0].mxu0
  %v624 = vadd.f32 0.0, %v623
  %v625 = vpop.f32.mrb[0].mxu0
  %626 = vmatprep.mubr.bf16.mxu0 0
  %627 = vmatmul.mubr.bf16.gmra.mrb[0].mxu0 %v468
  %v628 = vpop.f32.mrb[0].mxu0
  %v629 = vadd.f32 0.0, %v628
  %v630 = vpop.f32.mrb[0].mxu0
  %v631 = vpop.f32.mrb[0].mxu0
  %v632 = vadd.f32 0.0, %v631
  %v633 = vpop.f32.mrb[0].mxu0
  %634 = vmatprep.mubr.bf16.mxu0 0
  %635 = vmatmul.mubr.bf16.gmra.mrb[0].mxu0 %v469
  %v636 = vpop.f32.mrb[0].mxu0
  %v637 = vadd.f32 0.0, %v636
  %v638 = vpop.f32.mrb[0].mxu0
  %v639 = vpop.f32.mrb[0].mxu0
  %v640 = vadd.f32 0.0, %v639
  %v641 = vpop.f32.mrb[0].mxu0
  %642 = vmatprep.mubr.bf16.mxu0 0
  %643 = vmatmul.mubr.bf16.gmra.mrb[0].mxu0 %v470
  %v644 = vpop.f32.mrb[0].mxu0
  %v645 = vadd.f32 0.0, %v644
  %v646 = vpop.f32.mrb[0].mxu0
  %v647 = vpop.f32.mrb[0].mxu0
  %v648 = vadd.f32 0.0, %v647
  %v649 = vpop.f32.mrb[0].mxu0
  %650 = vmatprep.mubr.bf16.mxu0 0
  %651 = vmatmul.mubr.bf16.gmra.mrb[0].mxu0 %v471
  %v652 = vpop.f32.mrb[0].mxu0
  %v653 = vadd.f32 0.0, %v652
  %v654 = vpop.f32.mrb[0].mxu0
  %v655 = vpop.f32.mrb[0].mxu0
  %v656 = vadd.f32 0.0, %v655
  %v657 = vpop.f32.mrb[0].mxu0
  %658 = vmatprep.mubr.bf16.mxu0 0
  %659 = vmatmul.mubr.bf16.gmra.mrb[0].mxu0 %v472
  %v660 = vpop.f32.mrb[0].mxu0
  %v661 = vadd.f32 0.0, %v660
  %v662 = vpop.f32.mrb[0].mxu0
  %v663 = vpop.f32.mrb[0].mxu0
  %v664 = vadd.f32 0.0, %v663
  %v665 = vpop.f32.mrb[0].mxu0
  %666 = vmatprep.mubr.bf16.mxu0 0
  %667 = vmatmul.mubr.bf16.gmra.mrb[0].mxu0 %v473
  %v668 = vpop.f32.mrb[0].mxu0
  %v669 = vadd.f32 0.0, %v668
  %v670 = vpop.f32.mrb[0].mxu0
  %v671 = vpop.f32.mrb[0].mxu0
  %v672 = vadd.f32 0.0, %v671
  %v673 = vpop.f32.mrb[0].mxu0
  %674 = vmatprep.mubr.bf16.mxu0 0
  %675 = vmatmul.mubr.bf16.gmra.mrb[0].mxu0 %v474
  %v676 = vpop.f32.mrb[0].mxu0
  %v677 = vadd.f32 0.0, %v676
  %v678 = vpop.f32.mrb[0].mxu0
  %v679 = vpop.f32.mrb[0].mxu0
  %v680 = vadd.f32 0.0, %v679
  %v681 = vpop.f32.mrb[0].mxu0
  %682 = vmatprep.mubr.bf16.mxu0 0
  %683 = vmatmul.mubr.bf16.gmra.mrb[0].mxu0 %v475
  %v684 = vpop.f32.mrb[0].mxu0
  %v685 = vadd.f32 0.0, %v684
  %v686 = vpop.f32.mrb[0].mxu0
  %v687 = vpop.f32.mrb[0].mxu0
  %v688 = vadd.f32 0.0, %v687
  %v689 = vpop.f32.mrb[0].mxu0
  %690 = vmatprep.mubr.bf16.mxu0 0
  %691 = vmatmul.mubr.bf16.gmra.mrb[0].mxu0 %v476
  %v692 = vpop.f32.mrb[0].mxu0
  %v693 = vadd.f32 0.0, %v692
  %v694 = vpop.f32.mrb[0].mxu0
  %v695 = vpop.f32.mrb[0].mxu0
  %v696 = vadd.f32 0.0, %v695
  %v697 = vpop.f32.mrb[0].mxu0
  %698 = vmatprep.mubr.bf16.mxu0 0
  %699 = vmatmul.mubr.bf16.gmra.mrb[0].mxu0 %v477
  %v700 = vpop.f32.mrb[0].mxu0
  %v701 = vadd.f32 0.0, %v700
  %v702 = vpop.f32.mrb[0].mxu0
  %v703 = vpop.f32.mrb[0].mxu0
  %v704 = vadd.f32 0.0, %v703
  %v705 = vpop.f32.mrb[0].mxu0
  %706 = vmatprep.mubr.bf16.mxu0 0
  %707 = vmatmul.mubr.bf16.gmra.mrb[0].mxu0 %v478
  %v708 = vpop.f32.mrb[0].mxu0
  %v709 = vadd.f32 0.0, %v708
  %v710 = vpop.f32.mrb[0].mxu0
  %v711 = vpop.f32.mrb[0].mxu0
  %v712 = vadd.f32 0.0, %v711
  %v713 = vpop.f32.mrb[0].mxu0
  %714 = vmatprep.mubr.bf16.mxu0 0
  %715 = vmatmul.mubr.bf16.gmra.mrb[0].mxu0 %v479
  %v716 = vpop.f32.mrb[0].mxu0
  %v717 = vadd.f32 0.0, %v716
  %v718 = vpop.f32.mrb[0].mxu0
  %v719 = vpop.f32.mrb[0].mxu0
  %v720 = vadd.f32 0.0, %v719
  %v721 = vpop.f32.mrb[0].mxu0
  %722 = vmatprep.mubr.bf16.mxu0 0
  %723 = vmatmul.mubr.bf16.gmra.mrb[0].mxu0 %v480
  %v724 = vpop.f32.mrb[0].mxu0
  %v725 = vadd.f32 0.0, %v724
  %v726 = vpop.f32.mrb[0].mxu0
  %v727 = vpop.f32.mrb[0].mxu0
  %v728 = vadd.f32 0.0, %v727
  %v729 = vpop.f32.mrb[0].mxu0
  %730 = vmatprep.mubr.bf16.mxu0 0
  %731 = vmatmul.mubr.bf16.gmra.mrb[0].mxu0 %v481
  %v732 = vpop.f32.mrb[0].mxu0
  %v733 = vadd.f32 0.0, %v732
  %v734 = vpop.f32.mrb[0].mxu0
  %v735 = vpop.f32.mrb[0].mxu0
  %v736 = vadd.f32 0.0, %v735
  %v737 = vpop.f32.mrb[0].mxu0
  %738 = vmatprep.mubr.bf16.mxu0 0
  %739 = vmatmul.mubr.bf16.gmra.mrb[0].mxu0 %v482
  %v740 = vpop.f32.mrb[0].mxu0
  %v741 = vadd.f32 0.0, %v740
  %v742 = vpop.f32.mrb[0].mxu0
  %v743 = vpop.f32.mrb[0].mxu0
  %v744 = vadd.f32 0.0, %v743
  %v745 = vpop.f32.mrb[0].mxu0
  %746 = vmatprep.mubr.bf16.mxu0 0
  %747 = vmatmul.mubr.bf16.gmra.mrb[0].mxu0 %v483
  %v748 = vpop.f32.mrb[0].mxu0
  %v749 = vadd.f32 0.0, %v748
  %v750 = vpop.f32.mrb[0].mxu0
  %v751 = vpop.f32.mrb[0].mxu0
  %v752 = vadd.f32 0.0, %v751
  %v753 = vpop.f32.mrb[0].mxu0
  %754 = vmatprep.mubr.bf16.mxu0 0
  %755 = vmatmul.mubr.bf16.gmra.mrb[0].mxu0 %v484
  %v756 = vpop.f32.mrb[0].mxu0
  %v757 = vadd.f32 0.0, %v756
  %v758 = vpop.f32.mrb[0].mxu0
  %v759 = vpop.f32.mrb[0].mxu0
  %v760 = vadd.f32 0.0, %v759
  %v761 = vpop.f32.mrb[0].mxu0
  %762 = vmatprep.mubr.bf16.mxu0 0
  %763 = vmatmul.mubr.bf16.gmra.mrb[0].mxu0 %v485
  %v764 = vpop.f32.mrb[0].mxu0
  %v765 = vadd.f32 0.0, %v764
  %v766 = vpop.f32.mrb[0].mxu0
  %v767 = vpop.f32.mrb[0].mxu0
  %v768 = vadd.f32 0.0, %v767
  %v769 = vpop.f32.mrb[0].mxu0
  %770 = vmatprep.mubr.bf16.mxu0 0
  %771 = vmatmul.mubr.bf16.gmra.mrb[0].mxu0 %v486
  %v772 = vpop.f32.mrb[0].mxu0
  %v773 = vadd.f32 0.0, %v772
  %v774 = vpop.f32.mrb[0].mxu0
  %v775 = vpop.f32.mrb[0].mxu0
  %v776 = vadd.f32 0.0, %v775
  %v777 = vpop.f32.mrb[0].mxu0
  %778 = vmatprep.mubr.bf16.mxu0 0
  %779 = vmatmul.mubr.bf16.gmra.mrb[0].mxu0 %v487
  %v780 = vpop.f32.mrb[0].mxu0
  %v781 = vadd.f32 0.0, %v780
  %v782 = vpop.f32.mrb[0].mxu0
  %v783 = vpop.f32.mrb[0].mxu0
  %v784 = vadd.f32 0.0, %v783
  %v785 = vpop.f32.mrb[0].mxu0
  %786 = vmatprep.mubr.bf16.mxu0 0
  %787 = vmatmul.mubr.bf16.gmra.mrb[0].mxu0 %v488
  %v788 = vpop.f32.mrb[0].mxu0
  %v789 = vadd.f32 0.0, %v788
  %v790 = vpop.f32.mrb[0].mxu0
  %v791 = vpop.f32.mrb[0].mxu0
  %v792 = vadd.f32 0.0, %v791
  %v793 = vpop.f32.mrb[0].mxu0
  %794 = vmatprep.mubr.bf16.mxu0 0
  %795 = vmatmul.mubr.bf16.gmra.mrb[0].mxu0 %v489
  %v796 = vpop.f32.mrb[0].mxu0
  %v797 = vadd.f32 0.0, %v796
  %v798 = vpop.f32.mrb[0].mxu0
  %v799 = vpop.f32.mrb[0].mxu0
  %v800 = vadd.f32 0.0, %v799
  %v801 = vpop.f32.mrb[0].mxu0
  %802 = vmatprep.mubr.bf16.mxu0 0
  %803 = vmatmul.mubr.bf16.gmra.mrb[0].mxu0 %v490
  %v804 = vpop.f32.mrb[0].mxu0
  %v805 = vadd.f32 0.0, %v804
  %v806 = vpop.f32.mrb[0].mxu0
  %v807 = vpop.f32.mrb[0].mxu0
  %v808 = vadd.f32 0.0, %v807
  %v809 = vpop.f32.mrb[0].mxu0
  %810 = vmatprep.mubr.bf16.mxu0 0
  %811 = vmatmul.mubr.bf16.gmra.mrb[0].mxu0 %v491
  %v812 = vpop.f32.mrb[0].mxu0
  %v813 = vadd.f32 0.0, %v812
  %v814 = vpop.f32.mrb[0].mxu0
  %v815 = vpop.f32.mrb[0].mxu0
  %v816 = vadd.f32 0.0, %v815
  %v817 = vpop.f32.mrb[0].mxu0
  %818 = vmatprep.mubr.bf16.mxu0 0
  %819 = vmatmul.mubr.bf16.gmra.mrb[0].mxu0 %v492
  %v820 = vpop.f32.mrb[0].mxu0
  %v821 = vadd.f32 0.0, %v820
  %v822 = vpop.f32.mrb[0].mxu0
  %v823 = vpop.f32.mrb[0].mxu0
  %v824 = vadd.f32 0.0, %v823
  %v825 = vpop.f32.mrb[0].mxu0
  %826 = vmatprep.mubr.bf16.mxu0 0
  %827 = vmatmul.mubr.bf16.gmra.mrb[0].mxu0 %v493
  %v828 = vpop.f32.mrb[0].mxu0
  %v829 = vadd.f32 0.0, %v828
  %v830 = vpop.f32.mrb[0].mxu0
  %v831 = vpop.f32.mrb[0].mxu0
  %v832 = vadd.f32 0.0, %v831
  %v833 = vpop.f32.mrb[0].mxu0
  %834 = vmatprep.mubr.bf16.mxu0 0
  %835 = vmatmul.mubr.bf16.gmra.mrb[0].mxu0 %v494
  %v836 = vpop.f32.mrb[0].mxu0
  %v837 = vadd.f32 0.0, %v836
  %v838 = vpop.f32.mrb[0].mxu0
  %v839 = vpop.f32.mrb[0].mxu0
  %v840 = vadd.f32 0.0, %v839
  %v841 = vpop.f32.mrb[0].mxu0
  %842 = vmatprep.mubr.bf16.mxu0 0
  %843 = vmatmul.mubr.bf16.gmra.mrb[0].mxu0 %v495
  %v844 = vpop.f32.mrb[0].mxu0
  %v845 = vadd.f32 0.0, %v844
  %v846 = vpop.f32.mrb[0].mxu0
  %v847 = vpop.f32.mrb[0].mxu0
  %v848 = vadd.f32 0.0, %v847
  %v849 = vpop.f32.mrb[0].mxu0
  %850 = vmatprep.mubr.bf16.mxu0 0
  %851 = vmatmul.mubr.bf16.gmra.mrb[0].mxu0 %v496
  %v852 = vpop.f32.mrb[0].mxu0
  %v853 = vadd.f32 0.0, %v852
  %v854 = vpop.f32.mrb[0].mxu0
  %v855 = vpop.f32.mrb[0].mxu0
  %v856 = vadd.f32 0.0, %v855
  %v857 = vpop.f32.mrb[0].mxu0
  %858 = vmatprep.mubr.bf16.mxu0 0
  %859 = vmatmul.mubr.bf16.gmra.mrb[0].mxu0 %v497
  %v860 = vpop.f32.mrb[0].mxu0
  %v861 = vadd.f32 0.0, %v860
  %v862 = vpop.f32.mrb[0].mxu0
  %v863 = vpop.f32.mrb[0].mxu0
  %v864 = vadd.f32 0.0, %v863
  %v865 = vpop.f32.mrb[0].mxu0
  %866 = vdwg.mxu0
  %v931 = vunpack.c.l.b16 %v82
  %v932 = vunpack.c.l.b16 %v83
  %v933 = vunpack.c.l.b16 %v84
  %v934 = vunpack.c.l.b16 %v85
  %v935 = vunpack.c.l.b16 %v86
  %v936 = vunpack.c.l.b16 %v87
  %v937 = vunpack.c.l.b16 %v88
  %v938 = vunpack.c.l.b16 %v89
  %v939 = vunpack.c.l.b16 %v90
  %v940 = vunpack.c.l.b16 %v91
  %v941 = vunpack.c.l.b16 %v92
  %v942 = vunpack.c.l.b16 %v93
  %v943 = vunpack.c.l.b16 %v94
  %v944 = vunpack.c.l.b16 %v95
  %v945 = vunpack.c.l.b16 %v96
  %v946 = vunpack.c.l.b16 %v97
  %v947 = vunpack.c.l.b16 %v98
  %v948 = vunpack.c.l.b16 %v99
  %v949 = vunpack.c.l.b16 %v100
  %v950 = vunpack.c.l.b16 %v101
  %v951 = vunpack.c.l.b16 %v102
  %v952 = vunpack.c.l.b16 %v103
  %v953 = vunpack.c.l.b16 %v104
  %v954 = vunpack.c.l.b16 %v105
  %v955 = vunpack.c.l.b16 %v106
  %v956 = vunpack.c.l.b16 %v107
  %v957 = vunpack.c.l.b16 %v108
  %v958 = vunpack.c.l.b16 %v109
  %v959 = vunpack.c.l.b16 %v110
  %v960 = vunpack.c.l.b16 %v111
  %v961 = vunpack.c.l.b16 %v112
  %v962 = vunpack.c.l.b16 %v113
  %v963 = vunpack.c.l.b16 %v114
  %v964 = vunpack.c.l.b16 %v115
  %v965 = vunpack.c.l.b16 %v116
  %v966 = vunpack.c.l.b16 %v117
  %v967 = vunpack.c.l.b16 %v118
  %v968 = vunpack.c.l.b16 %v119
  %v969 = vunpack.c.l.b16 %v120
  %v970 = vunpack.c.l.b16 %v121
  %v971 = vunpack.c.l.b16 %v122
  %v972 = vunpack.c.l.b16 %v123
  %v973 = vunpack.c.l.b16 %v124
  %v974 = vunpack.c.l.b16 %v125
  %v975 = vunpack.c.l.b16 %v126
  %v976 = vunpack.c.l.b16 %v127
  %v977 = vunpack.c.l.b16 %v128
  %v978 = vunpack.c.l.b16 %v129
  %v979 = vunpack.c.l.b16 %v130
  %v980 = vunpack.c.l.b16 %v131
  %v981 = vunpack.c.l.b16 %v132
  %v982 = vunpack.c.l.b16 %v133
  %v983 = vunpack.c.l.b16 %v134
  %v984 = vunpack.c.l.b16 %v135
  %v985 = vunpack.c.l.b16 %v136
  %v986 = vunpack.c.l.b16 %v137
  %v987 = vunpack.c.l.b16 %v138
  %v988 = vunpack.c.l.b16 %v139
  %v989 = vunpack.c.l.b16 %v140
  %v990 = vunpack.c.l.b16 %v141
  %v991 = vunpack.c.l.b16 %v142
  %v992 = vunpack.c.l.b16 %v143
  %v993 = vunpack.c.l.b16 %v144
  %v994 = vunpack.c.l.b16 %v145
  %v995 = vpack.c.b16 %v932, %v931
  %v996 = vpack.c.b16 %v934, %v933
  %v997 = vpack.c.b16 %v936, %v935
  %v998 = vpack.c.b16 %v938, %v937
  %v999 = vpack.c.b16 %v940, %v939
  %v1000 = vpack.c.b16 %v942, %v941
  %v1001 = vpack.c.b16 %v944, %v943
  %v1002 = vpack.c.b16 %v946, %v945
  %v1003 = vpack.c.b16 %v948, %v947
  %v1004 = vpack.c.b16 %v950, %v949
  %v1005 = vpack.c.b16 %v952, %v951
  %v1006 = vpack.c.b16 %v954, %v953
  %v1007 = vpack.c.b16 %v956, %v955
  %v1008 = vpack.c.b16 %v958, %v957
  %v1009 = vpack.c.b16 %v960, %v959
  %v1010 = vpack.c.b16 %v962, %v961
  %v1011 = vpack.c.b16 %v964, %v963
  %v1012 = vpack.c.b16 %v966, %v965
  %v1013 = vpack.c.b16 %v968, %v967
  %v1014 = vpack.c.b16 %v970, %v969
  %v1015 = vpack.c.b16 %v972, %v971
  %v1016 = vpack.c.b16 %v974, %v973
  %v1017 = vpack.c.b16 %v976, %v975
  %v1018 = vpack.c.b16 %v978, %v977
  %v1019 = vpack.c.b16 %v980, %v979
  %v1020 = vpack.c.b16 %v982, %v981
  %v1021 = vpack.c.b16 %v984, %v983
  %v1022 = vpack.c.b16 %v986, %v985
  %v1023 = vpack.c.b16 %v988, %v987
  %v1024 = vpack.c.b16 %v990, %v989
  %v1025 = vpack.c.b16 %v992, %v991
  %v1026 = vpack.c.b16 %v994, %v993
  %v1075 = vunpack.c.l.b16 %v290
  %v1076 = vunpack.c.l.b16 %v291
  %v1077 = vunpack.c.l.b16 %v292
  %v1078 = vunpack.c.l.b16 %v293
  %v1079 = vunpack.c.l.b16 %v294
  %v1080 = vunpack.c.l.b16 %v295
  %v1081 = vunpack.c.l.b16 %v296
  %v1082 = vunpack.c.l.b16 %v297
  %v1083 = vunpack.c.l.b16 %v298
  %v1084 = vunpack.c.l.b16 %v299
  %v1085 = vunpack.c.l.b16 %v300
  %v1086 = vunpack.c.l.b16 %v301
  %v1087 = vunpack.c.l.b16 %v302
  %v1088 = vunpack.c.l.b16 %v303
  %v1089 = vunpack.c.l.b16 %v304
  %v1090 = vunpack.c.l.b16 %v305
  %v1091 = vpack.c.b16 %v1076, %v1075
  %v1092 = vpack.c.b16 %v1078, %v1077
  %v1093 = vpack.c.b16 %v1080, %v1079
  %v1094 = vpack.c.b16 %v1082, %v1081
  %v1095 = vpack.c.b16 %v1084, %v1083
  %v1096 = vpack.c.b16 %v1086, %v1085
  %v1097 = vpack.c.b16 %v1088, %v1087
  %v1098 = vpack.c.b16 %v1090, %v1089
  %1107 = vmatprep.subr.bf16.mxu0 0
  %1108 = vmatpush1.bf16.msra.mxu0 %v1091
  %1109 = vmatprep.subr.bf16.mxu0 0
  %1110 = vmatpush1.bf16.msra.mxu0 %v1092
  %1111 = vmatprep.subr.bf16.mxu0 0
  %1112 = vmatpush1.bf16.msra.mxu0 %v1093
  %1113 = vmatprep.subr.bf16.mxu0 0
  %1114 = vmatpush1.bf16.msra.mxu0 %v1094
  %1115 = vmatprep.subr.bf16.mxu0 0
  %1116 = vmatpush1.bf16.msra.mxu0 %v1095
  %1117 = vmatprep.subr.bf16.mxu0 0
  %1118 = vmatpush1.bf16.msra.mxu0 %v1096
  %1119 = vmatprep.subr.bf16.mxu0 0
  %1120 = vmatpush1.bf16.msra.mxu0 %v1097
  %1121 = vmatprep.subr.bf16.mxu0 0
  %1122 = vmatpush1.bf16.msra.mxu0 %v1098
  %1123 = vmatprep.subr.bf16.mxu0 0
  %1124 = vmatpush1.bf16.msra.mxu0 0
  %1125 = vmatprep.subr.bf16.mxu0 0
  %1126 = vmatpush1.bf16.msra.mxu0 0
  %1127 = vmatprep.subr.bf16.mxu0 0
  %1128 = vmatpush1.bf16.msra.mxu0 0
  %1129 = vmatprep.subr.bf16.mxu0 0
  %1130 = vmatpush1.bf16.msra.mxu0 0
  %1131 = vmatprep.subr.bf16.mxu0 0
  %1132 = vmatpush1.bf16.msra.mxu0 0
  %1133 = vmatprep.subr.bf16.mxu0 0
  %1134 = vmatpush1.bf16.msra.mxu0 0
  %1135 = vmatprep.subr.bf16.mxu0 0
  %1136 = vmatpush1.bf16.msra.mxu0 0
  %1137 = vmatprep.subr.bf16.mxu0 0
  %1138 = vmatpush1.bf16.msra.mxu0 0
  %1139 = vmatprep.mubr.bf16.mxu0 0
  %1140 = vmatmul.mubr.bf16.gmra.mrb[0].mxu0 %v995
  %v1141 = vpop.f32.mrb[0].mxu0
  %v1142 = vadd.f32 0.0, %v1141
  %v1143 = vpop.f32.mrb[0].mxu0
  %v1144 = vpop.f32.mrb[0].mxu0
  %v1145 = vadd.f32 0.0, %v1144
  %v1146 = vpop.f32.mrb[0].mxu0
  %1147 = vmatprep.mubr.bf16.mxu0 0
  %1148 = vmatmul.mubr.bf16.gmra.mrb[0].mxu0 %v996
  %v1149 = vpop.f32.mrb[0].mxu0
  %v1150 = vadd.f32 0.0, %v1149
  %v1151 = vpop.f32.mrb[0].mxu0
  %v1152 = vpop.f32.mrb[0].mxu0
  %v1153 = vadd.f32 0.0, %v1152
  %v1154 = vpop.f32.mrb[0].mxu0
  %1155 = vmatprep.mubr.bf16.mxu0 0
  %1156 = vmatmul.mubr.bf16.gmra.mrb[0].mxu0 %v997
  %v1157 = vpop.f32.mrb[0].mxu0
  %v1158 = vadd.f32 0.0, %v1157
  %v1159 = vpop.f32.mrb[0].mxu0
  %v1160 = vpop.f32.mrb[0].mxu0
  %v1161 = vadd.f32 0.0, %v1160
  %v1162 = vpop.f32.mrb[0].mxu0
  %1163 = vmatprep.mubr.bf16.mxu0 0
  %1164 = vmatmul.mubr.bf16.gmra.mrb[0].mxu0 %v998
  %v1165 = vpop.f32.mrb[0].mxu0
  %v1166 = vadd.f32 0.0, %v1165
  %v1167 = vpop.f32.mrb[0].mxu0
  %v1168 = vpop.f32.mrb[0].mxu0
  %v1169 = vadd.f32 0.0, %v1168
  %v1170 = vpop.f32.mrb[0].mxu0
  %1171 = vmatprep.mubr.bf16.mxu0 0
  %1172 = vmatmul.mubr.bf16.gmra.mrb[0].mxu0 %v999
  %v1173 = vpop.f32.mrb[0].mxu0
  %v1174 = vadd.f32 0.0, %v1173
  %v1175 = vpop.f32.mrb[0].mxu0
  %v1176 = vpop.f32.mrb[0].mxu0
  %v1177 = vadd.f32 0.0, %v1176
  %v1178 = vpop.f32.mrb[0].mxu0
  %1179 = vmatprep.mubr.bf16.mxu0 0
  %1180 = vmatmul.mubr.bf16.gmra.mrb[0].mxu0 %v1000
  %v1181 = vpop.f32.mrb[0].mxu0
  %v1182 = vadd.f32 0.0, %v1181
  %v1183 = vpop.f32.mrb[0].mxu0
  %v1184 = vpop.f32.mrb[0].mxu0
  %v1185 = vadd.f32 0.0, %v1184
  %v1186 = vpop.f32.mrb[0].mxu0
  %1187 = vmatprep.mubr.bf16.mxu0 0
  %1188 = vmatmul.mubr.bf16.gmra.mrb[0].mxu0 %v1001
  %v1189 = vpop.f32.mrb[0].mxu0
  %v1190 = vadd.f32 0.0, %v1189
  %v1191 = vpop.f32.mrb[0].mxu0
  %v1192 = vpop.f32.mrb[0].mxu0
  %v1193 = vadd.f32 0.0, %v1192
  %v1194 = vpop.f32.mrb[0].mxu0
  %1195 = vmatprep.mubr.bf16.mxu0 0
  %1196 = vmatmul.mubr.bf16.gmra.mrb[0].mxu0 %v1002
  %v1197 = vpop.f32.mrb[0].mxu0
  %v1198 = vadd.f32 0.0, %v1197
  %v1199 = vpop.f32.mrb[0].mxu0
  %v1200 = vpop.f32.mrb[0].mxu0
  %v1201 = vadd.f32 0.0, %v1200
  %v1202 = vpop.f32.mrb[0].mxu0
  %1203 = vmatprep.mubr.bf16.mxu0 0
  %1204 = vmatmul.mubr.bf16.gmra.mrb[0].mxu0 %v1003
  %v1205 = vpop.f32.mrb[0].mxu0
  %v1206 = vadd.f32 0.0, %v1205
  %v1207 = vpop.f32.mrb[0].mxu0
  %v1208 = vpop.f32.mrb[0].mxu0
  %v1209 = vadd.f32 0.0, %v1208
  %v1210 = vpop.f32.mrb[0].mxu0
  %1211 = vmatprep.mubr.bf16.mxu0 0
  %1212 = vmatmul.mubr.bf16.gmra.mrb[0].mxu0 %v1004
  %v1213 = vpop.f32.mrb[0].mxu0
  %v1214 = vadd.f32 0.0, %v1213
  %v1215 = vpop.f32.mrb[0].mxu0
  %v1216 = vpop.f32.mrb[0].mxu0
  %v1217 = vadd.f32 0.0, %v1216
  %v1218 = vpop.f32.mrb[0].mxu0
  %1219 = vmatprep.mubr.bf16.mxu0 0
  %1220 = vmatmul.mubr.bf16.gmra.mrb[0].mxu0 %v1005
  %v1221 = vpop.f32.mrb[0].mxu0
  %v1222 = vadd.f32 0.0, %v1221
  %v1223 = vpop.f32.mrb[0].mxu0
  %v1224 = vpop.f32.mrb[0].mxu0
  %v1225 = vadd.f32 0.0, %v1224
  %v1226 = vpop.f32.mrb[0].mxu0
  %1227 = vmatprep.mubr.bf16.mxu0 0
  %1228 = vmatmul.mubr.bf16.gmra.mrb[0].mxu0 %v1006
  %v1229 = vpop.f32.mrb[0].mxu0
  %v1230 = vadd.f32 0.0, %v1229
  %v1231 = vpop.f32.mrb[0].mxu0
  %v1232 = vpop.f32.mrb[0].mxu0
  %v1233 = vadd.f32 0.0, %v1232
  %v1234 = vpop.f32.mrb[0].mxu0
  %1235 = vmatprep.mubr.bf16.mxu0 0
  %1236 = vmatmul.mubr.bf16.gmra.mrb[0].mxu0 %v1007
  %v1237 = vpop.f32.mrb[0].mxu0
  %v1238 = vadd.f32 0.0, %v1237
  %v1239 = vpop.f32.mrb[0].mxu0
  %v1240 = vpop.f32.mrb[0].mxu0
  %v1241 = vadd.f32 0.0, %v1240
  %v1242 = vpop.f32.mrb[0].mxu0
  %1243 = vmatprep.mubr.bf16.mxu0 0
  %1244 = vmatmul.mubr.bf16.gmra.mrb[0].mxu0 %v1008
  %v1245 = vpop.f32.mrb[0].mxu0
  %v1246 = vadd.f32 0.0, %v1245
  %v1247 = vpop.f32.mrb[0].mxu0
  %v1248 = vpop.f32.mrb[0].mxu0
  %v1249 = vadd.f32 0.0, %v1248
  %v1250 = vpop.f32.mrb[0].mxu0
  %1251 = vmatprep.mubr.bf16.mxu0 0
  %1252 = vmatmul.mubr.bf16.gmra.mrb[0].mxu0 %v1009
  %v1253 = vpop.f32.mrb[0].mxu0
  %v1254 = vadd.f32 0.0, %v1253
  %v1255 = vpop.f32.mrb[0].mxu0
  %v1256 = vpop.f32.mrb[0].mxu0
  %v1257 = vadd.f32 0.0, %v1256
  %v1258 = vpop.f32.mrb[0].mxu0
  %1259 = vmatprep.mubr.bf16.mxu0 0
  %1260 = vmatmul.mubr.bf16.gmra.mrb[0].mxu0 %v1010
  %v1261 = vpop.f32.mrb[0].mxu0
  %v1262 = vadd.f32 0.0, %v1261
  %v1263 = vpop.f32.mrb[0].mxu0
  %v1264 = vpop.f32.mrb[0].mxu0
  %v1265 = vadd.f32 0.0, %v1264
  %v1266 = vpop.f32.mrb[0].mxu0
  %1267 = vmatprep.mubr.bf16.mxu0 0
  %1268 = vmatmul.mubr.bf16.gmra.mrb[0].mxu0 %v1011
  %v1269 = vpop.f32.mrb[0].mxu0
  %v1270 = vadd.f32 0.0, %v1269
  %v1271 = vpop.f32.mrb[0].mxu0
  %v1272 = vpop.f32.mrb[0].mxu0
  %v1273 = vadd.f32 0.0, %v1272
  %v1274 = vpop.f32.mrb[0].mxu0
  %1275 = vmatprep.mubr.bf16.mxu0 0
  %1276 = vmatmul.mubr.bf16.gmra.mrb[0].mxu0 %v1012
  %v1277 = vpop.f32.mrb[0].mxu0
  %v1278 = vadd.f32 0.0, %v1277
  %v1279 = vpop.f32.mrb[0].mxu0
  %v1280 = vpop.f32.mrb[0].mxu0
  %v1281 = vadd.f32 0.0, %v1280
  %v1282 = vpop.f32.mrb[0].mxu0
  %1283 = vmatprep.mubr.bf16.mxu0 0
  %1284 = vmatmul.mubr.bf16.gmra.mrb[0].mxu0 %v1013
  %v1285 = vpop.f32.mrb[0].mxu0
  %v1286 = vadd.f32 0.0, %v1285
  %v1287 = vpop.f32.mrb[0].mxu0
  %v1288 = vpop.f32.mrb[0].mxu0
  %v1289 = vadd.f32 0.0, %v1288
  %v1290 = vpop.f32.mrb[0].mxu0
  %1291 = vmatprep.mubr.bf16.mxu0 0
  %1292 = vmatmul.mubr.bf16.gmra.mrb[0].mxu0 %v1014
  %v1293 = vpop.f32.mrb[0].mxu0
  %v1294 = vadd.f32 0.0, %v1293
  %v1295 = vpop.f32.mrb[0].mxu0
  %v1296 = vpop.f32.mrb[0].mxu0
  %v1297 = vadd.f32 0.0, %v1296
  %v1298 = vpop.f32.mrb[0].mxu0
  %1299 = vmatprep.mubr.bf16.mxu0 0
  %1300 = vmatmul.mubr.bf16.gmra.mrb[0].mxu0 %v1015
  %v1301 = vpop.f32.mrb[0].mxu0
  %v1302 = vadd.f32 0.0, %v1301
  %v1303 = vpop.f32.mrb[0].mxu0
  %v1304 = vpop.f32.mrb[0].mxu0
  %v1305 = vadd.f32 0.0, %v1304
  %v1306 = vpop.f32.mrb[0].mxu0
  %1307 = vmatprep.mubr.bf16.mxu0 0
  %1308 = vmatmul.mubr.bf16.gmra.mrb[0].mxu0 %v1016
  %v1309 = vpop.f32.mrb[0].mxu0
  %v1310 = vadd.f32 0.0, %v1309
  %v1311 = vpop.f32.mrb[0].mxu0
  %v1312 = vpop.f32.mrb[0].mxu0
  %v1313 = vadd.f32 0.0, %v1312
  %v1314 = vpop.f32.mrb[0].mxu0
  %1315 = vmatprep.mubr.bf16.mxu0 0
  %1316 = vmatmul.mubr.bf16.gmra.mrb[0].mxu0 %v1017
  %v1317 = vpop.f32.mrb[0].mxu0
  %v1318 = vadd.f32 0.0, %v1317
  %v1319 = vpop.f32.mrb[0].mxu0
  %v1320 = vpop.f32.mrb[0].mxu0
  %v1321 = vadd.f32 0.0, %v1320
  %v1322 = vpop.f32.mrb[0].mxu0
  %1323 = vmatprep.mubr.bf16.mxu0 0
  %1324 = vmatmul.mubr.bf16.gmra.mrb[0].mxu0 %v1018
  %v1325 = vpop.f32.mrb[0].mxu0
  %v1326 = vadd.f32 0.0, %v1325
  %v1327 = vpop.f32.mrb[0].mxu0
  %v1328 = vpop.f32.mrb[0].mxu0
  %v1329 = vadd.f32 0.0, %v1328
  %v1330 = vpop.f32.mrb[0].mxu0
  %1331 = vmatprep.mubr.bf16.mxu0 0
  %1332 = vmatmul.mubr.bf16.gmra.mrb[0].mxu0 %v1019
  %v1333 = vpop.f32.mrb[0].mxu0
  %v1334 = vadd.f32 0.0, %v1333
  %v1335 = vpop.f32.mrb[0].mxu0
  %v1336 = vpop.f32.mrb[0].mxu0
  %v1337 = vadd.f32 0.0, %v1336
  %v1338 = vpop.f32.mrb[0].mxu0
  %1339 = vmatprep.mubr.bf16.mxu0 0
  %1340 = vmatmul.mubr.bf16.gmra.mrb[0].mxu0 %v1020
  %v1341 = vpop.f32.mrb[0].mxu0
  %v1342 = vadd.f32 0.0, %v1341
  %v1343 = vpop.f32.mrb[0].mxu0
  %v1344 = vpop.f32.mrb[0].mxu0
  %v1345 = vadd.f32 0.0, %v1344
  %v1346 = vpop.f32.mrb[0].mxu0
  %1347 = vmatprep.mubr.bf16.mxu0 0
  %1348 = vmatmul.mubr.bf16.gmra.mrb[0].mxu0 %v1021
  %v1349 = vpop.f32.mrb[0].mxu0
  %v1350 = vadd.f32 0.0, %v1349
  %v1351 = vpop.f32.mrb[0].mxu0
  %v1352 = vpop.f32.mrb[0].mxu0
  %v1353 = vadd.f32 0.0, %v1352
  %v1354 = vpop.f32.mrb[0].mxu0
  %1355 = vmatprep.mubr.bf16.mxu0 0
  %1356 = vmatmul.mubr.bf16.gmra.mrb[0].mxu0 %v1022
  %v1357 = vpop.f32.mrb[0].mxu0
  %v1358 = vadd.f32 0.0, %v1357
  %v1359 = vpop.f32.mrb[0].mxu0
  %v1360 = vpop.f32.mrb[0].mxu0
  %v1361 = vadd.f32 0.0, %v1360
  %v1362 = vpop.f32.mrb[0].mxu0
  %1363 = vmatprep.mubr.bf16.mxu0 0
  %1364 = vmatmul.mubr.bf16.gmra.mrb[0].mxu0 %v1023
  %v1365 = vpop.f32.mrb[0].mxu0
  %v1366 = vadd.f32 0.0, %v1365
  %v1367 = vpop.f32.mrb[0].mxu0
  %v1368 = vpop.f32.mrb[0].mxu0
  %v1369 = vadd.f32 0.0, %v1368
  %v1370 = vpop.f32.mrb[0].mxu0
  %1371 = vmatprep.mubr.bf16.mxu0 0
  %1372 = vmatmul.mubr.bf16.gmra.mrb[0].mxu0 %v1024
  %v1373 = vpop.f32.mrb[0].mxu0
  %v1374 = vadd.f32 0.0, %v1373
  %v1375 = vpop.f32.mrb[0].mxu0
  %v1376 = vpop.f32.mrb[0].mxu0
  %v1377 = vadd.f32 0.0, %v1376
  %v1378 = vpop.f32.mrb[0].mxu0
  %1379 = vmatprep.mubr.bf16.mxu0 0
  %1380 = vmatmul.mubr.bf16.gmra.mrb[0].mxu0 %v1025
  %v1381 = vpop.f32.mrb[0].mxu0
  %v1382 = vadd.f32 0.0, %v1381
  %v1383 = vpop.f32.mrb[0].mxu0
  %v1384 = vpop.f32.mrb[0].mxu0
  %v1385 = vadd.f32 0.0, %v1384
  %v1386 = vpop.f32.mrb[0].mxu0
  %1387 = vmatprep.mubr.bf16.mxu0 0
  %1388 = vmatmul.mubr.bf16.gmra.mrb[0].mxu0 %v1026
  %v1389 = vpop.f32.mrb[0].mxu0
  %v1390 = vadd.f32 0.0, %v1389
  %v1391 = vpop.f32.mrb[0].mxu0
  %v1392 = vpop.f32.mrb[0].mxu0
  %v1393 = vadd.f32 0.0, %v1392
  %v1394 = vpop.f32.mrb[0].mxu0
  %1395 = vdwg.mxu0
  %v1460 = vunpack.c.l.b16 %v146
  %v1461 = vunpack.c.l.b16 %v147
  %v1462 = vunpack.c.l.b16 %v148
  %v1463 = vunpack.c.l.b16 %v149
  %v1464 = vunpack.c.l.b16 %v150
  %v1465 = vunpack.c.l.b16 %v151
  %v1466 = vunpack.c.l.b16 %v152
  %v1467 = vunpack.c.l.b16 %v153
  %v1468 = vunpack.c.l.b16 %v154
  %v1469 = vunpack.c.l.b16 %v155
  %v1470 = vunpack.c.l.b16 %v156
  %v1471 = vunpack.c.l.b16 %v157
  %v1472 = vunpack.c.l.b16 %v158
  %v1473 = vunpack.c.l.b16 %v159
  %v1474 = vunpack.c.l.b16 %v160
  %v1475 = vunpack.c.l.b16 %v161
  %v1476 = vunpack.c.l.b16 %v162
  %v1477 = vunpack.c.l.b16 %v163
  %v1478 = vunpack.c.l.b16 %v164
  %v1479 = vunpack.c.l.b16 %v165
  %v1480 = vunpack.c.l.b16 %v166
  %v1481 = vunpack.c.l.b16 %v167
  %v1482 = vunpack.c.l.b16 %v168
  %v1483 = vunpack.c.l.b16 %v169
  %v1484 = vunpack.c.l.b16 %v170
  %v1485 = vunpack.c.l.b16 %v171
  %v1486 = vunpack.c.l.b16 %v172
  %v1487 = vunpack.c.l.b16 %v173
  %v1488 = vunpack.c.l.b16 %v174
  %v1489 = vunpack.c.l.b16 %v175
  %v1490 = vunpack.c.l.b16 %v176
  %v1491 = vunpack.c.l.b16 %v177
  %v1492 = vunpack.c.l.b16 %v178
  %v1493 = vunpack.c.l.b16 %v179
  %v1494 = vunpack.c.l.b16 %v180
  %v1495 = vunpack.c.l.b16 %v181
  %v1496 = vunpack.c.l.b16 %v182
  %v1497 = vunpack.c.l.b16 %v183
  %v1498 = vunpack.c.l.b16 %v184
  %v1499 = vunpack.c.l.b16 %v185
  %v1500 = vunpack.c.l.b16 %v186
  %v1501 = vunpack.c.l.b16 %v187
  %v1502 = vunpack.c.l.b16 %v188
  %v1503 = vunpack.c.l.b16 %v189
  %v1504 = vunpack.c.l.b16 %v190
  %v1505 = vunpack.c.l.b16 %v191
  %v1506 = vunpack.c.l.b16 %v192
  %v1507 = vunpack.c.l.b16 %v193
  %v1508 = vunpack.c.l.b16 %v194
  %v1509 = vunpack.c.l.b16 %v195
  %v1510 = vunpack.c.l.b16 %v196
  %v1511 = vunpack.c.l.b16 %v197
  %v1512 = vunpack.c.l.b16 %v198
  %v1513 = vunpack.c.l.b16 %v199
  %v1514 = vunpack.c.l.b16 %v200
  %v1515 = vunpack.c.l.b16 %v201
  %v1516 = vunpack.c.l.b16 %v202
  %v1517 = vunpack.c.l.b16 %v203
  %v1518 = vunpack.c.l.b16 %v204
  %v1519 = vunpack.c.l.b16 %v205
  %v1520 = vunpack.c.l.b16 %v206
  %v1521 = vunpack.c.l.b16 %v207
  %v1522 = vunpack.c.l.b16 %v208
  %v1523 = vunpack.c.l.b16 %v209
  %v1524 = vpack.c.b16 %v1461, %v1460
  %v1525 = vpack.c.b16 %v1463, %v1462
  %v1526 = vpack.c.b16 %v1465, %v1464
  %v1527 = vpack.c.b16 %v1467, %v1466
  %v1528 = vpack.c.b16 %v1469, %v1468
  %v1529 = vpack.c.b16 %v1471, %v1470
  %v1530 = vpack.c.b16 %v1473, %v1472
  %v1531 = vpack.c.b16 %v1475, %v1474
  %v1532 = vpack.c.b16 %v1477, %v1476
  %v1533 = vpack.c.b16 %v1479, %v1478
  %v1534 = vpack.c.b16 %v1481, %v1480
  %v1535 = vpack.c.b16 %v1483, %v1482
  %v1536 = vpack.c.b16 %v1485, %v1484
  %v1537 = vpack.c.b16 %v1487, %v1486
  %v1538 = vpack.c.b16 %v1489, %v1488
  %v1539 = vpack.c.b16 %v1491, %v1490
  %v1540 = vpack.c.b16 %v1493, %v1492
  %v1541 = vpack.c.b16 %v1495, %v1494
  %v1542 = vpack.c.b16 %v1497, %v1496
  %v1543 = vpack.c.b16 %v1499, %v1498
  %v1544 = vpack.c.b16 %v1501, %v1500
  %v1545 = vpack.c.b16 %v1503, %v1502
  %v1546 = vpack.c.b16 %v1505, %v1504
  %v1547 = vpack.c.b16 %v1507, %v1506
  %v1548 = vpack.c.b16 %v1509, %v1508
  %v1549 = vpack.c.b16 %v1511, %v1510
  %v1550 = vpack.c.b16 %v1513, %v1512
  %v1551 = vpack.c.b16 %v1515, %v1514
  %v1552 = vpack.c.b16 %v1517, %v1516
  %v1553 = vpack.c.b16 %v1519, %v1518
  %v1554 = vpack.c.b16 %v1521, %v1520
  %v1555 = vpack.c.b16 %v1523, %v1522
  %v1604 = vunpack.c.l.b16 %v306
  %v1605 = vunpack.c.l.b16 %v307
  %v1606 = vunpack.c.l.b16 %v308
  %v1607 = vunpack.c.l.b16 %v309
  %v1608 = vunpack.c.l.b16 %v310
  %v1609 = vunpack.c.l.b16 %v311
  %v1610 = vunpack.c.l.b16 %v312
  %v1611 = vunpack.c.l.b16 %v313
  %v1612 = vunpack.c.l.b16 %v314
  %v1613 = vunpack.c.l.b16 %v315
  %v1614 = vunpack.c.l.b16 %v316
  %v1615 = vunpack.c.l.b16 %v317
  %v1616 = vunpack.c.l.b16 %v318
  %v1617 = vunpack.c.l.b16 %v319
  %v1618 = vunpack.c.l.b16 %v320
  %v1619 = vunpack.c.l.b16 %v321
  %v1620 = vpack.c.b16 %v1605, %v1604
  %v1621 = vpack.c.b16 %v1607, %v1606
  %v1622 = vpack.c.b16 %v1609, %v1608
  %v1623 = vpack.c.b16 %v1611, %v1610
  %v1624 = vpack.c.b16 %v1613, %v1612
  %v1625 = vpack.c.b16 %v1615, %v1614
  %v1626 = vpack.c.b16 %v1617, %v1616
  %v1627 = vpack.c.b16 %v1619, %v1618
  %1636 = vmatprep.subr.bf16.mxu0 0
  %1637 = vmatpush1.bf16.msra.mxu0 %v1620
  %1638 = vmatprep.subr.bf16.mxu0 0
  %1639 = vmatpush1.bf16.msra.mxu0 %v1621
  %1640 = vmatprep.subr.bf16.mxu0 0
  %1641 = vmatpush1.bf16.msra.mxu0 %v1622
  %1642 = vmatprep.subr.bf16.mxu0 0
  %1643 = vmatpush1.bf16.msra.mxu0 %v1623
  %1644 = vmatprep.subr.bf16.mxu0 0
  %1645 = vmatpush1.bf16.msra.mxu0 %v1624
  %1646 = vmatprep.subr.bf16.mxu0 0
  %1647 = vmatpush1.bf16.msra.mxu0 %v1625
  %1648 = vmatprep.subr.bf16.mxu0 0
  %1649 = vmatpush1.bf16.msra.mxu0 %v1626
  %1650 = vmatprep.subr.bf16.mxu0 0
  %1651 = vmatpush1.bf16.msra.mxu0 %v1627
  %1652 = vmatprep.subr.bf16.mxu0 0
  %1653 = vmatpush1.bf16.msra.mxu0 0
  %1654 = vmatprep.subr.bf16.mxu0 0
  %1655 = vmatpush1.bf16.msra.mxu0 0
  %1656 = vmatprep.subr.bf16.mxu0 0
  %1657 = vmatpush1.bf16.msra.mxu0 0
  %1658 = vmatprep.subr.bf16.mxu0 0
  %1659 = vmatpush1.bf16.msra.mxu0 0
  %1660 = vmatprep.subr.bf16.mxu0 0
  %1661 = vmatpush1.bf16.msra.mxu0 0
  %1662 = vmatprep.subr.bf16.mxu0 0
  %1663 = vmatpush1.bf16.msra.mxu0 0
  %1664 = vmatprep.subr.bf16.mxu0 0
  %1665 = vmatpush1.bf16.msra.mxu0 0
  %1666 = vmatprep.subr.bf16.mxu0 0
  %1667 = vmatpush1.bf16.msra.mxu0 0
  %1668 = vmatprep.mubr.bf16.mxu0 0
  %1669 = vmatmul.mubr.bf16.gmra.mrb[0].mxu0 %v1524
  %v1670 = vpop.f32.mrb[0].mxu0
  %v1671 = vadd.f32 0.0, %v1670
  %v1672 = vpop.f32.mrb[0].mxu0
  %v1673 = vpop.f32.mrb[0].mxu0
  %v1674 = vadd.f32 0.0, %v1673
  %v1675 = vpop.f32.mrb[0].mxu0
  %1676 = vmatprep.mubr.bf16.mxu0 0
  %1677 = vmatmul.mubr.bf16.gmra.mrb[0].mxu0 %v1525
  %v1678 = vpop.f32.mrb[0].mxu0
  %v1679 = vadd.f32 0.0, %v1678
  %v1680 = vpop.f32.mrb[0].mxu0
  %v1681 = vpop.f32.mrb[0].mxu0
  %v1682 = vadd.f32 0.0, %v1681
  %v1683 = vpop.f32.mrb[0].mxu0
  %1684 = vmatprep.mubr.bf16.mxu0 0
  %1685 = vmatmul.mubr.bf16.gmra.mrb[0].mxu0 %v1526
  %v1686 = vpop.f32.mrb[0].mxu0
  %v1687 = vadd.f32 0.0, %v1686
  %v1688 = vpop.f32.mrb[0].mxu0
  %v1689 = vpop.f32.mrb[0].mxu0
  %v1690 = vadd.f32 0.0, %v1689
  %v1691 = vpop.f32.mrb[0].mxu0
  %1692 = vmatprep.mubr.bf16.mxu0 0
  %1693 = vmatmul.mubr.bf16.gmra.mrb[0].mxu0 %v1527
  %v1694 = vpop.f32.mrb[0].mxu0
  %v1695 = vadd.f32 0.0, %v1694
  %v1696 = vpop.f32.mrb[0].mxu0
  %v1697 = vpop.f32.mrb[0].mxu0
  %v1698 = vadd.f32 0.0, %v1697
  %v1699 = vpop.f32.mrb[0].mxu0
  %1700 = vmatprep.mubr.bf16.mxu0 0
  %1701 = vmatmul.mubr.bf16.gmra.mrb[0].mxu0 %v1528
  %v1702 = vpop.f32.mrb[0].mxu0
  %v1703 = vadd.f32 0.0, %v1702
  %v1704 = vpop.f32.mrb[0].mxu0
  %v1705 = vpop.f32.mrb[0].mxu0
  %v1706 = vadd.f32 0.0, %v1705
  %v1707 = vpop.f32.mrb[0].mxu0
  %1708 = vmatprep.mubr.bf16.mxu0 0
  %1709 = vmatmul.mubr.bf16.gmra.mrb[0].mxu0 %v1529
  %v1710 = vpop.f32.mrb[0].mxu0
  %v1711 = vadd.f32 0.0, %v1710
  %v1712 = vpop.f32.mrb[0].mxu0
  %v1713 = vpop.f32.mrb[0].mxu0
  %v1714 = vadd.f32 0.0, %v1713
  %v1715 = vpop.f32.mrb[0].mxu0
  %1716 = vmatprep.mubr.bf16.mxu0 0
  %1717 = vmatmul.mubr.bf16.gmra.mrb[0].mxu0 %v1530
  %v1718 = vpop.f32.mrb[0].mxu0
  %v1719 = vadd.f32 0.0, %v1718
  %v1720 = vpop.f32.mrb[0].mxu0
  %v1721 = vpop.f32.mrb[0].mxu0
  %v1722 = vadd.f32 0.0, %v1721
  %v1723 = vpop.f32.mrb[0].mxu0
  %1724 = vmatprep.mubr.bf16.mxu0 0
  %1725 = vmatmul.mubr.bf16.gmra.mrb[0].mxu0 %v1531
  %v1726 = vpop.f32.mrb[0].mxu0
  %v1727 = vadd.f32 0.0, %v1726
  %v1728 = vpop.f32.mrb[0].mxu0
  %v1729 = vpop.f32.mrb[0].mxu0
  %v1730 = vadd.f32 0.0, %v1729
  %v1731 = vpop.f32.mrb[0].mxu0
  %1732 = vmatprep.mubr.bf16.mxu0 0
  %1733 = vmatmul.mubr.bf16.gmra.mrb[0].mxu0 %v1532
  %v1734 = vpop.f32.mrb[0].mxu0
  %v1735 = vadd.f32 0.0, %v1734
  %v1736 = vpop.f32.mrb[0].mxu0
  %v1737 = vpop.f32.mrb[0].mxu0
  %v1738 = vadd.f32 0.0, %v1737
  %v1739 = vpop.f32.mrb[0].mxu0
  %1740 = vmatprep.mubr.bf16.mxu0 0
  %1741 = vmatmul.mubr.bf16.gmra.mrb[0].mxu0 %v1533
  %v1742 = vpop.f32.mrb[0].mxu0
  %v1743 = vadd.f32 0.0, %v1742
  %v1744 = vpop.f32.mrb[0].mxu0
  %v1745 = vpop.f32.mrb[0].mxu0
  %v1746 = vadd.f32 0.0, %v1745
  %v1747 = vpop.f32.mrb[0].mxu0
  %1748 = vmatprep.mubr.bf16.mxu0 0
  %1749 = vmatmul.mubr.bf16.gmra.mrb[0].mxu0 %v1534
  %v1750 = vpop.f32.mrb[0].mxu0
  %v1751 = vadd.f32 0.0, %v1750
  %v1752 = vpop.f32.mrb[0].mxu0
  %v1753 = vpop.f32.mrb[0].mxu0
  %v1754 = vadd.f32 0.0, %v1753
  %v1755 = vpop.f32.mrb[0].mxu0
  %1756 = vmatprep.mubr.bf16.mxu0 0
  %1757 = vmatmul.mubr.bf16.gmra.mrb[0].mxu0 %v1535
  %v1758 = vpop.f32.mrb[0].mxu0
  %v1759 = vadd.f32 0.0, %v1758
  %v1760 = vpop.f32.mrb[0].mxu0
  %v1761 = vpop.f32.mrb[0].mxu0
  %v1762 = vadd.f32 0.0, %v1761
  %v1763 = vpop.f32.mrb[0].mxu0
  %1764 = vmatprep.mubr.bf16.mxu0 0
  %1765 = vmatmul.mubr.bf16.gmra.mrb[0].mxu0 %v1536
  %v1766 = vpop.f32.mrb[0].mxu0
  %v1767 = vadd.f32 0.0, %v1766
  %v1768 = vpop.f32.mrb[0].mxu0
  %v1769 = vpop.f32.mrb[0].mxu0
  %v1770 = vadd.f32 0.0, %v1769
  %v1771 = vpop.f32.mrb[0].mxu0
  %1772 = vmatprep.mubr.bf16.mxu0 0
  %1773 = vmatmul.mubr.bf16.gmra.mrb[0].mxu0 %v1537
  %v1774 = vpop.f32.mrb[0].mxu0
  %v1775 = vadd.f32 0.0, %v1774
  %v1776 = vpop.f32.mrb[0].mxu0
  %v1777 = vpop.f32.mrb[0].mxu0
  %v1778 = vadd.f32 0.0, %v1777
  %v1779 = vpop.f32.mrb[0].mxu0
  %1780 = vmatprep.mubr.bf16.mxu0 0
  %1781 = vmatmul.mubr.bf16.gmra.mrb[0].mxu0 %v1538
  %v1782 = vpop.f32.mrb[0].mxu0
  %v1783 = vadd.f32 0.0, %v1782
  %v1784 = vpop.f32.mrb[0].mxu0
  %v1785 = vpop.f32.mrb[0].mxu0
  %v1786 = vadd.f32 0.0, %v1785
  %v1787 = vpop.f32.mrb[0].mxu0
  %1788 = vmatprep.mubr.bf16.mxu0 0
  %1789 = vmatmul.mubr.bf16.gmra.mrb[0].mxu0 %v1539
  %v1790 = vpop.f32.mrb[0].mxu0
  %v1791 = vadd.f32 0.0, %v1790
  %v1792 = vpop.f32.mrb[0].mxu0
  %v1793 = vpop.f32.mrb[0].mxu0
  %v1794 = vadd.f32 0.0, %v1793
  %v1795 = vpop.f32.mrb[0].mxu0
  %1796 = vmatprep.mubr.bf16.mxu0 0
  %1797 = vmatmul.mubr.bf16.gmra.mrb[0].mxu0 %v1540
  %v1798 = vpop.f32.mrb[0].mxu0
  %v1799 = vadd.f32 0.0, %v1798
  %v1800 = vpop.f32.mrb[0].mxu0
  %v1801 = vpop.f32.mrb[0].mxu0
  %v1802 = vadd.f32 0.0, %v1801
  %v1803 = vpop.f32.mrb[0].mxu0
  %1804 = vmatprep.mubr.bf16.mxu0 0
  %1805 = vmatmul.mubr.bf16.gmra.mrb[0].mxu0 %v1541
  %v1806 = vpop.f32.mrb[0].mxu0
  %v1807 = vadd.f32 0.0, %v1806
  %v1808 = vpop.f32.mrb[0].mxu0
  %v1809 = vpop.f32.mrb[0].mxu0
  %v1810 = vadd.f32 0.0, %v1809
  %v1811 = vpop.f32.mrb[0].mxu0
  %1812 = vmatprep.mubr.bf16.mxu0 0
  %1813 = vmatmul.mubr.bf16.gmra.mrb[0].mxu0 %v1542
  %v1814 = vpop.f32.mrb[0].mxu0
  %v1815 = vadd.f32 0.0, %v1814
  %v1816 = vpop.f32.mrb[0].mxu0
  %v1817 = vpop.f32.mrb[0].mxu0
  %v1818 = vadd.f32 0.0, %v1817
  %v1819 = vpop.f32.mrb[0].mxu0
  %1820 = vmatprep.mubr.bf16.mxu0 0
  %1821 = vmatmul.mubr.bf16.gmra.mrb[0].mxu0 %v1543
  %v1822 = vpop.f32.mrb[0].mxu0
  %v1823 = vadd.f32 0.0, %v1822
  %v1824 = vpop.f32.mrb[0].mxu0
  %v1825 = vpop.f32.mrb[0].mxu0
  %v1826 = vadd.f32 0.0, %v1825
  %v1827 = vpop.f32.mrb[0].mxu0
  %1828 = vmatprep.mubr.bf16.mxu0 0
  %1829 = vmatmul.mubr.bf16.gmra.mrb[0].mxu0 %v1544
  %v1830 = vpop.f32.mrb[0].mxu0
  %v1831 = vadd.f32 0.0, %v1830
  %v1832 = vpop.f32.mrb[0].mxu0
  %v1833 = vpop.f32.mrb[0].mxu0
  %v1834 = vadd.f32 0.0, %v1833
  %v1835 = vpop.f32.mrb[0].mxu0
  %1836 = vmatprep.mubr.bf16.mxu0 0
  %1837 = vmatmul.mubr.bf16.gmra.mrb[0].mxu0 %v1545
  %v1838 = vpop.f32.mrb[0].mxu0
  %v1839 = vadd.f32 0.0, %v1838
  %v1840 = vpop.f32.mrb[0].mxu0
  %v1841 = vpop.f32.mrb[0].mxu0
  %v1842 = vadd.f32 0.0, %v1841
  %v1843 = vpop.f32.mrb[0].mxu0
  %1844 = vmatprep.mubr.bf16.mxu0 0
  %1845 = vmatmul.mubr.bf16.gmra.mrb[0].mxu0 %v1546
  %v1846 = vpop.f32.mrb[0].mxu0
  %v1847 = vadd.f32 0.0, %v1846
  %v1848 = vpop.f32.mrb[0].mxu0
  %v1849 = vpop.f32.mrb[0].mxu0
  %v1850 = vadd.f32 0.0, %v1849
  %v1851 = vpop.f32.mrb[0].mxu0
  %1852 = vmatprep.mubr.bf16.mxu0 0
  %1853 = vmatmul.mubr.bf16.gmra.mrb[0].mxu0 %v1547
  %v1854 = vpop.f32.mrb[0].mxu0
  %v1855 = vadd.f32 0.0, %v1854
  %v1856 = vpop.f32.mrb[0].mxu0
  %v1857 = vpop.f32.mrb[0].mxu0
  %v1858 = vadd.f32 0.0, %v1857
  %v1859 = vpop.f32.mrb[0].mxu0
  %1860 = vmatprep.mubr.bf16.mxu0 0
  %1861 = vmatmul.mubr.bf16.gmra.mrb[0].mxu0 %v1548
  %v1862 = vpop.f32.mrb[0].mxu0
  %v1863 = vadd.f32 0.0, %v1862
  %v1864 = vpop.f32.mrb[0].mxu0
  %v1865 = vpop.f32.mrb[0].mxu0
  %v1866 = vadd.f32 0.0, %v1865
  %v1867 = vpop.f32.mrb[0].mxu0
  %1868 = vmatprep.mubr.bf16.mxu0 0
  %1869 = vmatmul.mubr.bf16.gmra.mrb[0].mxu0 %v1549
  %v1870 = vpop.f32.mrb[0].mxu0
  %v1871 = vadd.f32 0.0, %v1870
  %v1872 = vpop.f32.mrb[0].mxu0
  %v1873 = vpop.f32.mrb[0].mxu0
  %v1874 = vadd.f32 0.0, %v1873
  %v1875 = vpop.f32.mrb[0].mxu0
  %1876 = vmatprep.mubr.bf16.mxu0 0
  %1877 = vmatmul.mubr.bf16.gmra.mrb[0].mxu0 %v1550
  %v1878 = vpop.f32.mrb[0].mxu0
  %v1879 = vadd.f32 0.0, %v1878
  %v1880 = vpop.f32.mrb[0].mxu0
  %v1881 = vpop.f32.mrb[0].mxu0
  %v1882 = vadd.f32 0.0, %v1881
  %v1883 = vpop.f32.mrb[0].mxu0
  %1884 = vmatprep.mubr.bf16.mxu0 0
  %1885 = vmatmul.mubr.bf16.gmra.mrb[0].mxu0 %v1551
  %v1886 = vpop.f32.mrb[0].mxu0
  %v1887 = vadd.f32 0.0, %v1886
  %v1888 = vpop.f32.mrb[0].mxu0
  %v1889 = vpop.f32.mrb[0].mxu0
  %v1890 = vadd.f32 0.0, %v1889
  %v1891 = vpop.f32.mrb[0].mxu0
  %1892 = vmatprep.mubr.bf16.mxu0 0
  %1893 = vmatmul.mubr.bf16.gmra.mrb[0].mxu0 %v1552
  %v1894 = vpop.f32.mrb[0].mxu0
  %v1895 = vadd.f32 0.0, %v1894
  %v1896 = vpop.f32.mrb[0].mxu0
  %v1897 = vpop.f32.mrb[0].mxu0
  %v1898 = vadd.f32 0.0, %v1897
  %v1899 = vpop.f32.mrb[0].mxu0
  %1900 = vmatprep.mubr.bf16.mxu0 0
  %1901 = vmatmul.mubr.bf16.gmra.mrb[0].mxu0 %v1553
  %v1902 = vpop.f32.mrb[0].mxu0
  %v1903 = vadd.f32 0.0, %v1902
  %v1904 = vpop.f32.mrb[0].mxu0
  %v1905 = vpop.f32.mrb[0].mxu0
  %v1906 = vadd.f32 0.0, %v1905
  %v1907 = vpop.f32.mrb[0].mxu0
  %1908 = vmatprep.mubr.bf16.mxu0 0
  %1909 = vmatmul.mubr.bf16.gmra.mrb[0].mxu0 %v1554
  %v1910 = vpop.f32.mrb[0].mxu0
  %v1911 = vadd.f32 0.0, %v1910
  %v1912 = vpop.f32.mrb[0].mxu0
  %v1913 = vpop.f32.mrb[0].mxu0
  %v1914 = vadd.f32 0.0, %v1913
  %v1915 = vpop.f32.mrb[0].mxu0
  %1916 = vmatprep.mubr.bf16.mxu0 0
  %1917 = vmatmul.mubr.bf16.gmra.mrb[0].mxu0 %v1555
  %v1918 = vpop.f32.mrb[0].mxu0
  %v1919 = vadd.f32 0.0, %v1918
  %v1920 = vpop.f32.mrb[0].mxu0
  %v1921 = vpop.f32.mrb[0].mxu0
  %v1922 = vadd.f32 0.0, %v1921
  %v1923 = vpop.f32.mrb[0].mxu0
  %1924 = vdwg.mxu0
  %v1989 = vunpack.c.l.b16 %v210
  %v1990 = vunpack.c.l.b16 %v211
  %v1991 = vunpack.c.l.b16 %v212
  %v1992 = vunpack.c.l.b16 %v213
  %v1993 = vunpack.c.l.b16 %v214
  %v1994 = vunpack.c.l.b16 %v215
  %v1995 = vunpack.c.l.b16 %v216
  %v1996 = vunpack.c.l.b16 %v217
  %v1997 = vunpack.c.l.b16 %v218
  %v1998 = vunpack.c.l.b16 %v219
  %v1999 = vunpack.c.l.b16 %v220
  %v2000 = vunpack.c.l.b16 %v221
  %v2001 = vunpack.c.l.b16 %v222
  %v2002 = vunpack.c.l.b16 %v223
  %v2003 = vunpack.c.l.b16 %v224
  %v2004 = vunpack.c.l.b16 %v225
  %v2005 = vunpack.c.l.b16 %v226
  %v2006 = vunpack.c.l.b16 %v227
  %v2007 = vunpack.c.l.b16 %v228
  %v2008 = vunpack.c.l.b16 %v229
  %v2009 = vunpack.c.l.b16 %v230
  %v2010 = vunpack.c.l.b16 %v231
  %v2011 = vunpack.c.l.b16 %v232
  %v2012 = vunpack.c.l.b16 %v233
  %v2013 = vunpack.c.l.b16 %v234
  %v2014 = vunpack.c.l.b16 %v235
  %v2015 = vunpack.c.l.b16 %v236
  %v2016 = vunpack.c.l.b16 %v237
  %v2017 = vunpack.c.l.b16 %v238
  %v2018 = vunpack.c.l.b16 %v239
  %v2019 = vunpack.c.l.b16 %v240
  %v2020 = vunpack.c.l.b16 %v241
  %v2021 = vunpack.c.l.b16 %v242
  %v2022 = vunpack.c.l.b16 %v243
  %v2023 = vunpack.c.l.b16 %v244
  %v2024 = vunpack.c.l.b16 %v245
  %v2025 = vunpack.c.l.b16 %v246
  %v2026 = vunpack.c.l.b16 %v247
  %v2027 = vunpack.c.l.b16 %v248
  %v2028 = vunpack.c.l.b16 %v249
  %v2029 = vunpack.c.l.b16 %v250
  %v2030 = vunpack.c.l.b16 %v251
  %v2031 = vunpack.c.l.b16 %v252
  %v2032 = vunpack.c.l.b16 %v253
  %v2033 = vunpack.c.l.b16 %v254
  %v2034 = vunpack.c.l.b16 %v255
  %v2035 = vunpack.c.l.b16 %v256
  %v2036 = vunpack.c.l.b16 %v257
  %v2037 = vunpack.c.l.b16 %v258
  %v2038 = vunpack.c.l.b16 %v259
  %v2039 = vunpack.c.l.b16 %v260
  %v2040 = vunpack.c.l.b16 %v261
  %v2041 = vunpack.c.l.b16 %v262
  %v2042 = vunpack.c.l.b16 %v263
  %v2043 = vunpack.c.l.b16 %v264
  %v2044 = vunpack.c.l.b16 %v265
  %v2045 = vunpack.c.l.b16 %v266
  %v2046 = vunpack.c.l.b16 %v267
  %v2047 = vunpack.c.l.b16 %v268
  %v2048 = vunpack.c.l.b16 %v269
  %v2049 = vunpack.c.l.b16 %v270
  %v2050 = vunpack.c.l.b16 %v271
  %v2051 = vunpack.c.l.b16 %v272
  %v2052 = vunpack.c.l.b16 %v273
  %v2053 = vpack.c.b16 %v1990, %v1989
  %v2054 = vpack.c.b16 %v1992, %v1991
  %v2055 = vpack.c.b16 %v1994, %v1993
  %v2056 = vpack.c.b16 %v1996, %v1995
  %v2057 = vpack.c.b16 %v1998, %v1997
  %v2058 = vpack.c.b16 %v2000, %v1999
  %v2059 = vpack.c.b16 %v2002, %v2001
  %v2060 = vpack.c.b16 %v2004, %v2003
  %v2061 = vpack.c.b16 %v2006, %v2005
  %v2062 = vpack.c.b16 %v2008, %v2007
  %v2063 = vpack.c.b16 %v2010, %v2009
  %v2064 = vpack.c.b16 %v2012, %v2011
  %v2065 = vpack.c.b16 %v2014, %v2013
  %v2066 = vpack.c.b16 %v2016, %v2015
  %v2067 = vpack.c.b16 %v2018, %v2017
  %v2068 = vpack.c.b16 %v2020, %v2019
  %v2069 = vpack.c.b16 %v2022, %v2021
  %v2070 = vpack.c.b16 %v2024, %v2023
  %v2071 = vpack.c.b16 %v2026, %v2025
  %v2072 = vpack.c.b16 %v2028, %v2027
  %v2073 = vpack.c.b16 %v2030, %v2029
  %v2074 = vpack.c.b16 %v2032, %v2031
  %v2075 = vpack.c.b16 %v2034, %v2033
  %v2076 = vpack.c.b16 %v2036, %v2035
  %v2077 = vpack.c.b16 %v2038, %v2037
  %v2078 = vpack.c.b16 %v2040, %v2039
  %v2079 = vpack.c.b16 %v2042, %v2041
  %v2080 = vpack.c.b16 %v2044, %v2043
  %v2081 = vpack.c.b16 %v2046, %v2045
  %v2082 = vpack.c.b16 %v2048, %v2047
  %v2083 = vpack.c.b16 %v2050, %v2049
  %v2084 = vpack.c.b16 %v2052, %v2051
  %v2133 = vunpack.c.l.b16 %v322
  %v2134 = vunpack.c.l.b16 %v323
  %v2135 = vunpack.c.l.b16 %v324
  %v2136 = vunpack.c.l.b16 %v325
  %v2137 = vunpack.c.l.b16 %v326
  %v2138 = vunpack.c.l.b16 %v327
  %v2139 = vunpack.c.l.b16 %v328
  %v2140 = vunpack.c.l.b16 %v329
  %v2141 = vunpack.c.l.b16 %v330
  %v2142 = vunpack.c.l.b16 %v331
  %v2143 = vunpack.c.l.b16 %v332
  %v2144 = vunpack.c.l.b16 %v333
  %v2145 = vunpack.c.l.b16 %v334
  %v2146 = vunpack.c.l.b16 %v335
  %v2147 = vunpack.c.l.b16 %v336
  %v2148 = vunpack.c.l.b16 %v337
  %v2149 = vpack.c.b16 %v2134, %v2133
  %v2150 = vpack.c.b16 %v2136, %v2135
  %v2151 = vpack.c.b16 %v2138, %v2137
  %v2152 = vpack.c.b16 %v2140, %v2139
  %v2153 = vpack.c.b16 %v2142, %v2141
  %v2154 = vpack.c.b16 %v2144, %v2143
  %v2155 = vpack.c.b16 %v2146, %v2145
  %v2156 = vpack.c.b16 %v2148, %v2147
  %2165 = vmatprep.subr.bf16.mxu0 0
  %2166 = vmatpush1.bf16.msra.mxu0 %v2149
  %2167 = vmatprep.subr.bf16.mxu0 0
  %2168 = vmatpush1.bf16.msra.mxu0 %v2150
  %2169 = vmatprep.subr.bf16.mxu0 0
  %2170 = vmatpush1.bf16.msra.mxu0 %v2151
  %2171 = vmatprep.subr.bf16.mxu0 0
  %2172 = vmatpush1.bf16.msra.mxu0 %v2152
  %2173 = vmatprep.subr.bf16.mxu0 0
  %2174 = vmatpush1.bf16.msra.mxu0 %v2153
  %2175 = vmatprep.subr.bf16.mxu0 0
  %2176 = vmatpush1.bf16.msra.mxu0 %v2154
  %2177 = vmatprep.subr.bf16.mxu0 0
  %2178 = vmatpush1.bf16.msra.mxu0 %v2155
  %2179 = vmatprep.subr.bf16.mxu0 0
  %2180 = vmatpush1.bf16.msra.mxu0 %v2156
  %2181 = vmatprep.subr.bf16.mxu0 0
  %2182 = vmatpush1.bf16.msra.mxu0 0
  %2183 = vmatprep.subr.bf16.mxu0 0
  %2184 = vmatpush1.bf16.msra.mxu0 0
  %2185 = vmatprep.subr.bf16.mxu0 0
  %2186 = vmatpush1.bf16.msra.mxu0 0
  %2187 = vmatprep.subr.bf16.mxu0 0
  %2188 = vmatpush1.bf16.msra.mxu0 0
  %2189 = vmatprep.subr.bf16.mxu0 0
  %2190 = vmatpush1.bf16.msra.mxu0 0
  %2191 = vmatprep.subr.bf16.mxu0 0
  %2192 = vmatpush1.bf16.msra.mxu0 0
  %2193 = vmatprep.subr.bf16.mxu0 0
  %2194 = vmatpush1.bf16.msra.mxu0 0
  %2195 = vmatprep.subr.bf16.mxu0 0
  %2196 = vmatpush1.bf16.msra.mxu0 0
  %2197 = vmatprep.mubr.bf16.mxu0 0
  %2198 = vmatmul.mubr.bf16.gmra.mrb[0].mxu0 %v2053
  %v2199 = vpop.f32.mrb[0].mxu0
  %v2200 = vadd.f32 0.0, %v2199
  %v2201 = vpop.f32.mrb[0].mxu0
  %v2202 = vpop.f32.mrb[0].mxu0
  %v2203 = vadd.f32 0.0, %v2202
  %v2204 = vpop.f32.mrb[0].mxu0
  %2205 = vmatprep.mubr.bf16.mxu0 0
  %2206 = vmatmul.mubr.bf16.gmra.mrb[0].mxu0 %v2054
  %v2207 = vpop.f32.mrb[0].mxu0
  %v2208 = vadd.f32 0.0, %v2207
  %v2209 = vpop.f32.mrb[0].mxu0
  %v2210 = vpop.f32.mrb[0].mxu0
  %v2211 = vadd.f32 0.0, %v2210
  %v2212 = vpop.f32.mrb[0].mxu0
  %2213 = vmatprep.mubr.bf16.mxu0 0
  %2214 = vmatmul.mubr.bf16.gmra.mrb[0].mxu0 %v2055
  %v2215 = vpop.f32.mrb[0].mxu0
  %v2216 = vadd.f32 0.0, %v2215
  %v2217 = vpop.f32.mrb[0].mxu0
  %v2218 = vpop.f32.mrb[0].mxu0
  %v2219 = vadd.f32 0.0, %v2218
  %v2220 = vpop.f32.mrb[0].mxu0
  %2221 = vmatprep.mubr.bf16.mxu0 0
  %2222 = vmatmul.mubr.bf16.gmra.mrb[0].mxu0 %v2056
  %v2223 = vpop.f32.mrb[0].mxu0
  %v2224 = vadd.f32 0.0, %v2223
  %v2225 = vpop.f32.mrb[0].mxu0
  %v2226 = vpop.f32.mrb[0].mxu0
  %v2227 = vadd.f32 0.0, %v2226
  %v2228 = vpop.f32.mrb[0].mxu0
  %2229 = vmatprep.mubr.bf16.mxu0 0
  %2230 = vmatmul.mubr.bf16.gmra.mrb[0].mxu0 %v2057
  %v2231 = vpop.f32.mrb[0].mxu0
  %v2232 = vadd.f32 0.0, %v2231
  %v2233 = vpop.f32.mrb[0].mxu0
  %v2234 = vpop.f32.mrb[0].mxu0
  %v2235 = vadd.f32 0.0, %v2234
  %v2236 = vpop.f32.mrb[0].mxu0
  %2237 = vmatprep.mubr.bf16.mxu0 0
  %2238 = vmatmul.mubr.bf16.gmra.mrb[0].mxu0 %v2058
  %v2239 = vpop.f32.mrb[0].mxu0
  %v2240 = vadd.f32 0.0, %v2239
  %v2241 = vpop.f32.mrb[0].mxu0
  %v2242 = vpop.f32.mrb[0].mxu0
  %v2243 = vadd.f32 0.0, %v2242
  %v2244 = vpop.f32.mrb[0].mxu0
  %2245 = vmatprep.mubr.bf16.mxu0 0
  %2246 = vmatmul.mubr.bf16.gmra.mrb[0].mxu0 %v2059
  %v2247 = vpop.f32.mrb[0].mxu0
  %v2248 = vadd.f32 0.0, %v2247
  %v2249 = vpop.f32.mrb[0].mxu0
  %v2250 = vpop.f32.mrb[0].mxu0
  %v2251 = vadd.f32 0.0, %v2250
  %v2252 = vpop.f32.mrb[0].mxu0
  %2253 = vmatprep.mubr.bf16.mxu0 0
  %2254 = vmatmul.mubr.bf16.gmra.mrb[0].mxu0 %v2060
  %v2255 = vpop.f32.mrb[0].mxu0
  %v2256 = vadd.f32 0.0, %v2255
  %v2257 = vpop.f32.mrb[0].mxu0
  %v2258 = vpop.f32.mrb[0].mxu0
  %v2259 = vadd.f32 0.0, %v2258
  %v2260 = vpop.f32.mrb[0].mxu0
  %2261 = vmatprep.mubr.bf16.mxu0 0
  %2262 = vmatmul.mubr.bf16.gmra.mrb[0].mxu0 %v2061
  %v2263 = vpop.f32.mrb[0].mxu0
  %v2264 = vadd.f32 0.0, %v2263
  %v2265 = vpop.f32.mrb[0].mxu0
  %v2266 = vpop.f32.mrb[0].mxu0
  %v2267 = vadd.f32 0.0, %v2266
  %v2268 = vpop.f32.mrb[0].mxu0
  %2269 = vmatprep.mubr.bf16.mxu0 0
  %2270 = vmatmul.mubr.bf16.gmra.mrb[0].mxu0 %v2062
  %v2271 = vpop.f32.mrb[0].mxu0
  %v2272 = vadd.f32 0.0, %v2271
  %v2273 = vpop.f32.mrb[0].mxu0
  %v2274 = vpop.f32.mrb[0].mxu0
  %v2275 = vadd.f32 0.0, %v2274
  %v2276 = vpop.f32.mrb[0].mxu0
  %2277 = vmatprep.mubr.bf16.mxu0 0
  %2278 = vmatmul.mubr.bf16.gmra.mrb[0].mxu0 %v2063
  %v2279 = vpop.f32.mrb[0].mxu0
  %v2280 = vadd.f32 0.0, %v2279
  %v2281 = vpop.f32.mrb[0].mxu0
  %v2282 = vpop.f32.mrb[0].mxu0
  %v2283 = vadd.f32 0.0, %v2282
  %v2284 = vpop.f32.mrb[0].mxu0
  %2285 = vmatprep.mubr.bf16.mxu0 0
  %2286 = vmatmul.mubr.bf16.gmra.mrb[0].mxu0 %v2064
  %v2287 = vpop.f32.mrb[0].mxu0
  %v2288 = vadd.f32 0.0, %v2287
  %v2289 = vpop.f32.mrb[0].mxu0
  %v2290 = vpop.f32.mrb[0].mxu0
  %v2291 = vadd.f32 0.0, %v2290
  %v2292 = vpop.f32.mrb[0].mxu0
  %2293 = vmatprep.mubr.bf16.mxu0 0
  %2294 = vmatmul.mubr.bf16.gmra.mrb[0].mxu0 %v2065
  %v2295 = vpop.f32.mrb[0].mxu0
  %v2296 = vadd.f32 0.0, %v2295
  %v2297 = vpop.f32.mrb[0].mxu0
  %v2298 = vpop.f32.mrb[0].mxu0
  %v2299 = vadd.f32 0.0, %v2298
  %v2300 = vpop.f32.mrb[0].mxu0
  %2301 = vmatprep.mubr.bf16.mxu0 0
  %2302 = vmatmul.mubr.bf16.gmra.mrb[0].mxu0 %v2066
  %v2303 = vpop.f32.mrb[0].mxu0
  %v2304 = vadd.f32 0.0, %v2303
  %v2305 = vpop.f32.mrb[0].mxu0
  %v2306 = vpop.f32.mrb[0].mxu0
  %v2307 = vadd.f32 0.0, %v2306
  %v2308 = vpop.f32.mrb[0].mxu0
  %2309 = vmatprep.mubr.bf16.mxu0 0
  %2310 = vmatmul.mubr.bf16.gmra.mrb[0].mxu0 %v2067
  %v2311 = vpop.f32.mrb[0].mxu0
  %v2312 = vadd.f32 0.0, %v2311
  %v2313 = vpop.f32.mrb[0].mxu0
  %v2314 = vpop.f32.mrb[0].mxu0
  %v2315 = vadd.f32 0.0, %v2314
  %v2316 = vpop.f32.mrb[0].mxu0
  %2317 = vmatprep.mubr.bf16.mxu0 0
  %2318 = vmatmul.mubr.bf16.gmra.mrb[0].mxu0 %v2068
  %v2319 = vpop.f32.mrb[0].mxu0
  %v2320 = vadd.f32 0.0, %v2319
  %v2321 = vpop.f32.mrb[0].mxu0
  %v2322 = vpop.f32.mrb[0].mxu0
  %v2323 = vadd.f32 0.0, %v2322
  %v2324 = vpop.f32.mrb[0].mxu0
  %2325 = vmatprep.mubr.bf16.mxu0 0
  %2326 = vmatmul.mubr.bf16.gmra.mrb[0].mxu0 %v2069
  %v2327 = vpop.f32.mrb[0].mxu0
  %v2328 = vadd.f32 0.0, %v2327
  %v2329 = vpop.f32.mrb[0].mxu0
  %v2330 = vpop.f32.mrb[0].mxu0
  %v2331 = vadd.f32 0.0, %v2330
  %v2332 = vpop.f32.mrb[0].mxu0
  %2333 = vmatprep.mubr.bf16.mxu0 0
  %2334 = vmatmul.mubr.bf16.gmra.mrb[0].mxu0 %v2070
  %v2335 = vpop.f32.mrb[0].mxu0
  %v2336 = vadd.f32 0.0, %v2335
  %v2337 = vpop.f32.mrb[0].mxu0
  %v2338 = vpop.f32.mrb[0].mxu0
  %v2339 = vadd.f32 0.0, %v2338
  %v2340 = vpop.f32.mrb[0].mxu0
  %2341 = vmatprep.mubr.bf16.mxu0 0
  %2342 = vmatmul.mubr.bf16.gmra.mrb[0].mxu0 %v2071
  %v2343 = vpop.f32.mrb[0].mxu0
  %v2344 = vadd.f32 0.0, %v2343
  %v2345 = vpop.f32.mrb[0].mxu0
  %v2346 = vpop.f32.mrb[0].mxu0
  %v2347 = vadd.f32 0.0, %v2346
  %v2348 = vpop.f32.mrb[0].mxu0
  %2349 = vmatprep.mubr.bf16.mxu0 0
  %2350 = vmatmul.mubr.bf16.gmra.mrb[0].mxu0 %v2072
  %v2351 = vpop.f32.mrb[0].mxu0
  %v2352 = vadd.f32 0.0, %v2351
  %v2353 = vpop.f32.mrb[0].mxu0
  %v2354 = vpop.f32.mrb[0].mxu0
  %v2355 = vadd.f32 0.0, %v2354
  %v2356 = vpop.f32.mrb[0].mxu0
  %2357 = vmatprep.mubr.bf16.mxu0 0
  %2358 = vmatmul.mubr.bf16.gmra.mrb[0].mxu0 %v2073
  %v2359 = vpop.f32.mrb[0].mxu0
  %v2360 = vadd.f32 0.0, %v2359
  %v2361 = vpop.f32.mrb[0].mxu0
  %v2362 = vpop.f32.mrb[0].mxu0
  %v2363 = vadd.f32 0.0, %v2362
  %v2364 = vpop.f32.mrb[0].mxu0
  %2365 = vmatprep.mubr.bf16.mxu0 0
  %2366 = vmatmul.mubr.bf16.gmra.mrb[0].mxu0 %v2074
  %v2367 = vpop.f32.mrb[0].mxu0
  %v2368 = vadd.f32 0.0, %v2367
  %v2369 = vpop.f32.mrb[0].mxu0
  %v2370 = vpop.f32.mrb[0].mxu0
  %v2371 = vadd.f32 0.0, %v2370
  %v2372 = vpop.f32.mrb[0].mxu0
  %2373 = vmatprep.mubr.bf16.mxu0 0
  %2374 = vmatmul.mubr.bf16.gmra.mrb[0].mxu0 %v2075
  %v2375 = vpop.f32.mrb[0].mxu0
  %v2376 = vadd.f32 0.0, %v2375
  %v2377 = vpop.f32.mrb[0].mxu0
  %v2378 = vpop.f32.mrb[0].mxu0
  %v2379 = vadd.f32 0.0, %v2378
  %v2380 = vpop.f32.mrb[0].mxu0
  %2381 = vmatprep.mubr.bf16.mxu0 0
  %2382 = vmatmul.mubr.bf16.gmra.mrb[0].mxu0 %v2076
  %v2383 = vpop.f32.mrb[0].mxu0
  %v2384 = vadd.f32 0.0, %v2383
  %v2385 = vpop.f32.mrb[0].mxu0
  %v2386 = vpop.f32.mrb[0].mxu0
  %v2387 = vadd.f32 0.0, %v2386
  %v2388 = vpop.f32.mrb[0].mxu0
  %2389 = vmatprep.mubr.bf16.mxu0 0
  %2390 = vmatmul.mubr.bf16.gmra.mrb[0].mxu0 %v2077
  %v2391 = vpop.f32.mrb[0].mxu0
  %v2392 = vadd.f32 0.0, %v2391
  %v2393 = vpop.f32.mrb[0].mxu0
  %v2394 = vpop.f32.mrb[0].mxu0
  %v2395 = vadd.f32 0.0, %v2394
  %v2396 = vpop.f32.mrb[0].mxu0
  %2397 = vmatprep.mubr.bf16.mxu0 0
  %2398 = vmatmul.mubr.bf16.gmra.mrb[0].mxu0 %v2078
  %v2399 = vpop.f32.mrb[0].mxu0
  %v2400 = vadd.f32 0.0, %v2399
  %v2401 = vpop.f32.mrb[0].mxu0
  %v2402 = vpop.f32.mrb[0].mxu0
  %v2403 = vadd.f32 0.0, %v2402
  %v2404 = vpop.f32.mrb[0].mxu0
  %2405 = vmatprep.mubr.bf16.mxu0 0
  %2406 = vmatmul.mubr.bf16.gmra.mrb[0].mxu0 %v2079
  %v2407 = vpop.f32.mrb[0].mxu0
  %v2408 = vadd.f32 0.0, %v2407
  %v2409 = vpop.f32.mrb[0].mxu0
  %v2410 = vpop.f32.mrb[0].mxu0
  %v2411 = vadd.f32 0.0, %v2410
  %v2412 = vpop.f32.mrb[0].mxu0
  %2413 = vmatprep.mubr.bf16.mxu0 0
  %2414 = vmatmul.mubr.bf16.gmra.mrb[0].mxu0 %v2080
  %v2415 = vpop.f32.mrb[0].mxu0
  %v2416 = vadd.f32 0.0, %v2415
  %v2417 = vpop.f32.mrb[0].mxu0
  %v2418 = vpop.f32.mrb[0].mxu0
  %v2419 = vadd.f32 0.0, %v2418
  %v2420 = vpop.f32.mrb[0].mxu0
  %2421 = vmatprep.mubr.bf16.mxu0 0
  %2422 = vmatmul.mubr.bf16.gmra.mrb[0].mxu0 %v2081
  %v2423 = vpop.f32.mrb[0].mxu0
  %v2424 = vadd.f32 0.0, %v2423
  %v2425 = vpop.f32.mrb[0].mxu0
  %v2426 = vpop.f32.mrb[0].mxu0
  %v2427 = vadd.f32 0.0, %v2426
  %v2428 = vpop.f32.mrb[0].mxu0
  %2429 = vmatprep.mubr.bf16.mxu0 0
  %2430 = vmatmul.mubr.bf16.gmra.mrb[0].mxu0 %v2082
  %v2431 = vpop.f32.mrb[0].mxu0
  %v2432 = vadd.f32 0.0, %v2431
  %v2433 = vpop.f32.mrb[0].mxu0
  %v2434 = vpop.f32.mrb[0].mxu0
  %v2435 = vadd.f32 0.0, %v2434
  %v2436 = vpop.f32.mrb[0].mxu0
  %2437 = vmatprep.mubr.bf16.mxu0 0
  %2438 = vmatmul.mubr.bf16.gmra.mrb[0].mxu0 %v2083
  %v2439 = vpop.f32.mrb[0].mxu0
  %v2440 = vadd.f32 0.0, %v2439
  %v2441 = vpop.f32.mrb[0].mxu0
  %v2442 = vpop.f32.mrb[0].mxu0
  %v2443 = vadd.f32 0.0, %v2442
  %v2444 = vpop.f32.mrb[0].mxu0
  %2445 = vmatprep.mubr.bf16.mxu0 0
  %2446 = vmatmul.mubr.bf16.gmra.mrb[0].mxu0 %v2084
  %v2447 = vpop.f32.mrb[0].mxu0
  %v2448 = vadd.f32 0.0, %v2447
  %v2449 = vpop.f32.mrb[0].mxu0
  %v2450 = vpop.f32.mrb[0].mxu0
  %v2451 = vadd.f32 0.0, %v2450
  %v2452 = vpop.f32.mrb[0].mxu0
  %2453 = vdwg.mxu0
  %v2454 = vsub.f32 0.0, %v613
  %v2455 = vsub.f32 0.0, %v616
  %v2456 = vsub.f32 0.0, %v621
  %v2457 = vsub.f32 0.0, %v624
  %v2458 = vsub.f32 0.0, %v629
  %v2459 = vsub.f32 0.0, %v632
  %v2460 = vsub.f32 0.0, %v637
  %v2461 = vsub.f32 0.0, %v640
  %v2462 = vsub.f32 0.0, %v645
  %v2463 = vsub.f32 0.0, %v648
  %v2464 = vsub.f32 0.0, %v653
  %v2465 = vsub.f32 0.0, %v656
  %v2466 = vsub.f32 0.0, %v661
  %v2467 = vsub.f32 0.0, %v664
  %v2468 = vsub.f32 0.0, %v669
  %v2469 = vsub.f32 0.0, %v672
  %v2470 = vsub.f32 0.0, %v677
  %v2471 = vsub.f32 0.0, %v680
  %v2472 = vsub.f32 0.0, %v685
  %v2473 = vsub.f32 0.0, %v688
  %v2474 = vsub.f32 0.0, %v693
  %v2475 = vsub.f32 0.0, %v696
  %v2476 = vsub.f32 0.0, %v701
  %v2477 = vsub.f32 0.0, %v704
  %v2478 = vsub.f32 0.0, %v709
  %v2479 = vsub.f32 0.0, %v712
  %v2480 = vsub.f32 0.0, %v717
  %v2481 = vsub.f32 0.0, %v720
  %v2482 = vsub.f32 0.0, %v725
  %v2483 = vsub.f32 0.0, %v728
  %v2484 = vsub.f32 0.0, %v733
  %v2485 = vsub.f32 0.0, %v736
  %v2486 = vsub.f32 0.0, %v741
  %v2487 = vsub.f32 0.0, %v744
  %v2488 = vsub.f32 0.0, %v749
  %v2489 = vsub.f32 0.0, %v752
  %v2490 = vsub.f32 0.0, %v757
  %v2491 = vsub.f32 0.0, %v760
  %v2492 = vsub.f32 0.0, %v765
  %v2493 = vsub.f32 0.0, %v768
  %v2494 = vsub.f32 0.0, %v773
  %v2495 = vsub.f32 0.0, %v776
  %v2496 = vsub.f32 0.0, %v781
  %v2497 = vsub.f32 0.0, %v784
  %v2498 = vsub.f32 0.0, %v789
  %v2499 = vsub.f32 0.0, %v792
  %v2500 = vsub.f32 0.0, %v797
  %v2501 = vsub.f32 0.0, %v800
  %v2502 = vsub.f32 0.0, %v805
  %v2503 = vsub.f32 0.0, %v808
  %v2504 = vsub.f32 0.0, %v813
  %v2505 = vsub.f32 0.0, %v816
  %v2506 = vsub.f32 0.0, %v821
  %v2507 = vsub.f32 0.0, %v824
  %v2508 = vsub.f32 0.0, %v829
  %v2509 = vsub.f32 0.0, %v832
  %v2510 = vsub.f32 0.0, %v837
  %v2511 = vsub.f32 0.0, %v840
  %v2512 = vsub.f32 0.0, %v845
  %v2513 = vsub.f32 0.0, %v848
  %v2514 = vsub.f32 0.0, %v853
  %v2515 = vsub.f32 0.0, %v856
  %v2516 = vsub.f32 0.0, %v861
  %v2517 = vsub.f32 0.0, %v864
  %v2518 = vsub.f32 0.0, %v1142
  %v2519 = vsub.f32 0.0, %v1145
  %v2520 = vsub.f32 0.0, %v1150
  %v2521 = vsub.f32 0.0, %v1153
  %v2522 = vsub.f32 0.0, %v1158
  %v2523 = vsub.f32 0.0, %v1161
  %v2524 = vsub.f32 0.0, %v1166
  %v2525 = vsub.f32 0.0, %v1169
  %v2526 = vsub.f32 0.0, %v1174
  %v2527 = vsub.f32 0.0, %v1177
  %v2528 = vsub.f32 0.0, %v1182
  %v2529 = vsub.f32 0.0, %v1185
  %v2530 = vsub.f32 0.0, %v1190
  %v2531 = vsub.f32 0.0, %v1193
  %v2532 = vsub.f32 0.0, %v1198
  %v2533 = vsub.f32 0.0, %v1201
  %v2534 = vsub.f32 0.0, %v1206
  %v2535 = vsub.f32 0.0, %v1209
  %v2536 = vsub.f32 0.0, %v1214
  %v2537 = vsub.f32 0.0, %v1217
  %v2538 = vsub.f32 0.0, %v1222
  %v2539 = vsub.f32 0.0, %v1225
  %v2540 = vsub.f32 0.0, %v1230
  %v2541 = vsub.f32 0.0, %v1233
  %v2542 = vsub.f32 0.0, %v1238
  %v2543 = vsub.f32 0.0, %v1241
  %v2544 = vsub.f32 0.0, %v1246
  %v2545 = vsub.f32 0.0, %v1249
  %v2546 = vsub.f32 0.0, %v1254
  %v2547 = vsub.f32 0.0, %v1257
  %v2548 = vsub.f32 0.0, %v1262
  %v2549 = vsub.f32 0.0, %v1265
  %v2550 = vsub.f32 0.0, %v1270
  %v2551 = vsub.f32 0.0, %v1273
  %v2552 = vsub.f32 0.0, %v1278
  %v2553 = vsub.f32 0.0, %v1281
  %v2554 = vsub.f32 0.0, %v1286
  %v2555 = vsub.f32 0.0, %v1289
  %v2556 = vsub.f32 0.0, %v1294
  %v2557 = vsub.f32 0.0, %v1297
  %v2558 = vsub.f32 0.0, %v1302
  %v2559 = vsub.f32 0.0, %v1305
  %v2560 = vsub.f32 0.0, %v1310
  %v2561 = vsub.f32 0.0, %v1313
  %v2562 = vsub.f32 0.0, %v1318
  %v2563 = vsub.f32 0.0, %v1321
  %v2564 = vsub.f32 0.0, %v1326
  %v2565 = vsub.f32 0.0, %v1329
  %v2566 = vsub.f32 0.0, %v1334
  %v2567 = vsub.f32 0.0, %v1337
  %v2568 = vsub.f32 0.0, %v1342
  %v2569 = vsub.f32 0.0, %v1345
  %v2570 = vsub.f32 0.0, %v1350
  %v2571 = vsub.f32 0.0, %v1353
  %v2572 = vsub.f32 0.0, %v1358
  %v2573 = vsub.f32 0.0, %v1361
  %v2574 = vsub.f32 0.0, %v1366
  %v2575 = vsub.f32 0.0, %v1369
  %v2576 = vsub.f32 0.0, %v1374
  %v2577 = vsub.f32 0.0, %v1377
  %v2578 = vsub.f32 0.0, %v1382
  %v2579 = vsub.f32 0.0, %v1385
  %v2580 = vsub.f32 0.0, %v1390
  %v2581 = vsub.f32 0.0, %v1393
  %v2582 = vsub.f32 0.0, %v1671
  %v2583 = vsub.f32 0.0, %v1674
  %v2584 = vsub.f32 0.0, %v1679
  %v2585 = vsub.f32 0.0, %v1682
  %v2586 = vsub.f32 0.0, %v1687
  %v2587 = vsub.f32 0.0, %v1690
  %v2588 = vsub.f32 0.0, %v1695
  %v2589 = vsub.f32 0.0, %v1698
  %v2590 = vsub.f32 0.0, %v1703
  %v2591 = vsub.f32 0.0, %v1706
  %v2592 = vsub.f32 0.0, %v1711
  %v2593 = vsub.f32 0.0, %v1714
  %v2594 = vsub.f32 0.0, %v1719
  %v2595 = vsub.f32 0.0, %v1722
  %v2596 = vsub.f32 0.0, %v1727
  %v2597 = vsub.f32 0.0, %v1730
  %v2598 = vsub.f32 0.0, %v1735
  %v2599 = vsub.f32 0.0, %v1738
  %v2600 = vsub.f32 0.0, %v1743
  %v2601 = vsub.f32 0.0, %v1746
  %v2602 = vsub.f32 0.0, %v1751
  %v2603 = vsub.f32 0.0, %v1754
  %v2604 = vsub.f32 0.0, %v1759
  %v2605 = vsub.f32 0.0, %v1762
  %v2606 = vsub.f32 0.0, %v1767
  %v2607 = vsub.f32 0.0, %v1770
  %v2608 = vsub.f32 0.0, %v1775
  %v2609 = vsub.f32 0.0, %v1778
  %v2610 = vsub.f32 0.0, %v1783
  %v2611 = vsub.f32 0.0, %v1786
  %v2612 = vsub.f32 0.0, %v1791
  %v2613 = vsub.f32 0.0, %v1794
  %v2614 = vsub.f32 0.0, %v1799
  %v2615 = vsub.f32 0.0, %v1802
  %v2616 = vsub.f32 0.0, %v1807
  %v2617 = vsub.f32 0.0, %v1810
  %v2618 = vsub.f32 0.0, %v1815
  %v2619 = vsub.f32 0.0, %v1818
  %v2620 = vsub.f32 0.0, %v1823
  %v2621 = vsub.f32 0.0, %v1826
  %v2622 = vsub.f32 0.0, %v1831
  %v2623 = vsub.f32 0.0, %v1834
  %v2624 = vsub.f32 0.0, %v1839
  %v2625 = vsub.f32 0.0, %v1842
  %v2626 = vsub.f32 0.0, %v1847
  %v2627 = vsub.f32 0.0, %v1850
  %v2628 = vsub.f32 0.0, %v1855
  %v2629 = vsub.f32 0.0, %v1858
  %v2630 = vsub.f32 0.0, %v1863
  %v2631 = vsub.f32 0.0, %v1866
  %v2632 = vsub.f32 0.0, %v1871
  %v2633 = vsub.f32 0.0, %v1874
  %v2634 = vsub.f32 0.0, %v1879
  %v2635 = vsub.f32 0.0, %v1882
  %v2636 = vsub.f32 0.0, %v1887
  %v2637 = vsub.f32 0.0, %v1890
  %v2638 = vsub.f32 0.0, %v1895
  %v2639 = vsub.f32 0.0, %v1898
  %v2640 = vsub.f32 0.0, %v1903
  %v2641 = vsub.f32 0.0, %v1906
  %v2642 = vsub.f32 0.0, %v1911
  %v2643 = vsub.f32 0.0, %v1914
  %v2644 = vsub.f32 0.0, %v1919
  %v2645 = vsub.f32 0.0, %v1922
  %v2646 = vsub.f32 0.0, %v2200
  %v2647 = vsub.f32 0.0, %v2203
  %v2648 = vsub.f32 0.0, %v2208
  %v2649 = vsub.f32 0.0, %v2211
  %v2650 = vsub.f32 0.0, %v2216
  %v2651 = vsub.f32 0.0, %v2219
  %v2652 = vsub.f32 0.0, %v2224
  %v2653 = vsub.f32 0.0, %v2227
  %v2654 = vsub.f32 0.0, %v2232
  %v2655 = vsub.f32 0.0, %v2235
  %v2656 = vsub.f32 0.0, %v2240
  %v2657 = vsub.f32 0.0, %v2243
  %v2658 = vsub.f32 0.0, %v2248
  %v2659 = vsub.f32 0.0, %v2251
  %v2660 = vsub.f32 0.0, %v2256
  %v2661 = vsub.f32 0.0, %v2259
  %v2662 = vsub.f32 0.0, %v2264
  %v2663 = vsub.f32 0.0, %v2267
  %v2664 = vsub.f32 0.0, %v2272
  %v2665 = vsub.f32 0.0, %v2275
  %v2666 = vsub.f32 0.0, %v2280
  %v2667 = vsub.f32 0.0, %v2283
  %v2668 = vsub.f32 0.0, %v2288
  %v2669 = vsub.f32 0.0, %v2291
  %v2670 = vsub.f32 0.0, %v2296
  %v2671 = vsub.f32 0.0, %v2299
  %v2672 = vsub.f32 0.0, %v2304
  %v2673 = vsub.f32 0.0, %v2307
  %v2674 = vsub.f32 0.0, %v2312
  %v2675 = vsub.f32 0.0, %v2315
  %v2676 = vsub.f32 0.0, %v2320
  %v2677 = vsub.f32 0.0, %v2323
  %v2678 = vsub.f32 0.0, %v2328
  %v2679 = vsub.f32 0.0, %v2331
  %v2680 = vsub.f32 0.0, %v2336
  %v2681 = vsub.f32 0.0, %v2339
  %v2682 = vsub.f32 0.0, %v2344
  %v2683 = vsub.f32 0.0, %v2347
  %v2684 = vsub.f32 0.0, %v2352
  %v2685 = vsub.f32 0.0, %v2355
  %v2686 = vsub.f32 0.0, %v2360
  %v2687 = vsub.f32 0.0, %v2363
  %v2688 = vsub.f32 0.0, %v2368
  %v2689 = vsub.f32 0.0, %v2371
  %v2690 = vsub.f32 0.0, %v2376
  %v2691 = vsub.f32 0.0, %v2379
  %v2692 = vsub.f32 0.0, %v2384
  %v2693 = vsub.f32 0.0, %v2387
  %v2694 = vsub.f32 0.0, %v2392
  %v2695 = vsub.f32 0.0, %v2395
  %v2696 = vsub.f32 0.0, %v2400
  %v2697 = vsub.f32 0.0, %v2403
  %v2698 = vsub.f32 0.0, %v2408
  %v2699 = vsub.f32 0.0, %v2411
  %v2700 = vsub.f32 0.0, %v2416
  %v2701 = vsub.f32 0.0, %v2419
  %v2702 = vsub.f32 0.0, %v2424
  %v2703 = vsub.f32 0.0, %v2427
  %v2704 = vsub.f32 0.0, %v2432
  %v2705 = vsub.f32 0.0, %v2435
  %v2706 = vsub.f32 0.0, %v2440
  %v2707 = vsub.f32 0.0, %v2443
  %v2708 = vsub.f32 0.0, %v2448
  %v2709 = vsub.f32 0.0, %v2451
  %v2710 = vmul.f32 %v2454, 1.442695
  %v2711 = vpow.pop %v2710
  %v2712 = vmul.f32 %v2455, 1.442695
  %v2713 = vpow.pop %v2712
  %v2714 = vmul.f32 %v2456, 1.442695
  %v2715 = vpow.pop %v2714
  %v2716 = vmul.f32 %v2457, 1.442695
  %v2717 = vpow.pop %v2716
  %v2718 = vmul.f32 %v2458, 1.442695
  %v2719 = vpow.pop %v2718
  %v2720 = vmul.f32 %v2459, 1.442695
  %v2721 = vpow.pop %v2720
  %v2722 = vmul.f32 %v2460, 1.442695
  %v2723 = vpow.pop %v2722
  %v2724 = vmul.f32 %v2461, 1.442695
  %v2725 = vpow.pop %v2724
  %v2726 = vmul.f32 %v2462, 1.442695
  %v2727 = vpow.pop %v2726
  %v2728 = vmul.f32 %v2463, 1.442695
  %v2729 = vpow.pop %v2728
  %v2730 = vmul.f32 %v2464, 1.442695
  %v2731 = vpow.pop %v2730
  %v2732 = vmul.f32 %v2465, 1.442695
  %v2733 = vpow.pop %v2732
  %v2734 = vmul.f32 %v2466, 1.442695
  %v2735 = vpow.pop %v2734
  %v2736 = vmul.f32 %v2467, 1.442695
  %v2737 = vpow.pop %v2736
  %v2738 = vmul.f32 %v2468, 1.442695
  %v2739 = vpow.pop %v2738
  %v2740 = vmul.f32 %v2469, 1.442695
  %v2741 = vpow.pop %v2740
  %v2742 = vmul.f32 %v2470, 1.442695
  %v2743 = vpow.pop %v2742
  %v2744 = vmul.f32 %v2471, 1.442695
  %v2745 = vpow.pop %v2744
  %v2746 = vmul.f32 %v2472, 1.442695
  %v2747 = vpow.pop %v2746
  %v2748 = vmul.f32 %v2473, 1.442695
  %v2749 = vpow.pop %v2748
  %v2750 = vmul.f32 %v2474, 1.442695
  %v2751 = vpow.pop %v2750
  %v2752 = vmul.f32 %v2475, 1.442695
  %v2753 = vpow.pop %v2752
  %v2754 = vmul.f32 %v2476, 1.442695
  %v2755 = vpow.pop %v2754
  %v2756 = vmul.f32 %v2477, 1.442695
  %v2757 = vpow.pop %v2756
  %v2758 = vmul.f32 %v2478, 1.442695
  %v2759 = vpow.pop %v2758
  %v2760 = vmul.f32 %v2479, 1.442695
  %v2761 = vpow.pop %v2760
  %v2762 = vmul.f32 %v2480, 1.442695
  %v2763 = vpow.pop %v2762
  %v2764 = vmul.f32 %v2481, 1.442695
  %v2765 = vpow.pop %v2764
  %v2766 = vmul.f32 %v2482, 1.442695
  %v2767 = vpow.pop %v2766
  %v2768 = vmul.f32 %v2483, 1.442695
  %v2769 = vpow.pop %v2768
  %v2770 = vmul.f32 %v2484, 1.442695
  %v2771 = vpow.pop %v2770
  %v2772 = vmul.f32 %v2485, 1.442695
  %v2773 = vpow.pop %v2772
  %v2774 = vmul.f32 %v2486, 1.442695
  %v2775 = vpow.pop %v2774
  %v2776 = vmul.f32 %v2487, 1.442695
  %v2777 = vpow.pop %v2776
  %v2778 = vmul.f32 %v2488, 1.442695
  %v2779 = vpow.pop %v2778
  %v2780 = vmul.f32 %v2489, 1.442695
  %v2781 = vpow.pop %v2780
  %v2782 = vmul.f32 %v2490, 1.442695
  %v2783 = vpow.pop %v2782
  %v2784 = vmul.f32 %v2491, 1.442695
  %v2785 = vpow.pop %v2784
  %v2786 = vmul.f32 %v2492, 1.442695
  %v2787 = vpow.pop %v2786
  %v2788 = vmul.f32 %v2493, 1.442695
  %v2789 = vpow.pop %v2788
  %v2790 = vmul.f32 %v2494, 1.442695
  %v2791 = vpow.pop %v2790
  %v2792 = vmul.f32 %v2495, 1.442695
  %v2793 = vpow.pop %v2792
  %v2794 = vmul.f32 %v2496, 1.442695
  %v2795 = vpow.pop %v2794
  %v2796 = vmul.f32 %v2497, 1.442695
  %v2797 = vpow.pop %v2796
  %v2798 = vmul.f32 %v2498, 1.442695
  %v2799 = vpow.pop %v2798
  %v2800 = vmul.f32 %v2499, 1.442695
  %v2801 = vpow.pop %v2800
  %v2802 = vmul.f32 %v2500, 1.442695
  %v2803 = vpow.pop %v2802
  %v2804 = vmul.f32 %v2501, 1.442695
  %v2805 = vpow.pop %v2804
  %v2806 = vmul.f32 %v2502, 1.442695
  %v2807 = vpow.pop %v2806
  %v2808 = vmul.f32 %v2503, 1.442695
  %v2809 = vpow.pop %v2808
  %v2810 = vmul.f32 %v2504, 1.442695
  %v2811 = vpow.pop %v2810
  %v2812 = vmul.f32 %v2505, 1.442695
  %v2813 = vpow.pop %v2812
  %v2814 = vmul.f32 %v2506, 1.442695
  %v2815 = vpow.pop %v2814
  %v2816 = vmul.f32 %v2507, 1.442695
  %v2817 = vpow.pop %v2816
  %v2818 = vmul.f32 %v2508, 1.442695
  %v2819 = vpow.pop %v2818
  %v2820 = vmul.f32 %v2509, 1.442695
  %v2821 = vpow.pop %v2820
  %v2822 = vmul.f32 %v2510, 1.442695
  %v2823 = vpow.pop %v2822
  %v2824 = vmul.f32 %v2511, 1.442695
  %v2825 = vpow.pop %v2824
  %v2826 = vmul.f32 %v2512, 1.442695
  %v2827 = vpow.pop %v2826
  %v2828 = vmul.f32 %v2513, 1.442695
  %v2829 = vpow.pop %v2828
  %v2830 = vmul.f32 %v2514, 1.442695
  %v2831 = vpow.pop %v2830
  %v2832 = vmul.f32 %v2515, 1.442695
  %v2833 = vpow.pop %v2832
  %v2834 = vmul.f32 %v2516, 1.442695
  %v2835 = vpow.pop %v2834
  %v2836 = vmul.f32 %v2517, 1.442695
  %v2837 = vpow.pop %v2836
  %v2838 = vmul.f32 %v2518, 1.442695
  %v2839 = vpow.pop %v2838
  %v2840 = vmul.f32 %v2519, 1.442695
  %v2841 = vpow.pop %v2840
  %v2842 = vmul.f32 %v2520, 1.442695
  %v2843 = vpow.pop %v2842
  %v2844 = vmul.f32 %v2521, 1.442695
  %v2845 = vpow.pop %v2844
  %v2846 = vmul.f32 %v2522, 1.442695
  %v2847 = vpow.pop %v2846
  %v2848 = vmul.f32 %v2523, 1.442695
  %v2849 = vpow.pop %v2848
  %v2850 = vmul.f32 %v2524, 1.442695
  %v2851 = vpow.pop %v2850
  %v2852 = vmul.f32 %v2525, 1.442695
  %v2853 = vpow.pop %v2852
  %v2854 = vmul.f32 %v2526, 1.442695
  %v2855 = vpow.pop %v2854
  %v2856 = vmul.f32 %v2527, 1.442695
  %v2857 = vpow.pop %v2856
  %v2858 = vmul.f32 %v2528, 1.442695
  %v2859 = vpow.pop %v2858
  %v2860 = vmul.f32 %v2529, 1.442695
  %v2861 = vpow.pop %v2860
  %v2862 = vmul.f32 %v2530, 1.442695
  %v2863 = vpow.pop %v2862
  %v2864 = vmul.f32 %v2531, 1.442695
  %v2865 = vpow.pop %v2864
  %v2866 = vmul.f32 %v2532, 1.442695
  %v2867 = vpow.pop %v2866
  %v2868 = vmul.f32 %v2533, 1.442695
  %v2869 = vpow.pop %v2868
  %v2870 = vmul.f32 %v2534, 1.442695
  %v2871 = vpow.pop %v2870
  %v2872 = vmul.f32 %v2535, 1.442695
  %v2873 = vpow.pop %v2872
  %v2874 = vmul.f32 %v2536, 1.442695
  %v2875 = vpow.pop %v2874
  %v2876 = vmul.f32 %v2537, 1.442695
  %v2877 = vpow.pop %v2876
  %v2878 = vmul.f32 %v2538, 1.442695
  %v2879 = vpow.pop %v2878
  %v2880 = vmul.f32 %v2539, 1.442695
  %v2881 = vpow.pop %v2880
  %v2882 = vmul.f32 %v2540, 1.442695
  %v2883 = vpow.pop %v2882
  %v2884 = vmul.f32 %v2541, 1.442695
  %v2885 = vpow.pop %v2884
  %v2886 = vmul.f32 %v2542, 1.442695
  %v2887 = vpow.pop %v2886
  %v2888 = vmul.f32 %v2543, 1.442695
  %v2889 = vpow.pop %v2888
  %v2890 = vmul.f32 %v2544, 1.442695
  %v2891 = vpow.pop %v2890
  %v2892 = vmul.f32 %v2545, 1.442695
  %v2893 = vpow.pop %v2892
  %v2894 = vmul.f32 %v2546, 1.442695
  %v2895 = vpow.pop %v2894
  %v2896 = vmul.f32 %v2547, 1.442695
  %v2897 = vpow.pop %v2896
  %v2898 = vmul.f32 %v2548, 1.442695
  %v2899 = vpow.pop %v2898
  %v2900 = vmul.f32 %v2549, 1.442695
  %v2901 = vpow.pop %v2900
  %v2902 = vmul.f32 %v2550, 1.442695
  %v2903 = vpow.pop %v2902
  %v2904 = vmul.f32 %v2551, 1.442695
  %v2905 = vpow.pop %v2904
  %v2906 = vmul.f32 %v2552, 1.442695
  %v2907 = vpow.pop %v2906
  %v2908 = vmul.f32 %v2553, 1.442695
  %v2909 = vpow.pop %v2908
  %v2910 = vmul.f32 %v2554, 1.442695
  %v2911 = vpow.pop %v2910
  %v2912 = vmul.f32 %v2555, 1.442695
  %v2913 = vpow.pop %v2912
  %v2914 = vmul.f32 %v2556, 1.442695
  %v2915 = vpow.pop %v2914
  %v2916 = vmul.f32 %v2557, 1.442695
  %v2917 = vpow.pop %v2916
  %v2918 = vmul.f32 %v2558, 1.442695
  %v2919 = vpow.pop %v2918
  %v2920 = vmul.f32 %v2559, 1.442695
  %v2921 = vpow.pop %v2920
  %v2922 = vmul.f32 %v2560, 1.442695
  %v2923 = vpow.pop %v2922
  %v2924 = vmul.f32 %v2561, 1.442695
  %v2925 = vpow.pop %v2924
  %v2926 = vmul.f32 %v2562, 1.442695
  %v2927 = vpow.pop %v2926
  %v2928 = vmul.f32 %v2563, 1.442695
  %v2929 = vpow.pop %v2928
  %v2930 = vmul.f32 %v2564, 1.442695
  %v2931 = vpow.pop %v2930
  %v2932 = vmul.f32 %v2565, 1.442695
  %v2933 = vpow.pop %v2932
  %v2934 = vmul.f32 %v2566, 1.442695
  %v2935 = vpow.pop %v2934
  %v2936 = vmul.f32 %v2567, 1.442695
  %v2937 = vpow.pop %v2936
  %v2938 = vmul.f32 %v2568, 1.442695
  %v2939 = vpow.pop %v2938
  %v2940 = vmul.f32 %v2569, 1.442695
  %v2941 = vpow.pop %v2940
  %v2942 = vmul.f32 %v2570, 1.442695
  %v2943 = vpow.pop %v2942
  %v2944 = vmul.f32 %v2571, 1.442695
  %v2945 = vpow.pop %v2944
  %v2946 = vmul.f32 %v2572, 1.442695
  %v2947 = vpow.pop %v2946
  %v2948 = vmul.f32 %v2573, 1.442695
  %v2949 = vpow.pop %v2948
  %v2950 = vmul.f32 %v2574, 1.442695
  %v2951 = vpow.pop %v2950
  %v2952 = vmul.f32 %v2575, 1.442695
  %v2953 = vpow.pop %v2952
  %v2954 = vmul.f32 %v2576, 1.442695
  %v2955 = vpow.pop %v2954
  %v2956 = vmul.f32 %v2577, 1.442695
  %v2957 = vpow.pop %v2956
  %v2958 = vmul.f32 %v2578, 1.442695
  %v2959 = vpow.pop %v2958
  %v2960 = vmul.f32 %v2579, 1.442695
  %v2961 = vpow.pop %v2960
  %v2962 = vmul.f32 %v2580, 1.442695
  %v2963 = vpow.pop %v2962
  %v2964 = vmul.f32 %v2581, 1.442695
  %v2965 = vpow.pop %v2964
  %v2966 = vmul.f32 %v2582, 1.442695
  %v2967 = vpow.pop %v2966
  %v2968 = vmul.f32 %v2583, 1.442695
  %v2969 = vpow.pop %v2968
  %v2970 = vmul.f32 %v2584, 1.442695
  %v2971 = vpow.pop %v2970
  %v2972 = vmul.f32 %v2585, 1.442695
  %v2973 = vpow.pop %v2972
  %v2974 = vmul.f32 %v2586, 1.442695
  %v2975 = vpow.pop %v2974
  %v2976 = vmul.f32 %v2587, 1.442695
  %v2977 = vpow.pop %v2976
  %v2978 = vmul.f32 %v2588, 1.442695
  %v2979 = vpow.pop %v2978
  %v2980 = vmul.f32 %v2589, 1.442695
  %v2981 = vpow.pop %v2980
  %v2982 = vmul.f32 %v2590, 1.442695
  %v2983 = vpow.pop %v2982
  %v2984 = vmul.f32 %v2591, 1.442695
  %v2985 = vpow.pop %v2984
  %v2986 = vmul.f32 %v2592, 1.442695
  %v2987 = vpow.pop %v2986
  %v2988 = vmul.f32 %v2593, 1.442695
  %v2989 = vpow.pop %v2988
  %v2990 = vmul.f32 %v2594, 1.442695
  %v2991 = vpow.pop %v2990
  %v2992 = vmul.f32 %v2595, 1.442695
  %v2993 = vpow.pop %v2992
  %v2994 = vmul.f32 %v2596, 1.442695
  %v2995 = vpow.pop %v2994
  %v2996 = vmul.f32 %v2597, 1.442695
  %v2997 = vpow.pop %v2996
  %v2998 = vmul.f32 %v2598, 1.442695
  %v2999 = vpow.pop %v2998
  %v3000 = vmul.f32 %v2599, 1.442695
  %v3001 = vpow.pop %v3000
  %v3002 = vmul.f32 %v2600, 1.442695
  %v3003 = vpow.pop %v3002
  %v3004 = vmul.f32 %v2601, 1.442695
  %v3005 = vpow.pop %v3004
  %v3006 = vmul.f32 %v2602, 1.442695
  %v3007 = vpow.pop %v3006
  %v3008 = vmul.f32 %v2603, 1.442695
  %v3009 = vpow.pop %v3008
  %v3010 = vmul.f32 %v2604, 1.442695
  %v3011 = vpow.pop %v3010
  %v3012 = vmul.f32 %v2605, 1.442695
  %v3013 = vpow.pop %v3012
  %v3014 = vmul.f32 %v2606, 1.442695
  %v3015 = vpow.pop %v3014
  %v3016 = vmul.f32 %v2607, 1.442695
  %v3017 = vpow.pop %v3016
  %v3018 = vmul.f32 %v2608, 1.442695
  %v3019 = vpow.pop %v3018
  %v3020 = vmul.f32 %v2609, 1.442695
  %v3021 = vpow.pop %v3020
  %v3022 = vmul.f32 %v2610, 1.442695
  %v3023 = vpow.pop %v3022
  %v3024 = vmul.f32 %v2611, 1.442695
  %v3025 = vpow.pop %v3024
  %v3026 = vmul.f32 %v2612, 1.442695
  %v3027 = vpow.pop %v3026
  %v3028 = vmul.f32 %v2613, 1.442695
  %v3029 = vpow.pop %v3028
  %v3030 = vmul.f32 %v2614, 1.442695
  %v3031 = vpow.pop %v3030
  %v3032 = vmul.f32 %v2615, 1.442695
  %v3033 = vpow.pop %v3032
  %v3034 = vmul.f32 %v2616, 1.442695
  %v3035 = vpow.pop %v3034
  %v3036 = vmul.f32 %v2617, 1.442695
  %v3037 = vpow.pop %v3036
  %v3038 = vmul.f32 %v2618, 1.442695
  %v3039 = vpow.pop %v3038
  %v3040 = vmul.f32 %v2619, 1.442695
  %v3041 = vpow.pop %v3040
  %v3042 = vmul.f32 %v2620, 1.442695
  %v3043 = vpow.pop %v3042
  %v3044 = vmul.f32 %v2621, 1.442695
  %v3045 = vpow.pop %v3044
  %v3046 = vmul.f32 %v2622, 1.442695
  %v3047 = vpow.pop %v3046
  %v3048 = vmul.f32 %v2623, 1.442695
  %v3049 = vpow.pop %v3048
  %v3050 = vmul.f32 %v2624, 1.442695
  %v3051 = vpow.pop %v3050
  %v3052 = vmul.f32 %v2625, 1.442695
  %v3053 = vpow.pop %v3052
  %v3054 = vmul.f32 %v2626, 1.442695
  %v3055 = vpow.pop %v3054
  %v3056 = vmul.f32 %v2627, 1.442695
  %v3057 = vpow.pop %v3056
  %v3058 = vmul.f32 %v2628, 1.442695
  %v3059 = vpow.pop %v3058
  %v3060 = vmul.f32 %v2629, 1.442695
  %v3061 = vpow.pop %v3060
  %v3062 = vmul.f32 %v2630, 1.442695
  %v3063 = vpow.pop %v3062
  %v3064 = vmul.f32 %v2631, 1.442695
  %v3065 = vpow.pop %v3064
  %v3066 = vmul.f32 %v2632, 1.442695
  %v3067 = vpow.pop %v3066
  %v3068 = vmul.f32 %v2633, 1.442695
  %v3069 = vpow.pop %v3068
  %v3070 = vmul.f32 %v2634, 1.442695
  %v3071 = vpow.pop %v3070
  %v3072 = vmul.f32 %v2635, 1.442695
  %v3073 = vpow.pop %v3072
  %v3074 = vmul.f32 %v2636, 1.442695
  %v3075 = vpow.pop %v3074
  %v3076 = vmul.f32 %v2637, 1.442695
  %v3077 = vpow.pop %v3076
  %v3078 = vmul.f32 %v2638, 1.442695
  %v3079 = vpow.pop %v3078
  %v3080 = vmul.f32 %v2639, 1.442695
  %v3081 = vpow.pop %v3080
  %v3082 = vmul.f32 %v2640, 1.442695
  %v3083 = vpow.pop %v3082
  %v3084 = vmul.f32 %v2641, 1.442695
  %v3085 = vpow.pop %v3084
  %v3086 = vmul.f32 %v2642, 1.442695
  %v3087 = vpow.pop %v3086
  %v3088 = vmul.f32 %v2643, 1.442695
  %v3089 = vpow.pop %v3088
  %v3090 = vmul.f32 %v2644, 1.442695
  %v3091 = vpow.pop %v3090
  %v3092 = vmul.f32 %v2645, 1.442695
  %v3093 = vpow.pop %v3092
  %v3094 = vmul.f32 %v2646, 1.442695
  %v3095 = vpow.pop %v3094
  %v3096 = vmul.f32 %v2647, 1.442695
  %v3097 = vpow.pop %v3096
  %v3098 = vmul.f32 %v2648, 1.442695
  %v3099 = vpow.pop %v3098
  %v3100 = vmul.f32 %v2649, 1.442695
  %v3101 = vpow.pop %v3100
  %v3102 = vmul.f32 %v2650, 1.442695
  %v3103 = vpow.pop %v3102
  %v3104 = vmul.f32 %v2651, 1.442695
  %v3105 = vpow.pop %v3104
  %v3106 = vmul.f32 %v2652, 1.442695
  %v3107 = vpow.pop %v3106
  %v3108 = vmul.f32 %v2653, 1.442695
  %v3109 = vpow.pop %v3108
  %v3110 = vmul.f32 %v2654, 1.442695
  %v3111 = vpow.pop %v3110
  %v3112 = vmul.f32 %v2655, 1.442695
  %v3113 = vpow.pop %v3112
  %v3114 = vmul.f32 %v2656, 1.442695
  %v3115 = vpow.pop %v3114
  %v3116 = vmul.f32 %v2657, 1.442695
  %v3117 = vpow.pop %v3116
  %v3118 = vmul.f32 %v2658, 1.442695
  %v3119 = vpow.pop %v3118
  %v3120 = vmul.f32 %v2659, 1.442695
  %v3121 = vpow.pop %v3120
  %v3122 = vmul.f32 %v2660, 1.442695
  %v3123 = vpow.pop %v3122
  %v3124 = vmul.f32 %v2661, 1.442695
  %v3125 = vpow.pop %v3124
  %v3126 = vmul.f32 %v2662, 1.442695
  %v3127 = vpow.pop %v3126
  %v3128 = vmul.f32 %v2663, 1.442695
  %v3129 = vpow.pop %v3128
  %v3130 = vmul.f32 %v2664, 1.442695
  %v3131 = vpow.pop %v3130
  %v3132 = vmul.f32 %v2665, 1.442695
  %v3133 = vpow.pop %v3132
  %v3134 = vmul.f32 %v2666, 1.442695
  %v3135 = vpow.pop %v3134
  %v3136 = vmul.f32 %v2667, 1.442695
  %v3137 = vpow.pop %v3136
  %v3138 = vmul.f32 %v2668, 1.442695
  %v3139 = vpow.pop %v3138
  %v3140 = vmul.f32 %v2669, 1.442695
  %v3141 = vpow.pop %v3140
  %v3142 = vmul.f32 %v2670, 1.442695
  %v3143 = vpow.pop %v3142
  %v3144 = vmul.f32 %v2671, 1.442695
  %v3145 = vpow.pop %v3144
  %v3146 = vmul.f32 %v2672, 1.442695
  %v3147 = vpow.pop %v3146
  %v3148 = vmul.f32 %v2673, 1.442695
  %v3149 = vpow.pop %v3148
  %v3150 = vmul.f32 %v2674, 1.442695
  %v3151 = vpow.pop %v3150
  %v3152 = vmul.f32 %v2675, 1.442695
  %v3153 = vpow.pop %v3152
  %v3154 = vmul.f32 %v2676, 1.442695
  %v3155 = vpow.pop %v3154
  %v3156 = vmul.f32 %v2677, 1.442695
  %v3157 = vpow.pop %v3156
  %v3158 = vmul.f32 %v2678, 1.442695
  %v3159 = vpow.pop %v3158
  %v3160 = vmul.f32 %v2679, 1.442695
  %v3161 = vpow.pop %v3160
  %v3162 = vmul.f32 %v2680, 1.442695
  %v3163 = vpow.pop %v3162
  %v3164 = vmul.f32 %v2681, 1.442695
  %v3165 = vpow.pop %v3164
  %v3166 = vmul.f32 %v2682, 1.442695
  %v3167 = vpow.pop %v3166
  %v3168 = vmul.f32 %v2683, 1.442695
  %v3169 = vpow.pop %v3168
  %v3170 = vmul.f32 %v2684, 1.442695
  %v3171 = vpow.pop %v3170
  %v3172 = vmul.f32 %v2685, 1.442695
  %v3173 = vpow.pop %v3172
  %v3174 = vmul.f32 %v2686, 1.442695
  %v3175 = vpow.pop %v3174
  %v3176 = vmul.f32 %v2687, 1.442695
  %v3177 = vpow.pop %v3176
  %v3178 = vmul.f32 %v2688, 1.442695
  %v3179 = vpow.pop %v3178
  %v3180 = vmul.f32 %v2689, 1.442695
  %v3181 = vpow.pop %v3180
  %v3182 = vmul.f32 %v2690, 1.442695
  %v3183 = vpow.pop %v3182
  %v3184 = vmul.f32 %v2691, 1.442695
  %v3185 = vpow.pop %v3184
  %v3186 = vmul.f32 %v2692, 1.442695
  %v3187 = vpow.pop %v3186
  %v3188 = vmul.f32 %v2693, 1.442695
  %v3189 = vpow.pop %v3188
  %v3190 = vmul.f32 %v2694, 1.442695
  %v3191 = vpow.pop %v3190
  %v3192 = vmul.f32 %v2695, 1.442695
  %v3193 = vpow.pop %v3192
  %v3194 = vmul.f32 %v2696, 1.442695
  %v3195 = vpow.pop %v3194
  %v3196 = vmul.f32 %v2697, 1.442695
  %v3197 = vpow.pop %v3196
  %v3198 = vmul.f32 %v2698, 1.442695
  %v3199 = vpow.pop %v3198
  %v3200 = vmul.f32 %v2699, 1.442695
  %v3201 = vpow.pop %v3200
  %v3202 = vmul.f32 %v2700, 1.442695
  %v3203 = vpow.pop %v3202
  %v3204 = vmul.f32 %v2701, 1.442695
  %v3205 = vpow.pop %v3204
  %v3206 = vmul.f32 %v2702, 1.442695
  %v3207 = vpow.pop %v3206
  %v3208 = vmul.f32 %v2703, 1.442695
  %v3209 = vpow.pop %v3208
  %v3210 = vmul.f32 %v2704, 1.442695
  %v3211 = vpow.pop %v3210
  %v3212 = vmul.f32 %v2705, 1.442695
  %v3213 = vpow.pop %v3212
  %v3214 = vmul.f32 %v2706, 1.442695
  %v3215 = vpow.pop %v3214
  %v3216 = vmul.f32 %v2707, 1.442695
  %v3217 = vpow.pop %v3216
  %v3218 = vmul.f32 %v2708, 1.442695
  %v3219 = vpow.pop %v3218
  %v3220 = vmul.f32 %v2709, 1.442695
  %v3221 = vpow.pop %v3220
  %v3222 = vadd.f32 %v2711, 1.0
  %v3223 = vadd.f32 %v2713, 1.0
  %v3224 = vadd.f32 %v2715, 1.0
  %v3225 = vadd.f32 %v2717, 1.0
  %v3226 = vadd.f32 %v2719, 1.0
  %v3227 = vadd.f32 %v2721, 1.0
  %v3228 = vadd.f32 %v2723, 1.0
  %v3229 = vadd.f32 %v2725, 1.0
  %v3230 = vadd.f32 %v2727, 1.0
  %v3231 = vadd.f32 %v2729, 1.0
  %v3232 = vadd.f32 %v2731, 1.0
  %v3233 = vadd.f32 %v2733, 1.0
  %v3234 = vadd.f32 %v2735, 1.0
  %v3235 = vadd.f32 %v2737, 1.0
  %v3236 = vadd.f32 %v2739, 1.0
  %v3237 = vadd.f32 %v2741, 1.0
  %v3238 = vadd.f32 %v2743, 1.0
  %v3239 = vadd.f32 %v2745, 1.0
  %v3240 = vadd.f32 %v2747, 1.0
  %v3241 = vadd.f32 %v2749, 1.0
  %v3242 = vadd.f32 %v2751, 1.0
  %v3243 = vadd.f32 %v2753, 1.0
  %v3244 = vadd.f32 %v2755, 1.0
  %v3245 = vadd.f32 %v2757, 1.0
  %v3246 = vadd.f32 %v2759, 1.0
  %v3247 = vadd.f32 %v2761, 1.0
  %v3248 = vadd.f32 %v2763, 1.0
  %v3249 = vadd.f32 %v2765, 1.0
  %v3250 = vadd.f32 %v2767, 1.0
  %v3251 = vadd.f32 %v2769, 1.0
  %v3252 = vadd.f32 %v2771, 1.0
  %v3253 = vadd.f32 %v2773, 1.0
  %v3254 = vadd.f32 %v2775, 1.0
  %v3255 = vadd.f32 %v2777, 1.0
  %v3256 = vadd.f32 %v2779, 1.0
  %v3257 = vadd.f32 %v2781, 1.0
  %v3258 = vadd.f32 %v2783, 1.0
  %v3259 = vadd.f32 %v2785, 1.0
  %v3260 = vadd.f32 %v2787, 1.0
  %v3261 = vadd.f32 %v2789, 1.0
  %v3262 = vadd.f32 %v2791, 1.0
  %v3263 = vadd.f32 %v2793, 1.0
  %v3264 = vadd.f32 %v2795, 1.0
  %v3265 = vadd.f32 %v2797, 1.0
  %v3266 = vadd.f32 %v2799, 1.0
  %v3267 = vadd.f32 %v2801, 1.0
  %v3268 = vadd.f32 %v2803, 1.0
  %v3269 = vadd.f32 %v2805, 1.0
  %v3270 = vadd.f32 %v2807, 1.0
  %v3271 = vadd.f32 %v2809, 1.0
  %v3272 = vadd.f32 %v2811, 1.0
  %v3273 = vadd.f32 %v2813, 1.0
  %v3274 = vadd.f32 %v2815, 1.0
  %v3275 = vadd.f32 %v2817, 1.0
  %v3276 = vadd.f32 %v2819, 1.0
  %v3277 = vadd.f32 %v2821, 1.0
  %v3278 = vadd.f32 %v2823, 1.0
  %v3279 = vadd.f32 %v2825, 1.0
  %v3280 = vadd.f32 %v2827, 1.0
  %v3281 = vadd.f32 %v2829, 1.0
  %v3282 = vadd.f32 %v2831, 1.0
  %v3283 = vadd.f32 %v2833, 1.0
  %v3284 = vadd.f32 %v2835, 1.0
  %v3285 = vadd.f32 %v2837, 1.0
  %v3286 = vadd.f32 %v2839, 1.0
  %v3287 = vadd.f32 %v2841, 1.0
  %v3288 = vadd.f32 %v2843, 1.0
  %v3289 = vadd.f32 %v2845, 1.0
  %v3290 = vadd.f32 %v2847, 1.0
  %v3291 = vadd.f32 %v2849, 1.0
  %v3292 = vadd.f32 %v2851, 1.0
  %v3293 = vadd.f32 %v2853, 1.0
  %v3294 = vadd.f32 %v2855, 1.0
  %v3295 = vadd.f32 %v2857, 1.0
  %v3296 = vadd.f32 %v2859, 1.0
  %v3297 = vadd.f32 %v2861, 1.0
  %v3298 = vadd.f32 %v2863, 1.0
  %v3299 = vadd.f32 %v2865, 1.0
  %v3300 = vadd.f32 %v2867, 1.0
  %v3301 = vadd.f32 %v2869, 1.0
  %v3302 = vadd.f32 %v2871, 1.0
  %v3303 = vadd.f32 %v2873, 1.0
  %v3304 = vadd.f32 %v2875, 1.0
  %v3305 = vadd.f32 %v2877, 1.0
  %v3306 = vadd.f32 %v2879, 1.0
  %v3307 = vadd.f32 %v2881, 1.0
  %v3308 = vadd.f32 %v2883, 1.0
  %v3309 = vadd.f32 %v2885, 1.0
  %v3310 = vadd.f32 %v2887, 1.0
  %v3311 = vadd.f32 %v2889, 1.0
  %v3312 = vadd.f32 %v2891, 1.0
  %v3313 = vadd.f32 %v2893, 1.0
  %v3314 = vadd.f32 %v2895, 1.0
  %v3315 = vadd.f32 %v2897, 1.0
  %v3316 = vadd.f32 %v2899, 1.0
  %v3317 = vadd.f32 %v2901, 1.0
  %v3318 = vadd.f32 %v2903, 1.0
  %v3319 = vadd.f32 %v2905, 1.0
  %v3320 = vadd.f32 %v2907, 1.0
  %v3321 = vadd.f32 %v2909, 1.0
  %v3322 = vadd.f32 %v2911, 1.0
  %v3323 = vadd.f32 %v2913, 1.0
  %v3324 = vadd.f32 %v2915, 1.0
  %v3325 = vadd.f32 %v2917, 1.0
  %v3326 = vadd.f32 %v2919, 1.0
  %v3327 = vadd.f32 %v2921, 1.0
  %v3328 = vadd.f32 %v2923, 1.0
  %v3329 = vadd.f32 %v2925, 1.0
  %v3330 = vadd.f32 %v2927, 1.0
  %v3331 = vadd.f32 %v2929, 1.0
  %v3332 = vadd.f32 %v2931, 1.0
  %v3333 = vadd.f32 %v2933, 1.0
  %v3334 = vadd.f32 %v2935, 1.0
  %v3335 = vadd.f32 %v2937, 1.0
  %v3336 = vadd.f32 %v2939, 1.0
  %v3337 = vadd.f32 %v2941, 1.0
  %v3338 = vadd.f32 %v2943, 1.0
  %v3339 = vadd.f32 %v2945, 1.0
  %v3340 = vadd.f32 %v2947, 1.0
  %v3341 = vadd.f32 %v2949, 1.0
  %v3342 = vadd.f32 %v2951, 1.0
  %v3343 = vadd.f32 %v2953, 1.0
  %v3344 = vadd.f32 %v2955, 1.0
  %v3345 = vadd.f32 %v2957, 1.0
  %v3346 = vadd.f32 %v2959, 1.0
  %v3347 = vadd.f32 %v2961, 1.0
  %v3348 = vadd.f32 %v2963, 1.0
  %v3349 = vadd.f32 %v2965, 1.0
  %v3350 = vadd.f32 %v2967, 1.0
  %v3351 = vadd.f32 %v2969, 1.0
  %v3352 = vadd.f32 %v2971, 1.0
  %v3353 = vadd.f32 %v2973, 1.0
  %v3354 = vadd.f32 %v2975, 1.0
  %v3355 = vadd.f32 %v2977, 1.0
  %v3356 = vadd.f32 %v2979, 1.0
  %v3357 = vadd.f32 %v2981, 1.0
  %v3358 = vadd.f32 %v2983, 1.0
  %v3359 = vadd.f32 %v2985, 1.0
  %v3360 = vadd.f32 %v2987, 1.0
  %v3361 = vadd.f32 %v2989, 1.0
  %v3362 = vadd.f32 %v2991, 1.0
  %v3363 = vadd.f32 %v2993, 1.0
  %v3364 = vadd.f32 %v2995, 1.0
  %v3365 = vadd.f32 %v2997, 1.0
  %v3366 = vadd.f32 %v2999, 1.0
  %v3367 = vadd.f32 %v3001, 1.0
  %v3368 = vadd.f32 %v3003, 1.0
  %v3369 = vadd.f32 %v3005, 1.0
  %v3370 = vadd.f32 %v3007, 1.0
  %v3371 = vadd.f32 %v3009, 1.0
  %v3372 = vadd.f32 %v3011, 1.0
  %v3373 = vadd.f32 %v3013, 1.0
  %v3374 = vadd.f32 %v3015, 1.0
  %v3375 = vadd.f32 %v3017, 1.0
  %v3376 = vadd.f32 %v3019, 1.0
  %v3377 = vadd.f32 %v3021, 1.0
  %v3378 = vadd.f32 %v3023, 1.0
  %v3379 = vadd.f32 %v3025, 1.0
  %v3380 = vadd.f32 %v3027, 1.0
  %v3381 = vadd.f32 %v3029, 1.0
  %v3382 = vadd.f32 %v3031, 1.0
  %v3383 = vadd.f32 %v3033, 1.0
  %v3384 = vadd.f32 %v3035, 1.0
  %v3385 = vadd.f32 %v3037, 1.0
  %v3386 = vadd.f32 %v3039, 1.0
  %v3387 = vadd.f32 %v3041, 1.0
  %v3388 = vadd.f32 %v3043, 1.0
  %v3389 = vadd.f32 %v3045, 1.0
  %v3390 = vadd.f32 %v3047, 1.0
  %v3391 = vadd.f32 %v3049, 1.0
  %v3392 = vadd.f32 %v3051, 1.0
  %v3393 = vadd.f32 %v3053, 1.0
  %v3394 = vadd.f32 %v3055, 1.0
  %v3395 = vadd.f32 %v3057, 1.0
  %v3396 = vadd.f32 %v3059, 1.0
  %v3397 = vadd.f32 %v3061, 1.0
  %v3398 = vadd.f32 %v3063, 1.0
  %v3399 = vadd.f32 %v3065, 1.0
  %v3400 = vadd.f32 %v3067, 1.0
  %v3401 = vadd.f32 %v3069, 1.0
  %v3402 = vadd.f32 %v3071, 1.0
  %v3403 = vadd.f32 %v3073, 1.0
  %v3404 = vadd.f32 %v3075, 1.0
  %v3405 = vadd.f32 %v3077, 1.0
  %v3406 = vadd.f32 %v3079, 1.0
  %v3407 = vadd.f32 %v3081, 1.0
  %v3408 = vadd.f32 %v3083, 1.0
  %v3409 = vadd.f32 %v3085, 1.0
  %v3410 = vadd.f32 %v3087, 1.0
  %v3411 = vadd.f32 %v3089, 1.0
  %v3412 = vadd.f32 %v3091, 1.0
  %v3413 = vadd.f32 %v3093, 1.0
  %v3414 = vadd.f32 %v3095, 1.0
  %v3415 = vadd.f32 %v3097, 1.0
  %v3416 = vadd.f32 %v3099, 1.0
  %v3417 = vadd.f32 %v3101, 1.0
  %v3418 = vadd.f32 %v3103, 1.0
  %v3419 = vadd.f32 %v3105, 1.0
  %v3420 = vadd.f32 %v3107, 1.0
  %v3421 = vadd.f32 %v3109, 1.0
  %v3422 = vadd.f32 %v3111, 1.0
  %v3423 = vadd.f32 %v3113, 1.0
  %v3424 = vadd.f32 %v3115, 1.0
  %v3425 = vadd.f32 %v3117, 1.0
  %v3426 = vadd.f32 %v3119, 1.0
  %v3427 = vadd.f32 %v3121, 1.0
  %v3428 = vadd.f32 %v3123, 1.0
  %v3429 = vadd.f32 %v3125, 1.0
  %v3430 = vadd.f32 %v3127, 1.0
  %v3431 = vadd.f32 %v3129, 1.0
  %v3432 = vadd.f32 %v3131, 1.0
  %v3433 = vadd.f32 %v3133, 1.0
  %v3434 = vadd.f32 %v3135, 1.0
  %v3435 = vadd.f32 %v3137, 1.0
  %v3436 = vadd.f32 %v3139, 1.0
  %v3437 = vadd.f32 %v3141, 1.0
  %v3438 = vadd.f32 %v3143, 1.0
  %v3439 = vadd.f32 %v3145, 1.0
  %v3440 = vadd.f32 %v3147, 1.0
  %v3441 = vadd.f32 %v3149, 1.0
  %v3442 = vadd.f32 %v3151, 1.0
  %v3443 = vadd.f32 %v3153, 1.0
  %v3444 = vadd.f32 %v3155, 1.0
  %v3445 = vadd.f32 %v3157, 1.0
  %v3446 = vadd.f32 %v3159, 1.0
  %v3447 = vadd.f32 %v3161, 1.0
  %v3448 = vadd.f32 %v3163, 1.0
  %v3449 = vadd.f32 %v3165, 1.0
  %v3450 = vadd.f32 %v3167, 1.0
  %v3451 = vadd.f32 %v3169, 1.0
  %v3452 = vadd.f32 %v3171, 1.0
  %v3453 = vadd.f32 %v3173, 1.0
  %v3454 = vadd.f32 %v3175, 1.0
  %v3455 = vadd.f32 %v3177, 1.0
  %v3456 = vadd.f32 %v3179, 1.0
  %v3457 = vadd.f32 %v3181, 1.0
  %v3458 = vadd.f32 %v3183, 1.0
  %v3459 = vadd.f32 %v3185, 1.0
  %v3460 = vadd.f32 %v3187, 1.0
  %v3461 = vadd.f32 %v3189, 1.0
  %v3462 = vadd.f32 %v3191, 1.0
  %v3463 = vadd.f32 %v3193, 1.0
  %v3464 = vadd.f32 %v3195, 1.0
  %v3465 = vadd.f32 %v3197, 1.0
  %v3466 = vadd.f32 %v3199, 1.0
  %v3467 = vadd.f32 %v3201, 1.0
  %v3468 = vadd.f32 %v3203, 1.0
  %v3469 = vadd.f32 %v3205, 1.0
  %v3470 = vadd.f32 %v3207, 1.0
  %v3471 = vadd.f32 %v3209, 1.0
  %v3472 = vadd.f32 %v3211, 1.0
  %v3473 = vadd.f32 %v3213, 1.0
  %v3474 = vadd.f32 %v3215, 1.0
  %v3475 = vadd.f32 %v3217, 1.0
  %v3476 = vadd.f32 %v3219, 1.0
  %v3477 = vadd.f32 %v3221, 1.0
  %v3478 = vrcp.pop %v3222
  %v3479 = vmul.f32 1.0, %v3478
  %v3480 = vrcp.pop %v3223
  %v3481 = vmul.f32 1.0, %v3480
  %v3482 = vrcp.pop %v3224
  %v3483 = vmul.f32 1.0, %v3482
  %v3484 = vrcp.pop %v3225
  %v3485 = vmul.f32 1.0, %v3484
  %v3486 = vrcp.pop %v3226
  %v3487 = vmul.f32 1.0, %v3486
  %v3488 = vrcp.pop %v3227
  %v3489 = vmul.f32 1.0, %v3488
  %v3490 = vrcp.pop %v3228
  %v3491 = vmul.f32 1.0, %v3490
  %v3492 = vrcp.pop %v3229
  %v3493 = vmul.f32 1.0, %v3492
  %v3494 = vrcp.pop %v3230
  %v3495 = vmul.f32 1.0, %v3494
  %v3496 = vrcp.pop %v3231
  %v3497 = vmul.f32 1.0, %v3496
  %v3498 = vrcp.pop %v3232
  %v3499 = vmul.f32 1.0, %v3498
  %v3500 = vrcp.pop %v3233
  %v3501 = vmul.f32 1.0, %v3500
  %v3502 = vrcp.pop %v3234
  %v3503 = vmul.f32 1.0, %v3502
  %v3504 = vrcp.pop %v3235
  %v3505 = vmul.f32 1.0, %v3504
  %v3506 = vrcp.pop %v3236
  %v3507 = vmul.f32 1.0, %v3506
  %v3508 = vrcp.pop %v3237
  %v3509 = vmul.f32 1.0, %v3508
  %v3510 = vrcp.pop %v3238
  %v3511 = vmul.f32 1.0, %v3510
  %v3512 = vrcp.pop %v3239
  %v3513 = vmul.f32 1.0, %v3512
  %v3514 = vrcp.pop %v3240
  %v3515 = vmul.f32 1.0, %v3514
  %v3516 = vrcp.pop %v3241
  %v3517 = vmul.f32 1.0, %v3516
  %v3518 = vrcp.pop %v3242
  %v3519 = vmul.f32 1.0, %v3518
  %v3520 = vrcp.pop %v3243
  %v3521 = vmul.f32 1.0, %v3520
  %v3522 = vrcp.pop %v3244
  %v3523 = vmul.f32 1.0, %v3522
  %v3524 = vrcp.pop %v3245
  %v3525 = vmul.f32 1.0, %v3524
  %v3526 = vrcp.pop %v3246
  %v3527 = vmul.f32 1.0, %v3526
  %v3528 = vrcp.pop %v3247
  %v3529 = vmul.f32 1.0, %v3528
  %v3530 = vrcp.pop %v3248
  %v3531 = vmul.f32 1.0, %v3530
  %v3532 = vrcp.pop %v3249
  %v3533 = vmul.f32 1.0, %v3532
  %v3534 = vrcp.pop %v3250
  %v3535 = vmul.f32 1.0, %v3534
  %v3536 = vrcp.pop %v3251
  %v3537 = vmul.f32 1.0, %v3536
  %v3538 = vrcp.pop %v3252
  %v3539 = vmul.f32 1.0, %v3538
  %v3540 = vrcp.pop %v3253
  %v3541 = vmul.f32 1.0, %v3540
  %v3542 = vrcp.pop %v3254
  %v3543 = vmul.f32 1.0, %v3542
  %v3544 = vrcp.pop %v3255
  %v3545 = vmul.f32 1.0, %v3544
  %v3546 = vrcp.pop %v3256
  %v3547 = vmul.f32 1.0, %v3546
  %v3548 = vrcp.pop %v3257
  %v3549 = vmul.f32 1.0, %v3548
  %v3550 = vrcp.pop %v3258
  %v3551 = vmul.f32 1.0, %v3550
  %v3552 = vrcp.pop %v3259
  %v3553 = vmul.f32 1.0, %v3552
  %v3554 = vrcp.pop %v3260
  %v3555 = vmul.f32 1.0, %v3554
  %v3556 = vrcp.pop %v3261
  %v3557 = vmul.f32 1.0, %v3556
  %v3558 = vrcp.pop %v3262
  %v3559 = vmul.f32 1.0, %v3558
  %v3560 = vrcp.pop %v3263
  %v3561 = vmul.f32 1.0, %v3560
  %v3562 = vrcp.pop %v3264
  %v3563 = vmul.f32 1.0, %v3562
  %v3564 = vrcp.pop %v3265
  %v3565 = vmul.f32 1.0, %v3564
  %v3566 = vrcp.pop %v3266
  %v3567 = vmul.f32 1.0, %v3566
  %v3568 = vrcp.pop %v3267
  %v3569 = vmul.f32 1.0, %v3568
  %v3570 = vrcp.pop %v3268
  %v3571 = vmul.f32 1.0, %v3570
  %v3572 = vrcp.pop %v3269
  %v3573 = vmul.f32 1.0, %v3572
  %v3574 = vrcp.pop %v3270
  %v3575 = vmul.f32 1.0, %v3574
  %v3576 = vrcp.pop %v3271
  %v3577 = vmul.f32 1.0, %v3576
  %v3578 = vrcp.pop %v3272
  %v3579 = vmul.f32 1.0, %v3578
  %v3580 = vrcp.pop %v3273
  %v3581 = vmul.f32 1.0, %v3580
  %v3582 = vrcp.pop %v3274
  %v3583 = vmul.f32 1.0, %v3582
  %v3584 = vrcp.pop %v3275
  %v3585 = vmul.f32 1.0, %v3584
  %v3586 = vrcp.pop %v3276
  %v3587 = vmul.f32 1.0, %v3586
  %v3588 = vrcp.pop %v3277
  %v3589 = vmul.f32 1.0, %v3588
  %v3590 = vrcp.pop %v3278
  %v3591 = vmul.f32 1.0, %v3590
  %v3592 = vrcp.pop %v3279
  %v3593 = vmul.f32 1.0, %v3592
  %v3594 = vrcp.pop %v3280
  %v3595 = vmul.f32 1.0, %v3594
  %v3596 = vrcp.pop %v3281
  %v3597 = vmul.f32 1.0, %v3596
  %v3598 = vrcp.pop %v3282
  %v3599 = vmul.f32 1.0, %v3598
  %v3600 = vrcp.pop %v3283
  %v3601 = vmul.f32 1.0, %v3600
  %v3602 = vrcp.pop %v3284
  %v3603 = vmul.f32 1.0, %v3602
  %v3604 = vrcp.pop %v3285
  %v3605 = vmul.f32 1.0, %v3604
  %v3606 = vrcp.pop %v3286
  %v3607 = vmul.f32 1.0, %v3606
  %v3608 = vrcp.pop %v3287
  %v3609 = vmul.f32 1.0, %v3608
  %v3610 = vrcp.pop %v3288
  %v3611 = vmul.f32 1.0, %v3610
  %v3612 = vrcp.pop %v3289
  %v3613 = vmul.f32 1.0, %v3612
  %v3614 = vrcp.pop %v3290
  %v3615 = vmul.f32 1.0, %v3614
  %v3616 = vrcp.pop %v3291
  %v3617 = vmul.f32 1.0, %v3616
  %v3618 = vrcp.pop %v3292
  %v3619 = vmul.f32 1.0, %v3618
  %v3620 = vrcp.pop %v3293
  %v3621 = vmul.f32 1.0, %v3620
  %v3622 = vrcp.pop %v3294
  %v3623 = vmul.f32 1.0, %v3622
  %v3624 = vrcp.pop %v3295
  %v3625 = vmul.f32 1.0, %v3624
  %v3626 = vrcp.pop %v3296
  %v3627 = vmul.f32 1.0, %v3626
  %v3628 = vrcp.pop %v3297
  %v3629 = vmul.f32 1.0, %v3628
  %v3630 = vrcp.pop %v3298
  %v3631 = vmul.f32 1.0, %v3630
  %v3632 = vrcp.pop %v3299
  %v3633 = vmul.f32 1.0, %v3632
  %v3634 = vrcp.pop %v3300
  %v3635 = vmul.f32 1.0, %v3634
  %v3636 = vrcp.pop %v3301
  %v3637 = vmul.f32 1.0, %v3636
  %v3638 = vrcp.pop %v3302
  %v3639 = vmul.f32 1.0, %v3638
  %v3640 = vrcp.pop %v3303
  %v3641 = vmul.f32 1.0, %v3640
  %v3642 = vrcp.pop %v3304
  %v3643 = vmul.f32 1.0, %v3642
  %v3644 = vrcp.pop %v3305
  %v3645 = vmul.f32 1.0, %v3644
  %v3646 = vrcp.pop %v3306
  %v3647 = vmul.f32 1.0, %v3646
  %v3648 = vrcp.pop %v3307
  %v3649 = vmul.f32 1.0, %v3648
  %v3650 = vrcp.pop %v3308
  %v3651 = vmul.f32 1.0, %v3650
  %v3652 = vrcp.pop %v3309
  %v3653 = vmul.f32 1.0, %v3652
  %v3654 = vrcp.pop %v3310
  %v3655 = vmul.f32 1.0, %v3654
  %v3656 = vrcp.pop %v3311
  %v3657 = vmul.f32 1.0, %v3656
  %v3658 = vrcp.pop %v3312
  %v3659 = vmul.f32 1.0, %v3658
  %v3660 = vrcp.pop %v3313
  %v3661 = vmul.f32 1.0, %v3660
  %v3662 = vrcp.pop %v3314
  %v3663 = vmul.f32 1.0, %v3662
  %v3664 = vrcp.pop %v3315
  %v3665 = vmul.f32 1.0, %v3664
  %v3666 = vrcp.pop %v3316
  %v3667 = vmul.f32 1.0, %v3666
  %v3668 = vrcp.pop %v3317
  %v3669 = vmul.f32 1.0, %v3668
  %v3670 = vrcp.pop %v3318
  %v3671 = vmul.f32 1.0, %v3670
  %v3672 = vrcp.pop %v3319
  %v3673 = vmul.f32 1.0, %v3672
  %v3674 = vrcp.pop %v3320
  %v3675 = vmul.f32 1.0, %v3674
  %v3676 = vrcp.pop %v3321
  %v3677 = vmul.f32 1.0, %v3676
  %v3678 = vrcp.pop %v3322
  %v3679 = vmul.f32 1.0, %v3678
  %v3680 = vrcp.pop %v3323
  %v3681 = vmul.f32 1.0, %v3680
  %v3682 = vrcp.pop %v3324
  %v3683 = vmul.f32 1.0, %v3682
  %v3684 = vrcp.pop %v3325
  %v3685 = vmul.f32 1.0, %v3684
  %v3686 = vrcp.pop %v3326
  %v3687 = vmul.f32 1.0, %v3686
  %v3688 = vrcp.pop %v3327
  %v3689 = vmul.f32 1.0, %v3688
  %v3690 = vrcp.pop %v3328
  %v3691 = vmul.f32 1.0, %v3690
  %v3692 = vrcp.pop %v3329
  %v3693 = vmul.f32 1.0, %v3692
  %v3694 = vrcp.pop %v3330
  %v3695 = vmul.f32 1.0, %v3694
  %v3696 = vrcp.pop %v3331
  %v3697 = vmul.f32 1.0, %v3696
  %v3698 = vrcp.pop %v3332
  %v3699 = vmul.f32 1.0, %v3698
  %v3700 = vrcp.pop %v3333
  %v3701 = vmul.f32 1.0, %v3700
  %v3702 = vrcp.pop %v3334
  %v3703 = vmul.f32 1.0, %v3702
  %v3704 = vrcp.pop %v3335
  %v3705 = vmul.f32 1.0, %v3704
  %v3706 = vrcp.pop %v3336
  %v3707 = vmul.f32 1.0, %v3706
  %v3708 = vrcp.pop %v3337
  %v3709 = vmul.f32 1.0, %v3708
  %v3710 = vrcp.pop %v3338
  %v3711 = vmul.f32 1.0, %v3710
  %v3712 = vrcp.pop %v3339
  %v3713 = vmul.f32 1.0, %v3712
  %v3714 = vrcp.pop %v3340
  %v3715 = vmul.f32 1.0, %v3714
  %v3716 = vrcp.pop %v3341
  %v3717 = vmul.f32 1.0, %v3716
  %v3718 = vrcp.pop %v3342
  %v3719 = vmul.f32 1.0, %v3718
  %v3720 = vrcp.pop %v3343
  %v3721 = vmul.f32 1.0, %v3720
  %v3722 = vrcp.pop %v3344
  %v3723 = vmul.f32 1.0, %v3722
  %v3724 = vrcp.pop %v3345
  %v3725 = vmul.f32 1.0, %v3724
  %v3726 = vrcp.pop %v3346
  %v3727 = vmul.f32 1.0, %v3726
  %v3728 = vrcp.pop %v3347
  %v3729 = vmul.f32 1.0, %v3728
  %v3730 = vrcp.pop %v3348
  %v3731 = vmul.f32 1.0, %v3730
  %v3732 = vrcp.pop %v3349
  %v3733 = vmul.f32 1.0, %v3732
  %v3734 = vrcp.pop %v3350
  %v3735 = vmul.f32 1.0, %v3734
  %v3736 = vrcp.pop %v3351
  %v3737 = vmul.f32 1.0, %v3736
  %v3738 = vrcp.pop %v3352
  %v3739 = vmul.f32 1.0, %v3738
  %v3740 = vrcp.pop %v3353
  %v3741 = vmul.f32 1.0, %v3740
  %v3742 = vrcp.pop %v3354
  %v3743 = vmul.f32 1.0, %v3742
  %v3744 = vrcp.pop %v3355
  %v3745 = vmul.f32 1.0, %v3744
  %v3746 = vrcp.pop %v3356
  %v3747 = vmul.f32 1.0, %v3746
  %v3748 = vrcp.pop %v3357
  %v3749 = vmul.f32 1.0, %v3748
  %v3750 = vrcp.pop %v3358
  %v3751 = vmul.f32 1.0, %v3750
  %v3752 = vrcp.pop %v3359
  %v3753 = vmul.f32 1.0, %v3752
  %v3754 = vrcp.pop %v3360
  %v3755 = vmul.f32 1.0, %v3754
  %v3756 = vrcp.pop %v3361
  %v3757 = vmul.f32 1.0, %v3756
  %v3758 = vrcp.pop %v3362
  %v3759 = vmul.f32 1.0, %v3758
  %v3760 = vrcp.pop %v3363
  %v3761 = vmul.f32 1.0, %v3760
  %v3762 = vrcp.pop %v3364
  %v3763 = vmul.f32 1.0, %v3762
  %v3764 = vrcp.pop %v3365
  %v3765 = vmul.f32 1.0, %v3764
  %v3766 = vrcp.pop %v3366
  %v3767 = vmul.f32 1.0, %v3766
  %v3768 = vrcp.pop %v3367
  %v3769 = vmul.f32 1.0, %v3768
  %v3770 = vrcp.pop %v3368
  %v3771 = vmul.f32 1.0, %v3770
  %v3772 = vrcp.pop %v3369
  %v3773 = vmul.f32 1.0, %v3772
  %v3774 = vrcp.pop %v3370
  %v3775 = vmul.f32 1.0, %v3774
  %v3776 = vrcp.pop %v3371
  %v3777 = vmul.f32 1.0, %v3776
  %v3778 = vrcp.pop %v3372
  %v3779 = vmul.f32 1.0, %v3778
  %v3780 = vrcp.pop %v3373
  %v3781 = vmul.f32 1.0, %v3780
  %v3782 = vrcp.pop %v3374
  %v3783 = vmul.f32 1.0, %v3782
  %v3784 = vrcp.pop %v3375
  %v3785 = vmul.f32 1.0, %v3784
  %v3786 = vrcp.pop %v3376
  %v3787 = vmul.f32 1.0, %v3786
  %v3788 = vrcp.pop %v3377
  %v3789 = vmul.f32 1.0, %v3788
  %v3790 = vrcp.pop %v3378
  %v3791 = vmul.f32 1.0, %v3790
  %v3792 = vrcp.pop %v3379
  %v3793 = vmul.f32 1.0, %v3792
  %v3794 = vrcp.pop %v3380
  %v3795 = vmul.f32 1.0, %v3794
  %v3796 = vrcp.pop %v3381
  %v3797 = vmul.f32 1.0, %v3796
  %v3798 = vrcp.pop %v3382
  %v3799 = vmul.f32 1.0, %v3798
  %v3800 = vrcp.pop %v3383
  %v3801 = vmul.f32 1.0, %v3800
  %v3802 = vrcp.pop %v3384
  %v3803 = vmul.f32 1.0, %v3802
  %v3804 = vrcp.pop %v3385
  %v3805 = vmul.f32 1.0, %v3804
  %v3806 = vrcp.pop %v3386
  %v3807 = vmul.f32 1.0, %v3806
  %v3808 = vrcp.pop %v3387
  %v3809 = vmul.f32 1.0, %v3808
  %v3810 = vrcp.pop %v3388
  %v3811 = vmul.f32 1.0, %v3810
  %v3812 = vrcp.pop %v3389
  %v3813 = vmul.f32 1.0, %v3812
  %v3814 = vrcp.pop %v3390
  %v3815 = vmul.f32 1.0, %v3814
  %v3816 = vrcp.pop %v3391
  %v3817 = vmul.f32 1.0, %v3816
  %v3818 = vrcp.pop %v3392
  %v3819 = vmul.f32 1.0, %v3818
  %v3820 = vrcp.pop %v3393
  %v3821 = vmul.f32 1.0, %v3820
  %v3822 = vrcp.pop %v3394
  %v3823 = vmul.f32 1.0, %v3822
  %v3824 = vrcp.pop %v3395
  %v3825 = vmul.f32 1.0, %v3824
  %v3826 = vrcp.pop %v3396
  %v3827 = vmul.f32 1.0, %v3826
  %v3828 = vrcp.pop %v3397
  %v3829 = vmul.f32 1.0, %v3828
  %v3830 = vrcp.pop %v3398
  %v3831 = vmul.f32 1.0, %v3830
  %v3832 = vrcp.pop %v3399
  %v3833 = vmul.f32 1.0, %v3832
  %v3834 = vrcp.pop %v3400
  %v3835 = vmul.f32 1.0, %v3834
  %v3836 = vrcp.pop %v3401
  %v3837 = vmul.f32 1.0, %v3836
  %v3838 = vrcp.pop %v3402
  %v3839 = vmul.f32 1.0, %v3838
  %v3840 = vrcp.pop %v3403
  %v3841 = vmul.f32 1.0, %v3840
  %v3842 = vrcp.pop %v3404
  %v3843 = vmul.f32 1.0, %v3842
  %v3844 = vrcp.pop %v3405
  %v3845 = vmul.f32 1.0, %v3844
  %v3846 = vrcp.pop %v3406
  %v3847 = vmul.f32 1.0, %v3846
  %v3848 = vrcp.pop %v3407
  %v3849 = vmul.f32 1.0, %v3848
  %v3850 = vrcp.pop %v3408
  %v3851 = vmul.f32 1.0, %v3850
  %v3852 = vrcp.pop %v3409
  %v3853 = vmul.f32 1.0, %v3852
  %v3854 = vrcp.pop %v3410
  %v3855 = vmul.f32 1.0, %v3854
  %v3856 = vrcp.pop %v3411
  %v3857 = vmul.f32 1.0, %v3856
  %v3858 = vrcp.pop %v3412
  %v3859 = vmul.f32 1.0, %v3858
  %v3860 = vrcp.pop %v3413
  %v3861 = vmul.f32 1.0, %v3860
  %v3862 = vrcp.pop %v3414
  %v3863 = vmul.f32 1.0, %v3862
  %v3864 = vrcp.pop %v3415
  %v3865 = vmul.f32 1.0, %v3864
  %v3866 = vrcp.pop %v3416
  %v3867 = vmul.f32 1.0, %v3866
  %v3868 = vrcp.pop %v3417
  %v3869 = vmul.f32 1.0, %v3868
  %v3870 = vrcp.pop %v3418
  %v3871 = vmul.f32 1.0, %v3870
  %v3872 = vrcp.pop %v3419
  %v3873 = vmul.f32 1.0, %v3872
  %v3874 = vrcp.pop %v3420
  %v3875 = vmul.f32 1.0, %v3874
  %v3876 = vrcp.pop %v3421
  %v3877 = vmul.f32 1.0, %v3876
  %v3878 = vrcp.pop %v3422
  %v3879 = vmul.f32 1.0, %v3878
  %v3880 = vrcp.pop %v3423
  %v3881 = vmul.f32 1.0, %v3880
  %v3882 = vrcp.pop %v3424
  %v3883 = vmul.f32 1.0, %v3882
  %v3884 = vrcp.pop %v3425
  %v3885 = vmul.f32 1.0, %v3884
  %v3886 = vrcp.pop %v3426
  %v3887 = vmul.f32 1.0, %v3886
  %v3888 = vrcp.pop %v3427
  %v3889 = vmul.f32 1.0, %v3888
  %v3890 = vrcp.pop %v3428
  %v3891 = vmul.f32 1.0, %v3890
  %v3892 = vrcp.pop %v3429
  %v3893 = vmul.f32 1.0, %v3892
  %v3894 = vrcp.pop %v3430
  %v3895 = vmul.f32 1.0, %v3894
  %v3896 = vrcp.pop %v3431
  %v3897 = vmul.f32 1.0, %v3896
  %v3898 = vrcp.pop %v3432
  %v3899 = vmul.f32 1.0, %v3898
  %v3900 = vrcp.pop %v3433
  %v3901 = vmul.f32 1.0, %v3900
  %v3902 = vrcp.pop %v3434
  %v3903 = vmul.f32 1.0, %v3902
  %v3904 = vrcp.pop %v3435
  %v3905 = vmul.f32 1.0, %v3904
  %v3906 = vrcp.pop %v3436
  %v3907 = vmul.f32 1.0, %v3906
  %v3908 = vrcp.pop %v3437
  %v3909 = vmul.f32 1.0, %v3908
  %v3910 = vrcp.pop %v3438
  %v3911 = vmul.f32 1.0, %v3910
  %v3912 = vrcp.pop %v3439
  %v3913 = vmul.f32 1.0, %v3912
  %v3914 = vrcp.pop %v3440
  %v3915 = vmul.f32 1.0, %v3914
  %v3916 = vrcp.pop %v3441
  %v3917 = vmul.f32 1.0, %v3916
  %v3918 = vrcp.pop %v3442
  %v3919 = vmul.f32 1.0, %v3918
  %v3920 = vrcp.pop %v3443
  %v3921 = vmul.f32 1.0, %v3920
  %v3922 = vrcp.pop %v3444
  %v3923 = vmul.f32 1.0, %v3922
  %v3924 = vrcp.pop %v3445
  %v3925 = vmul.f32 1.0, %v3924
  %v3926 = vrcp.pop %v3446
  %v3927 = vmul.f32 1.0, %v3926
  %v3928 = vrcp.pop %v3447
  %v3929 = vmul.f32 1.0, %v3928
  %v3930 = vrcp.pop %v3448
  %v3931 = vmul.f32 1.0, %v3930
  %v3932 = vrcp.pop %v3449
  %v3933 = vmul.f32 1.0, %v3932
  %v3934 = vrcp.pop %v3450
  %v3935 = vmul.f32 1.0, %v3934
  %v3936 = vrcp.pop %v3451
  %v3937 = vmul.f32 1.0, %v3936
  %v3938 = vrcp.pop %v3452
  %v3939 = vmul.f32 1.0, %v3938
  %v3940 = vrcp.pop %v3453
  %v3941 = vmul.f32 1.0, %v3940
  %v3942 = vrcp.pop %v3454
  %v3943 = vmul.f32 1.0, %v3942
  %v3944 = vrcp.pop %v3455
  %v3945 = vmul.f32 1.0, %v3944
  %v3946 = vrcp.pop %v3456
  %v3947 = vmul.f32 1.0, %v3946
  %v3948 = vrcp.pop %v3457
  %v3949 = vmul.f32 1.0, %v3948
  %v3950 = vrcp.pop %v3458
  %v3951 = vmul.f32 1.0, %v3950
  %v3952 = vrcp.pop %v3459
  %v3953 = vmul.f32 1.0, %v3952
  %v3954 = vrcp.pop %v3460
  %v3955 = vmul.f32 1.0, %v3954
  %v3956 = vrcp.pop %v3461
  %v3957 = vmul.f32 1.0, %v3956
  %v3958 = vrcp.pop %v3462
  %v3959 = vmul.f32 1.0, %v3958
  %v3960 = vrcp.pop %v3463
  %v3961 = vmul.f32 1.0, %v3960
  %v3962 = vrcp.pop %v3464
  %v3963 = vmul.f32 1.0, %v3962
  %v3964 = vrcp.pop %v3465
  %v3965 = vmul.f32 1.0, %v3964
  %v3966 = vrcp.pop %v3466
  %v3967 = vmul.f32 1.0, %v3966
  %v3968 = vrcp.pop %v3467
  %v3969 = vmul.f32 1.0, %v3968
  %v3970 = vrcp.pop %v3468
  %v3971 = vmul.f32 1.0, %v3970
  %v3972 = vrcp.pop %v3469
  %v3973 = vmul.f32 1.0, %v3972
  %v3974 = vrcp.pop %v3470
  %v3975 = vmul.f32 1.0, %v3974
  %v3976 = vrcp.pop %v3471
  %v3977 = vmul.f32 1.0, %v3976
  %v3978 = vrcp.pop %v3472
  %v3979 = vmul.f32 1.0, %v3978
  %v3980 = vrcp.pop %v3473
  %v3981 = vmul.f32 1.0, %v3980
  %v3982 = vrcp.pop %v3474
  %v3983 = vmul.f32 1.0, %v3982
  %v3984 = vrcp.pop %v3475
  %v3985 = vmul.f32 1.0, %v3984
  %v3986 = vrcp.pop %v3476
  %v3987 = vmul.f32 1.0, %v3986
  %v3988 = vrcp.pop %v3477
  %v3989 = vmul.f32 1.0, %v3988
  %vm3990 = vcmask 23552
  %3991 = vst.msk [vmem:[%s4] sm:$0xff] %vm3990, %v3479
  %3992 = vst.msk [vmem:[%s4 + $0x8] sm:$0xff] %vm3990, %v3481
  %3993 = vst.msk [vmem:[%s4 + $0x10] sm:$0xff] %vm3990, %v3483
  %3994 = vst.msk [vmem:[%s4 + $0x18] sm:$0xff] %vm3990, %v3485
  %3995 = vst.msk [vmem:[%s4 + $0x20] sm:$0xff] %vm3990, %v3487
  %3996 = vst.msk [vmem:[%s4 + $0x28] sm:$0xff] %vm3990, %v3489
  %3997 = vst.msk [vmem:[%s4 + $0x30] sm:$0xff] %vm3990, %v3491
  %3998 = vst.msk [vmem:[%s4 + $0x38] sm:$0xff] %vm3990, %v3493
  %3999 = vst.msk [vmem:[%s4 + $0x40] sm:$0xff] %vm3990, %v3495
  %4000 = vst.msk [vmem:[%s4 + $0x48] sm:$0xff] %vm3990, %v3497
  %4001 = vst.msk [vmem:[%s4 + $0x50] sm:$0xff] %vm3990, %v3499
  %4002 = vst.msk [vmem:[%s4 + $0x58] sm:$0xff] %vm3990, %v3501
  %4003 = vst.msk [vmem:[%s4 + $0x60] sm:$0xff] %vm3990, %v3503
  %4004 = vst.msk [vmem:[%s4 + $0x68] sm:$0xff] %vm3990, %v3505
  %4005 = vst.msk [vmem:[%s4 + $0x70] sm:$0xff] %vm3990, %v3507
  %4006 = vst.msk [vmem:[%s4 + $0x78] sm:$0xff] %vm3990, %v3509
  %4007 = vst.msk [vmem:[%s4 + $0x80] sm:$0xff] %vm3990, %v3511
  %4008 = vst.msk [vmem:[%s4 + $0x88] sm:$0xff] %vm3990, %v3513
  %4009 = vst.msk [vmem:[%s4 + $0x90] sm:$0xff] %vm3990, %v3515
  %4010 = vst.msk [vmem:[%s4 + $0x98] sm:$0xff] %vm3990, %v3517
  %4011 = vst.msk [vmem:[%s4 + $0xa0] sm:$0xff] %vm3990, %v3519
  %4012 = vst.msk [vmem:[%s4 + $0xa8] sm:$0xff] %vm3990, %v3521
  %4013 = vst.msk [vmem:[%s4 + $0xb0] sm:$0xff] %vm3990, %v3523
  %4014 = vst.msk [vmem:[%s4 + $0xb8] sm:$0xff] %vm3990, %v3525
  %4015 = vst.msk [vmem:[%s4 + $0xc0] sm:$0xff] %vm3990, %v3527
  %4016 = vst.msk [vmem:[%s4 + $0xc8] sm:$0xff] %vm3990, %v3529
  %4017 = vst.msk [vmem:[%s4 + $0xd0] sm:$0xff] %vm3990, %v3531
  %4018 = vst.msk [vmem:[%s4 + $0xd8] sm:$0xff] %vm3990, %v3533
  %4019 = vst.msk [vmem:[%s4 + $0xe0] sm:$0xff] %vm3990, %v3535
  %4020 = vst.msk [vmem:[%s4 + $0xe8] sm:$0xff] %vm3990, %v3537
  %4021 = vst.msk [vmem:[%s4 + $0xf0] sm:$0xff] %vm3990, %v3539
  %4022 = vst.msk [vmem:[%s4 + $0xf8] sm:$0xff] %vm3990, %v3541
  %4023 = vst.msk [vmem:[%s4 + $0x100] sm:$0xff] %vm3990, %v3543
  %4024 = vst.msk [vmem:[%s4 + $0x108] sm:$0xff] %vm3990, %v3545
  %4025 = vst.msk [vmem:[%s4 + $0x110] sm:$0xff] %vm3990, %v3547
  %4026 = vst.msk [vmem:[%s4 + $0x118] sm:$0xff] %vm3990, %v3549
  %4027 = vst.msk [vmem:[%s4 + $0x120] sm:$0xff] %vm3990, %v3551
  %4028 = vst.msk [vmem:[%s4 + $0x128] sm:$0xff] %vm3990, %v3553
  %4029 = vst.msk [vmem:[%s4 + $0x130] sm:$0xff] %vm3990, %v3555
  %4030 = vst.msk [vmem:[%s4 + $0x138] sm:$0xff] %vm3990, %v3557
  %4031 = vst.msk [vmem:[%s4 + $0x140] sm:$0xff] %vm3990, %v3559
  %4032 = vst.msk [vmem:[%s4 + $0x148] sm:$0xff] %vm3990, %v3561
  %4033 = vst.msk [vmem:[%s4 + $0x150] sm:$0xff] %vm3990, %v3563
  %4034 = vst.msk [vmem:[%s4 + $0x158] sm:$0xff] %vm3990, %v3565
  %4035 = vst.msk [vmem:[%s4 + $0x160] sm:$0xff] %vm3990, %v3567
  %4036 = vst.msk [vmem:[%s4 + $0x168] sm:$0xff] %vm3990, %v3569
  %4037 = vst.msk [vmem:[%s4 + $0x170] sm:$0xff] %vm3990, %v3571
  %4038 = vst.msk [vmem:[%s4 + $0x178] sm:$0xff] %vm3990, %v3573
  %4039 = vst.msk [vmem:[%s4 + $0x180] sm:$0xff] %vm3990, %v3575
  %4040 = vst.msk [vmem:[%s4 + $0x188] sm:$0xff] %vm3990, %v3577
  %4041 = vst.msk [vmem:[%s4 + $0x190] sm:$0xff] %vm3990, %v3579
  %4042 = vst.msk [vmem:[%s4 + $0x198] sm:$0xff] %vm3990, %v3581
  %4043 = vst.msk [vmem:[%s4 + $0x1a0] sm:$0xff] %vm3990, %v3583
  %4044 = vst.msk [vmem:[%s4 + $0x1a8] sm:$0xff] %vm3990, %v3585
  %4045 = vst.msk [vmem:[%s4 + $0x1b0] sm:$0xff] %vm3990, %v3587
  %4046 = vst.msk [vmem:[%s4 + $0x1b8] sm:$0xff] %vm3990, %v3589
  %4047 = vst.msk [vmem:[%s4 + $0x1c0] sm:$0xff] %vm3990, %v3591
  %4048 = vst.msk [vmem:[%s4 + $0x1c8] sm:$0xff] %vm3990, %v3593
  %4049 = vst.msk [vmem:[%s4 + $0x1d0] sm:$0xff] %vm3990, %v3595
  %4050 = vst.msk [vmem:[%s4 + $0x1d8] sm:$0xff] %vm3990, %v3597
  %4051 = vst.msk [vmem:[%s4 + $0x1e0] sm:$0xff] %vm3990, %v3599
  %4052 = vst.msk [vmem:[%s4 + $0x1e8] sm:$0xff] %vm3990, %v3601
  %4053 = vst.msk [vmem:[%s4 + $0x1f0] sm:$0xff] %vm3990, %v3603
  %4054 = vst.msk [vmem:[%s4 + $0x1f8] sm:$0xff] %vm3990, %v3605
  %4055 = vst.msk [vmem:[%s4 + $0x200] sm:$0xff] %vm3990, %v3607
  %4056 = vst.msk [vmem:[%s4 + $0x208] sm:$0xff] %vm3990, %v3609
  %4057 = vst.msk [vmem:[%s4 + $0x210] sm:$0xff] %vm3990, %v3611
  %4058 = vst.msk [vmem:[%s4 + $0x218] sm:$0xff] %vm3990, %v3613
  %4059 = vst.msk [vmem:[%s4 + $0x220] sm:$0xff] %vm3990, %v3615
  %4060 = vst.msk [vmem:[%s4 + $0x228] sm:$0xff] %vm3990, %v3617
  %4061 = vst.msk [vmem:[%s4 + $0x230] sm:$0xff] %vm3990, %v3619
  %4062 = vst.msk [vmem:[%s4 + $0x238] sm:$0xff] %vm3990, %v3621
  %4063 = vst.msk [vmem:[%s4 + $0x240] sm:$0xff] %vm3990, %v3623
  %4064 = vst.msk [vmem:[%s4 + $0x248] sm:$0xff] %vm3990, %v3625
  %4065 = vst.msk [vmem:[%s4 + $0x250] sm:$0xff] %vm3990, %v3627
  %4066 = vst.msk [vmem:[%s4 + $0x258] sm:$0xff] %vm3990, %v3629
  %4067 = vst.msk [vmem:[%s4 + $0x260] sm:$0xff] %vm3990, %v3631
  %4068 = vst.msk [vmem:[%s4 + $0x268] sm:$0xff] %vm3990, %v3633
  %4069 = vst.msk [vmem:[%s4 + $0x270] sm:$0xff] %vm3990, %v3635
  %4070 = vst.msk [vmem:[%s4 + $0x278] sm:$0xff] %vm3990, %v3637
  %4071 = vst.msk [vmem:[%s4 + $0x280] sm:$0xff] %vm3990, %v3639
  %4072 = vst.msk [vmem:[%s4 + $0x288] sm:$0xff] %vm3990, %v3641
  %4073 = vst.msk [vmem:[%s4 + $0x290] sm:$0xff] %vm3990, %v3643
  %4074 = vst.msk [vmem:[%s4 + $0x298] sm:$0xff] %vm3990, %v3645
  %4075 = vst.msk [vmem:[%s4 + $0x2a0] sm:$0xff] %vm3990, %v3647
  %4076 = vst.msk [vmem:[%s4 + $0x2a8] sm:$0xff] %vm3990, %v3649
  %4077 = vst.msk [vmem:[%s4 + $0x2b0] sm:$0xff] %vm3990, %v3651
  %4078 = vst.msk [vmem:[%s4 + $0x2b8] sm:$0xff] %vm3990, %v3653
  %4079 = vst.msk [vmem:[%s4 + $0x2c0] sm:$0xff] %vm3990, %v3655
  %4080 = vst.msk [vmem:[%s4 + $0x2c8] sm:$0xff] %vm3990, %v3657
  %4081 = vst.msk [vmem:[%s4 + $0x2d0] sm:$0xff] %vm3990, %v3659
  %4082 = vst.msk [vmem:[%s4 + $0x2d8] sm:$0xff] %vm3990, %v3661
  %4083 = vst.msk [vmem:[%s4 + $0x2e0] sm:$0xff] %vm3990, %v3663
  %4084 = vst.msk [vmem:[%s4 + $0x2e8] sm:$0xff] %vm3990, %v3665
  %4085 = vst.msk [vmem:[%s4 + $0x2f0] sm:$0xff] %vm3990, %v3667
  %4086 = vst.msk [vmem:[%s4 + $0x2f8] sm:$0xff] %vm3990, %v3669
  %4087 = vst.msk [vmem:[%s4 + $0x300] sm:$0xff] %vm3990, %v3671
  %4088 = vst.msk [vmem:[%s4 + $0x308] sm:$0xff] %vm3990, %v3673
  %4089 = vst.msk [vmem:[%s4 + $0x310] sm:$0xff] %vm3990, %v3675
  %4090 = vst.msk [vmem:[%s4 + $0x318] sm:$0xff] %vm3990, %v3677
  %4091 = vst.msk [vmem:[%s4 + $0x320] sm:$0xff] %vm3990, %v3679
  %4092 = vst.msk [vmem:[%s4 + $0x328] sm:$0xff] %vm3990, %v3681
  %4093 = vst.msk [vmem:[%s4 + $0x330] sm:$0xff] %vm3990, %v3683
  %4094 = vst.msk [vmem:[%s4 + $0x338] sm:$0xff] %vm3990, %v3685
  %4095 = vst.msk [vmem:[%s4 + $0x340] sm:$0xff] %vm3990, %v3687
  %4096 = vst.msk [vmem:[%s4 + $0x348] sm:$0xff] %vm3990, %v3689
  %4097 = vst.msk [vmem:[%s4 + $0x350] sm:$0xff] %vm3990, %v3691
  %4098 = vst.msk [vmem:[%s4 + $0x358] sm:$0xff] %vm3990, %v3693
  %4099 = vst.msk [vmem:[%s4 + $0x360] sm:$0xff] %vm3990, %v3695
  %4100 = vst.msk [vmem:[%s4 + $0x368] sm:$0xff] %vm3990, %v3697
  %4101 = vst.msk [vmem:[%s4 + $0x370] sm:$0xff] %vm3990, %v3699
  %4102 = vst.msk [vmem:[%s4 + $0x378] sm:$0xff] %vm3990, %v3701
  %4103 = vst.msk [vmem:[%s4 + $0x380] sm:$0xff] %vm3990, %v3703
  %4104 = vst.msk [vmem:[%s4 + $0x388] sm:$0xff] %vm3990, %v3705
  %4105 = vst.msk [vmem:[%s4 + $0x390] sm:$0xff] %vm3990, %v3707
  %4106 = vst.msk [vmem:[%s4 + $0x398] sm:$0xff] %vm3990, %v3709
  %4107 = vst.msk [vmem:[%s4 + $0x3a0] sm:$0xff] %vm3990, %v3711
  %4108 = vst.msk [vmem:[%s4 + $0x3a8] sm:$0xff] %vm3990, %v3713
  %4109 = vst.msk [vmem:[%s4 + $0x3b0] sm:$0xff] %vm3990, %v3715
  %4110 = vst.msk [vmem:[%s4 + $0x3b8] sm:$0xff] %vm3990, %v3717
  %4111 = vst.msk [vmem:[%s4 + $0x3c0] sm:$0xff] %vm3990, %v3719
  %4112 = vst.msk [vmem:[%s4 + $0x3c8] sm:$0xff] %vm3990, %v3721
  %4113 = vst.msk [vmem:[%s4 + $0x3d0] sm:$0xff] %vm3990, %v3723
  %4114 = vst.msk [vmem:[%s4 + $0x3d8] sm:$0xff] %vm3990, %v3725
  %4115 = vst.msk [vmem:[%s4 + $0x3e0] sm:$0xff] %vm3990, %v3727
  %4116 = vst.msk [vmem:[%s4 + $0x3e8] sm:$0xff] %vm3990, %v3729
  %4117 = vst.msk [vmem:[%s4 + $0x3f0] sm:$0xff] %vm3990, %v3731
  %4118 = vst.msk [vmem:[%s4 + $0x3f8] sm:$0xff] %vm3990, %v3733
  %4119 = vst.msk [vmem:[%s4 + $0x400] sm:$0xff] %vm3990, %v3735
  %4120 = vst.msk [vmem:[%s4 + $0x408] sm:$0xff] %vm3990, %v3737
  %4121 = vst.msk [vmem:[%s4 + $0x410] sm:$0xff] %vm3990, %v3739
  %4122 = vst.msk [vmem:[%s4 + $0x418] sm:$0xff] %vm3990, %v3741
  %4123 = vst.msk [vmem:[%s4 + $0x420] sm:$0xff] %vm3990, %v3743
  %4124 = vst.msk [vmem:[%s4 + $0x428] sm:$0xff] %vm3990, %v3745
  %4125 = vst.msk [vmem:[%s4 + $0x430] sm:$0xff] %vm3990, %v3747
  %4126 = vst.msk [vmem:[%s4 + $0x438] sm:$0xff] %vm3990, %v3749
  %4127 = vst.msk [vmem:[%s4 + $0x440] sm:$0xff] %vm3990, %v3751
  %4128 = vst.msk [vmem:[%s4 + $0x448] sm:$0xff] %vm3990, %v3753
  %4129 = vst.msk [vmem:[%s4 + $0x450] sm:$0xff] %vm3990, %v3755
  %4130 = vst.msk [vmem:[%s4 + $0x458] sm:$0xff] %vm3990, %v3757
  %4131 = vst.msk [vmem:[%s4 + $0x460] sm:$0xff] %vm3990, %v3759
  %4132 = vst.msk [vmem:[%s4 + $0x468] sm:$0xff] %vm3990, %v3761
  %4133 = vst.msk [vmem:[%s4 + $0x470] sm:$0xff] %vm3990, %v3763
  %4134 = vst.msk [vmem:[%s4 + $0x478] sm:$0xff] %vm3990, %v3765
  %4135 = vst.msk [vmem:[%s4 + $0x480] sm:$0xff] %vm3990, %v3767
  %4136 = vst.msk [vmem:[%s4 + $0x488] sm:$0xff] %vm3990, %v3769
  %4137 = vst.msk [vmem:[%s4 + $0x490] sm:$0xff] %vm3990, %v3771
  %4138 = vst.msk [vmem:[%s4 + $0x498] sm:$0xff] %vm3990, %v3773
  %4139 = vst.msk [vmem:[%s4 + $0x4a0] sm:$0xff] %vm3990, %v3775
  %4140 = vst.msk [vmem:[%s4 + $0x4a8] sm:$0xff] %vm3990, %v3777
  %4141 = vst.msk [vmem:[%s4 + $0x4b0] sm:$0xff] %vm3990, %v3779
  %4142 = vst.msk [vmem:[%s4 + $0x4b8] sm:$0xff] %vm3990, %v3781
  %4143 = vst.msk [vmem:[%s4 + $0x4c0] sm:$0xff] %vm3990, %v3783
  %4144 = vst.msk [vmem:[%s4 + $0x4c8] sm:$0xff] %vm3990, %v3785
  %4145 = vst.msk [vmem:[%s4 + $0x4d0] sm:$0xff] %vm3990, %v3787
  %4146 = vst.msk [vmem:[%s4 + $0x4d8] sm:$0xff] %vm3990, %v3789
  %4147 = vst.msk [vmem:[%s4 + $0x4e0] sm:$0xff] %vm3990, %v3791
  %4148 = vst.msk [vmem:[%s4 + $0x4e8] sm:$0xff] %vm3990, %v3793
  %4149 = vst.msk [vmem:[%s4 + $0x4f0] sm:$0xff] %vm3990, %v3795
  %4150 = vst.msk [vmem:[%s4 + $0x4f8] sm:$0xff] %vm3990, %v3797
  %4151 = vst.msk [vmem:[%s4 + $0x500] sm:$0xff] %vm3990, %v3799
  %4152 = vst.msk [vmem:[%s4 + $0x508] sm:$0xff] %vm3990, %v3801
  %4153 = vst.msk [vmem:[%s4 + $0x510] sm:$0xff] %vm3990, %v3803
  %4154 = vst.msk [vmem:[%s4 + $0x518] sm:$0xff] %vm3990, %v3805
  %4155 = vst.msk [vmem:[%s4 + $0x520] sm:$0xff] %vm3990, %v3807
  %4156 = vst.msk [vmem:[%s4 + $0x528] sm:$0xff] %vm3990, %v3809
  %4157 = vst.msk [vmem:[%s4 + $0x530] sm:$0xff] %vm3990, %v3811
  %4158 = vst.msk [vmem:[%s4 + $0x538] sm:$0xff] %vm3990, %v3813
  %4159 = vst.msk [vmem:[%s4 + $0x540] sm:$0xff] %vm3990, %v3815
  %4160 = vst.msk [vmem:[%s4 + $0x548] sm:$0xff] %vm3990, %v3817
  %4161 = vst.msk [vmem:[%s4 + $0x550] sm:$0xff] %vm3990, %v3819
  %4162 = vst.msk [vmem:[%s4 + $0x558] sm:$0xff] %vm3990, %v3821
  %4163 = vst.msk [vmem:[%s4 + $0x560] sm:$0xff] %vm3990, %v3823
  %4164 = vst.msk [vmem:[%s4 + $0x568] sm:$0xff] %vm3990, %v3825
  %4165 = vst.msk [vmem:[%s4 + $0x570] sm:$0xff] %vm3990, %v3827
  %4166 = vst.msk [vmem:[%s4 + $0x578] sm:$0xff] %vm3990, %v3829
  %4167 = vst.msk [vmem:[%s4 + $0x580] sm:$0xff] %vm3990, %v3831
  %4168 = vst.msk [vmem:[%s4 + $0x588] sm:$0xff] %vm3990, %v3833
  %4169 = vst.msk [vmem:[%s4 + $0x590] sm:$0xff] %vm3990, %v3835
  %4170 = vst.msk [vmem:[%s4 + $0x598] sm:$0xff] %vm3990, %v3837
  %4171 = vst.msk [vmem:[%s4 + $0x5a0] sm:$0xff] %vm3990, %v3839
  %4172 = vst.msk [vmem:[%s4 + $0x5a8] sm:$0xff] %vm3990, %v3841
  %4173 = vst.msk [vmem:[%s4 + $0x5b0] sm:$0xff] %vm3990, %v3843
  %4174 = vst.msk [vmem:[%s4 + $0x5b8] sm:$0xff] %vm3990, %v3845
  %4175 = vst.msk [vmem:[%s4 + $0x5c0] sm:$0xff] %vm3990, %v3847
  %4176 = vst.msk [vmem:[%s4 + $0x5c8] sm:$0xff] %vm3990, %v3849
  %4177 = vst.msk [vmem:[%s4 + $0x5d0] sm:$0xff] %vm3990, %v3851
  %4178 = vst.msk [vmem:[%s4 + $0x5d8] sm:$0xff] %vm3990, %v3853
  %4179 = vst.msk [vmem:[%s4 + $0x5e0] sm:$0xff] %vm3990, %v3855
  %4180 = vst.msk [vmem:[%s4 + $0x5e8] sm:$0xff] %vm3990, %v3857
  %4181 = vst.msk [vmem:[%s4 + $0x5f0] sm:$0xff] %vm3990, %v3859
  %4182 = vst.msk [vmem:[%s4 + $0x5f8] sm:$0xff] %vm3990, %v3861
  %4183 = vst.msk [vmem:[%s4 + $0x600] sm:$0xff] %vm3990, %v3863
  %4184 = vst.msk [vmem:[%s4 + $0x608] sm:$0xff] %vm3990, %v3865
  %4185 = vst.msk [vmem:[%s4 + $0x610] sm:$0xff] %vm3990, %v3867
  %4186 = vst.msk [vmem:[%s4 + $0x618] sm:$0xff] %vm3990, %v3869
  %4187 = vst.msk [vmem:[%s4 + $0x620] sm:$0xff] %vm3990, %v3871
  %4188 = vst.msk [vmem:[%s4 + $0x628] sm:$0xff] %vm3990, %v3873
  %4189 = vst.msk [vmem:[%s4 + $0x630] sm:$0xff] %vm3990, %v3875
  %4190 = vst.msk [vmem:[%s4 + $0x638] sm:$0xff] %vm3990, %v3877
  %4191 = vst.msk [vmem:[%s4 + $0x640] sm:$0xff] %vm3990, %v3879
  %4192 = vst.msk [vmem:[%s4 + $0x648] sm:$0xff] %vm3990, %v3881
  %4193 = vst.msk [vmem:[%s4 + $0x650] sm:$0xff] %vm3990, %v3883
  %4194 = vst.msk [vmem:[%s4 + $0x658] sm:$0xff] %vm3990, %v3885
  %4195 = vst.msk [vmem:[%s4 + $0x660] sm:$0xff] %vm3990, %v3887
  %4196 = vst.msk [vmem:[%s4 + $0x668] sm:$0xff] %vm3990, %v3889
  %4197 = vst.msk [vmem:[%s4 + $0x670] sm:$0xff] %vm3990, %v3891
  %4198 = vst.msk [vmem:[%s4 + $0x678] sm:$0xff] %vm3990, %v3893
  %4199 = vst.msk [vmem:[%s4 + $0x680] sm:$0xff] %vm3990, %v3895
  %4200 = vst.msk [vmem:[%s4 + $0x688] sm:$0xff] %vm3990, %v3897
  %4201 = vst.msk [vmem:[%s4 + $0x690] sm:$0xff] %vm3990, %v3899
  %4202 = vst.msk [vmem:[%s4 + $0x698] sm:$0xff] %vm3990, %v3901
  %4203 = vst.msk [vmem:[%s4 + $0x6a0] sm:$0xff] %vm3990, %v3903
  %4204 = vst.msk [vmem:[%s4 + $0x6a8] sm:$0xff] %vm3990, %v3905
  %4205 = vst.msk [vmem:[%s4 + $0x6b0] sm:$0xff] %vm3990, %v3907
  %4206 = vst.msk [vmem:[%s4 + $0x6b8] sm:$0xff] %vm3990, %v3909
  %4207 = vst.msk [vmem:[%s4 + $0x6c0] sm:$0xff] %vm3990, %v3911
  %4208 = vst.msk [vmem:[%s4 + $0x6c8] sm:$0xff] %vm3990, %v3913
  %4209 = vst.msk [vmem:[%s4 + $0x6d0] sm:$0xff] %vm3990, %v3915
  %4210 = vst.msk [vmem:[%s4 + $0x6d8] sm:$0xff] %vm3990, %v3917
  %4211 = vst.msk [vmem:[%s4 + $0x6e0] sm:$0xff] %vm3990, %v3919
  %4212 = vst.msk [vmem:[%s4 + $0x6e8] sm:$0xff] %vm3990, %v3921
  %4213 = vst.msk [vmem:[%s4 + $0x6f0] sm:$0xff] %vm3990, %v3923
  %4214 = vst.msk [vmem:[%s4 + $0x6f8] sm:$0xff] %vm3990, %v3925
  %4215 = vst.msk [vmem:[%s4 + $0x700] sm:$0xff] %vm3990, %v3927
  %4216 = vst.msk [vmem:[%s4 + $0x708] sm:$0xff] %vm3990, %v3929
  %4217 = vst.msk [vmem:[%s4 + $0x710] sm:$0xff] %vm3990, %v3931
  %4218 = vst.msk [vmem:[%s4 + $0x718] sm:$0xff] %vm3990, %v3933
  %4219 = vst.msk [vmem:[%s4 + $0x720] sm:$0xff] %vm3990, %v3935
  %4220 = vst.msk [vmem:[%s4 + $0x728] sm:$0xff] %vm3990, %v3937
  %4221 = vst.msk [vmem:[%s4 + $0x730] sm:$0xff] %vm3990, %v3939
  %4222 = vst.msk [vmem:[%s4 + $0x738] sm:$0xff] %vm3990, %v3941
  %4223 = vst.msk [vmem:[%s4 + $0x740] sm:$0xff] %vm3990, %v3943
  %4224 = vst.msk [vmem:[%s4 + $0x748] sm:$0xff] %vm3990, %v3945
  %4225 = vst.msk [vmem:[%s4 + $0x750] sm:$0xff] %vm3990, %v3947
  %4226 = vst.msk [vmem:[%s4 + $0x758] sm:$0xff] %vm3990, %v3949
  %4227 = vst.msk [vmem:[%s4 + $0x760] sm:$0xff] %vm3990, %v3951
  %4228 = vst.msk [vmem:[%s4 + $0x768] sm:$0xff] %vm3990, %v3953
  %4229 = vst.msk [vmem:[%s4 + $0x770] sm:$0xff] %vm3990, %v3955
  %4230 = vst.msk [vmem:[%s4 + $0x778] sm:$0xff] %vm3990, %v3957
  %4231 = vst.msk [vmem:[%s4 + $0x780] sm:$0xff] %vm3990, %v3959
  %4232 = vst.msk [vmem:[%s4 + $0x788] sm:$0xff] %vm3990, %v3961
  %4233 = vst.msk [vmem:[%s4 + $0x790] sm:$0xff] %vm3990, %v3963
  %4234 = vst.msk [vmem:[%s4 + $0x798] sm:$0xff] %vm3990, %v3965
  %4235 = vst.msk [vmem:[%s4 + $0x7a0] sm:$0xff] %vm3990, %v3967
  %4236 = vst.msk [vmem:[%s4 + $0x7a8] sm:$0xff] %vm3990, %v3969
  %4237 = vst.msk [vmem:[%s4 + $0x7b0] sm:$0xff] %vm3990, %v3971
  %4238 = vst.msk [vmem:[%s4 + $0x7b8] sm:$0xff] %vm3990, %v3973
  %4239 = vst.msk [vmem:[%s4 + $0x7c0] sm:$0xff] %vm3990, %v3975
  %4240 = vst.msk [vmem:[%s4 + $0x7c8] sm:$0xff] %vm3990, %v3977
  %4241 = vst.msk [vmem:[%s4 + $0x7d0] sm:$0xff] %vm3990, %v3979
  %4242 = vst.msk [vmem:[%s4 + $0x7d8] sm:$0xff] %vm3990, %v3981
  %4243 = vst.msk [vmem:[%s4 + $0x7e0] sm:$0xff] %vm3990, %v3983
  %4244 = vst.msk [vmem:[%s4 + $0x7e8] sm:$0xff] %vm3990, %v3985
  %4245 = vst.msk [vmem:[%s4 + $0x7f0] sm:$0xff] %vm3990, %v3987
  %4246 = vst.msk [vmem:[%s4 + $0x7f8] sm:$0xff] %vm3990, %v3989
  // Predicated region
  $region18: #{vae_forward.17} parent=0 // pred_check
    _
  $region19: #{vae_forward.17} parent=0 // pred_check_branch
    %4248 = sbr.rel (0) target = $region21
  $region20: #{vae_forward.17} parent=0 // pred_region
    _
  $region21: #{vae_forward.17} parent=0 // pred_fallthru
    _
  // Predicated region
  $region22: #{vae_forward.17} parent=0 // pred_check
    _
  $region23: #{vae_forward.17} parent=0 // pred_check_branch
    %4250 = sbr.rel (0) target = $region25
  $region24: #{vae_forward.17} parent=0 // pred_region
    _
  $region25: #{vae_forward.17} parent=0 // pred_fallthru
    _

</llo_original>
